<compile_context>
chip_gen: v6e
topology: v6e:2x2x1
jax: 0.10.0
libtpu: 0.0.40
codegen_flags: <defaults>
</compile_context>

<pallas_src>
import functools

import jax
import jax.numpy as jnp
from jax.experimental import pallas as pl
from jax.experimental.pallas import tpu as pltpu

BN_EPS = 1e-5


def _round_up(x, m):
    return ((x + m - 1) // m) * m


def _cdiv(a, b):
    return -(-a // b)


def _vmem_capacity():
    try:
        info = pltpu.get_tpu_info()
        cap = int(getattr(info, "vmem_capacity_bytes", 0) or 0)
        if cap > 0:
            return cap
    except Exception:
        pass
    return 64 * 1024 * 1024


_VMEM_CAP = _vmem_capacity()
if _VMEM_CAP >= 96 * 1024 * 1024:            # v5e / v6e: 128 MiB physical VMEM
    VMEM_LIMIT = 100 * 1024 * 1024
    TILE_M = 1024
else:                                        # v7x (64 MiB physical) or unknown
    VMEM_LIMIT = 48 * 1024 * 1024
    TILE_M = 512
TILE_ROWS = 2048                             # 128-lane rows per pass-B / maxpool tile


def _row_tiles(M, target):
    """Largest tile <= target, multiple of 8, with >= 2 tiles whenever M > 8 (v7x megacore)."""
    half = _round_up(max(_cdiv(M, 2), 1), 8)
    t = max(8, min(target, half))
    Mp = _round_up(M, t)
    return t, Mp


def _compiler_params():
    return pltpu.CompilerParams(dimension_semantics=("parallel",),
                                vmem_limit_bytes=VMEM_LIMIT)


# ---------------------------- Pallas kernels ----------------------------

def _band_conv_kernel(x_ref, w_ref, m_ref, y_ref, ps_ref, pq_ref, *, band, offs):
    """3x3 s1 p1 conv of one image as 9 shifted row-band matmuls (halo-free, f32 accumulation).

    x_ref: [1, (H+4)*(W+2), Cin] bf16 flattened zero-padded image (VMEM).
    w_ref: [9, Cin, Cout] bf16 per-tap weights (VMEM-resident across the grid).
    m_ref: [band, 1] f32 validity mask (pad columns -> 0), used only for BN statistics.
    """
    cout = w_ref.shape[-1]
    acc = jnp.zeros((band, cout), jnp.float32)
    for t, off in enumerate(offs):
        acc = acc + jnp.dot(x_ref[0, pl.ds(off, band), :], w_ref[t],
                            preferred_element_type=jnp.float32)
    y_ref[0] = acc.astype(y_ref.dtype)                       # bf16 HBM round trip
    masked = acc * m_ref[...]
    ps_ref[0] = jnp.sum(masked, axis=0, keepdims=True)       # exact: pad columns masked out
    pq_ref[0] = jnp.sum(masked * masked, axis=0, keepdims=True)


def _im2col_conv_kernel(p_ref, w_ref, y_ref, ps_ref, pq_ref):
    """One M-tile of im2col conv (open / transition convs): y = p @ w + channel stats."""
    y = jnp.dot(p_ref[...], w_ref[...], preferred_element_type=jnp.float32)
    y_ref[...] = y.astype(y_ref.dtype)                       # bf16 HBM round trip
    ps_ref[...] = jnp.sum(y, axis=0, keepdims=True)[None]
    pq_ref[...] = jnp.sum(y * y, axis=0, keepdims=True)[None]


def _bn_apply_kernel(y_ref, sc_ref, sh_ref, o_ref):
    """Lane-dense BN apply + ReLU: y is bf16 [tr, lanes]; scale/shift tiled across lanes."""
    o_ref[...] = jnp.maximum(y_ref[...].astype(jnp.float32) * sc_ref[...] + sh_ref[...], 0.0)


def _bn_apply_axpy_kernel(y_ref, sc_ref, sh_ref, x_ref, o_ref, *, dt):
    """BN apply + ReLU with the forward-Euler update x + dt*f fused into the writeback."""
    f = jnp.maximum(y_ref[...].astype(jnp.float32) * sc_ref[...] + sh_ref[...], 0.0)
    o_ref[...] = x_ref[...] + dt * f


def _maxpool_kernel(p_ref, o_ref):
    """p: [9, tr, 128] lane-dense window taps -> elementwise max over the leading axis."""
    m = p_ref[0]
    for t in range(1, p_ref.shape[0]):
        m = jnp.maximum(m, p_ref[t])
    o_ref[...] = m


def _close_kernel(x_ref, w_ref, b_ref, o_ref):
    """Global average pool + Linear.  x: [tn, HW, C]  w: [C, 256-padded] bf16  b: [1, 256]."""
    pooled = jnp.mean(x_ref[...], axis=1)
    o_ref[...] = jnp.dot(pooled.astype(w_ref.dtype), w_ref[...],
                         preferred_element_type=jnp.float32) + b_ref[...]


# ---------------------------- JAX glue ----------------------------

def _extract_patches(x, kh, kw, stride, pad, pad_value=0.0, stack_axis=3):
    """x: [N,H,W,C] -> im2col taps (glue only; used by open conv / transitions / maxpool).
    stack_axis=3 -> [N,Ho,Wo,kh*kw,C]; stack_axis=0 -> [kh*kw,N,Ho,Wo,C]."""
    N, H, W, C = x.shape
    xp = jnp.pad(x, ((0, 0), (pad, pad), (pad, pad), (0, 0)), constant_values=pad_value)
    Ho = (H + 2 * pad - kh) // stride + 1
    Wo = (W + 2 * pad - kw) // stride + 1
    taps = []
    for i in range(kh):
        for j in range(kw):
            taps.append(xp[:, i:i + stride * Ho:stride, j:j + stride * Wo:stride, :])
    return jnp.stack(taps, axis=stack_axis), Ho, Wo


def _pad_rows(a, Mp):
    M = a.shape[0]
    if Mp == M:
        return a
    return jnp.pad(a, ((0, Mp - M),) + ((0, 0),) * (a.ndim - 1))


def _scale_shift(psum, psq, gamma, beta, m_true):
    """Reduce per-tile channel stats (tiny) and fold BN into a per-channel scale/shift."""
    s = jnp.sum(psum, axis=tuple(range(psum.ndim - 1)))
    ss = jnp.sum(psq, axis=tuple(range(psq.ndim - 1)))
    mean = s / m_true
    var = jnp.maximum(ss / m_true - mean * mean, 0.0)        # clamp catastrophic cancellation
    scale = gamma.reshape(-1) * jax.lax.rsqrt(var + BN_EPS)
    shift = beta.reshape(-1) - mean * scale
    return scale, shift


def bn_relu_apply(y, scale, shift, cout, residual=None, dt=None):
    """Lane-dense BN apply + ReLU (+ fused Euler residual) over a channel-fastest buffer.

    y (bf16, any shape with last dim == cout) is reshaped zero-copy to [rows, 128] so stores are
    full-lane-width; returns an f32 array of y.shape.  residual (if given) must share y's shape.
    """
    lanes = 128 if 128 % cout == 0 else cout
    reps = lanes // cout
    yf = y.reshape(-1)
    total = yf.shape[0]
    R = _cdiv(total, lanes)
    tr, Rp = _row_tiles(R, TILE_ROWS)
    pad = Rp * lanes - total
    y2 = jnp.pad(yf, (0, pad)).reshape(Rp, lanes)
    sc = jnp.tile(scale.astype(jnp.float32), reps).reshape(1, lanes)
    sh = jnp.tile(shift.astype(jnp.float32), reps).reshape(1, lanes)
    row = pl.BlockSpec((tr, lanes), lambda i: (i, 0))
    vec = pl.BlockSpec((1, lanes), lambda i: (0, 0))
    grid = (Rp // tr,)
    if residual is None:
        out = pl.pallas_call(
            _bn_apply_kernel, grid=grid,
            in_specs=[row, vec, vec], out_specs=row,
            out_shape=jax.ShapeDtypeStruct((Rp, lanes), jnp.float32),
            compiler_params=_compiler_params(),
        )(y2, sc, sh)
    else:
        x2 = jnp.pad(residual.astype(jnp.float32).reshape(-1), (0, pad)).reshape(Rp, lanes)
        out = pl.pallas_call(
            functools.partial(_bn_apply_axpy_kernel, dt=dt), grid=grid,
            in_specs=[row, vec, vec, row], out_specs=row,
            out_shape=jax.ShapeDtypeStruct((Rp, lanes), jnp.float32),
            compiler_params=_compiler_params(),
        )(y2, sc, sh, x2)
    return out.reshape(-1)[:total].reshape(y.shape)


def step_conv_bn_relu(x, w, gamma, beta, residual=None, dt=None):
    """3x3 stride-1 pad-1 conv (halo-free band kernel) + batch-stat BN + ReLU (+ x + dt*out)."""
    N, H, W, C = x.shape
    cout = w.shape[-1]
    Wp = W + 2
    band = H * Wp
    Mimg = (H + 4) * Wp
    # pad 2 rows / 1 col on each side once (~1.3x input traffic instead of 9x im2col).
    xp = jnp.pad(x, ((0, 0), (2, 2), (1, 1), (0, 0))).reshape(N, Mimg, C).astype(jnp.bfloat16)
    wt = w.reshape(9, C, cout).astype(jnp.bfloat16)
    # band row j corresponds to padded column j % Wp; columns 0 and W+1 are conv padding.
    col = jnp.arange(band, dtype=jnp.int32) % Wp
    mask = ((col >= 1) & (col <= W)).astype(jnp.float32).reshape(band, 1)
    # tap (a,b) reads flattened rows [ (1+a)*Wp + b-1 , +band ) -- constant per-tap offsets.
    offs = tuple((1 + a) * Wp + (b - 1) for a in range(3) for b in range(3))

    y, psum, psq = pl.pallas_call(
        functools.partial(_band_conv_kernel, band=band, offs=offs),
        grid=(N,),
        in_specs=[pl.BlockSpec((1, Mimg, C), lambda n: (n, 0, 0)),
                  pl.BlockSpec((9, C, cout), lambda n: (0, 0, 0)),     # VMEM-resident weights
                  pl.BlockSpec((band, 1), lambda n: (0, 0))],
        out_specs=(pl.BlockSpec((1, band, cout), lambda n: (n, 0, 0)),
                   pl.BlockSpec((1, 1, cout), lambda n: (n, 0, 0)),
                   pl.BlockSpec((1, 1, cout), lambda n: (n, 0, 0))),
        out_shape=(jax.ShapeDtypeStruct((N, band, cout), jnp.bfloat16),
                   jax.ShapeDtypeStruct((N, 1, cout), jnp.float32),
                   jax.ShapeDtypeStruct((N, 1, cout), jnp.float32)),
        compiler_params=_compiler_params(),
    )(xp, wt, mask)

    scale, shift = _scale_shift(psum, psq, gamma, beta, float(N * H * W))
    res_band = None
    if residual is not None:
        res_band = jnp.pad(residual, ((0, 0), (0, 0), (1, 1), (0, 0))).reshape(N, band, cout)
    out = bn_relu_apply(y, scale, shift, cout, residual=res_band, dt=dt)
    return out.reshape(N, H, Wp, cout)[:, :, 1:W + 1, :]


def conv_im2col_bn_relu(x, w, gamma, beta, *, stride, pad):
    """Strided conv (open 7x7/s2, transitions 3x3/s2) + batch-stat BN + ReLU (runs once each)."""
    kh, kw, cin, cout = w.shape
    patches, Ho, Wo = _extract_patches(x, kh, kw, stride, pad)
    N = x.shape[0]
    M, K = N * Ho * Wo, kh * kw * cin
    tm, Mp = _row_tiles(M, TILE_M)
    num_m = Mp // tm
    p2 = _pad_rows(patches.reshape(M, K), Mp).astype(jnp.bfloat16)   # zero rows -> stats exact
    wb = w.reshape(K, cout).astype(jnp.bfloat16)

    y, psum, psq = pl.pallas_call(
        _im2col_conv_kernel, grid=(num_m,),
        in_specs=[pl.BlockSpec((tm, K), lambda i: (i, 0)),
                  pl.BlockSpec((K, cout), lambda i: (0, 0))],         # VMEM-resident weights
        out_specs=(pl.BlockSpec((tm, cout), lambda i: (i, 0)),
                   pl.BlockSpec((1, 1, cout), lambda i: (i, 0, 0)),
                   pl.BlockSpec((1, 1, cout), lambda i: (i, 0, 0))),
        out_shape=(jax.ShapeDtypeStruct((Mp, cout), jnp.bfloat16),
                   jax.ShapeDtypeStruct((num_m, 1, cout), jnp.float32),
                   jax.ShapeDtypeStruct((num_m, 1, cout), jnp.float32)),
        compiler_params=_compiler_params(),
    )(p2, wb)

    scale, shift = _scale_shift(psum, psq, gamma, beta, float(M))
    out = bn_relu_apply(y, scale, shift, cout)
    return out[:M].reshape(N, Ho, Wo, cout)


def maxpool_3x3_s2(x):
    N, H, W, C = x.shape
    taps, Ho, Wo = _extract_patches(x, 3, 3, 2, 1, pad_value=-jnp.inf, stack_axis=0)
    T = N * Ho * Wo * C
    lanes = 128
    R = _cdiv(T, lanes)
    tr, Rp = _row_tiles(R, TILE_ROWS)
    taps_f = jnp.pad(taps.reshape(9, T), ((0, 0), (0, Rp * lanes - T))).reshape(9, Rp, lanes)
    out = pl.pallas_call(
        _maxpool_kernel, grid=(Rp // tr,),
        in_specs=[pl.BlockSpec((9, tr, lanes), lambda i: (0, i, 0))],
        out_specs=pl.BlockSpec((tr, lanes), lambda i: (i, 0)),
        out_shape=jax.ShapeDtypeStruct((Rp, lanes), jnp.float32),
        compiler_params=_compiler_params(),
    )(taps_f)
    return out.reshape(-1)[:T].reshape(N, Ho, Wo, C)


def ode_step(x, sp, dt):
    y = step_conv_bn_relu(x, sp['w1'], sp['g1'], sp['b1'])
    # second conv: BN + ReLU + forward-Euler update fused into the writeback epilogue.
    return step_conv_bn_relu(y, sp['w2'], sp['g2'], sp['b2'], residual=x, dt=dt)


def close_layer(x, w, b):
    N, H, W, C = x.shape
    HW = H * W
    ncls = w.shape[1]
    ncls_p = _round_up(ncls, 128)            # 200 -> 256: lane-dense output stores
    wp = jnp.pad(w, ((0, 0), (0, ncls_p - ncls))).astype(jnp.bfloat16)
    bp = jnp.pad(b.reshape(-1), (0, ncls_p - ncls)).reshape(1, ncls_p).astype(jnp.float32)
    tn = 8 if N >= 8 else N
    Np = _round_up(N, tn)
    xr = _pad_rows(x.reshape(N, HW, C), Np)
    out = pl.pallas_call(
        _close_kernel, grid=(Np // tn,),
        in_specs=[pl.BlockSpec((tn, HW, C), lambda i: (i, 0, 0)),
                  pl.BlockSpec((C, ncls_p), lambda i: (0, 0)),
                  pl.BlockSpec((1, ncls_p), lambda i: (0, 0))],
        out_specs=pl.BlockSpec((tn, ncls_p), lambda i: (i, 0)),
        out_shape=jax.ShapeDtypeStruct((Np, ncls_p), jnp.float32),
        compiler_params=_compiler_params(),
    )(xr, wp, bp)
    return out[:N, :ncls]


def parallel_net_forward(x_nchw, params, *, global_steps, Tf=1.0):
    x = jnp.transpose(x_nchw, (0, 2, 3, 1)).astype(jnp.float32)     # NCHW -> NHWC
    total_steps = 4 * 1 + 4 * (global_steps - 1)                    # sum(num_steps)
    dt = Tf / total_steps

    # OpenLayer
    op = params['open']
    x = conv_im2col_bn_relu(x, op['w'], op['g'], op['b'], stride=2, pad=3)
    x = maxpool_3x3_s2(x)

    # [StepLayer x (G-1), Transition] x 3, then StepLayer x (G-1)
    for s in range(4):
        sp = params[f'step{s + 1}']
        for _ in range(global_steps - 1):
            x = ode_step(x, sp, dt)
        if s < 3:
            tp = params[f'trans{s + 1}']
            x = conv_im2col_bn_relu(x, tp['w'], tp['g'], tp['b'], stride=2, pad=1)

    # CloseLayer
    cl = params['close']
    return close_layer(x, cl['w'], cl['b'])


# ---------------------------- deterministic parameters ----------------------------

def init_params(key, channels):
    C = channels
    keys = iter(jax.random.split(key, 16))

    def conv_w(cin, cout, k):
        fan_in = cin * k * k
        return jax.random.normal(next(keys), (k, k, cin, cout), jnp.float32) / jnp.sqrt(fan_in)

    def bn(c):
        return jnp.ones((c,), jnp.float32), jnp.zeros((c,), jnp.float32)

    params = {}
    g, b = bn(C)
    params['open'] = {'w': conv_w(3, C, 7), 'g': g, 'b': b}
    widths = [C, 2 * C, 4 * C, 8 * C]
    for s, wd in enumerate(widths):
        g1, b1 = bn(wd)
        g2, b2 = bn(wd)
        params[f'step{s + 1}'] = {'w1': conv_w(wd, wd, 3), 'g1': g1, 'b1': b1,
                                  'w2': conv_w(wd, wd, 3), 'g2': g2, 'b2': b2}
    for t, wd in enumerate(widths[:3]):
        g, b = bn(2 * wd)
        params[f'trans{t + 1}'] = {'w': conv_w(wd, 2 * wd, 3), 'g': g, 'b': b}
    fc_in = 8 * C
    params['close'] = {
        'w': jax.random.normal(next(keys), (fc_in, 200), jnp.float32) / jnp.sqrt(fc_in),
        'b': jnp.zeros((200,), jnp.float32),
    }
    return params


if __name__ == "__main__":
    key = jax.random.PRNGKey(0)
    pkey, xkey = jax.random.split(key)

    channels = 4        # ParallelNet(channels=4, ...)
    global_steps = 2    # small number of ODE steps for the demo
    params = init_params(pkey, channels)

    x = jax.random.normal(xkey, (2, 3, 32, 32), jnp.float32)   # small NCHW input

    fwd = jax.jit(functools.partial(parallel_net_forward, global_steps=global_steps))
    out = fwd(x, params)
    jax.block_until_ready(out)

    assert out.shape == (2, 200) and out.dtype == jnp.float32
    print("KERNEL_OK")
</pallas_src>

<mosaic_0001>
module attributes {stable_mosaic.version = 11 : i64} {
  func.func @_im2col_conv_kernel(%arg0: i32, %arg1: memref<256x147xbf16, #tpu.memory_space<vmem>>, %arg2: memref<147x4xbf16, #tpu.memory_space<vmem>>, %arg3: memref<256x4xbf16, #tpu.memory_space<vmem>>, %arg4: memref<1x1x4xf32, #tpu.memory_space<vmem>>, %arg5: memref<1x1x4xf32, #tpu.memory_space<vmem>>) attributes {dimension_semantics = [#tpu.dimension_semantics<parallel>], iteration_bounds = array<i64: 2>, scalar_prefetch = 0 : i64, scratch_operands = 0 : i64, tpu.core_type = #tpu.core_type<tc>, window_params = [{transform_indices = @transform_0, window_bounds = array<i64: 256, 147>}, {pipeline_mode = #tpu.pipeline_mode<synchronous>, transform_indices = @transform_1, window_bounds = array<i64: 147, 4>}, {transform_indices = @transform_2, window_bounds = array<i64: 256, 4>}, {transform_indices = @transform_3, window_bounds = array<i64: 1, 1, 4>}, {transform_indices = @transform_4, window_bounds = array<i64: 1, 1, 4>}]} {
    %c0 = arith.constant 0 : index
    %c0_0 = arith.constant 0 : index
    %0 = vector.load %arg1[%c0, %c0_0] : memref<256x147xbf16, #tpu.memory_space<vmem>>, vector<256x147xbf16>
    %c0_1 = arith.constant 0 : index
    %c0_2 = arith.constant 0 : index
    %1 = vector.load %arg2[%c0_1, %c0_2] : memref<147x4xbf16, #tpu.memory_space<vmem>>, vector<147x4xbf16>
    %cst = arith.constant dense<0.000000e+00> : vector<256x4xf32>
    %2 = tpu.matmul %0, %1, %cst {dimension_numbers = #tpu.dot_dimension_numbers<[1], [0], [0], [1], [0, 0, 1, 1], [], []>} : vector<256x147xbf16>, vector<147x4xbf16>, vector<256x4xf32> -> vector<256x4xf32>
    %3 = arith.truncf %2 : vector<256x4xf32> to vector<256x4xbf16>
    %c0_3 = arith.constant 0 : index
    %c0_4 = arith.constant 0 : index
    %4 = vector.load %arg3[%c0_3, %c0_4] : memref<256x4xbf16, #tpu.memory_space<vmem>>, vector<256x4xbf16>
    tpu.vector_store %arg3[%c0_3, %c0_4], %3 {strides = array<i32>} : memref<256x4xbf16, #tpu.memory_space<vmem>>, vector<256x4xbf16>,
    %cst_5 = arith.constant dense<0.000000e+00> : vector<4xf32>
    %5 = vector.multi_reduction <add>, %2, %cst_5 [0] : vector<256x4xf32> to vector<4xf32>
    %6 = vector.shape_cast %5 : vector<4xf32> to vector<1x4xf32>
    %7 = vector.shape_cast %6 : vector<1x4xf32> to vector<1x1x4xf32>
    %c0_6 = arith.constant 0 : index
    %c0_7 = arith.constant 0 : index
    %c0_8 = arith.constant 0 : index
    %8 = vector.load %arg4[%c0_6, %c0_7, %c0_8] : memref<1x1x4xf32, #tpu.memory_space<vmem>>, vector<1x1x4xf32>
    tpu.vector_store %arg4[%c0_6, %c0_7, %c0_8], %7 {strides = array<i32>} : memref<1x1x4xf32, #tpu.memory_space<vmem>>, vector<1x1x4xf32>,
    %9 = arith.mulf %2, %2 : vector<256x4xf32>
    %cst_9 = arith.constant dense<0.000000e+00> : vector<4xf32>
    %10 = vector.multi_reduction <add>, %9, %cst_9 [0] : vector<256x4xf32> to vector<4xf32>
    %11 = vector.shape_cast %10 : vector<4xf32> to vector<1x4xf32>
    %12 = vector.shape_cast %11 : vector<1x4xf32> to vector<1x1x4xf32>
    %c0_10 = arith.constant 0 : index
    %c0_11 = arith.constant 0 : index
    %c0_12 = arith.constant 0 : index
    %13 = vector.load %arg5[%c0_10, %c0_11, %c0_12] : memref<1x1x4xf32, #tpu.memory_space<vmem>>, vector<1x1x4xf32>
    tpu.vector_store %arg5[%c0_10, %c0_11, %c0_12], %12 {strides = array<i32>} : memref<1x1x4xf32, #tpu.memory_space<vmem>>, vector<1x1x4xf32>,
    return
  }
  func.func @transform_0(%arg0: i32) -> (i32, i32) {
    %c0_i32 = arith.constant 0 : i32
    %c0_i32_0 = arith.constant 0 : i32
    return %arg0, %c0_i32 : i32, i32
  }
  func.func @transform_1(%arg0: i32) -> (i32, i32) {
    %c0_i32 = arith.constant 0 : i32
    %c0_i32_0 = arith.constant 0 : i32
    %c0_i32_1 = arith.constant 0 : i32
    return %c0_i32, %c0_i32_0 : i32, i32
  }
  func.func @transform_2(%arg0: i32) -> (i32, i32) {
    %c0_i32 = arith.constant 0 : i32
    %c0_i32_0 = arith.constant 0 : i32
    return %arg0, %c0_i32 : i32, i32
  }
  func.func @transform_3(%arg0: i32) -> (i32, i32, i32) {
    %c0_i32 = arith.constant 0 : i32
    %c0_i32_0 = arith.constant 0 : i32
    %c0_i32_1 = arith.constant 0 : i32
    return %arg0, %c0_i32, %c0_i32_0 : i32, i32, i32
  }
  func.func @transform_4(%arg0: i32) -> (i32, i32, i32) {
    %c0_i32 = arith.constant 0 : i32
    %c0_i32_0 = arith.constant 0 : i32
    %c0_i32_1 = arith.constant 0 : i32
    return %arg0, %c0_i32, %c0_i32_0 : i32, i32, i32
  }
}

module attributes {stable_mosaic.version = 11 : i64} {
  func.func @_bn_apply_kernel(%arg0: i32, %arg1: memref<8x128xbf16, #tpu.memory_space<vmem>>, %arg2: memref<1x128xf32, #tpu.memory_space<vmem>>, %arg3: memref<1x128xf32, #tpu.memory_space<vmem>>, %arg4: memref<8x128xf32, #tpu.memory_space<vmem>>) attributes {dimension_semantics = [#tpu.dimension_semantics<parallel>], iteration_bounds = array<i64: 2>, scalar_prefetch = 0 : i64, scratch_operands = 0 : i64, tpu.core_type = #tpu.core_type<tc>, window_params = [{transform_indices = @transform_0, window_bounds = array<i64: 8, 128>}, {pipeline_mode = #tpu.pipeline_mode<synchronous>, transform_indices = @transform_1, window_bounds = array<i64: 1, 128>}, {pipeline_mode = #tpu.pipeline_mode<synchronous>, transform_indices = @transform_2, window_bounds = array<i64: 1, 128>}, {transform_indices = @transform_3, window_bounds = array<i64: 8, 128>}]} {
    %c0 = arith.constant 0 : index
    %c0_0 = arith.constant 0 : index
    %0 = vector.load %arg1[%c0, %c0_0] : memref<8x128xbf16, #tpu.memory_space<vmem>>, vector<8x128xbf16>
    %1 = arith.extf %0 : vector<8x128xbf16> to vector<8x128xf32>
    %c0_1 = arith.constant 0 : index
    %c0_2 = arith.constant 0 : index
    %2 = vector.load %arg2[%c0_1, %c0_2] : memref<1x128xf32, #tpu.memory_space<vmem>>, vector<1x128xf32>
    %3 = vector.broadcast %2 : vector<1x128xf32> to vector<8x128xf32>
    %4 = arith.mulf %1, %3 : vector<8x128xf32>
    %c0_3 = arith.constant 0 : index
    %c0_4 = arith.constant 0 : index
    %5 = vector.load %arg3[%c0_3, %c0_4] : memref<1x128xf32, #tpu.memory_space<vmem>>, vector<1x128xf32>
    %6 = vector.broadcast %5 : vector<1x128xf32> to vector<8x128xf32>
    %7 = arith.addf %4, %6 : vector<8x128xf32>
    %cst = arith.constant 0.000000e+00 : f32
    %8 = vector.broadcast %cst : f32 to vector<8x128xf32>
    %9 = arith.maximumf %7, %8 : vector<8x128xf32>
    %c0_5 = arith.constant 0 : index
    %c0_6 = arith.constant 0 : index
    %10 = vector.load %arg4[%c0_5, %c0_6] : memref<8x128xf32, #tpu.memory_space<vmem>>, vector<8x128xf32>
    tpu.vector_store %arg4[%c0_5, %c0_6], %9 {strides = array<i32>} : memref<8x128xf32, #tpu.memory_space<vmem>>, vector<8x128xf32>,
    return
  }
  func.func @transform_0(%arg0: i32) -> (i32, i32) {
    %c0_i32 = arith.constant 0 : i32
    %c0_i32_0 = arith.constant 0 : i32
    return %arg0, %c0_i32 : i32, i32
  }
  func.func @transform_1(%arg0: i32) -> (i32, i32) {
    %c0_i32 = arith.constant 0 : i32
    %c0_i32_0 = arith.constant 0 : i32
    %c0_i32_1 = arith.constant 0 : i32
    return %c0_i32, %c0_i32_0 : i32, i32
  }
  func.func @transform_2(%arg0: i32) -> (i32, i32) {
    %c0_i32 = arith.constant 0 : i32
    %c0_i32_0 = arith.constant 0 : i32
    %c0_i32_1 = arith.constant 0 : i32
    return %c0_i32, %c0_i32_0 : i32, i32
  }
  func.func @transform_3(%arg0: i32) -> (i32, i32) {
    %c0_i32 = arith.constant 0 : i32
    %c0_i32_0 = arith.constant 0 : i32
    return %arg0, %c0_i32 : i32, i32
  }
}

module attributes {stable_mosaic.version = 11 : i64} {
  func.func @_maxpool_kernel(%arg0: i32, %arg1: memref<9x8x128xf32, #tpu.memory_space<vmem>>, %arg2: memref<8x128xf32, #tpu.memory_space<vmem>>) attributes {dimension_semantics = [#tpu.dimension_semantics<parallel>], iteration_bounds = array<i64: 1>, scalar_prefetch = 0 : i64, scratch_operands = 0 : i64, tpu.core_type = #tpu.core_type<tc>, window_params = [{transform_indices = @transform_0, window_bounds = array<i64: 9, 8, 128>}, {transform_indices = @transform_1, window_bounds = array<i64: 8, 128>}]} {
    %c0 = arith.constant 0 : index
    %c0_0 = arith.constant 0 : index
    %c0_1 = arith.constant 0 : index
    %0 = vector.load %arg1[%c0, %c0_0, %c0_1] : memref<9x8x128xf32, #tpu.memory_space<vmem>>, vector<1x8x128xf32>
    %1 = vector.shape_cast %0 : vector<1x8x128xf32> to vector<8x128xf32>
    %c1 = arith.constant 1 : index
    %c0_2 = arith.constant 0 : index
    %c0_3 = arith.constant 0 : index
    %2 = vector.load %arg1[%c1, %c0_2, %c0_3] : memref<9x8x128xf32, #tpu.memory_space<vmem>>, vector<1x8x128xf32>
    %3 = vector.shape_cast %2 : vector<1x8x128xf32> to vector<8x128xf32>
    %4 = arith.maximumf %1, %3 : vector<8x128xf32>
    %c2 = arith.constant 2 : index
    %c0_4 = arith.constant 0 : index
    %c0_5 = arith.constant 0 : index
    %5 = vector.load %arg1[%c2, %c0_4, %c0_5] : memref<9x8x128xf32, #tpu.memory_space<vmem>>, vector<1x8x128xf32>
    %6 = vector.shape_cast %5 : vector<1x8x128xf32> to vector<8x128xf32>
    %7 = arith.maximumf %4, %6 : vector<8x128xf32>
    %c3 = arith.constant 3 : index
    %c0_6 = arith.constant 0 : index
    %c0_7 = arith.constant 0 : index
    %8 = vector.load %arg1[%c3, %c0_6, %c0_7] : memref<9x8x128xf32, #tpu.memory_space<vmem>>, vector<1x8x128xf32>
    %9 = vector.shape_cast %8 : vector<1x8x128xf32> to vector<8x128xf32>
    %10 = arith.maximumf %7, %9 : vector<8x128xf32>
    %c4 = arith.constant 4 : index
    %c0_8 = arith.constant 0 : index
    %c0_9 = arith.constant 0 : index
    %11 = vector.load %arg1[%c4, %c0_8, %c0_9] : memref<9x8x128xf32, #tpu.memory_space<vmem>>, vector<1x8x128xf32>
    %12 = vector.shape_cast %11 : vector<1x8x128xf32> to vector<8x128xf32>
    %13 = arith.maximumf %10, %12 : vector<8x128xf32>
    %c5 = arith.constant 5 : index
    %c0_10 = arith.constant 0 : index
    %c0_11 = arith.constant 0 : index
    %14 = vector.load %arg1[%c5, %c0_10, %c0_11] : memref<9x8x128xf32, #tpu.memory_space<vmem>>, vector<1x8x128xf32>
    %15 = vector.shape_cast %14 : vector<1x8x128xf32> to vector<8x128xf32>
    %16 = arith.maximumf %13, %15 : vector<8x128xf32>
    %c6 = arith.constant 6 : index
    %c0_12 = arith.constant 0 : index
    %c0_13 = arith.constant 0 : index
    %17 = vector.load %arg1[%c6, %c0_12, %c0_13] : memref<9x8x128xf32, #tpu.memory_space<vmem>>, vector<1x8x128xf32>
    %18 = vector.shape_cast %17 : vector<1x8x128xf32> to vector<8x128xf32>
    %19 = arith.maximumf %16, %18 : vector<8x128xf32>
    %c7 = arith.constant 7 : index
    %c0_14 = arith.constant 0 : index
    %c0_15 = arith.constant 0 : index
    %20 = vector.load %arg1[%c7, %c0_14, %c0_15] : memref<9x8x128xf32, #tpu.memory_space<vmem>>, vector<1x8x128xf32>
    %21 = vector.shape_cast %20 : vector<1x8x128xf32> to vector<8x128xf32>
    %22 = arith.maximumf %19, %21 : vector<8x128xf32>
    %c8 = arith.constant 8 : index
    %c0_16 = arith.constant 0 : index
    %c0_17 = arith.constant 0 : index
    %23 = vector.load %arg1[%c8, %c0_16, %c0_17] : memref<9x8x128xf32, #tpu.memory_space<vmem>>, vector<1x8x128xf32>
    %24 = vector.shape_cast %23 : vector<1x8x128xf32> to vector<8x128xf32>
    %25 = arith.maximumf %22, %24 : vector<8x128xf32>
    %c0_18 = arith.constant 0 : index
    %c0_19 = arith.constant 0 : index
    %26 = vector.load %arg2[%c0_18, %c0_19] : memref<8x128xf32, #tpu.memory_space<vmem>>, vector<8x128xf32>
    tpu.vector_store %arg2[%c0_18, %c0_19], %25 {strides = array<i32>} : memref<8x128xf32, #tpu.memory_space<vmem>>, vector<8x128xf32>,
    return
  }
  func.func @transform_0(%arg0: i32) -> (i32, i32, i32) {
    %c0_i32 = arith.constant 0 : i32
    %c0_i32_0 = arith.constant 0 : i32
    %c0_i32_1 = arith.constant 0 : i32
    return %c0_i32, %arg0, %c0_i32_0 : i32, i32, i32
  }
  func.func @transform_1(%arg0: i32) -> (i32, i32) {
    %c0_i32 = arith.constant 0 : i32
    %c0_i32_0 = arith.constant 0 : i32
    return %arg0, %c0_i32 : i32, i32
  }
}

module attributes {stable_mosaic.version = 11 : i64} {
  func.func @_bn_apply_kernel(%arg0: i32, %arg1: memref<8x128xbf16, #tpu.memory_space<vmem>>, %arg2: memref<1x128xf32, #tpu.memory_space<vmem>>, %arg3: memref<1x128xf32, #tpu.memory_space<vmem>>, %arg4: memref<8x128xf32, #tpu.memory_space<vmem>>) attributes {dimension_semantics = [#tpu.dimension_semantics<parallel>], iteration_bounds = array<i64: 1>, scalar_prefetch = 0 : i64, scratch_operands = 0 : i64, tpu.core_type = #tpu.core_type<tc>, window_params = [{transform_indices = @transform_0, window_bounds = array<i64: 8, 128>}, {pipeline_mode = #tpu.pipeline_mode<synchronous>, transform_indices = @transform_1, window_bounds = array<i64: 1, 128>}, {pipeline_mode = #tpu.pipeline_mode<synchronous>, transform_indices = @transform_2, window_bounds = array<i64: 1, 128>}, {transform_indices = @transform_3, window_bounds = array<i64: 8, 128>}]} {
    %c0 = arith.constant 0 : index
    %c0_0 = arith.constant 0 : index
    %0 = vector.load %arg1[%c0, %c0_0] : memref<8x128xbf16, #tpu.memory_space<vmem>>, vector<8x128xbf16>
    %1 = arith.extf %0 : vector<8x128xbf16> to vector<8x128xf32>
    %c0_1 = arith.constant 0 : index
    %c0_2 = arith.constant 0 : index
    %2 = vector.load %arg2[%c0_1, %c0_2] : memref<1x128xf32, #tpu.memory_space<vmem>>, vector<1x128xf32>
    %3 = vector.broadcast %2 : vector<1x128xf32> to vector<8x128xf32>
    %4 = arith.mulf %1, %3 : vector<8x128xf32>
    %c0_3 = arith.constant 0 : index
    %c0_4 = arith.constant 0 : index
    %5 = vector.load %arg3[%c0_3, %c0_4] : memref<1x128xf32, #tpu.memory_space<vmem>>, vector<1x128xf32>
    %6 = vector.broadcast %5 : vector<1x128xf32> to vector<8x128xf32>
    %7 = arith.addf %4, %6 : vector<8x128xf32>
    %cst = arith.constant 0.000000e+00 : f32
    %8 = vector.broadcast %cst : f32 to vector<8x128xf32>
    %9 = arith.maximumf %7, %8 : vector<8x128xf32>
    %c0_5 = arith.constant 0 : index
    %c0_6 = arith.constant 0 : index
    %10 = vector.load %arg4[%c0_5, %c0_6] : memref<8x128xf32, #tpu.memory_space<vmem>>, vector<8x128xf32>
    tpu.vector_store %arg4[%c0_5, %c0_6], %9 {strides = array<i32>} : memref<8x128xf32, #tpu.memory_space<vmem>>, vector<8x128xf32>,
    return
  }
  func.func @transform_0(%arg0: i32) -> (i32, i32) {
    %c0_i32 = arith.constant 0 : i32
    %c0_i32_0 = arith.constant 0 : i32
    return %arg0, %c0_i32 : i32, i32
  }
  func.func @transform_1(%arg0: i32) -> (i32, i32) {
    %c0_i32 = arith.constant 0 : i32
    %c0_i32_0 = arith.constant 0 : i32
    %c0_i32_1 = arith.constant 0 : i32
    return %c0_i32, %c0_i32_0 : i32, i32
  }
  func.func @transform_2(%arg0: i32) -> (i32, i32) {
    %c0_i32 = arith.constant 0 : i32
    %c0_i32_0 = arith.constant 0 : i32
    %c0_i32_1 = arith.constant 0 : i32
    return %c0_i32, %c0_i32_0 : i32, i32
  }
  func.func @transform_3(%arg0: i32) -> (i32, i32) {
    %c0_i32 = arith.constant 0 : i32
    %c0_i32_0 = arith.constant 0 : i32
    return %arg0, %c0_i32 : i32, i32
  }
}

module attributes {stable_mosaic.version = 11 : i64} {
  func.func @_band_conv_kernel(%arg0: i32, %arg1: memref<1x120x4xbf16, #tpu.memory_space<vmem>>, %arg2: memref<9x4x4xbf16, #tpu.memory_space<vmem>>, %arg3: memref<80x1xf32, #tpu.memory_space<vmem>>, %arg4: memref<1x80x4xbf16, #tpu.memory_space<vmem>>, %arg5: memref<1x1x4xf32, #tpu.memory_space<vmem>>, %arg6: memref<1x1x4xf32, #tpu.memory_space<vmem>>) attributes {dimension_semantics = [#tpu.dimension_semantics<parallel>], iteration_bounds = array<i64: 2>, scalar_prefetch = 0 : i64, scratch_operands = 0 : i64, tpu.core_type = #tpu.core_type<tc>, window_params = [{transform_indices = @transform_0, window_bounds = array<i64: 1, 120, 4>}, {pipeline_mode = #tpu.pipeline_mode<synchronous>, transform_indices = @transform_1, window_bounds = array<i64: 9, 4, 4>}, {pipeline_mode = #tpu.pipeline_mode<synchronous>, transform_indices = @transform_2, window_bounds = array<i64: 80, 1>}, {transform_indices = @transform_3, window_bounds = array<i64: 1, 80, 4>}, {transform_indices = @transform_4, window_bounds = array<i64: 1, 1, 4>}, {transform_indices = @transform_5, window_bounds = array<i64: 1, 1, 4>}]} {
    %cst = arith.constant 0.000000e+00 : f32
    %0 = vector.broadcast %cst : f32 to vector<80x4xf32>
    %c0 = arith.constant 0 : index
    %c9 = arith.constant 9 : index
    %c0_0 = arith.constant 0 : index
    %1 = vector.load %arg1[%c0, %c9, %c0_0] : memref<1x120x4xbf16, #tpu.memory_space<vmem>>, vector<1x80x4xbf16>
    %2 = vector.shape_cast %1 : vector<1x80x4xbf16> to vector<80x4xbf16>
    %c0_1 = arith.constant 0 : index
    %c0_2 = arith.constant 0 : index
    %c0_3 = arith.constant 0 : index
    %3 = vector.load %arg2[%c0_1, %c0_2, %c0_3] : memref<9x4x4xbf16, #tpu.memory_space<vmem>>, vector<1x4x4xbf16>
    %4 = vector.shape_cast %3 : vector<1x4x4xbf16> to vector<4x4xbf16>
    %cst_4 = arith.constant dense<0.000000e+00> : vector<80x4xf32>
    %5 = tpu.matmul %2, %4, %cst_4 {dimension_numbers = #tpu.dot_dimension_numbers<[1], [0], [0], [1], [0, 0, 1, 1], [], []>} : vector<80x4xbf16>, vector<4x4xbf16>, vector<80x4xf32> -> vector<80x4xf32>
    %6 = arith.addf %0, %5 : vector<80x4xf32>
    %c0_5 = arith.constant 0 : index
    %c10 = arith.constant 10 : index
    %c0_6 = arith.constant 0 : index
    %7 = vector.load %arg1[%c0_5, %c10, %c0_6] : memref<1x120x4xbf16, #tpu.memory_space<vmem>>, vector<1x80x4xbf16>
    %8 = vector.shape_cast %7 : vector<1x80x4xbf16> to vector<80x4xbf16>
    %c1 = arith.constant 1 : index
    %c0_7 = arith.constant 0 : index
    %c0_8 = arith.constant 0 : index
    %9 = vector.load %arg2[%c1, %c0_7, %c0_8] : memref<9x4x4xbf16, #tpu.memory_space<vmem>>, vector<1x4x4xbf16>
    %10 = vector.shape_cast %9 : vector<1x4x4xbf16> to vector<4x4xbf16>
    %cst_9 = arith.constant dense<0.000000e+00> : vector<80x4xf32>
    %11 = tpu.matmul %8, %10, %cst_9 {dimension_numbers = #tpu.dot_dimension_numbers<[1], [0], [0], [1], [0, 0, 1, 1], [], []>} : vector<80x4xbf16>, vector<4x4xbf16>, vector<80x4xf32> -> vector<80x4xf32>
    %12 = arith.addf %6, %11 : vector<80x4xf32>
    %c0_10 = arith.constant 0 : index
    %c11 = arith.constant 11 : index
    %c0_11 = arith.constant 0 : index
    %13 = vector.load %arg1[%c0_10, %c11, %c0_11] : memref<1x120x4xbf16, #tpu.memory_space<vmem>>, vector<1x80x4xbf16>
    %14 = vector.shape_cast %13 : vector<1x80x4xbf16> to vector<80x4xbf16>
    %c2 = arith.constant 2 : index
    %c0_12 = arith.constant 0 : index
    %c0_13 = arith.constant 0 : index
    %15 = vector.load %arg2[%c2, %c0_12, %c0_13] : memref<9x4x4xbf16, #tpu.memory_space<vmem>>, vector<1x4x4xbf16>
    %16 = vector.shape_cast %15 : vector<1x4x4xbf16> to vector<4x4xbf16>
    %cst_14 = arith.constant dense<0.000000e+00> : vector<80x4xf32>
    %17 = tpu.matmul %14, %16, %cst_14 {dimension_numbers = #tpu.dot_dimension_numbers<[1], [0], [0], [1], [0, 0, 1, 1], [], []>} : vector<80x4xbf16>, vector<4x4xbf16>, vector<80x4xf32> -> vector<80x4xf32>
    %18 = arith.addf %12, %17 : vector<80x4xf32>
    %c0_15 = arith.constant 0 : index
    %c19 = arith.constant 19 : index
    %c0_16 = arith.constant 0 : index
    %19 = vector.load %arg1[%c0_15, %c19, %c0_16] : memref<1x120x4xbf16, #tpu.memory_space<vmem>>, vector<1x80x4xbf16>
    %20 = vector.shape_cast %19 : vector<1x80x4xbf16> to vector<80x4xbf16>
    %c3 = arith.constant 3 : index
    %c0_17 = arith.constant 0 : index
    %c0_18 = arith.constant 0 : index
    %21 = vector.load %arg2[%c3, %c0_17, %c0_18] : memref<9x4x4xbf16, #tpu.memory_space<vmem>>, vector<1x4x4xbf16>
    %22 = vector.shape_cast %21 : vector<1x4x4xbf16> to vector<4x4xbf16>
    %cst_19 = arith.constant dense<0.000000e+00> : vector<80x4xf32>
    %23 = tpu.matmul %20, %22, %cst_19 {dimension_numbers = #tpu.dot_dimension_numbers<[1], [0], [0], [1], [0, 0, 1, 1], [], []>} : vector<80x4xbf16>, vector<4x4xbf16>, vector<80x4xf32> -> vector<80x4xf32>
    %24 = arith.addf %18, %23 : vector<80x4xf32>
    %c0_20 = arith.constant 0 : index
    %c20 = arith.constant 20 : index
    %c0_21 = arith.constant 0 : index
    %25 = vector.load %arg1[%c0_20, %c20, %c0_21] : memref<1x120x4xbf16, #tpu.memory_space<vmem>>, vector<1x80x4xbf16>
    %26 = vector.shape_cast %25 : vector<1x80x4xbf16> to vector<80x4xbf16>
    %c4 = arith.constant 4 : index
    %c0_22 = arith.constant 0 : index
    %c0_23 = arith.constant 0 : index
    %27 = vector.load %arg2[%c4, %c0_22, %c0_23] : memref<9x4x4xbf16, #tpu.memory_space<vmem>>, vector<1x4x4xbf16>
    %28 = vector.shape_cast %27 : vector<1x4x4xbf16> to vector<4x4xbf16>
    %cst_24 = arith.constant dense<0.000000e+00> : vector<80x4xf32>
    %29 = tpu.matmul %26, %28, %cst_24 {dimension_numbers = #tpu.dot_dimension_numbers<[1], [0], [0], [1], [0, 0, 1, 1], [], []>} : vector<80x4xbf16>, vector<4x4xbf16>, vector<80x4xf32> -> vector<80x4xf32>
    %30 = arith.addf %24, %29 : vector<80x4xf32>
    %c0_25 = arith.constant 0 : index
    %c21 = arith.constant 21 : index
    %c0_26 = arith.constant 0 : index
    %31 = vector.load %arg1[%c0_25, %c21, %c0_26] : memref<1x120x4xbf16, #tpu.memory_space<vmem>>, vector<1x80x4xbf16>
    %32 = vector.shape_cast %31 : vector<1x80x4xbf16> to vector<80x4xbf16>
    %c5 = arith.constant 5 : index
    %c0_27 = arith.constant 0 : index
    %c0_28 = arith.constant 0 : index
    %33 = vector.load %arg2[%c5, %c0_27, %c0_28] : memref<9x4x4xbf16, #tpu.memory_space<vmem>>, vector<1x4x4xbf16>
    %34 = vector.shape_cast %33 : vector<1x4x4xbf16> to vector<4x4xbf16>
    %cst_29 = arith.constant dense<0.000000e+00> : vector<80x4xf32>
    %35 = tpu.matmul %32, %34, %cst_29 {dimension_numbers = #tpu.dot_dimension_numbers<[1], [0], [0], [1], [0, 0, 1, 1], [], []>} : vector<80x4xbf16>, vector<4x4xbf16>, vector<80x4xf32> -> vector<80x4xf32>
    %36 = arith.addf %30, %35 : vector<80x4xf32>
    %c0_30 = arith.constant 0 : index
    %c29 = arith.constant 29 : index
    %c0_31 = arith.constant 0 : index
    %37 = vector.load %arg1[%c0_30, %c29, %c0_31] : memref<1x120x4xbf16, #tpu.memory_space<vmem>>, vector<1x80x4xbf16>
    %38 = vector.shape_cast %37 : vector<1x80x4xbf16> to vector<80x4xbf16>
    %c6 = arith.constant 6 : index
    %c0_32 = arith.constant 0 : index
    %c0_33 = arith.constant 0 : index
    %39 = vector.load %arg2[%c6, %c0_32, %c0_33] : memref<9x4x4xbf16, #tpu.memory_space<vmem>>, vector<1x4x4xbf16>
    %40 = vector.shape_cast %39 : vector<1x4x4xbf16> to vector<4x4xbf16>
    %cst_34 = arith.constant dense<0.000000e+00> : vector<80x4xf32>
    %41 = tpu.matmul %38, %40, %cst_34 {dimension_numbers = #tpu.dot_dimension_numbers<[1], [0], [0], [1], [0, 0, 1, 1], [], []>} : vector<80x4xbf16>, vector<4x4xbf16>, vector<80x4xf32> -> vector<80x4xf32>
    %42 = arith.addf %36, %41 : vector<80x4xf32>
    %c0_35 = arith.constant 0 : index
    %c30 = arith.constant 30 : index
    %c0_36 = arith.constant 0 : index
    %43 = vector.load %arg1[%c0_35, %c30, %c0_36] : memref<1x120x4xbf16, #tpu.memory_space<vmem>>, vector<1x80x4xbf16>
    %44 = vector.shape_cast %43 : vector<1x80x4xbf16> to vector<80x4xbf16>
    %c7 = arith.constant 7 : index
    %c0_37 = arith.constant 0 : index
    %c0_38 = arith.constant 0 : index
    %45 = vector.load %arg2[%c7, %c0_37, %c0_38] : memref<9x4x4xbf16, #tpu.memory_space<vmem>>, vector<1x4x4xbf16>
    %46 = vector.shape_cast %45 : vector<1x4x4xbf16> to vector<4x4xbf16>
    %cst_39 = arith.constant dense<0.000000e+00> : vector<80x4xf32>
    %47 = tpu.matmul %44, %46, %cst_39 {dimension_numbers = #tpu.dot_dimension_numbers<[1], [0], [0], [1], [0, 0, 1, 1], [], []>} : vector<80x4xbf16>, vector<4x4xbf16>, vector<80x4xf32> -> vector<80x4xf32>
    %48 = arith.addf %42, %47 : vector<80x4xf32>
    %c0_40 = arith.constant 0 : index
    %c31 = arith.constant 31 : index
    %c0_41 = arith.constant 0 : index
    %49 = vector.load %arg1[%c0_40, %c31, %c0_41] : memref<1x120x4xbf16, #tpu.memory_space<vmem>>, vector<1x80x4xbf16>
    %50 = vector.shape_cast %49 : vector<1x80x4xbf16> to vector<80x4xbf16>
    %c8 = arith.constant 8 : index
    %c0_42 = arith.constant 0 : index
    %c0_43 = arith.constant 0 : index
    %51 = vector.load %arg2[%c8, %c0_42, %c0_43] : memref<9x4x4xbf16, #tpu.memory_space<vmem>>, vector<1x4x4xbf16>
    %52 = vector.shape_cast %51 : vector<1x4x4xbf16> to vector<4x4xbf16>
    %cst_44 = arith.constant dense<0.000000e+00> : vector<80x4xf32>
    %53 = tpu.matmul %50, %52, %cst_44 {dimension_numbers = #tpu.dot_dimension_numbers<[1], [0], [0], [1], [0, 0, 1, 1], [], []>} : vector<80x4xbf16>, vector<4x4xbf16>, vector<80x4xf32> -> vector<80x4xf32>
    %54 = arith.addf %48, %53 : vector<80x4xf32>
    %55 = arith.truncf %54 : vector<80x4xf32> to vector<80x4xbf16>
    %c0_45 = arith.constant 0 : index
    %c0_46 = arith.constant 0 : index
    %c0_47 = arith.constant 0 : index
    %56 = vector.load %arg4[%c0_45, %c0_46, %c0_47] : memref<1x80x4xbf16, #tpu.memory_space<vmem>>, vector<1x80x4xbf16>
    %57 = vector.shape_cast %56 : vector<1x80x4xbf16> to vector<80x4xbf16>
    %58 = vector.shape_cast %55 : vector<80x4xbf16> to vector<1x80x4xbf16>
    tpu.vector_store %arg4[%c0_45, %c0_46, %c0_47], %58 {strides = array<i32>} : memref<1x80x4xbf16, #tpu.memory_space<vmem>>, vector<1x80x4xbf16>,
    %c0_48 = arith.constant 0 : index
    %c0_49 = arith.constant 0 : index
    %59 = vector.load %arg3[%c0_48, %c0_49] : memref<80x1xf32, #tpu.memory_space<vmem>>, vector<80x1xf32>
    %60 = vector.broadcast %59 : vector<80x1xf32> to vector<80x4xf32>
    %61 = arith.mulf %54, %60 : vector<80x4xf32>
    %cst_50 = arith.constant dense<0.000000e+00> : vector<4xf32>
    %62 = vector.multi_reduction <add>, %61, %cst_50 [0] : vector<80x4xf32> to vector<4xf32>
    %63 = vector.shape_cast %62 : vector<4xf32> to vector<1x4xf32>
    %c0_51 = arith.constant 0 : index
    %c0_52 = arith.constant 0 : index
    %c0_53 = arith.constant 0 : index
    %64 = vector.load %arg5[%c0_51, %c0_52, %c0_53] : memref<1x1x4xf32, #tpu.memory_space<vmem>>, vector<1x1x4xf32>
    %65 = vector.shape_cast %64 : vector<1x1x4xf32> to vector<1x4xf32>
    %66 = vector.shape_cast %63 : vector<1x4xf32> to vector<1x1x4xf32>
    tpu.vector_store %arg5[%c0_51, %c0_52, %c0_53], %66 {strides = array<i32>} : memref<1x1x4xf32, #tpu.memory_space<vmem>>, vector<1x1x4xf32>,
    %67 = arith.mulf %61, %61 : vector<80x4xf32>
    %cst_54 = arith.constant dense<0.000000e+00> : vector<4xf32>
    %68 = vector.multi_reduction <add>, %67, %cst_54 [0] : vector<80x4xf32> to vector<4xf32>
    %69 = vector.shape_cast %68 : vector<4xf32> to vector<1x4xf32>
    %c0_55 = arith.constant 0 : index
    %c0_56 = arith.constant 0 : index
    %c0_57 = arith.constant 0 : index
    %70 = vector.load %arg6[%c0_55, %c0_56, %c0_57] : memref<1x1x4xf32, #tpu.memory_space<vmem>>, vector<1x1x4xf32>
    %71 = vector.shape_cast %70 : vector<1x1x4xf32> to vector<1x4xf32>
    %72 = vector.shape_cast %69 : vector<1x4xf32> to vector<1x1x4xf32>
    tpu.vector_store %arg6[%c0_55, %c0_56, %c0_57], %72 {strides = array<i32>} : memref<1x1x4xf32, #tpu.memory_space<vmem>>, vector<1x1x4xf32>,
    return
  }
  func.func @transform_0(%arg0: i32) -> (i32, i32, i32) {
    %c0_i32 = arith.constant 0 : i32
    %c0_i32_0 = arith.constant 0 : i32
    %c0_i32_1 = arith.constant 0 : i32
    return %arg0, %c0_i32, %c0_i32_0 : i32, i32, i32
  }
  func.func @transform_1(%arg0: i32) -> (i32, i32, i32) {
    %c0_i32 = arith.constant 0 : i32
    %c0_i32_0 = arith.constant 0 : i32
    %c0_i32_1 = arith.constant 0 : i32
    %c0_i32_2 = arith.constant 0 : i32
    return %c0_i32, %c0_i32_0, %c0_i32_1 : i32, i32, i32
  }
  func.func @transform_2(%arg0: i32) -> (i32, i32) {
    %c0_i32 = arith.constant 0 : i32
    %c0_i32_0 = arith.constant 0 : i32
    %c0_i32_1 = arith.constant 0 : i32
    return %c0_i32, %c0_i32_0 : i32, i32
  }
  func.func @transform_3(%arg0: i32) -> (i32, i32, i32) {
    %c0_i32 = arith.constant 0 : i32
    %c0_i32_0 = arith.constant 0 : i32
    %c0_i32_1 = arith.constant 0 : i32
    return %arg0, %c0_i32, %c0_i32_0 : i32, i32, i32
  }
  func.func @transform_4(%arg0: i32) -> (i32, i32, i32) {
    %c0_i32 = arith.constant 0 : i32
    %c0_i32_0 = arith.constant 0 : i32
    %c0_i32_1 = arith.constant 0 : i32
    return %arg0, %c0_i32, %c0_i32_0 : i32, i32, i32
  }
  func.func @transform_5(%arg0: i32) -> (i32, i32, i32) {
    %c0_i32 = arith.constant 0 : i32
    %c0_i32_0 = arith.constant 0 : i32
    %c0_i32_1 = arith.constant 0 : i32
    return %arg0, %c0_i32, %c0_i32_0 : i32, i32, i32
  }
}

module attributes {stable_mosaic.version = 11 : i64} {
  func.func @_bn_apply_axpy_kernel(%arg0: i32, %arg1: memref<8x128xbf16, #tpu.memory_space<vmem>>, %arg2: memref<1x128xf32, #tpu.memory_space<vmem>>, %arg3: memref<1x128xf32, #tpu.memory_space<vmem>>, %arg4: memref<8x128xf32, #tpu.memory_space<vmem>>, %arg5: memref<8x128xf32, #tpu.memory_space<vmem>>) attributes {dimension_semantics = [#tpu.dimension_semantics<parallel>], iteration_bounds = array<i64: 1>, scalar_prefetch = 0 : i64, scratch_operands = 0 : i64, tpu.core_type = #tpu.core_type<tc>, window_params = [{transform_indices = @transform_0, window_bounds = array<i64: 8, 128>}, {pipeline_mode = #tpu.pipeline_mode<synchronous>, transform_indices = @transform_1, window_bounds = array<i64: 1, 128>}, {pipeline_mode = #tpu.pipeline_mode<synchronous>, transform_indices = @transform_2, window_bounds = array<i64: 1, 128>}, {transform_indices = @transform_3, window_bounds = array<i64: 8, 128>}, {transform_indices = @transform_4, window_bounds = array<i64: 8, 128>}]} {
    %c0 = arith.constant 0 : index
    %c0_0 = arith.constant 0 : index
    %0 = vector.load %arg1[%c0, %c0_0] : memref<8x128xbf16, #tpu.memory_space<vmem>>, vector<8x128xbf16>
    %1 = arith.extf %0 : vector<8x128xbf16> to vector<8x128xf32>
    %c0_1 = arith.constant 0 : index
    %c0_2 = arith.constant 0 : index
    %2 = vector.load %arg2[%c0_1, %c0_2] : memref<1x128xf32, #tpu.memory_space<vmem>>, vector<1x128xf32>
    %3 = vector.broadcast %2 : vector<1x128xf32> to vector<8x128xf32>
    %4 = arith.mulf %1, %3 : vector<8x128xf32>
    %c0_3 = arith.constant 0 : index
    %c0_4 = arith.constant 0 : index
    %5 = vector.load %arg3[%c0_3, %c0_4] : memref<1x128xf32, #tpu.memory_space<vmem>>, vector<1x128xf32>
    %6 = vector.broadcast %5 : vector<1x128xf32> to vector<8x128xf32>
    %7 = arith.addf %4, %6 : vector<8x128xf32>
    %cst = arith.constant 0.000000e+00 : f32
    %8 = vector.broadcast %cst : f32 to vector<8x128xf32>
    %9 = arith.maximumf %7, %8 : vector<8x128xf32>
    %c0_5 = arith.constant 0 : index
    %c0_6 = arith.constant 0 : index
    %10 = vector.load %arg4[%c0_5, %c0_6] : memref<8x128xf32, #tpu.memory_space<vmem>>, vector<8x128xf32>
    %cst_7 = arith.constant 1.250000e-01 : f32
    %11 = vector.broadcast %cst_7 : f32 to vector<8x128xf32>
    %12 = arith.mulf %11, %9 : vector<8x128xf32>
    %13 = arith.addf %10, %12 : vector<8x128xf32>
    %c0_8 = arith.constant 0 : index
    %c0_9 = arith.constant 0 : index
    %14 = vector.load %arg5[%c0_8, %c0_9] : memref<8x128xf32, #tpu.memory_space<vmem>>, vector<8x128xf32>
    tpu.vector_store %arg5[%c0_8, %c0_9], %13 {strides = array<i32>} : memref<8x128xf32, #tpu.memory_space<vmem>>, vector<8x128xf32>,
    return
  }
  func.func @transform_0(%arg0: i32) -> (i32, i32) {
    %c0_i32 = arith.constant 0 : i32
    %c0_i32_0 = arith.constant 0 : i32
    return %arg0, %c0_i32 : i32, i32
  }
  func.func @transform_1(%arg0: i32) -> (i32, i32) {
    %c0_i32 = arith.constant 0 : i32
    %c0_i32_0 = arith.constant 0 : i32
    %c0_i32_1 = arith.constant 0 : i32
    return %c0_i32, %c0_i32_0 : i32, i32
  }
  func.func @transform_2(%arg0: i32) -> (i32, i32) {
    %c0_i32 = arith.constant 0 : i32
    %c0_i32_0 = arith.constant 0 : i32
    %c0_i32_1 = arith.constant 0 : i32
    return %c0_i32, %c0_i32_0 : i32, i32
  }
  func.func @transform_3(%arg0: i32) -> (i32, i32) {
    %c0_i32 = arith.constant 0 : i32
    %c0_i32_0 = arith.constant 0 : i32
    return %arg0, %c0_i32 : i32, i32
  }
  func.func @transform_4(%arg0: i32) -> (i32, i32) {
    %c0_i32 = arith.constant 0 : i32
    %c0_i32_0 = arith.constant 0 : i32
    return %arg0, %c0_i32 : i32, i32
  }
}

module attributes {stable_mosaic.version = 11 : i64} {
  func.func @_im2col_conv_kernel(%arg0: i32, %arg1: memref<16x36xbf16, #tpu.memory_space<vmem>>, %arg2: memref<36x8xbf16, #tpu.memory_space<vmem>>, %arg3: memref<16x8xbf16, #tpu.memory_space<vmem>>, %arg4: memref<1x1x8xf32, #tpu.memory_space<vmem>>, %arg5: memref<1x1x8xf32, #tpu.memory_space<vmem>>) attributes {dimension_semantics = [#tpu.dimension_semantics<parallel>], iteration_bounds = array<i64: 2>, scalar_prefetch = 0 : i64, scratch_operands = 0 : i64, tpu.core_type = #tpu.core_type<tc>, window_params = [{transform_indices = @transform_0, window_bounds = array<i64: 16, 36>}, {pipeline_mode = #tpu.pipeline_mode<synchronous>, transform_indices = @transform_1, window_bounds = array<i64: 36, 8>}, {transform_indices = @transform_2, window_bounds = array<i64: 16, 8>}, {transform_indices = @transform_3, window_bounds = array<i64: 1, 1, 8>}, {transform_indices = @transform_4, window_bounds = array<i64: 1, 1, 8>}]} {
    %c0 = arith.constant 0 : index
    %c0_0 = arith.constant 0 : index
    %0 = vector.load %arg1[%c0, %c0_0] : memref<16x36xbf16, #tpu.memory_space<vmem>>, vector<16x36xbf16>
    %c0_1 = arith.constant 0 : index
    %c0_2 = arith.constant 0 : index
    %1 = vector.load %arg2[%c0_1, %c0_2] : memref<36x8xbf16, #tpu.memory_space<vmem>>, vector<36x8xbf16>
    %cst = arith.constant dense<0.000000e+00> : vector<16x8xf32>
    %2 = tpu.matmul %0, %1, %cst {dimension_numbers = #tpu.dot_dimension_numbers<[1], [0], [0], [1], [0, 0, 1, 1], [], []>} : vector<16x36xbf16>, vector<36x8xbf16>, vector<16x8xf32> -> vector<16x8xf32>
    %3 = arith.truncf %2 : vector<16x8xf32> to vector<16x8xbf16>
    %c0_3 = arith.constant 0 : index
    %c0_4 = arith.constant 0 : index
    %4 = vector.load %arg3[%c0_3, %c0_4] : memref<16x8xbf16, #tpu.memory_space<vmem>>, vector<16x8xbf16>
    tpu.vector_store %arg3[%c0_3, %c0_4], %3 {strides = array<i32>} : memref<16x8xbf16, #tpu.memory_space<vmem>>, vector<16x8xbf16>,
    %cst_5 = arith.constant dense<0.000000e+00> : vector<8xf32>
    %5 = vector.multi_reduction <add>, %2, %cst_5 [0] : vector<16x8xf32> to vector<8xf32>
    %6 = vector.shape_cast %5 : vector<8xf32> to vector<1x8xf32>
    %7 = vector.shape_cast %6 : vector<1x8xf32> to vector<1x1x8xf32>
    %c0_6 = arith.constant 0 : index
    %c0_7 = arith.constant 0 : index
    %c0_8 = arith.constant 0 : index
    %8 = vector.load %arg4[%c0_6, %c0_7, %c0_8] : memref<1x1x8xf32, #tpu.memory_space<vmem>>, vector<1x1x8xf32>
    tpu.vector_store %arg4[%c0_6, %c0_7, %c0_8], %7 {strides = array<i32>} : memref<1x1x8xf32, #tpu.memory_space<vmem>>, vector<1x1x8xf32>,
    %9 = arith.mulf %2, %2 : vector<16x8xf32>
    %cst_9 = arith.constant dense<0.000000e+00> : vector<8xf32>
    %10 = vector.multi_reduction <add>, %9, %cst_9 [0] : vector<16x8xf32> to vector<8xf32>
    %11 = vector.shape_cast %10 : vector<8xf32> to vector<1x8xf32>
    %12 = vector.shape_cast %11 : vector<1x8xf32> to vector<1x1x8xf32>
    %c0_10 = arith.constant 0 : index
    %c0_11 = arith.constant 0 : index
    %c0_12 = arith.constant 0 : index
    %13 = vector.load %arg5[%c0_10, %c0_11, %c0_12] : memref<1x1x8xf32, #tpu.memory_space<vmem>>, vector<1x1x8xf32>
    tpu.vector_store %arg5[%c0_10, %c0_11, %c0_12], %12 {strides = array<i32>} : memref<1x1x8xf32, #tpu.memory_space<vmem>>, vector<1x1x8xf32>,
    return
  }
  func.func @transform_0(%arg0: i32) -> (i32, i32) {
    %c0_i32 = arith.constant 0 : i32
    %c0_i32_0 = arith.constant 0 : i32
    return %arg0, %c0_i32 : i32, i32
  }
  func.func @transform_1(%arg0: i32) -> (i32, i32) {
    %c0_i32 = arith.constant 0 : i32
    %c0_i32_0 = arith.constant 0 : i32
    %c0_i32_1 = arith.constant 0 : i32
    return %c0_i32, %c0_i32_0 : i32, i32
  }
  func.func @transform_2(%arg0: i32) -> (i32, i32) {
    %c0_i32 = arith.constant 0 : i32
    %c0_i32_0 = arith.constant 0 : i32
    return %arg0, %c0_i32 : i32, i32
  }
  func.func @transform_3(%arg0: i32) -> (i32, i32, i32) {
    %c0_i32 = arith.constant 0 : i32
    %c0_i32_0 = arith.constant 0 : i32
    %c0_i32_1 = arith.constant 0 : i32
    return %arg0, %c0_i32, %c0_i32_0 : i32, i32, i32
  }
  func.func @transform_4(%arg0: i32) -> (i32, i32, i32) {
    %c0_i32 = arith.constant 0 : i32
    %c0_i32_0 = arith.constant 0 : i32
    %c0_i32_1 = arith.constant 0 : i32
    return %arg0, %c0_i32, %c0_i32_0 : i32, i32, i32
  }
}

module attributes {stable_mosaic.version = 11 : i64} {
  func.func @_band_conv_kernel(%arg0: i32, %arg1: memref<1x48x8xbf16, #tpu.memory_space<vmem>>, %arg2: memref<9x8x8xbf16, #tpu.memory_space<vmem>>, %arg3: memref<24x1xf32, #tpu.memory_space<vmem>>, %arg4: memref<1x24x8xbf16, #tpu.memory_space<vmem>>, %arg5: memref<1x1x8xf32, #tpu.memory_space<vmem>>, %arg6: memref<1x1x8xf32, #tpu.memory_space<vmem>>) attributes {dimension_semantics = [#tpu.dimension_semantics<parallel>], iteration_bounds = array<i64: 2>, scalar_prefetch = 0 : i64, scratch_operands = 0 : i64, tpu.core_type = #tpu.core_type<tc>, window_params = [{transform_indices = @transform_0, window_bounds = array<i64: 1, 48, 8>}, {pipeline_mode = #tpu.pipeline_mode<synchronous>, transform_indices = @transform_1, window_bounds = array<i64: 9, 8, 8>}, {pipeline_mode = #tpu.pipeline_mode<synchronous>, transform_indices = @transform_2, window_bounds = array<i64: 24, 1>}, {transform_indices = @transform_3, window_bounds = array<i64: 1, 24, 8>}, {transform_indices = @transform_4, window_bounds = array<i64: 1, 1, 8>}, {transform_indices = @transform_5, window_bounds = array<i64: 1, 1, 8>}]} {
    %cst = arith.constant 0.000000e+00 : f32
    %0 = vector.broadcast %cst : f32 to vector<24x8xf32>
    %c0 = arith.constant 0 : index
    %c5 = arith.constant 5 : index
    %c0_0 = arith.constant 0 : index
    %1 = vector.load %arg1[%c0, %c5, %c0_0] : memref<1x48x8xbf16, #tpu.memory_space<vmem>>, vector<1x24x8xbf16>
    %2 = vector.shape_cast %1 : vector<1x24x8xbf16> to vector<24x8xbf16>
    %c0_1 = arith.constant 0 : index
    %c0_2 = arith.constant 0 : index
    %c0_3 = arith.constant 0 : index
    %3 = vector.load %arg2[%c0_1, %c0_2, %c0_3] : memref<9x8x8xbf16, #tpu.memory_space<vmem>>, vector<1x8x8xbf16>
    %4 = vector.shape_cast %3 : vector<1x8x8xbf16> to vector<8x8xbf16>
    %cst_4 = arith.constant dense<0.000000e+00> : vector<24x8xf32>
    %5 = tpu.matmul %2, %4, %cst_4 {dimension_numbers = #tpu.dot_dimension_numbers<[1], [0], [0], [1], [0, 0, 1, 1], [], []>} : vector<24x8xbf16>, vector<8x8xbf16>, vector<24x8xf32> -> vector<24x8xf32>
    %6 = arith.addf %0, %5 : vector<24x8xf32>
    %c0_5 = arith.constant 0 : index
    %c6 = arith.constant 6 : index
    %c0_6 = arith.constant 0 : index
    %7 = vector.load %arg1[%c0_5, %c6, %c0_6] : memref<1x48x8xbf16, #tpu.memory_space<vmem>>, vector<1x24x8xbf16>
    %8 = vector.shape_cast %7 : vector<1x24x8xbf16> to vector<24x8xbf16>
    %c1 = arith.constant 1 : index
    %c0_7 = arith.constant 0 : index
    %c0_8 = arith.constant 0 : index
    %9 = vector.load %arg2[%c1, %c0_7, %c0_8] : memref<9x8x8xbf16, #tpu.memory_space<vmem>>, vector<1x8x8xbf16>
    %10 = vector.shape_cast %9 : vector<1x8x8xbf16> to vector<8x8xbf16>
    %cst_9 = arith.constant dense<0.000000e+00> : vector<24x8xf32>
    %11 = tpu.matmul %8, %10, %cst_9 {dimension_numbers = #tpu.dot_dimension_numbers<[1], [0], [0], [1], [0, 0, 1, 1], [], []>} : vector<24x8xbf16>, vector<8x8xbf16>, vector<24x8xf32> -> vector<24x8xf32>
    %12 = arith.addf %6, %11 : vector<24x8xf32>
    %c0_10 = arith.constant 0 : index
    %c7 = arith.constant 7 : index
    %c0_11 = arith.constant 0 : index
    %13 = vector.load %arg1[%c0_10, %c7, %c0_11] : memref<1x48x8xbf16, #tpu.memory_space<vmem>>, vector<1x24x8xbf16>
    %14 = vector.shape_cast %13 : vector<1x24x8xbf16> to vector<24x8xbf16>
    %c2 = arith.constant 2 : index
    %c0_12 = arith.constant 0 : index
    %c0_13 = arith.constant 0 : index
    %15 = vector.load %arg2[%c2, %c0_12, %c0_13] : memref<9x8x8xbf16, #tpu.memory_space<vmem>>, vector<1x8x8xbf16>
    %16 = vector.shape_cast %15 : vector<1x8x8xbf16> to vector<8x8xbf16>
    %cst_14 = arith.constant dense<0.000000e+00> : vector<24x8xf32>
    %17 = tpu.matmul %14, %16, %cst_14 {dimension_numbers = #tpu.dot_dimension_numbers<[1], [0], [0], [1], [0, 0, 1, 1], [], []>} : vector<24x8xbf16>, vector<8x8xbf16>, vector<24x8xf32> -> vector<24x8xf32>
    %18 = arith.addf %12, %17 : vector<24x8xf32>
    %c0_15 = arith.constant 0 : index
    %c11 = arith.constant 11 : index
    %c0_16 = arith.constant 0 : index
    %19 = vector.load %arg1[%c0_15, %c11, %c0_16] : memref<1x48x8xbf16, #tpu.memory_space<vmem>>, vector<1x24x8xbf16>
    %20 = vector.shape_cast %19 : vector<1x24x8xbf16> to vector<24x8xbf16>
    %c3 = arith.constant 3 : index
    %c0_17 = arith.constant 0 : index
    %c0_18 = arith.constant 0 : index
    %21 = vector.load %arg2[%c3, %c0_17, %c0_18] : memref<9x8x8xbf16, #tpu.memory_space<vmem>>, vector<1x8x8xbf16>
    %22 = vector.shape_cast %21 : vector<1x8x8xbf16> to vector<8x8xbf16>
    %cst_19 = arith.constant dense<0.000000e+00> : vector<24x8xf32>
    %23 = tpu.matmul %20, %22, %cst_19 {dimension_numbers = #tpu.dot_dimension_numbers<[1], [0], [0], [1], [0, 0, 1, 1], [], []>} : vector<24x8xbf16>, vector<8x8xbf16>, vector<24x8xf32> -> vector<24x8xf32>
    %24 = arith.addf %18, %23 : vector<24x8xf32>
    %c0_20 = arith.constant 0 : index
    %c12 = arith.constant 12 : index
    %c0_21 = arith.constant 0 : index
    %25 = vector.load %arg1[%c0_20, %c12, %c0_21] : memref<1x48x8xbf16, #tpu.memory_space<vmem>>, vector<1x24x8xbf16>
    %26 = vector.shape_cast %25 : vector<1x24x8xbf16> to vector<24x8xbf16>
    %c4 = arith.constant 4 : index
    %c0_22 = arith.constant 0 : index
    %c0_23 = arith.constant 0 : index
    %27 = vector.load %arg2[%c4, %c0_22, %c0_23] : memref<9x8x8xbf16, #tpu.memory_space<vmem>>, vector<1x8x8xbf16>
    %28 = vector.shape_cast %27 : vector<1x8x8xbf16> to vector<8x8xbf16>
    %cst_24 = arith.constant dense<0.000000e+00> : vector<24x8xf32>
    %29 = tpu.matmul %26, %28, %cst_24 {dimension_numbers = #tpu.dot_dimension_numbers<[1], [0], [0], [1], [0, 0, 1, 1], [], []>} : vector<24x8xbf16>, vector<8x8xbf16>, vector<24x8xf32> -> vector<24x8xf32>
    %30 = arith.addf %24, %29 : vector<24x8xf32>
    %c0_25 = arith.constant 0 : index
    %c13 = arith.constant 13 : index
    %c0_26 = arith.constant 0 : index
    %31 = vector.load %arg1[%c0_25, %c13, %c0_26] : memref<1x48x8xbf16, #tpu.memory_space<vmem>>, vector<1x24x8xbf16>
    %32 = vector.shape_cast %31 : vector<1x24x8xbf16> to vector<24x8xbf16>
    %c5_27 = arith.constant 5 : index
    %c0_28 = arith.constant 0 : index
    %c0_29 = arith.constant 0 : index
    %33 = vector.load %arg2[%c5_27, %c0_28, %c0_29] : memref<9x8x8xbf16, #tpu.memory_space<vmem>>, vector<1x8x8xbf16>
    %34 = vector.shape_cast %33 : vector<1x8x8xbf16> to vector<8x8xbf16>
    %cst_30 = arith.constant dense<0.000000e+00> : vector<24x8xf32>
    %35 = tpu.matmul %32, %34, %cst_30 {dimension_numbers = #tpu.dot_dimension_numbers<[1], [0], [0], [1], [0, 0, 1, 1], [], []>} : vector<24x8xbf16>, vector<8x8xbf16>, vector<24x8xf32> -> vector<24x8xf32>
    %36 = arith.addf %30, %35 : vector<24x8xf32>
    %c0_31 = arith.constant 0 : index
    %c17 = arith.constant 17 : index
    %c0_32 = arith.constant 0 : index
    %37 = vector.load %arg1[%c0_31, %c17, %c0_32] : memref<1x48x8xbf16, #tpu.memory_space<vmem>>, vector<1x24x8xbf16>
    %38 = vector.shape_cast %37 : vector<1x24x8xbf16> to vector<24x8xbf16>
    %c6_33 = arith.constant 6 : index
    %c0_34 = arith.constant 0 : index
    %c0_35 = arith.constant 0 : index
    %39 = vector.load %arg2[%c6_33, %c0_34, %c0_35] : memref<9x8x8xbf16, #tpu.memory_space<vmem>>, vector<1x8x8xbf16>
    %40 = vector.shape_cast %39 : vector<1x8x8xbf16> to vector<8x8xbf16>
    %cst_36 = arith.constant dense<0.000000e+00> : vector<24x8xf32>
    %41 = tpu.matmul %38, %40, %cst_36 {dimension_numbers = #tpu.dot_dimension_numbers<[1], [0], [0], [1], [0, 0, 1, 1], [], []>} : vector<24x8xbf16>, vector<8x8xbf16>, vector<24x8xf32> -> vector<24x8xf32>
    %42 = arith.addf %36, %41 : vector<24x8xf32>
    %c0_37 = arith.constant 0 : index
    %c18 = arith.constant 18 : index
    %c0_38 = arith.constant 0 : index
    %43 = vector.load %arg1[%c0_37, %c18, %c0_38] : memref<1x48x8xbf16, #tpu.memory_space<vmem>>, vector<1x24x8xbf16>
    %44 = vector.shape_cast %43 : vector<1x24x8xbf16> to vector<24x8xbf16>
    %c7_39 = arith.constant 7 : index
    %c0_40 = arith.constant 0 : index
    %c0_41 = arith.constant 0 : index
    %45 = vector.load %arg2[%c7_39, %c0_40, %c0_41] : memref<9x8x8xbf16, #tpu.memory_space<vmem>>, vector<1x8x8xbf16>
    %46 = vector.shape_cast %45 : vector<1x8x8xbf16> to vector<8x8xbf16>
    %cst_42 = arith.constant dense<0.000000e+00> : vector<24x8xf32>
    %47 = tpu.matmul %44, %46, %cst_42 {dimension_numbers = #tpu.dot_dimension_numbers<[1], [0], [0], [1], [0, 0, 1, 1], [], []>} : vector<24x8xbf16>, vector<8x8xbf16>, vector<24x8xf32> -> vector<24x8xf32>
    %48 = arith.addf %42, %47 : vector<24x8xf32>
    %c0_43 = arith.constant 0 : index
    %c19 = arith.constant 19 : index
    %c0_44 = arith.constant 0 : index
    %49 = vector.load %arg1[%c0_43, %c19, %c0_44] : memref<1x48x8xbf16, #tpu.memory_space<vmem>>, vector<1x24x8xbf16>
    %50 = vector.shape_cast %49 : vector<1x24x8xbf16> to vector<24x8xbf16>
    %c8 = arith.constant 8 : index
    %c0_45 = arith.constant 0 : index
    %c0_46 = arith.constant 0 : index
    %51 = vector.load %arg2[%c8, %c0_45, %c0_46] : memref<9x8x8xbf16, #tpu.memory_space<vmem>>, vector<1x8x8xbf16>
    %52 = vector.shape_cast %51 : vector<1x8x8xbf16> to vector<8x8xbf16>
    %cst_47 = arith.constant dense<0.000000e+00> : vector<24x8xf32>
    %53 = tpu.matmul %50, %52, %cst_47 {dimension_numbers = #tpu.dot_dimension_numbers<[1], [0], [0], [1], [0, 0, 1, 1], [], []>} : vector<24x8xbf16>, vector<8x8xbf16>, vector<24x8xf32> -> vector<24x8xf32>
    %54 = arith.addf %48, %53 : vector<24x8xf32>
    %55 = arith.truncf %54 : vector<24x8xf32> to vector<24x8xbf16>
    %c0_48 = arith.constant 0 : index
    %c0_49 = arith.constant 0 : index
    %c0_50 = arith.constant 0 : index
    %56 = vector.load %arg4[%c0_48, %c0_49, %c0_50] : memref<1x24x8xbf16, #tpu.memory_space<vmem>>, vector<1x24x8xbf16>
    %57 = vector.shape_cast %56 : vector<1x24x8xbf16> to vector<24x8xbf16>
    %58 = vector.shape_cast %55 : vector<24x8xbf16> to vector<1x24x8xbf16>
    tpu.vector_store %arg4[%c0_48, %c0_49, %c0_50], %58 {strides = array<i32>} : memref<1x24x8xbf16, #tpu.memory_space<vmem>>, vector<1x24x8xbf16>,
    %c0_51 = arith.constant 0 : index
    %c0_52 = arith.constant 0 : index
    %59 = vector.load %arg3[%c0_51, %c0_52] : memref<24x1xf32, #tpu.memory_space<vmem>>, vector<24x1xf32>
    %60 = vector.broadcast %59 : vector<24x1xf32> to vector<24x8xf32>
    %61 = arith.mulf %54, %60 : vector<24x8xf32>
    %cst_53 = arith.constant dense<0.000000e+00> : vector<8xf32>
    %62 = vector.multi_reduction <add>, %61, %cst_53 [0] : vector<24x8xf32> to vector<8xf32>
    %63 = vector.shape_cast %62 : vector<8xf32> to vector<1x8xf32>
    %c0_54 = arith.constant 0 : index
    %c0_55 = arith.constant 0 : index
    %c0_56 = arith.constant 0 : index
    %64 = vector.load %arg5[%c0_54, %c0_55, %c0_56] : memref<1x1x8xf32, #tpu.memory_space<vmem>>, vector<1x1x8xf32>
    %65 = vector.shape_cast %64 : vector<1x1x8xf32> to vector<1x8xf32>
    %66 = vector.shape_cast %63 : vector<1x8xf32> to vector<1x1x8xf32>
    tpu.vector_store %arg5[%c0_54, %c0_55, %c0_56], %66 {strides = array<i32>} : memref<1x1x8xf32, #tpu.memory_space<vmem>>, vector<1x1x8xf32>,
    %67 = arith.mulf %61, %61 : vector<24x8xf32>
    %cst_57 = arith.constant dense<0.000000e+00> : vector<8xf32>
    %68 = vector.multi_reduction <add>, %67, %cst_57 [0] : vector<24x8xf32> to vector<8xf32>
    %69 = vector.shape_cast %68 : vector<8xf32> to vector<1x8xf32>
    %c0_58 = arith.constant 0 : index
    %c0_59 = arith.constant 0 : index
    %c0_60 = arith.constant 0 : index
    %70 = vector.load %arg6[%c0_58, %c0_59, %c0_60] : memref<1x1x8xf32, #tpu.memory_space<vmem>>, vector<1x1x8xf32>
    %71 = vector.shape_cast %70 : vector<1x1x8xf32> to vector<1x8xf32>
    %72 = vector.shape_cast %69 : vector<1x8xf32> to vector<1x1x8xf32>
    tpu.vector_store %arg6[%c0_58, %c0_59, %c0_60], %72 {strides = array<i32>} : memref<1x1x8xf32, #tpu.memory_space<vmem>>, vector<1x1x8xf32>,
    return
  }
  func.func @transform_0(%arg0: i32) -> (i32, i32, i32) {
    %c0_i32 = arith.constant 0 : i32
    %c0_i32_0 = arith.constant 0 : i32
    %c0_i32_1 = arith.constant 0 : i32
    return %arg0, %c0_i32, %c0_i32_0 : i32, i32, i32
  }
  func.func @transform_1(%arg0: i32) -> (i32, i32, i32) {
    %c0_i32 = arith.constant 0 : i32
    %c0_i32_0 = arith.constant 0 : i32
    %c0_i32_1 = arith.constant 0 : i32
    %c0_i32_2 = arith.constant 0 : i32
    return %c0_i32, %c0_i32_0, %c0_i32_1 : i32, i32, i32
  }
  func.func @transform_2(%arg0: i32) -> (i32, i32) {
    %c0_i32 = arith.constant 0 : i32
    %c0_i32_0 = arith.constant 0 : i32
    %c0_i32_1 = arith.constant 0 : i32
    return %c0_i32, %c0_i32_0 : i32, i32
  }
  func.func @transform_3(%arg0: i32) -> (i32, i32, i32) {
    %c0_i32 = arith.constant 0 : i32
    %c0_i32_0 = arith.constant 0 : i32
    %c0_i32_1 = arith.constant 0 : i32
    return %arg0, %c0_i32, %c0_i32_0 : i32, i32, i32
  }
  func.func @transform_4(%arg0: i32) -> (i32, i32, i32) {
    %c0_i32 = arith.constant 0 : i32
    %c0_i32_0 = arith.constant 0 : i32
    %c0_i32_1 = arith.constant 0 : i32
    return %arg0, %c0_i32, %c0_i32_0 : i32, i32, i32
  }
  func.func @transform_5(%arg0: i32) -> (i32, i32, i32) {
    %c0_i32 = arith.constant 0 : i32
    %c0_i32_0 = arith.constant 0 : i32
    %c0_i32_1 = arith.constant 0 : i32
    return %arg0, %c0_i32, %c0_i32_0 : i32, i32, i32
  }
}

module attributes {stable_mosaic.version = 11 : i64} {
  func.func @_im2col_conv_kernel(%arg0: i32, %arg1: memref<8x72xbf16, #tpu.memory_space<vmem>>, %arg2: memref<72x16xbf16, #tpu.memory_space<vmem>>, %arg3: memref<8x16xbf16, #tpu.memory_space<vmem>>, %arg4: memref<1x1x16xf32, #tpu.memory_space<vmem>>, %arg5: memref<1x1x16xf32, #tpu.memory_space<vmem>>) attributes {dimension_semantics = [#tpu.dimension_semantics<parallel>], iteration_bounds = array<i64: 1>, scalar_prefetch = 0 : i64, scratch_operands = 0 : i64, tpu.core_type = #tpu.core_type<tc>, window_params = [{transform_indices = @transform_0, window_bounds = array<i64: 8, 72>}, {pipeline_mode = #tpu.pipeline_mode<synchronous>, transform_indices = @transform_1, window_bounds = array<i64: 72, 16>}, {transform_indices = @transform_2, window_bounds = array<i64: 8, 16>}, {transform_indices = @transform_3, window_bounds = array<i64: 1, 1, 16>}, {transform_indices = @transform_4, window_bounds = array<i64: 1, 1, 16>}]} {
    %c0 = arith.constant 0 : index
    %c0_0 = arith.constant 0 : index
    %0 = vector.load %arg1[%c0, %c0_0] : memref<8x72xbf16, #tpu.memory_space<vmem>>, vector<8x72xbf16>
    %c0_1 = arith.constant 0 : index
    %c0_2 = arith.constant 0 : index
    %1 = vector.load %arg2[%c0_1, %c0_2] : memref<72x16xbf16, #tpu.memory_space<vmem>>, vector<72x16xbf16>
    %cst = arith.constant dense<0.000000e+00> : vector<8x16xf32>
    %2 = tpu.matmul %0, %1, %cst {dimension_numbers = #tpu.dot_dimension_numbers<[1], [0], [0], [1], [0, 0, 1, 1], [], []>} : vector<8x72xbf16>, vector<72x16xbf16>, vector<8x16xf32> -> vector<8x16xf32>
    %3 = arith.truncf %2 : vector<8x16xf32> to vector<8x16xbf16>
    %c0_3 = arith.constant 0 : index
    %c0_4 = arith.constant 0 : index
    %4 = vector.load %arg3[%c0_3, %c0_4] : memref<8x16xbf16, #tpu.memory_space<vmem>>, vector<8x16xbf16>
    tpu.vector_store %arg3[%c0_3, %c0_4], %3 {strides = array<i32>} : memref<8x16xbf16, #tpu.memory_space<vmem>>, vector<8x16xbf16>,
    %cst_5 = arith.constant dense<0.000000e+00> : vector<16xf32>
    %5 = vector.multi_reduction <add>, %2, %cst_5 [0] : vector<8x16xf32> to vector<16xf32>
    %6 = vector.shape_cast %5 : vector<16xf32> to vector<1x16xf32>
    %7 = vector.shape_cast %6 : vector<1x16xf32> to vector<1x1x16xf32>
    %c0_6 = arith.constant 0 : index
    %c0_7 = arith.constant 0 : index
    %c0_8 = arith.constant 0 : index
    %8 = vector.load %arg4[%c0_6, %c0_7, %c0_8] : memref<1x1x16xf32, #tpu.memory_space<vmem>>, vector<1x1x16xf32>
    tpu.vector_store %arg4[%c0_6, %c0_7, %c0_8], %7 {strides = array<i32>} : memref<1x1x16xf32, #tpu.memory_space<vmem>>, vector<1x1x16xf32>,
    %9 = arith.mulf %2, %2 : vector<8x16xf32>
    %cst_9 = arith.constant dense<0.000000e+00> : vector<16xf32>
    %10 = vector.multi_reduction <add>, %9, %cst_9 [0] : vector<8x16xf32> to vector<16xf32>
    %11 = vector.shape_cast %10 : vector<16xf32> to vector<1x16xf32>
    %12 = vector.shape_cast %11 : vector<1x16xf32> to vector<1x1x16xf32>
    %c0_10 = arith.constant 0 : index
    %c0_11 = arith.constant 0 : index
    %c0_12 = arith.constant 0 : index
    %13 = vector.load %arg5[%c0_10, %c0_11, %c0_12] : memref<1x1x16xf32, #tpu.memory_space<vmem>>, vector<1x1x16xf32>
    tpu.vector_store %arg5[%c0_10, %c0_11, %c0_12], %12 {strides = array<i32>} : memref<1x1x16xf32, #tpu.memory_space<vmem>>, vector<1x1x16xf32>,
    return
  }
  func.func @transform_0(%arg0: i32) -> (i32, i32) {
    %c0_i32 = arith.constant 0 : i32
    %c0_i32_0 = arith.constant 0 : i32
    return %arg0, %c0_i32 : i32, i32
  }
  func.func @transform_1(%arg0: i32) -> (i32, i32) {
    %c0_i32 = arith.constant 0 : i32
    %c0_i32_0 = arith.constant 0 : i32
    %c0_i32_1 = arith.constant 0 : i32
    return %c0_i32, %c0_i32_0 : i32, i32
  }
  func.func @transform_2(%arg0: i32) -> (i32, i32) {
    %c0_i32 = arith.constant 0 : i32
    %c0_i32_0 = arith.constant 0 : i32
    return %arg0, %c0_i32 : i32, i32
  }
  func.func @transform_3(%arg0: i32) -> (i32, i32, i32) {
    %c0_i32 = arith.constant 0 : i32
    %c0_i32_0 = arith.constant 0 : i32
    %c0_i32_1 = arith.constant 0 : i32
    return %arg0, %c0_i32, %c0_i32_0 : i32, i32, i32
  }
  func.func @transform_4(%arg0: i32) -> (i32, i32, i32) {
    %c0_i32 = arith.constant 0 : i32
    %c0_i32_0 = arith.constant 0 : i32
    %c0_i32_1 = arith.constant 0 : i32
    return %arg0, %c0_i32, %c0_i32_0 : i32, i32, i32
  }
}

module attributes {stable_mosaic.version = 11 : i64} {
  func.func @_band_conv_kernel(%arg0: i32, %arg1: memref<1x24x16xbf16, #tpu.memory_space<vmem>>, %arg2: memref<9x16x16xbf16, #tpu.memory_space<vmem>>, %arg3: memref<8x1xf32, #tpu.memory_space<vmem>>, %arg4: memref<1x8x16xbf16, #tpu.memory_space<vmem>>, %arg5: memref<1x1x16xf32, #tpu.memory_space<vmem>>, %arg6: memref<1x1x16xf32, #tpu.memory_space<vmem>>) attributes {dimension_semantics = [#tpu.dimension_semantics<parallel>], iteration_bounds = array<i64: 2>, scalar_prefetch = 0 : i64, scratch_operands = 0 : i64, tpu.core_type = #tpu.core_type<tc>, window_params = [{transform_indices = @transform_0, window_bounds = array<i64: 1, 24, 16>}, {pipeline_mode = #tpu.pipeline_mode<synchronous>, transform_indices = @transform_1, window_bounds = array<i64: 9, 16, 16>}, {pipeline_mode = #tpu.pipeline_mode<synchronous>, transform_indices = @transform_2, window_bounds = array<i64: 8, 1>}, {transform_indices = @transform_3, window_bounds = array<i64: 1, 8, 16>}, {transform_indices = @transform_4, window_bounds = array<i64: 1, 1, 16>}, {transform_indices = @transform_5, window_bounds = array<i64: 1, 1, 16>}]} {
    %cst = arith.constant 0.000000e+00 : f32
    %0 = vector.broadcast %cst : f32 to vector<8x16xf32>
    %c0 = arith.constant 0 : index
    %c3 = arith.constant 3 : index
    %c0_0 = arith.constant 0 : index
    %1 = vector.load %arg1[%c0, %c3, %c0_0] : memref<1x24x16xbf16, #tpu.memory_space<vmem>>, vector<1x8x16xbf16>
    %2 = vector.shape_cast %1 : vector<1x8x16xbf16> to vector<8x16xbf16>
    %c0_1 = arith.constant 0 : index
    %c0_2 = arith.constant 0 : index
    %c0_3 = arith.constant 0 : index
    %3 = vector.load %arg2[%c0_1, %c0_2, %c0_3] : memref<9x16x16xbf16, #tpu.memory_space<vmem>>, vector<1x16x16xbf16>
    %4 = vector.shape_cast %3 : vector<1x16x16xbf16> to vector<16x16xbf16>
    %cst_4 = arith.constant dense<0.000000e+00> : vector<8x16xf32>
    %5 = tpu.matmul %2, %4, %cst_4 {dimension_numbers = #tpu.dot_dimension_numbers<[1], [0], [0], [1], [0, 0, 1, 1], [], []>} : vector<8x16xbf16>, vector<16x16xbf16>, vector<8x16xf32> -> vector<8x16xf32>
    %6 = arith.addf %0, %5 : vector<8x16xf32>
    %c0_5 = arith.constant 0 : index
    %c4 = arith.constant 4 : index
    %c0_6 = arith.constant 0 : index
    %7 = vector.load %arg1[%c0_5, %c4, %c0_6] : memref<1x24x16xbf16, #tpu.memory_space<vmem>>, vector<1x8x16xbf16>
    %8 = vector.shape_cast %7 : vector<1x8x16xbf16> to vector<8x16xbf16>
    %c1 = arith.constant 1 : index
    %c0_7 = arith.constant 0 : index
    %c0_8 = arith.constant 0 : index
    %9 = vector.load %arg2[%c1, %c0_7, %c0_8] : memref<9x16x16xbf16, #tpu.memory_space<vmem>>, vector<1x16x16xbf16>
    %10 = vector.shape_cast %9 : vector<1x16x16xbf16> to vector<16x16xbf16>
    %cst_9 = arith.constant dense<0.000000e+00> : vector<8x16xf32>
    %11 = tpu.matmul %8, %10, %cst_9 {dimension_numbers = #tpu.dot_dimension_numbers<[1], [0], [0], [1], [0, 0, 1, 1], [], []>} : vector<8x16xbf16>, vector<16x16xbf16>, vector<8x16xf32> -> vector<8x16xf32>
    %12 = arith.addf %6, %11 : vector<8x16xf32>
    %c0_10 = arith.constant 0 : index
    %c5 = arith.constant 5 : index
    %c0_11 = arith.constant 0 : index
    %13 = vector.load %arg1[%c0_10, %c5, %c0_11] : memref<1x24x16xbf16, #tpu.memory_space<vmem>>, vector<1x8x16xbf16>
    %14 = vector.shape_cast %13 : vector<1x8x16xbf16> to vector<8x16xbf16>
    %c2 = arith.constant 2 : index
    %c0_12 = arith.constant 0 : index
    %c0_13 = arith.constant 0 : index
    %15 = vector.load %arg2[%c2, %c0_12, %c0_13] : memref<9x16x16xbf16, #tpu.memory_space<vmem>>, vector<1x16x16xbf16>
    %16 = vector.shape_cast %15 : vector<1x16x16xbf16> to vector<16x16xbf16>
    %cst_14 = arith.constant dense<0.000000e+00> : vector<8x16xf32>
    %17 = tpu.matmul %14, %16, %cst_14 {dimension_numbers = #tpu.dot_dimension_numbers<[1], [0], [0], [1], [0, 0, 1, 1], [], []>} : vector<8x16xbf16>, vector<16x16xbf16>, vector<8x16xf32> -> vector<8x16xf32>
    %18 = arith.addf %12, %17 : vector<8x16xf32>
    %c0_15 = arith.constant 0 : index
    %c7 = arith.constant 7 : index
    %c0_16 = arith.constant 0 : index
    %19 = vector.load %arg1[%c0_15, %c7, %c0_16] : memref<1x24x16xbf16, #tpu.memory_space<vmem>>, vector<1x8x16xbf16>
    %20 = vector.shape_cast %19 : vector<1x8x16xbf16> to vector<8x16xbf16>
    %c3_17 = arith.constant 3 : index
    %c0_18 = arith.constant 0 : index
    %c0_19 = arith.constant 0 : index
    %21 = vector.load %arg2[%c3_17, %c0_18, %c0_19] : memref<9x16x16xbf16, #tpu.memory_space<vmem>>, vector<1x16x16xbf16>
    %22 = vector.shape_cast %21 : vector<1x16x16xbf16> to vector<16x16xbf16>
    %cst_20 = arith.constant dense<0.000000e+00> : vector<8x16xf32>
    %23 = tpu.matmul %20, %22, %cst_20 {dimension_numbers = #tpu.dot_dimension_numbers<[1], [0], [0], [1], [0, 0, 1, 1], [], []>} : vector<8x16xbf16>, vector<16x16xbf16>, vector<8x16xf32> -> vector<8x16xf32>
    %24 = arith.addf %18, %23 : vector<8x16xf32>
    %c0_21 = arith.constant 0 : index
    %c8 = arith.constant 8 : index
    %c0_22 = arith.constant 0 : index
    %25 = vector.load %arg1[%c0_21, %c8, %c0_22] : memref<1x24x16xbf16, #tpu.memory_space<vmem>>, vector<1x8x16xbf16>
    %26 = vector.shape_cast %25 : vector<1x8x16xbf16> to vector<8x16xbf16>
    %c4_23 = arith.constant 4 : index
    %c0_24 = arith.constant 0 : index
    %c0_25 = arith.constant 0 : index
    %27 = vector.load %arg2[%c4_23, %c0_24, %c0_25] : memref<9x16x16xbf16, #tpu.memory_space<vmem>>, vector<1x16x16xbf16>
    %28 = vector.shape_cast %27 : vector<1x16x16xbf16> to vector<16x16xbf16>
    %cst_26 = arith.constant dense<0.000000e+00> : vector<8x16xf32>
    %29 = tpu.matmul %26, %28, %cst_26 {dimension_numbers = #tpu.dot_dimension_numbers<[1], [0], [0], [1], [0, 0, 1, 1], [], []>} : vector<8x16xbf16>, vector<16x16xbf16>, vector<8x16xf32> -> vector<8x16xf32>
    %30 = arith.addf %24, %29 : vector<8x16xf32>
    %c0_27 = arith.constant 0 : index
    %c9 = arith.constant 9 : index
    %c0_28 = arith.constant 0 : index
    %31 = vector.load %arg1[%c0_27, %c9, %c0_28] : memref<1x24x16xbf16, #tpu.memory_space<vmem>>, vector<1x8x16xbf16>
    %32 = vector.shape_cast %31 : vector<1x8x16xbf16> to vector<8x16xbf16>
    %c5_29 = arith.constant 5 : index
    %c0_30 = arith.constant 0 : index
    %c0_31 = arith.constant 0 : index
    %33 = vector.load %arg2[%c5_29, %c0_30, %c0_31] : memref<9x16x16xbf16, #tpu.memory_space<vmem>>, vector<1x16x16xbf16>
    %34 = vector.shape_cast %33 : vector<1x16x16xbf16> to vector<16x16xbf16>
    %cst_32 = arith.constant dense<0.000000e+00> : vector<8x16xf32>
    %35 = tpu.matmul %32, %34, %cst_32 {dimension_numbers = #tpu.dot_dimension_numbers<[1], [0], [0], [1], [0, 0, 1, 1], [], []>} : vector<8x16xbf16>, vector<16x16xbf16>, vector<8x16xf32> -> vector<8x16xf32>
    %36 = arith.addf %30, %35 : vector<8x16xf32>
    %c0_33 = arith.constant 0 : index
    %c11 = arith.constant 11 : index
    %c0_34 = arith.constant 0 : index
    %37 = vector.load %arg1[%c0_33, %c11, %c0_34] : memref<1x24x16xbf16, #tpu.memory_space<vmem>>, vector<1x8x16xbf16>
    %38 = vector.shape_cast %37 : vector<1x8x16xbf16> to vector<8x16xbf16>
    %c6 = arith.constant 6 : index
    %c0_35 = arith.constant 0 : index
    %c0_36 = arith.constant 0 : index
    %39 = vector.load %arg2[%c6, %c0_35, %c0_36] : memref<9x16x16xbf16, #tpu.memory_space<vmem>>, vector<1x16x16xbf16>
    %40 = vector.shape_cast %39 : vector<1x16x16xbf16> to vector<16x16xbf16>
    %cst_37 = arith.constant dense<0.000000e+00> : vector<8x16xf32>
    %41 = tpu.matmul %38, %40, %cst_37 {dimension_numbers = #tpu.dot_dimension_numbers<[1], [0], [0], [1], [0, 0, 1, 1], [], []>} : vector<8x16xbf16>, vector<16x16xbf16>, vector<8x16xf32> -> vector<8x16xf32>
    %42 = arith.addf %36, %41 : vector<8x16xf32>
    %c0_38 = arith.constant 0 : index
    %c12 = arith.constant 12 : index
    %c0_39 = arith.constant 0 : index
    %43 = vector.load %arg1[%c0_38, %c12, %c0_39] : memref<1x24x16xbf16, #tpu.memory_space<vmem>>, vector<1x8x16xbf16>
    %44 = vector.shape_cast %43 : vector<1x8x16xbf16> to vector<8x16xbf16>
    %c7_40 = arith.constant 7 : index
    %c0_41 = arith.constant 0 : index
    %c0_42 = arith.constant 0 : index
    %45 = vector.load %arg2[%c7_40, %c0_41, %c0_42] : memref<9x16x16xbf16, #tpu.memory_space<vmem>>, vector<1x16x16xbf16>
    %46 = vector.shape_cast %45 : vector<1x16x16xbf16> to vector<16x16xbf16>
    %cst_43 = arith.constant dense<0.000000e+00> : vector<8x16xf32>
    %47 = tpu.matmul %44, %46, %cst_43 {dimension_numbers = #tpu.dot_dimension_numbers<[1], [0], [0], [1], [0, 0, 1, 1], [], []>} : vector<8x16xbf16>, vector<16x16xbf16>, vector<8x16xf32> -> vector<8x16xf32>
    %48 = arith.addf %42, %47 : vector<8x16xf32>
    %c0_44 = arith.constant 0 : index
    %c13 = arith.constant 13 : index
    %c0_45 = arith.constant 0 : index
    %49 = vector.load %arg1[%c0_44, %c13, %c0_45] : memref<1x24x16xbf16, #tpu.memory_space<vmem>>, vector<1x8x16xbf16>
    %50 = vector.shape_cast %49 : vector<1x8x16xbf16> to vector<8x16xbf16>
    %c8_46 = arith.constant 8 : index
    %c0_47 = arith.constant 0 : index
    %c0_48 = arith.constant 0 : index
    %51 = vector.load %arg2[%c8_46, %c0_47, %c0_48] : memref<9x16x16xbf16, #tpu.memory_space<vmem>>, vector<1x16x16xbf16>
    %52 = vector.shape_cast %51 : vector<1x16x16xbf16> to vector<16x16xbf16>
    %cst_49 = arith.constant dense<0.000000e+00> : vector<8x16xf32>
    %53 = tpu.matmul %50, %52, %cst_49 {dimension_numbers = #tpu.dot_dimension_numbers<[1], [0], [0], [1], [0, 0, 1, 1], [], []>} : vector<8x16xbf16>, vector<16x16xbf16>, vector<8x16xf32> -> vector<8x16xf32>
    %54 = arith.addf %48, %53 : vector<8x16xf32>
    %55 = arith.truncf %54 : vector<8x16xf32> to vector<8x16xbf16>
    %c0_50 = arith.constant 0 : index
    %c0_51 = arith.constant 0 : index
    %c0_52 = arith.constant 0 : index
    %56 = vector.load %arg4[%c0_50, %c0_51, %c0_52] : memref<1x8x16xbf16, #tpu.memory_space<vmem>>, vector<1x8x16xbf16>
    %57 = vector.shape_cast %56 : vector<1x8x16xbf16> to vector<8x16xbf16>
    %58 = vector.shape_cast %55 : vector<8x16xbf16> to vector<1x8x16xbf16>
    tpu.vector_store %arg4[%c0_50, %c0_51, %c0_52], %58 {strides = array<i32>} : memref<1x8x16xbf16, #tpu.memory_space<vmem>>, vector<1x8x16xbf16>,
    %c0_53 = arith.constant 0 : index
    %c0_54 = arith.constant 0 : index
    %59 = vector.load %arg3[%c0_53, %c0_54] : memref<8x1xf32, #tpu.memory_space<vmem>>, vector<8x1xf32>
    %60 = vector.broadcast %59 : vector<8x1xf32> to vector<8x16xf32>
    %61 = arith.mulf %54, %60 : vector<8x16xf32>
    %cst_55 = arith.constant dense<0.000000e+00> : vector<16xf32>
    %62 = vector.multi_reduction <add>, %61, %cst_55 [0] : vector<8x16xf32> to vector<16xf32>
    %63 = vector.shape_cast %62 : vector<16xf32> to vector<1x16xf32>
    %c0_56 = arith.constant 0 : index
    %c0_57 = arith.constant 0 : index
    %c0_58 = arith.constant 0 : index
    %64 = vector.load %arg5[%c0_56, %c0_57, %c0_58] : memref<1x1x16xf32, #tpu.memory_space<vmem>>, vector<1x1x16xf32>
    %65 = vector.shape_cast %64 : vector<1x1x16xf32> to vector<1x16xf32>
    %66 = vector.shape_cast %63 : vector<1x16xf32> to vector<1x1x16xf32>
    tpu.vector_store %arg5[%c0_56, %c0_57, %c0_58], %66 {strides = array<i32>} : memref<1x1x16xf32, #tpu.memory_space<vmem>>, vector<1x1x16xf32>,
    %67 = arith.mulf %61, %61 : vector<8x16xf32>
    %cst_59 = arith.constant dense<0.000000e+00> : vector<16xf32>
    %68 = vector.multi_reduction <add>, %67, %cst_59 [0] : vector<8x16xf32> to vector<16xf32>
    %69 = vector.shape_cast %68 : vector<16xf32> to vector<1x16xf32>
    %c0_60 = arith.constant 0 : index
    %c0_61 = arith.constant 0 : index
    %c0_62 = arith.constant 0 : index
    %70 = vector.load %arg6[%c0_60, %c0_61, %c0_62] : memref<1x1x16xf32, #tpu.memory_space<vmem>>, vector<1x1x16xf32>
    %71 = vector.shape_cast %70 : vector<1x1x16xf32> to vector<1x16xf32>
    %72 = vector.shape_cast %69 : vector<1x16xf32> to vector<1x1x16xf32>
    tpu.vector_store %arg6[%c0_60, %c0_61, %c0_62], %72 {strides = array<i32>} : memref<1x1x16xf32, #tpu.memory_space<vmem>>, vector<1x1x16xf32>,
    return
  }
  func.func @transform_0(%arg0: i32) -> (i32, i32, i32) {
    %c0_i32 = arith.constant 0 : i32
    %c0_i32_0 = arith.constant 0 : i32
    %c0_i32_1 = arith.constant 0 : i32
    return %arg0, %c0_i32, %c0_i32_0 : i32, i32, i32
  }
  func.func @transform_1(%arg0: i32) -> (i32, i32, i32) {
    %c0_i32 = arith.constant 0 : i32
    %c0_i32_0 = arith.constant 0 : i32
    %c0_i32_1 = arith.constant 0 : i32
    %c0_i32_2 = arith.constant 0 : i32
    return %c0_i32, %c0_i32_0, %c0_i32_1 : i32, i32, i32
  }
  func.func @transform_2(%arg0: i32) -> (i32, i32) {
    %c0_i32 = arith.constant 0 : i32
    %c0_i32_0 = arith.constant 0 : i32
    %c0_i32_1 = arith.constant 0 : i32
    return %c0_i32, %c0_i32_0 : i32, i32
  }
  func.func @transform_3(%arg0: i32) -> (i32, i32, i32) {
    %c0_i32 = arith.constant 0 : i32
    %c0_i32_0 = arith.constant 0 : i32
    %c0_i32_1 = arith.constant 0 : i32
    return %arg0, %c0_i32, %c0_i32_0 : i32, i32, i32
  }
  func.func @transform_4(%arg0: i32) -> (i32, i32, i32) {
    %c0_i32 = arith.constant 0 : i32
    %c0_i32_0 = arith.constant 0 : i32
    %c0_i32_1 = arith.constant 0 : i32
    return %arg0, %c0_i32, %c0_i32_0 : i32, i32, i32
  }
  func.func @transform_5(%arg0: i32) -> (i32, i32, i32) {
    %c0_i32 = arith.constant 0 : i32
    %c0_i32_0 = arith.constant 0 : i32
    %c0_i32_1 = arith.constant 0 : i32
    return %arg0, %c0_i32, %c0_i32_0 : i32, i32, i32
  }
}

module attributes {stable_mosaic.version = 11 : i64} {
  func.func @_im2col_conv_kernel(%arg0: i32, %arg1: memref<8x144xbf16, #tpu.memory_space<vmem>>, %arg2: memref<144x32xbf16, #tpu.memory_space<vmem>>, %arg3: memref<8x32xbf16, #tpu.memory_space<vmem>>, %arg4: memref<1x1x32xf32, #tpu.memory_space<vmem>>, %arg5: memref<1x1x32xf32, #tpu.memory_space<vmem>>) attributes {dimension_semantics = [#tpu.dimension_semantics<parallel>], iteration_bounds = array<i64: 1>, scalar_prefetch = 0 : i64, scratch_operands = 0 : i64, tpu.core_type = #tpu.core_type<tc>, window_params = [{transform_indices = @transform_0, window_bounds = array<i64: 8, 144>}, {pipeline_mode = #tpu.pipeline_mode<synchronous>, transform_indices = @transform_1, window_bounds = array<i64: 144, 32>}, {transform_indices = @transform_2, window_bounds = array<i64: 8, 32>}, {transform_indices = @transform_3, window_bounds = array<i64: 1, 1, 32>}, {transform_indices = @transform_4, window_bounds = array<i64: 1, 1, 32>}]} {
    %c0 = arith.constant 0 : index
    %c0_0 = arith.constant 0 : index
    %0 = vector.load %arg1[%c0, %c0_0] : memref<8x144xbf16, #tpu.memory_space<vmem>>, vector<8x144xbf16>
    %c0_1 = arith.constant 0 : index
    %c0_2 = arith.constant 0 : index
    %1 = vector.load %arg2[%c0_1, %c0_2] : memref<144x32xbf16, #tpu.memory_space<vmem>>, vector<144x32xbf16>
    %cst = arith.constant dense<0.000000e+00> : vector<8x32xf32>
    %2 = tpu.matmul %0, %1, %cst {dimension_numbers = #tpu.dot_dimension_numbers<[1], [0], [0], [1], [0, 0, 1, 1], [], []>} : vector<8x144xbf16>, vector<144x32xbf16>, vector<8x32xf32> -> vector<8x32xf32>
    %3 = arith.truncf %2 : vector<8x32xf32> to vector<8x32xbf16>
    %c0_3 = arith.constant 0 : index
    %c0_4 = arith.constant 0 : index
    %4 = vector.load %arg3[%c0_3, %c0_4] : memref<8x32xbf16, #tpu.memory_space<vmem>>, vector<8x32xbf16>
    tpu.vector_store %arg3[%c0_3, %c0_4], %3 {strides = array<i32>} : memref<8x32xbf16, #tpu.memory_space<vmem>>, vector<8x32xbf16>,
    %cst_5 = arith.constant dense<0.000000e+00> : vector<32xf32>
    %5 = vector.multi_reduction <add>, %2, %cst_5 [0] : vector<8x32xf32> to vector<32xf32>
    %6 = vector.shape_cast %5 : vector<32xf32> to vector<1x32xf32>
    %7 = vector.shape_cast %6 : vector<1x32xf32> to vector<1x1x32xf32>
    %c0_6 = arith.constant 0 : index
    %c0_7 = arith.constant 0 : index
    %c0_8 = arith.constant 0 : index
    %8 = vector.load %arg4[%c0_6, %c0_7, %c0_8] : memref<1x1x32xf32, #tpu.memory_space<vmem>>, vector<1x1x32xf32>
    tpu.vector_store %arg4[%c0_6, %c0_7, %c0_8], %7 {strides = array<i32>} : memref<1x1x32xf32, #tpu.memory_space<vmem>>, vector<1x1x32xf32>,
    %9 = arith.mulf %2, %2 : vector<8x32xf32>
    %cst_9 = arith.constant dense<0.000000e+00> : vector<32xf32>
    %10 = vector.multi_reduction <add>, %9, %cst_9 [0] : vector<8x32xf32> to vector<32xf32>
    %11 = vector.shape_cast %10 : vector<32xf32> to vector<1x32xf32>
    %12 = vector.shape_cast %11 : vector<1x32xf32> to vector<1x1x32xf32>
    %c0_10 = arith.constant 0 : index
    %c0_11 = arith.constant 0 : index
    %c0_12 = arith.constant 0 : index
    %13 = vector.load %arg5[%c0_10, %c0_11, %c0_12] : memref<1x1x32xf32, #tpu.memory_space<vmem>>, vector<1x1x32xf32>
    tpu.vector_store %arg5[%c0_10, %c0_11, %c0_12], %12 {strides = array<i32>} : memref<1x1x32xf32, #tpu.memory_space<vmem>>, vector<1x1x32xf32>,
    return
  }
  func.func @transform_0(%arg0: i32) -> (i32, i32) {
    %c0_i32 = arith.constant 0 : i32
    %c0_i32_0 = arith.constant 0 : i32
    return %arg0, %c0_i32 : i32, i32
  }
  func.func @transform_1(%arg0: i32) -> (i32, i32) {
    %c0_i32 = arith.constant 0 : i32
    %c0_i32_0 = arith.constant 0 : i32
    %c0_i32_1 = arith.constant 0 : i32
    return %c0_i32, %c0_i32_0 : i32, i32
  }
  func.func @transform_2(%arg0: i32) -> (i32, i32) {
    %c0_i32 = arith.constant 0 : i32
    %c0_i32_0 = arith.constant 0 : i32
    return %arg0, %c0_i32 : i32, i32
  }
  func.func @transform_3(%arg0: i32) -> (i32, i32, i32) {
    %c0_i32 = arith.constant 0 : i32
    %c0_i32_0 = arith.constant 0 : i32
    %c0_i32_1 = arith.constant 0 : i32
    return %arg0, %c0_i32, %c0_i32_0 : i32, i32, i32
  }
  func.func @transform_4(%arg0: i32) -> (i32, i32, i32) {
    %c0_i32 = arith.constant 0 : i32
    %c0_i32_0 = arith.constant 0 : i32
    %c0_i32_1 = arith.constant 0 : i32
    return %arg0, %c0_i32, %c0_i32_0 : i32, i32, i32
  }
}

module attributes {stable_mosaic.version = 11 : i64} {
  func.func @_band_conv_kernel(%arg0: i32, %arg1: memref<1x15x32xbf16, #tpu.memory_space<vmem>>, %arg2: memref<9x32x32xbf16, #tpu.memory_space<vmem>>, %arg3: memref<3x1xf32, #tpu.memory_space<vmem>>, %arg4: memref<1x3x32xbf16, #tpu.memory_space<vmem>>, %arg5: memref<1x1x32xf32, #tpu.memory_space<vmem>>, %arg6: memref<1x1x32xf32, #tpu.memory_space<vmem>>) attributes {dimension_semantics = [#tpu.dimension_semantics<parallel>], iteration_bounds = array<i64: 2>, scalar_prefetch = 0 : i64, scratch_operands = 0 : i64, tpu.core_type = #tpu.core_type<tc>, window_params = [{transform_indices = @transform_0, window_bounds = array<i64: 1, 15, 32>}, {pipeline_mode = #tpu.pipeline_mode<synchronous>, transform_indices = @transform_1, window_bounds = array<i64: 9, 32, 32>}, {pipeline_mode = #tpu.pipeline_mode<synchronous>, transform_indices = @transform_2, window_bounds = array<i64: 3, 1>}, {transform_indices = @transform_3, window_bounds = array<i64: 1, 3, 32>}, {transform_indices = @transform_4, window_bounds = array<i64: 1, 1, 32>}, {transform_indices = @transform_5, window_bounds = array<i64: 1, 1, 32>}]} {
    %cst = arith.constant 0.000000e+00 : f32
    %0 = vector.broadcast %cst : f32 to vector<3x32xf32>
    %c0 = arith.constant 0 : index
    %c2 = arith.constant 2 : index
    %c0_0 = arith.constant 0 : index
    %1 = vector.load %arg1[%c0, %c2, %c0_0] : memref<1x15x32xbf16, #tpu.memory_space<vmem>>, vector<1x3x32xbf16>
    %2 = vector.shape_cast %1 : vector<1x3x32xbf16> to vector<3x32xbf16>
    %c0_1 = arith.constant 0 : index
    %c0_2 = arith.constant 0 : index
    %c0_3 = arith.constant 0 : index
    %3 = vector.load %arg2[%c0_1, %c0_2, %c0_3] : memref<9x32x32xbf16, #tpu.memory_space<vmem>>, vector<1x32x32xbf16>
    %4 = vector.shape_cast %3 : vector<1x32x32xbf16> to vector<32x32xbf16>
    %cst_4 = arith.constant dense<0.000000e+00> : vector<3x32xf32>
    %5 = tpu.matmul %2, %4, %cst_4 {dimension_numbers = #tpu.dot_dimension_numbers<[1], [0], [0], [1], [0, 0, 1, 1], [], []>} : vector<3x32xbf16>, vector<32x32xbf16>, vector<3x32xf32> -> vector<3x32xf32>
    %6 = arith.addf %0, %5 : vector<3x32xf32>
    %c0_5 = arith.constant 0 : index
    %c3 = arith.constant 3 : index
    %c0_6 = arith.constant 0 : index
    %7 = vector.load %arg1[%c0_5, %c3, %c0_6] : memref<1x15x32xbf16, #tpu.memory_space<vmem>>, vector<1x3x32xbf16>
    %8 = vector.shape_cast %7 : vector<1x3x32xbf16> to vector<3x32xbf16>
    %c1 = arith.constant 1 : index
    %c0_7 = arith.constant 0 : index
    %c0_8 = arith.constant 0 : index
    %9 = vector.load %arg2[%c1, %c0_7, %c0_8] : memref<9x32x32xbf16, #tpu.memory_space<vmem>>, vector<1x32x32xbf16>
    %10 = vector.shape_cast %9 : vector<1x32x32xbf16> to vector<32x32xbf16>
    %cst_9 = arith.constant dense<0.000000e+00> : vector<3x32xf32>
    %11 = tpu.matmul %8, %10, %cst_9 {dimension_numbers = #tpu.dot_dimension_numbers<[1], [0], [0], [1], [0, 0, 1, 1], [], []>} : vector<3x32xbf16>, vector<32x32xbf16>, vector<3x32xf32> -> vector<3x32xf32>
    %12 = arith.addf %6, %11 : vector<3x32xf32>
    %c0_10 = arith.constant 0 : index
    %c4 = arith.constant 4 : index
    %c0_11 = arith.constant 0 : index
    %13 = vector.load %arg1[%c0_10, %c4, %c0_11] : memref<1x15x32xbf16, #tpu.memory_space<vmem>>, vector<1x3x32xbf16>
    %14 = vector.shape_cast %13 : vector<1x3x32xbf16> to vector<3x32xbf16>
    %c2_12 = arith.constant 2 : index
    %c0_13 = arith.constant 0 : index
    %c0_14 = arith.constant 0 : index
    %15 = vector.load %arg2[%c2_12, %c0_13, %c0_14] : memref<9x32x32xbf16, #tpu.memory_space<vmem>>, vector<1x32x32xbf16>
    %16 = vector.shape_cast %15 : vector<1x32x32xbf16> to vector<32x32xbf16>
    %cst_15 = arith.constant dense<0.000000e+00> : vector<3x32xf32>
    %17 = tpu.matmul %14, %16, %cst_15 {dimension_numbers = #tpu.dot_dimension_numbers<[1], [0], [0], [1], [0, 0, 1, 1], [], []>} : vector<3x32xbf16>, vector<32x32xbf16>, vector<3x32xf32> -> vector<3x32xf32>
    %18 = arith.addf %12, %17 : vector<3x32xf32>
    %c0_16 = arith.constant 0 : index
    %c5 = arith.constant 5 : index
    %c0_17 = arith.constant 0 : index
    %19 = vector.load %arg1[%c0_16, %c5, %c0_17] : memref<1x15x32xbf16, #tpu.memory_space<vmem>>, vector<1x3x32xbf16>
    %20 = vector.shape_cast %19 : vector<1x3x32xbf16> to vector<3x32xbf16>
    %c3_18 = arith.constant 3 : index
    %c0_19 = arith.constant 0 : index
    %c0_20 = arith.constant 0 : index
    %21 = vector.load %arg2[%c3_18, %c0_19, %c0_20] : memref<9x32x32xbf16, #tpu.memory_space<vmem>>, vector<1x32x32xbf16>
    %22 = vector.shape_cast %21 : vector<1x32x32xbf16> to vector<32x32xbf16>
    %cst_21 = arith.constant dense<0.000000e+00> : vector<3x32xf32>
    %23 = tpu.matmul %20, %22, %cst_21 {dimension_numbers = #tpu.dot_dimension_numbers<[1], [0], [0], [1], [0, 0, 1, 1], [], []>} : vector<3x32xbf16>, vector<32x32xbf16>, vector<3x32xf32> -> vector<3x32xf32>
    %24 = arith.addf %18, %23 : vector<3x32xf32>
    %c0_22 = arith.constant 0 : index
    %c6 = arith.constant 6 : index
    %c0_23 = arith.constant 0 : index
    %25 = vector.load %arg1[%c0_22, %c6, %c0_23] : memref<1x15x32xbf16, #tpu.memory_space<vmem>>, vector<1x3x32xbf16>
    %26 = vector.shape_cast %25 : vector<1x3x32xbf16> to vector<3x32xbf16>
    %c4_24 = arith.constant 4 : index
    %c0_25 = arith.constant 0 : index
    %c0_26 = arith.constant 0 : index
    %27 = vector.load %arg2[%c4_24, %c0_25, %c0_26] : memref<9x32x32xbf16, #tpu.memory_space<vmem>>, vector<1x32x32xbf16>
    %28 = vector.shape_cast %27 : vector<1x32x32xbf16> to vector<32x32xbf16>
    %cst_27 = arith.constant dense<0.000000e+00> : vector<3x32xf32>
    %29 = tpu.matmul %26, %28, %cst_27 {dimension_numbers = #tpu.dot_dimension_numbers<[1], [0], [0], [1], [0, 0, 1, 1], [], []>} : vector<3x32xbf16>, vector<32x32xbf16>, vector<3x32xf32> -> vector<3x32xf32>
    %30 = arith.addf %24, %29 : vector<3x32xf32>
    %c0_28 = arith.constant 0 : index
    %c7 = arith.constant 7 : index
    %c0_29 = arith.constant 0 : index
    %31 = vector.load %arg1[%c0_28, %c7, %c0_29] : memref<1x15x32xbf16, #tpu.memory_space<vmem>>, vector<1x3x32xbf16>
    %32 = vector.shape_cast %31 : vector<1x3x32xbf16> to vector<3x32xbf16>
    %c5_30 = arith.constant 5 : index
    %c0_31 = arith.constant 0 : index
    %c0_32 = arith.constant 0 : index
    %33 = vector.load %arg2[%c5_30, %c0_31, %c0_32] : memref<9x32x32xbf16, #tpu.memory_space<vmem>>, vector<1x32x32xbf16>
    %34 = vector.shape_cast %33 : vector<1x32x32xbf16> to vector<32x32xbf16>
    %cst_33 = arith.constant dense<0.000000e+00> : vector<3x32xf32>
    %35 = tpu.matmul %32, %34, %cst_33 {dimension_numbers = #tpu.dot_dimension_numbers<[1], [0], [0], [1], [0, 0, 1, 1], [], []>} : vector<3x32xbf16>, vector<32x32xbf16>, vector<3x32xf32> -> vector<3x32xf32>
    %36 = arith.addf %30, %35 : vector<3x32xf32>
    %c0_34 = arith.constant 0 : index
    %c8 = arith.constant 8 : index
    %c0_35 = arith.constant 0 : index
    %37 = vector.load %arg1[%c0_34, %c8, %c0_35] : memref<1x15x32xbf16, #tpu.memory_space<vmem>>, vector<1x3x32xbf16>
    %38 = vector.shape_cast %37 : vector<1x3x32xbf16> to vector<3x32xbf16>
    %c6_36 = arith.constant 6 : index
    %c0_37 = arith.constant 0 : index
    %c0_38 = arith.constant 0 : index
    %39 = vector.load %arg2[%c6_36, %c0_37, %c0_38] : memref<9x32x32xbf16, #tpu.memory_space<vmem>>, vector<1x32x32xbf16>
    %40 = vector.shape_cast %39 : vector<1x32x32xbf16> to vector<32x32xbf16>
    %cst_39 = arith.constant dense<0.000000e+00> : vector<3x32xf32>
    %41 = tpu.matmul %38, %40, %cst_39 {dimension_numbers = #tpu.dot_dimension_numbers<[1], [0], [0], [1], [0, 0, 1, 1], [], []>} : vector<3x32xbf16>, vector<32x32xbf16>, vector<3x32xf32> -> vector<3x32xf32>
    %42 = arith.addf %36, %41 : vector<3x32xf32>
    %c0_40 = arith.constant 0 : index
    %c9 = arith.constant 9 : index
    %c0_41 = arith.constant 0 : index
    %43 = vector.load %arg1[%c0_40, %c9, %c0_41] : memref<1x15x32xbf16, #tpu.memory_space<vmem>>, vector<1x3x32xbf16>
    %44 = vector.shape_cast %43 : vector<1x3x32xbf16> to vector<3x32xbf16>
    %c7_42 = arith.constant 7 : index
    %c0_43 = arith.constant 0 : index
    %c0_44 = arith.constant 0 : index
    %45 = vector.load %arg2[%c7_42, %c0_43, %c0_44] : memref<9x32x32xbf16, #tpu.memory_space<vmem>>, vector<1x32x32xbf16>
    %46 = vector.shape_cast %45 : vector<1x32x32xbf16> to vector<32x32xbf16>
    %cst_45 = arith.constant dense<0.000000e+00> : vector<3x32xf32>
    %47 = tpu.matmul %44, %46, %cst_45 {dimension_numbers = #tpu.dot_dimension_numbers<[1], [0], [0], [1], [0, 0, 1, 1], [], []>} : vector<3x32xbf16>, vector<32x32xbf16>, vector<3x32xf32> -> vector<3x32xf32>
    %48 = arith.addf %42, %47 : vector<3x32xf32>
    %c0_46 = arith.constant 0 : index
    %c10 = arith.constant 10 : index
    %c0_47 = arith.constant 0 : index
    %49 = vector.load %arg1[%c0_46, %c10, %c0_47] : memref<1x15x32xbf16, #tpu.memory_space<vmem>>, vector<1x3x32xbf16>
    %50 = vector.shape_cast %49 : vector<1x3x32xbf16> to vector<3x32xbf16>
    %c8_48 = arith.constant 8 : index
    %c0_49 = arith.constant 0 : index
    %c0_50 = arith.constant 0 : index
    %51 = vector.load %arg2[%c8_48, %c0_49, %c0_50] : memref<9x32x32xbf16, #tpu.memory_space<vmem>>, vector<1x32x32xbf16>
    %52 = vector.shape_cast %51 : vector<1x32x32xbf16> to vector<32x32xbf16>
    %cst_51 = arith.constant dense<0.000000e+00> : vector<3x32xf32>
    %53 = tpu.matmul %50, %52, %cst_51 {dimension_numbers = #tpu.dot_dimension_numbers<[1], [0], [0], [1], [0, 0, 1, 1], [], []>} : vector<3x32xbf16>, vector<32x32xbf16>, vector<3x32xf32> -> vector<3x32xf32>
    %54 = arith.addf %48, %53 : vector<3x32xf32>
    %55 = arith.truncf %54 : vector<3x32xf32> to vector<3x32xbf16>
    %c0_52 = arith.constant 0 : index
    %c0_53 = arith.constant 0 : index
    %c0_54 = arith.constant 0 : index
    %56 = vector.load %arg4[%c0_52, %c0_53, %c0_54] : memref<1x3x32xbf16, #tpu.memory_space<vmem>>, vector<1x3x32xbf16>
    %57 = vector.shape_cast %56 : vector<1x3x32xbf16> to vector<3x32xbf16>
    %58 = vector.shape_cast %55 : vector<3x32xbf16> to vector<1x3x32xbf16>
    tpu.vector_store %arg4[%c0_52, %c0_53, %c0_54], %58 {strides = array<i32>} : memref<1x3x32xbf16, #tpu.memory_space<vmem>>, vector<1x3x32xbf16>,
    %c0_55 = arith.constant 0 : index
    %c0_56 = arith.constant 0 : index
    %59 = vector.load %arg3[%c0_55, %c0_56] : memref<3x1xf32, #tpu.memory_space<vmem>>, vector<3x1xf32>
    %60 = vector.broadcast %59 : vector<3x1xf32> to vector<3x32xf32>
    %61 = arith.mulf %54, %60 : vector<3x32xf32>
    %cst_57 = arith.constant dense<0.000000e+00> : vector<32xf32>
    %62 = vector.multi_reduction <add>, %61, %cst_57 [0] : vector<3x32xf32> to vector<32xf32>
    %63 = vector.shape_cast %62 : vector<32xf32> to vector<1x32xf32>
    %c0_58 = arith.constant 0 : index
    %c0_59 = arith.constant 0 : index
    %c0_60 = arith.constant 0 : index
    %64 = vector.load %arg5[%c0_58, %c0_59, %c0_60] : memref<1x1x32xf32, #tpu.memory_space<vmem>>, vector<1x1x32xf32>
    %65 = vector.shape_cast %64 : vector<1x1x32xf32> to vector<1x32xf32>
    %66 = vector.shape_cast %63 : vector<1x32xf32> to vector<1x1x32xf32>
    tpu.vector_store %arg5[%c0_58, %c0_59, %c0_60], %66 {strides = array<i32>} : memref<1x1x32xf32, #tpu.memory_space<vmem>>, vector<1x1x32xf32>,
    %67 = arith.mulf %61, %61 : vector<3x32xf32>
    %cst_61 = arith.constant dense<0.000000e+00> : vector<32xf32>
    %68 = vector.multi_reduction <add>, %67, %cst_61 [0] : vector<3x32xf32> to vector<32xf32>
    %69 = vector.shape_cast %68 : vector<32xf32> to vector<1x32xf32>
    %c0_62 = arith.constant 0 : index
    %c0_63 = arith.constant 0 : index
    %c0_64 = arith.constant 0 : index
    %70 = vector.load %arg6[%c0_62, %c0_63, %c0_64] : memref<1x1x32xf32, #tpu.memory_space<vmem>>, vector<1x1x32xf32>
    %71 = vector.shape_cast %70 : vector<1x1x32xf32> to vector<1x32xf32>
    %72 = vector.shape_cast %69 : vector<1x32xf32> to vector<1x1x32xf32>
    tpu.vector_store %arg6[%c0_62, %c0_63, %c0_64], %72 {strides = array<i32>} : memref<1x1x32xf32, #tpu.memory_space<vmem>>, vector<1x1x32xf32>,
    return
  }
  func.func @transform_0(%arg0: i32) -> (i32, i32, i32) {
    %c0_i32 = arith.constant 0 : i32
    %c0_i32_0 = arith.constant 0 : i32
    %c0_i32_1 = arith.constant 0 : i32
    return %arg0, %c0_i32, %c0_i32_0 : i32, i32, i32
  }
  func.func @transform_1(%arg0: i32) -> (i32, i32, i32) {
    %c0_i32 = arith.constant 0 : i32
    %c0_i32_0 = arith.constant 0 : i32
    %c0_i32_1 = arith.constant 0 : i32
    %c0_i32_2 = arith.constant 0 : i32
    return %c0_i32, %c0_i32_0, %c0_i32_1 : i32, i32, i32
  }
  func.func @transform_2(%arg0: i32) -> (i32, i32) {
    %c0_i32 = arith.constant 0 : i32
    %c0_i32_0 = arith.constant 0 : i32
    %c0_i32_1 = arith.constant 0 : i32
    return %c0_i32, %c0_i32_0 : i32, i32
  }
  func.func @transform_3(%arg0: i32) -> (i32, i32, i32) {
    %c0_i32 = arith.constant 0 : i32
    %c0_i32_0 = arith.constant 0 : i32
    %c0_i32_1 = arith.constant 0 : i32
    return %arg0, %c0_i32, %c0_i32_0 : i32, i32, i32
  }
  func.func @transform_4(%arg0: i32) -> (i32, i32, i32) {
    %c0_i32 = arith.constant 0 : i32
    %c0_i32_0 = arith.constant 0 : i32
    %c0_i32_1 = arith.constant 0 : i32
    return %arg0, %c0_i32, %c0_i32_0 : i32, i32, i32
  }
  func.func @transform_5(%arg0: i32) -> (i32, i32, i32) {
    %c0_i32 = arith.constant 0 : i32
    %c0_i32_0 = arith.constant 0 : i32
    %c0_i32_1 = arith.constant 0 : i32
    return %arg0, %c0_i32, %c0_i32_0 : i32, i32, i32
  }
}

module attributes {stable_mosaic.version = 11 : i64} {
  func.func @_close_kernel(%arg0: i32, %arg1: memref<2x1x32xf32, #tpu.memory_space<vmem>>, %arg2: memref<32x256xbf16, #tpu.memory_space<vmem>>, %arg3: memref<1x256xf32, #tpu.memory_space<vmem>>, %arg4: memref<2x256xf32, #tpu.memory_space<vmem>>) attributes {dimension_semantics = [#tpu.dimension_semantics<parallel>], iteration_bounds = array<i64: 1>, scalar_prefetch = 0 : i64, scratch_operands = 0 : i64, tpu.core_type = #tpu.core_type<tc>, window_params = [{transform_indices = @transform_0, window_bounds = array<i64: 2, 1, 32>}, {pipeline_mode = #tpu.pipeline_mode<synchronous>, transform_indices = @transform_1, window_bounds = array<i64: 32, 256>}, {pipeline_mode = #tpu.pipeline_mode<synchronous>, transform_indices = @transform_2, window_bounds = array<i64: 1, 256>}, {transform_indices = @transform_3, window_bounds = array<i64: 2, 256>}]} {
    %c0 = arith.constant 0 : index
    %c0_0 = arith.constant 0 : index
    %c0_1 = arith.constant 0 : index
    %0 = vector.load %arg1[%c0, %c0_0, %c0_1] : memref<2x1x32xf32, #tpu.memory_space<vmem>>, vector<2x1x32xf32>
    %cst = arith.constant dense<0.000000e+00> : vector<2x32xf32>
    %1 = vector.multi_reduction <add>, %0, %cst [1] : vector<2x1x32xf32> to vector<2x32xf32>
    %cst_2 = arith.constant 1.000000e+00 : f32
    %2 = vector.broadcast %cst_2 : f32 to vector<2x32xf32>
    %3 = arith.divf %1, %2 : vector<2x32xf32>
    %4 = arith.truncf %3 : vector<2x32xf32> to vector<2x32xbf16>
    %c0_3 = arith.constant 0 : index
    %c0_4 = arith.constant 0 : index
    %5 = vector.load %arg2[%c0_3, %c0_4] : memref<32x256xbf16, #tpu.memory_space<vmem>>, vector<32x256xbf16>
    %cst_5 = arith.constant dense<0.000000e+00> : vector<2x256xf32>
    %6 = tpu.matmul %4, %5, %cst_5 {dimension_numbers = #tpu.dot_dimension_numbers<[1], [0], [0], [1], [0, 0, 1, 1], [], []>} : vector<2x32xbf16>, vector<32x256xbf16>, vector<2x256xf32> -> vector<2x256xf32>
    %c0_6 = arith.constant 0 : index
    %c0_7 = arith.constant 0 : index
    %7 = vector.load %arg3[%c0_6, %c0_7] : memref<1x256xf32, #tpu.memory_space<vmem>>, vector<1x256xf32>
    %8 = vector.broadcast %7 : vector<1x256xf32> to vector<2x256xf32>
    %9 = arith.addf %6, %8 : vector<2x256xf32>
    %c0_8 = arith.constant 0 : index
    %c0_9 = arith.constant 0 : index
    %10 = vector.load %arg4[%c0_8, %c0_9] : memref<2x256xf32, #tpu.memory_space<vmem>>, vector<2x256xf32>
    tpu.vector_store %arg4[%c0_8, %c0_9], %9 {strides = array<i32>} : memref<2x256xf32, #tpu.memory_space<vmem>>, vector<2x256xf32>,
    return
  }
  func.func @transform_0(%arg0: i32) -> (i32, i32, i32) {
    %c0_i32 = arith.constant 0 : i32
    %c0_i32_0 = arith.constant 0 : i32
    %c0_i32_1 = arith.constant 0 : i32
    return %arg0, %c0_i32, %c0_i32_0 : i32, i32, i32
  }
  func.func @transform_1(%arg0: i32) -> (i32, i32) {
    %c0_i32 = arith.constant 0 : i32
    %c0_i32_0 = arith.constant 0 : i32
    %c0_i32_1 = arith.constant 0 : i32
    return %c0_i32, %c0_i32_0 : i32, i32
  }
  func.func @transform_2(%arg0: i32) -> (i32, i32) {
    %c0_i32 = arith.constant 0 : i32
    %c0_i32_0 = arith.constant 0 : i32
    %c0_i32_1 = arith.constant 0 : i32
    return %c0_i32, %c0_i32_0 : i32, i32
  }
  func.func @transform_3(%arg0: i32) -> (i32, i32) {
    %c0_i32 = arith.constant 0 : i32
    %c0_i32_0 = arith.constant 0 : i32
    return %arg0, %c0_i32 : i32, i32
  }
}

</mosaic_0001>

<llo_original>
// kernel: tile.123
$region0: #{tile.123}
  #allocation0 [shape = 's32[1]{0}', space=sflag, size = 0x4, scoped, tag = 'scoped memory for tile.123']
  %s0 = inlined_call_operand.vmem [shape: f32[4], index: 0, kind: input, shape index: {}]
  %s1 = inlined_call_operand.vmem [shape: f32[32,4], index: 1, kind: output, shape index: {}]
  // Predicated region
  $region2: #{tile.123} parent=0 // pred_check
    _
  $region3: #{tile.123} parent=0 // pred_check_branch
    %3 = sbr.rel (0) target = $region5
  $region4: #{tile.123} parent=0 // pred_region
    _
  $region5: #{tile.123} parent=0 // pred_fallthru
    _
  %v4 = vld [vmem:[%s0] ss:$0 sm:$0xff]
  %5 = vst [vmem:[%s1] sm:$0xff] %v4
  %s6 = scalar_lea.vmem %s1, 8
  %7 = vst [vmem:[%s6] sm:$0xff] %v4
  %s8 = scalar_lea.vmem %s1, 16
  %9 = vst [vmem:[%s8] sm:$0xff] %v4
  %s10 = scalar_lea.vmem %s1, 24
  %11 = vst [vmem:[%s10] sm:$0xff] %v4

// kernel: tile.124
$region0: #{tile.124}
  %s0 = inlined_call_operand.vmem [shape: f32[32,4], index: 0, kind: input, shape index: {}]
  %s1 = inlined_call_operand.vmem [shape: f32[1,128], index: 1, kind: output, shape index: {}]
  $region1: #{tile.124} parent=0
    #allocation0 [shape = 'u8[4096]{0}', space=vmem, size = 0x1000, scoped, tag = 'scoped mem for output reshape']
    %v2 = vld [vmem:[%s0] sm:$0x1]
    %vm3 = vcmask 31744
    %4 = vst.msk [vmem:[#allocation0] sm:$0x1] %vm3, %v2
    %s5 = scalar_lea.vmem %s0, 31
    %v6 = vld [vmem:[%s5] sm:$0x1]
    %7 = vrot.lane.b32.xlu0 %v6, 124
    %v8 = vpop.permute.xlu0 %7
    %vm9 = vcmask 1048544
    %10 = vst.msk [vmem:[#allocation0] sm:$0x1] %vm9, %v8
    %s11 = scalar_lea.vmem %s0, 30
    %v12 = vld [vmem:[%s11] sm:$0x1]
    %13 = vrot.lane.b32.xlu0 %v12, 120
    %v14 = vpop.permute.xlu0 %13
    %vm15 = vcmask 1015744
    %16 = vst.msk [vmem:[#allocation0] sm:$0x1] %vm15, %v14
    %s17 = scalar_lea.vmem %s0, 29
    %v18 = vld [vmem:[%s17] sm:$0x1]
    %19 = vrot.lane.b32.xlu0 %v18, 116
    %v20 = vpop.permute.xlu0 %19
    %vm21 = vcmask 982944
    %22 = vst.msk [vmem:[#allocation0] sm:$0x1] %vm21, %v20
    %s23 = scalar_lea.vmem %s0, 28
    %v24 = vld [vmem:[%s23] sm:$0x1]
    %25 = vrot.lane.b32.xlu0 %v24, 112
    %v26 = vpop.permute.xlu0 %25
    %vm27 = vcmask 950144
    %28 = vst.msk [vmem:[#allocation0] sm:$0x1] %vm27, %v26
    %s29 = scalar_lea.vmem %s0, 27
    %v30 = vld [vmem:[%s29] sm:$0x1]
    %31 = vrot.lane.b32.xlu0 %v30, 108
    %v32 = vpop.permute.xlu0 %31
    %vm33 = vcmask 917344
    %34 = vst.msk [vmem:[#allocation0] sm:$0x1] %vm33, %v32
    %s35 = scalar_lea.vmem %s0, 26
    %v36 = vld [vmem:[%s35] sm:$0x1]
    %37 = vrot.lane.b32.xlu0 %v36, 104
    %v38 = vpop.permute.xlu0 %37
    %vm39 = vcmask 884544
    %40 = vst.msk [vmem:[#allocation0] sm:$0x1] %vm39, %v38
    %s41 = scalar_lea.vmem %s0, 25
    %v42 = vld [vmem:[%s41] sm:$0x1]
    %43 = vrot.lane.b32.xlu0 %v42, 100
    %v44 = vpop.permute.xlu0 %43
    %vm45 = vcmask 851744
    %46 = vst.msk [vmem:[#allocation0] sm:$0x1] %vm45, %v44
    %s47 = scalar_lea.vmem %s0, 24
    %v48 = vld [vmem:[%s47] sm:$0x1]
    %49 = vrot.lane.b32.xlu0 %v48, 96
    %v50 = vpop.permute.xlu0 %49
    %vm51 = vcmask 818944
    %52 = vst.msk [vmem:[#allocation0] sm:$0x1] %vm51, %v50
    %s53 = scalar_lea.vmem %s0, 23
    %v54 = vld [vmem:[%s53] sm:$0x1]
    %55 = vrot.lane.b32.xlu0 %v54, 92
    %v56 = vpop.permute.xlu0 %55
    %vm57 = vcmask 786144
    %58 = vst.msk [vmem:[#allocation0] sm:$0x1] %vm57, %v56
    %s59 = scalar_lea.vmem %s0, 22
    %v60 = vld [vmem:[%s59] sm:$0x1]
    %61 = vrot.lane.b32.xlu0 %v60, 88
    %v62 = vpop.permute.xlu0 %61
    %vm63 = vcmask 753344
    %64 = vst.msk [vmem:[#allocation0] sm:$0x1] %vm63, %v62
    %s65 = scalar_lea.vmem %s0, 21
    %v66 = vld [vmem:[%s65] sm:$0x1]
    %67 = vrot.lane.b32.xlu0 %v66, 84
    %v68 = vpop.permute.xlu0 %67
    %vm69 = vcmask 720544
    %70 = vst.msk [vmem:[#allocation0] sm:$0x1] %vm69, %v68
    %s71 = scalar_lea.vmem %s0, 20
    %v72 = vld [vmem:[%s71] sm:$0x1]
    %73 = vrot.lane.b32.xlu0 %v72, 80
    %v74 = vpop.permute.xlu0 %73
    %vm75 = vcmask 687744
    %76 = vst.msk [vmem:[#allocation0] sm:$0x1] %vm75, %v74
    %s77 = scalar_lea.vmem %s0, 19
    %v78 = vld [vmem:[%s77] sm:$0x1]
    %79 = vrot.lane.b32.xlu0 %v78, 76
    %v80 = vpop.permute.xlu0 %79
    %vm81 = vcmask 654944
    %82 = vst.msk [vmem:[#allocation0] sm:$0x1] %vm81, %v80
    %s83 = scalar_lea.vmem %s0, 18
    %v84 = vld [vmem:[%s83] sm:$0x1]
    %85 = vrot.lane.b32.xlu0 %v84, 72
    %v86 = vpop.permute.xlu0 %85
    %vm87 = vcmask 622144
    %88 = vst.msk [vmem:[#allocation0] sm:$0x1] %vm87, %v86
    %s89 = scalar_lea.vmem %s0, 17
    %v90 = vld [vmem:[%s89] sm:$0x1]
    %91 = vrot.lane.b32.xlu0 %v90, 68
    %v92 = vpop.permute.xlu0 %91
    %vm93 = vcmask 589344
    %94 = vst.msk [vmem:[#allocation0] sm:$0x1] %vm93, %v92
    %s95 = scalar_lea.vmem %s0, 16
    %v96 = vld [vmem:[%s95] sm:$0x1]
    %97 = vrot.lane.b32.xlu0 %v96, 64
    %v98 = vpop.permute.xlu0 %97
    %vm99 = vcmask 556544
    %100 = vst.msk [vmem:[#allocation0] sm:$0x1] %vm99, %v98
    %s101 = scalar_lea.vmem %s0, 15
    %v102 = vld [vmem:[%s101] sm:$0x1]
    %103 = vrot.lane.b32.xlu0 %v102, 60
    %v104 = vpop.permute.xlu0 %103
    %vm105 = vcmask 523744
    %106 = vst.msk [vmem:[#allocation0] sm:$0x1] %vm105, %v104
    %s107 = scalar_lea.vmem %s0, 14
    %v108 = vld [vmem:[%s107] sm:$0x1]
    %109 = vrot.lane.b32.xlu0 %v108, 56
    %v110 = vpop.permute.xlu0 %109
    %vm111 = vcmask 490944
    %112 = vst.msk [vmem:[#allocation0] sm:$0x1] %vm111, %v110
    %s113 = scalar_lea.vmem %s0, 13
    %v114 = vld [vmem:[%s113] sm:$0x1]
    %115 = vrot.lane.b32.xlu0 %v114, 52
    %v116 = vpop.permute.xlu0 %115
    %vm117 = vcmask 458144
    %118 = vst.msk [vmem:[#allocation0] sm:$0x1] %vm117, %v116
    %s119 = scalar_lea.vmem %s0, 12
    %v120 = vld [vmem:[%s119] sm:$0x1]
    %121 = vrot.lane.b32.xlu0 %v120, 48
    %v122 = vpop.permute.xlu0 %121
    %vm123 = vcmask 425344
    %124 = vst.msk [vmem:[#allocation0] sm:$0x1] %vm123, %v122
    %s125 = scalar_lea.vmem %s0, 11
    %v126 = vld [vmem:[%s125] sm:$0x1]
    %127 = vrot.lane.b32.xlu0 %v126, 44
    %v128 = vpop.permute.xlu0 %127
    %vm129 = vcmask 392544
    %130 = vst.msk [vmem:[#allocation0] sm:$0x1] %vm129, %v128
    %s131 = scalar_lea.vmem %s0, 10
    %v132 = vld [vmem:[%s131] sm:$0x1]
    %133 = vrot.lane.b32.xlu0 %v132, 40
    %v134 = vpop.permute.xlu0 %133
    %vm135 = vcmask 359744
    %136 = vst.msk [vmem:[#allocation0] sm:$0x1] %vm135, %v134
    %s137 = scalar_lea.vmem %s0, 9
    %v138 = vld [vmem:[%s137] sm:$0x1]
    %139 = vrot.lane.b32.xlu0 %v138, 36
    %v140 = vpop.permute.xlu0 %139
    %vm141 = vcmask 326944
    %142 = vst.msk [vmem:[#allocation0] sm:$0x1] %vm141, %v140
    %s143 = scalar_lea.vmem %s0, 8
    %v144 = vld [vmem:[%s143] sm:$0x1]
    %145 = vrot.lane.b32.xlu0 %v144, 32
    %v146 = vpop.permute.xlu0 %145
    %vm147 = vcmask 294144
    %148 = vst.msk [vmem:[#allocation0] sm:$0x1] %vm147, %v146
    %s149 = scalar_lea.vmem %s0, 7
    %v150 = vld [vmem:[%s149] sm:$0x1]
    %151 = vrot.lane.b32.xlu0 %v150, 28
    %v152 = vpop.permute.xlu0 %151
    %vm153 = vcmask 261344
    %154 = vst.msk [vmem:[#allocation0] sm:$0x1] %vm153, %v152
    %s155 = scalar_lea.vmem %s0, 6
    %v156 = vld [vmem:[%s155] sm:$0x1]
    %157 = vrot.lane.b32.xlu0 %v156, 24
    %v158 = vpop.permute.xlu0 %157
    %vm159 = vcmask 228544
    %160 = vst.msk [vmem:[#allocation0] sm:$0x1] %vm159, %v158
    %s161 = scalar_lea.vmem %s0, 5
    %v162 = vld [vmem:[%s161] sm:$0x1]
    %163 = vrot.lane.b32.xlu0 %v162, 20
    %v164 = vpop.permute.xlu0 %163
    %vm165 = vcmask 195744
    %166 = vst.msk [vmem:[#allocation0] sm:$0x1] %vm165, %v164
    %s167 = scalar_lea.vmem %s0, 4
    %v168 = vld [vmem:[%s167] sm:$0x1]
    %169 = vrot.lane.b32.xlu0 %v168, 16
    %v170 = vpop.permute.xlu0 %169
    %vm171 = vcmask 162944
    %172 = vst.msk [vmem:[#allocation0] sm:$0x1] %vm171, %v170
    %s173 = scalar_lea.vmem %s0, 3
    %v174 = vld [vmem:[%s173] sm:$0x1]
    %175 = vrot.lane.b32.xlu0 %v174, 12
    %v176 = vpop.permute.xlu0 %175
    %vm177 = vcmask 130144
    %178 = vst.msk [vmem:[#allocation0] sm:$0x1] %vm177, %v176
    %s179 = scalar_lea.vmem %s0, 2
    %v180 = vld [vmem:[%s179] sm:$0x1]
    %181 = vrot.lane.b32.xlu0 %v180, 8
    %v182 = vpop.permute.xlu0 %181
    %vm183 = vcmask 97344
    %184 = vst.msk [vmem:[#allocation0] sm:$0x1] %vm183, %v182
    %s185 = scalar_lea.vmem %s0, 1
    %v186 = vld [vmem:[%s185] sm:$0x1]
    %187 = vrot.lane.b32.xlu0 %v186, 4
    %v188 = vpop.permute.xlu0 %187
    %vm189 = vcmask 64544
    %190 = vst.msk [vmem:[#allocation0] sm:$0x1] %vm189, %v188
    %s192 = sshll.u32 1, 1
    %s193 = ssub.s32 %s192, 1
    %v195 = vld [vmem:[#allocation0] sm:%s193]
    %s196 = sshll.u32 1, 1
    %s197 = ssub.s32 %s196, 1
    %198 = vst [vmem:[%s1] sm:%s197] %v195

// kernel: parallel_net_forward.27
$region0: #{parallel_net_forward.27}
  #allocation0 [shape = 'u32[]', space=smem, size = 0x4, offset = 0x4, fixed_abs, tag = 'smem constant byte address 0x4 - core index']
  #allocation1 [shape = 'u32[144,128]{1,0:T(1,128)}', space=vmem, size = 0x12000, scoped, tag = 'internal scratch']
  %s0 = inlined_call_operand.vmem [shape: bf16[16,128], index: 0, kind: input, shape index: {}]
  %s1 = inlined_call_operand.vmem [shape: f32[1,128], index: 1, kind: input, shape index: {}]
  %s2 = inlined_call_operand.vmem [shape: f32[1,128], index: 2, kind: input, shape index: {}]
  %s3 = inlined_call_operand.vmem [shape: f32[16,128], index: 3, kind: output, shape index: {}]
  %s4 = sld [smem:[#allocation0]]
  $region45: #{parallel_net_forward.27} parent=0
    _
  %s6 = ssub.s32 1, %s4
  %s7 = scalar_select 0, %s6, %s4
  loop: start=0, step=1, limit=4
  $region2: #{parallel_net_forward.27} parent=0 // loop_pre_header
    _
  $region3: #{parallel_net_forward.27} parent=0 // loop_header
    %s9 = sphi 0, %s13
    %p10 = scmp.ge.s32.totalorder %s9, 4
    %s19 = sphi 0, %s21
    %s22 = sphi 0, %s19
    %s23 = sphi 0, %s22
    %s39 = sphi 0, %s23
    %s43 = sphi 0, %s43
    %s45 = sphi 0, %s43
    %s46 = sphi 0, %s45
    %s60 = sphi 0, %s46
    %s64 = sphi 0, %s64
    %s66 = sphi 0, %s64
    %s67 = sphi 0, %s66
    %s81 = sphi 0, %s67
    %s87 = sphi 0, %s89
    %s90 = sphi 0, %s87
    %s91 = sphi 0, %s90
    %s107 = sphi 0, %s91
  $region4: #{parallel_net_forward.27} parent=0 // loop_header_branch
    %12 = sbr.rel (%p10) target = $region8
  $region5: #{parallel_net_forward.27} parent=0 // loop_body
    %s14 = ssub.s32 %s9, 1
    %s15 = ssub.s32 %s9, 2
    %s16 = sadd.s32 %s9, 1
    %s17 = ssub.s32 %s9, %s16
    %p18 = scmp.eq.s32.totalorder %s17, 0
    %s20 = sadd.s32 %s19, 1
    %s21 = scalar_select %p18, %s19, %s20
    %p24 = pneg %p18
    %p25 = scmp.eq.s32.totalorder %s9, 1
    %p26 = por %p24, %p25
    %p27 = scmp.ne.s32.totalorder %s19, %s22
    %p28 = scmp.eq.s32.totalorder %s9, 0
    %p29 = por %p27, %p28
    %p30 = scmp.ne.s32.totalorder %s19, %s22
    %p31 = scmp.eq.s32.totalorder %s14, 1
    %p32 = por %p30, %p31
    %p33 = scmp.ne.s32.totalorder %s22, %s23
    %p34 = scmp.eq.s32.totalorder %s14, 0
    %p35 = por %p33, %p34
    %p36 = scmp.ne.s32.totalorder %s22, %s23
    %p37 = scmp.eq.s32.totalorder %s15, 1
    %p38 = por %p36, %p37
    %p40 = scmp.ne.s32.totalorder %s23, %s39
    %p41 = scmp.eq.s32.totalorder %s15, 0
    %p42 = por %p40, %p41
    %s44 = sadd.s32 %s43, 1
    %p47 = scmp.eq.s32.totalorder %s9, 1
    %p48 = scmp.ne.s32.totalorder %s43, %s45
    %p49 = scmp.eq.s32.totalorder %s9, 0
    %p50 = por %p48, %p49
    %p51 = scmp.ne.s32.totalorder %s43, %s45
    %p52 = scmp.eq.s32.totalorder %s14, 1
    %p53 = por %p51, %p52
    %p54 = scmp.ne.s32.totalorder %s45, %s46
    %p55 = scmp.eq.s32.totalorder %s14, 0
    %p56 = por %p54, %p55
    %p57 = scmp.ne.s32.totalorder %s45, %s46
    %p58 = scmp.eq.s32.totalorder %s15, 1
    %p59 = por %p57, %p58
    %p61 = scmp.ne.s32.totalorder %s46, %s60
    %p62 = scmp.eq.s32.totalorder %s15, 0
    %p63 = por %p61, %p62
    %s65 = sadd.s32 %s64, 1
    %p68 = scmp.eq.s32.totalorder %s9, 1
    %p69 = scmp.ne.s32.totalorder %s64, %s66
    %p70 = scmp.eq.s32.totalorder %s9, 0
    %p71 = por %p69, %p70
    %p72 = scmp.ne.s32.totalorder %s64, %s66
    %p73 = scmp.eq.s32.totalorder %s14, 1
    %p74 = por %p72, %p73
    %p75 = scmp.ne.s32.totalorder %s66, %s67
    %p76 = scmp.eq.s32.totalorder %s14, 0
    %p77 = por %p75, %p76
    %p78 = scmp.ne.s32.totalorder %s66, %s67
    %p79 = scmp.eq.s32.totalorder %s15, 1
    %p80 = por %p78, %p79
    %p82 = scmp.ne.s32.totalorder %s67, %s81
    %p83 = scmp.eq.s32.totalorder %s15, 0
    %p84 = por %p82, %p83
    %s85 = ssub.s32 %s9, %s16
    %p86 = scmp.eq.s32.totalorder %s85, 0
    %s88 = sadd.s32 %s87, 1
    %s89 = scalar_select %p86, %s87, %s88
    %p92 = pneg %p86
    %p93 = scmp.eq.s32.totalorder %s9, 1
    %p94 = por %p92, %p93
    %p95 = scmp.ne.s32.totalorder %s87, %s90
    %p96 = scmp.eq.s32.totalorder %s9, 0
    %p97 = por %p95, %p96
    %p98 = scmp.ne.s32.totalorder %s87, %s90
    %p99 = scmp.eq.s32.totalorder %s14, 1
    %p100 = por %p98, %p99
    %p101 = scmp.ne.s32.totalorder %s90, %s91
    %p102 = scmp.eq.s32.totalorder %s14, 0
    %p103 = por %p101, %p102
    %p104 = scmp.ne.s32.totalorder %s90, %s91
    %p105 = scmp.eq.s32.totalorder %s15, 1
    %p106 = por %p104, %p105
    %p108 = scmp.ne.s32.totalorder %s91, %s107
    %p109 = scmp.eq.s32.totalorder %s15, 0
    %p110 = por %p108, %p109
    %p111 = scmp.le.s32.totalorder 1, %s9
    %p112 = scmp.lt.s32.totalorder %s9, 3
    %p113 = pnand %p111, %p112
    %p114 = pneg %p113
    // Predicated region
    $region9: #{parallel_net_forward.27} parent=5 // pred_check
      _
    $region10: #{parallel_net_forward.27} parent=5 // pred_check_branch
      %116 = sbr.rel (%p113) target = $region12
    $region11: #{parallel_net_forward.27} parent=5 // pred_region
      %s117 = ssub.s32 %s9, 1
      // Predicated region
      $region13: #{parallel_net_forward.27} parent=11 // pred_check
        %p118 = pneg %p56
      $region14: #{parallel_net_forward.27} parent=11 // pred_check_branch
        %120 = sbr.rel (%p118) target = $region16
      $region15: #{parallel_net_forward.27} parent=11 // pred_region
        _
      $region16: #{parallel_net_forward.27} parent=11 // pred_fallthru
        _
      // Predicated region
      $region17: #{parallel_net_forward.27} parent=11 // pred_check
        %p121 = pneg %p77
      $region18: #{parallel_net_forward.27} parent=11 // pred_check_branch
        %123 = sbr.rel (%p121) target = $region20
      $region19: #{parallel_net_forward.27} parent=11 // pred_region
        _
      $region20: #{parallel_net_forward.27} parent=11 // pred_fallthru
        _
    $region12: #{parallel_net_forward.27} parent=5 // pred_fallthru
      _
    %p124 = scmp.lt.s32.totalorder %s9, 2
    // Predicated region
    $region21: #{parallel_net_forward.27} parent=5 // pred_check
      %p125 = pneg %p124
    $region22: #{parallel_net_forward.27} parent=5 // pred_check_branch
      %127 = sbr.rel (%p125) target = $region24
    $region23: #{parallel_net_forward.27} parent=5 // pred_region
      // Predicated region
      $region25: #{parallel_net_forward.27} parent=23 // pred_check
        %p128 = pneg %p29
      $region26: #{parallel_net_forward.27} parent=23 // pred_check_branch
        %130 = sbr.rel (%p128) target = $region28
      $region27: #{parallel_net_forward.27} parent=23 // pred_region
        %p131 = scmp.lt.s32.totalorder %s9, 1
        %s132 = scalar_select %p131, %s9, 1
        %s133 = smul.addr %s132, 4
        %s134 = scalar_lea.vmem %s0, %s133
      $region28: #{parallel_net_forward.27} parent=23 // pred_fallthru
        _
    $region24: #{parallel_net_forward.27} parent=5 // pred_fallthru
      _
    %p135 = scmp.le.s32.totalorder 1, %s9
    %p136 = scmp.lt.s32.totalorder %s9, 3
    %p137 = pnand %p135, %p136
    %p138 = pneg %p137
    // Predicated region
    $region29: #{parallel_net_forward.27} parent=5 // pred_check
      _
    $region30: #{parallel_net_forward.27} parent=5 // pred_check_branch
      %140 = sbr.rel (%p137) target = $region32
    $region31: #{parallel_net_forward.27} parent=5 // pred_region
      %s141 = ssub.s32 %s9, 1
      %p142 = scmp.lt.s32.totalorder %s14, 1
      %s143 = scalar_select %p142, %s14, 1
      %s144 = smul.addr %s143, 4
      %s145 = scalar_lea.vmem %s0, %s144
      %p146 = pneg %p35
      %p147 = pneg %p32
      %p148 = pneg %p56
      %p149 = pneg %p53
      %p150 = pneg %p77
      %p151 = pneg %p74
      %p152 = pneg %p103
      %p153 = pneg %p100
      %p154 = scmp.lt.s32.totalorder %s14, 1
      %s155 = scalar_select %p154, %s14, 1
      %s156 = smul.addr %s155, 8
      %s157 = scalar_lea.vmem %s3, %s156
      %p158 = scmp.lt.s32.totalorder %s14, 1
      %s159 = scalar_select %p158, %s14, 1
      %s160 = smul.addr %s159, 4
      %s161 = scalar_lea.vmem %s0, %s160
      %p162 = scmp.lt.s32.totalorder %s14, 1
      %s163 = scalar_select %p162, %s14, 1
      %s164 = smul.addr %s163, 8
      %s165 = scalar_lea.vmem %s3, %s164
      %v166 = vld [vmem:[%s161] sm:$0xf]
      %v167 = vunpack.c.l.bf16 %v166
      %v168 = vld [vmem:[%s1] sm:$0x1]
      %v170 = vlaneseq
      %v171 = vshrl.u32 %v170, 7
      %v172 = vsub.s32 0, %v171
      %v173 = vrot.slane %v168, %v172
      %v175 = vmul.f32 %v167, %v173
      %v176 = vld [vmem:[%s2] sm:$0x1]
      %v178 = vlaneseq
      %v179 = vshrl.u32 %v178, 7
      %v180 = vsub.s32 0, %v179
      %v181 = vrot.slane %v176, %v180
      %v183 = vadd.f32 %v175, %v181
      %v184 = vmax.f32 %v183, 0.0
      %185 = vst [vmem:[%s165] sm:$0xff] %v184
      %p186 = scmp.lt.s32.totalorder %s14, 1
      %s187 = scalar_select %p186, %s14, 1
      %s188 = smul.addr %s187, 8
      %s189 = scalar_lea.vmem %s3, %s188
      // Predicated region
      $region33: #{parallel_net_forward.27} parent=31 // pred_check
        %p190 = pneg %p100
      $region34: #{parallel_net_forward.27} parent=31 // pred_check_branch
        %192 = sbr.rel (%p190) target = $region36
      $region35: #{parallel_net_forward.27} parent=31 // pred_region
        _
      $region36: #{parallel_net_forward.27} parent=31 // pred_fallthru
        _
    $region32: #{parallel_net_forward.27} parent=5 // pred_fallthru
      _
    %p193 = scmp.le.s32.totalorder 2, %s9
    // Predicated region
    $region37: #{parallel_net_forward.27} parent=5 // pred_check
      %p194 = pneg %p193
    $region38: #{parallel_net_forward.27} parent=5 // pred_check_branch
      %196 = sbr.rel (%p194) target = $region40
    $region39: #{parallel_net_forward.27} parent=5 // pred_region
      %s197 = ssub.s32 %s9, 2
      // Predicated region
      $region41: #{parallel_net_forward.27} parent=39 // pred_check
        %p198 = pneg %p106
      $region42: #{parallel_net_forward.27} parent=39 // pred_check_branch
        %200 = sbr.rel (%p198) target = $region44
      $region43: #{parallel_net_forward.27} parent=39 // pred_region
        %p201 = scmp.lt.s32.totalorder %s15, 1
        %s202 = scalar_select %p201, %s15, 1
        %s203 = smul.addr %s202, 8
        %s204 = scalar_lea.vmem %s3, %s203
      $region44: #{parallel_net_forward.27} parent=39 // pred_fallthru
        _
    $region40: #{parallel_net_forward.27} parent=5 // pred_fallthru
      _
  $region6: #{parallel_net_forward.27} parent=0 // loop_footer
    %s13 = sadd.s32 1, %s9
  $region7: #{parallel_net_forward.27} parent=0 // loop_footer_branch
    %8 = sbr.rel target = $region3
  $region8: #{parallel_net_forward.27} parent=0 // loop_exit
    _

// kernel: parallel_net_forward.26
$region0: #{parallel_net_forward.26}
  #allocation0 [shape = 'u32[]', space=smem, size = 0x4, offset = 0x4, fixed_abs, tag = 'smem constant byte address 0x4 - core index']
  #allocation1 [shape = 'u32[144,128]{1,0:T(1,128)}', space=vmem, size = 0x12000, scoped, tag = 'internal scratch']
  %s0 = inlined_call_operand.vmem [shape: bf16[512,147], index: 0, kind: input, shape index: {}]
  %s1 = inlined_call_operand.vmem [shape: bf16[147,4], index: 1, kind: input, shape index: {}]
  %s2 = inlined_call_operand.vmem [shape: bf16[512,4], index: 2, kind: output, shape index: {0}]
  %s3 = inlined_call_operand.vmem [shape: f32[2,1,4], index: 3, kind: output, shape index: {1}]
  %s4 = inlined_call_operand.vmem [shape: f32[2,1,4], index: 4, kind: output, shape index: {2}]
  %5 = xla_tuple %s2, %s3, %s4
  %s6 = sld [smem:[#allocation0]]
  $region57: #{parallel_net_forward.26} parent=0
    _
  %s8 = ssub.s32 1, %s6
  %s9 = scalar_select 0, %s8, %s6
  loop: start=0, step=1, limit=4
  $region2: #{parallel_net_forward.26} parent=0 // loop_pre_header
    _
  $region3: #{parallel_net_forward.26} parent=0 // loop_header
    %s11 = sphi 0, %s15
    %p12 = scmp.ge.s32.totalorder %s11, 4
    %s21 = sphi 0, %s23
    %s24 = sphi 0, %s21
    %s25 = sphi 0, %s24
    %s41 = sphi 0, %s25
    %s45 = sphi 0, %s45
    %s47 = sphi 0, %s45
    %s48 = sphi 0, %s47
    %s62 = sphi 0, %s48
    %s68 = sphi 0, %s70
    %s71 = sphi 0, %s68
    %s72 = sphi 0, %s71
    %s88 = sphi 0, %s72
    %s94 = sphi 0, %s96
    %s97 = sphi 0, %s94
    %s98 = sphi 0, %s97
    %s114 = sphi 0, %s98
    %s120 = sphi 0, %s122
    %s123 = sphi 0, %s120
    %s124 = sphi 0, %s123
    %s140 = sphi 0, %s124
  $region4: #{parallel_net_forward.26} parent=0 // loop_header_branch
    %14 = sbr.rel (%p12) target = $region8
  $region5: #{parallel_net_forward.26} parent=0 // loop_body
    %s16 = ssub.s32 %s11, 1
    %s17 = ssub.s32 %s11, 2
    %s18 = sadd.s32 %s11, 1
    %s19 = ssub.s32 %s11, %s18
    %p20 = scmp.eq.s32.totalorder %s19, 0
    %s22 = sadd.s32 %s21, 1
    %s23 = scalar_select %p20, %s21, %s22
    %p26 = pneg %p20
    %p27 = scmp.eq.s32.totalorder %s11, 1
    %p28 = por %p26, %p27
    %p29 = scmp.ne.s32.totalorder %s21, %s24
    %p30 = scmp.eq.s32.totalorder %s11, 0
    %p31 = por %p29, %p30
    %p32 = scmp.ne.s32.totalorder %s21, %s24
    %p33 = scmp.eq.s32.totalorder %s16, 1
    %p34 = por %p32, %p33
    %p35 = scmp.ne.s32.totalorder %s24, %s25
    %p36 = scmp.eq.s32.totalorder %s16, 0
    %p37 = por %p35, %p36
    %p38 = scmp.ne.s32.totalorder %s24, %s25
    %p39 = scmp.eq.s32.totalorder %s17, 1
    %p40 = por %p38, %p39
    %p42 = scmp.ne.s32.totalorder %s25, %s41
    %p43 = scmp.eq.s32.totalorder %s17, 0
    %p44 = por %p42, %p43
    %s46 = sadd.s32 %s45, 1
    %p49 = scmp.eq.s32.totalorder %s11, 1
    %p50 = scmp.ne.s32.totalorder %s45, %s47
    %p51 = scmp.eq.s32.totalorder %s11, 0
    %p52 = por %p50, %p51
    %p53 = scmp.ne.s32.totalorder %s45, %s47
    %p54 = scmp.eq.s32.totalorder %s16, 1
    %p55 = por %p53, %p54
    %p56 = scmp.ne.s32.totalorder %s47, %s48
    %p57 = scmp.eq.s32.totalorder %s16, 0
    %p58 = por %p56, %p57
    %p59 = scmp.ne.s32.totalorder %s47, %s48
    %p60 = scmp.eq.s32.totalorder %s17, 1
    %p61 = por %p59, %p60
    %p63 = scmp.ne.s32.totalorder %s48, %s62
    %p64 = scmp.eq.s32.totalorder %s17, 0
    %p65 = por %p63, %p64
    %s66 = ssub.s32 %s11, %s18
    %p67 = scmp.eq.s32.totalorder %s66, 0
    %s69 = sadd.s32 %s68, 1
    %s70 = scalar_select %p67, %s68, %s69
    %p73 = pneg %p67
    %p74 = scmp.eq.s32.totalorder %s11, 1
    %p75 = por %p73, %p74
    %p76 = scmp.ne.s32.totalorder %s68, %s71
    %p77 = scmp.eq.s32.totalorder %s11, 0
    %p78 = por %p76, %p77
    %p79 = scmp.ne.s32.totalorder %s68, %s71
    %p80 = scmp.eq.s32.totalorder %s16, 1
    %p81 = por %p79, %p80
    %p82 = scmp.ne.s32.totalorder %s71, %s72
    %p83 = scmp.eq.s32.totalorder %s16, 0
    %p84 = por %p82, %p83
    %p85 = scmp.ne.s32.totalorder %s71, %s72
    %p86 = scmp.eq.s32.totalorder %s17, 1
    %p87 = por %p85, %p86
    %p89 = scmp.ne.s32.totalorder %s72, %s88
    %p90 = scmp.eq.s32.totalorder %s17, 0
    %p91 = por %p89, %p90
    %s92 = ssub.s32 %s11, %s18
    %p93 = scmp.eq.s32.totalorder %s92, 0
    %s95 = sadd.s32 %s94, 1
    %s96 = scalar_select %p93, %s94, %s95
    %p99 = pneg %p93
    %p100 = scmp.eq.s32.totalorder %s11, 1
    %p101 = por %p99, %p100
    %p102 = scmp.ne.s32.totalorder %s94, %s97
    %p103 = scmp.eq.s32.totalorder %s11, 0
    %p104 = por %p102, %p103
    %p105 = scmp.ne.s32.totalorder %s94, %s97
    %p106 = scmp.eq.s32.totalorder %s16, 1
    %p107 = por %p105, %p106
    %p108 = scmp.ne.s32.totalorder %s97, %s98
    %p109 = scmp.eq.s32.totalorder %s16, 0
    %p110 = por %p108, %p109
    %p111 = scmp.ne.s32.totalorder %s97, %s98
    %p112 = scmp.eq.s32.totalorder %s17, 1
    %p113 = por %p111, %p112
    %p115 = scmp.ne.s32.totalorder %s98, %s114
    %p116 = scmp.eq.s32.totalorder %s17, 0
    %p117 = por %p115, %p116
    %s118 = ssub.s32 %s11, %s18
    %p119 = scmp.eq.s32.totalorder %s118, 0
    %s121 = sadd.s32 %s120, 1
    %s122 = scalar_select %p119, %s120, %s121
    %p125 = pneg %p119
    %p126 = scmp.eq.s32.totalorder %s11, 1
    %p127 = por %p125, %p126
    %p128 = scmp.ne.s32.totalorder %s120, %s123
    %p129 = scmp.eq.s32.totalorder %s11, 0
    %p130 = por %p128, %p129
    %p131 = scmp.ne.s32.totalorder %s120, %s123
    %p132 = scmp.eq.s32.totalorder %s16, 1
    %p133 = por %p131, %p132
    %p134 = scmp.ne.s32.totalorder %s123, %s124
    %p135 = scmp.eq.s32.totalorder %s16, 0
    %p136 = por %p134, %p135
    %p137 = scmp.ne.s32.totalorder %s123, %s124
    %p138 = scmp.eq.s32.totalorder %s17, 1
    %p139 = por %p137, %p138
    %p141 = scmp.ne.s32.totalorder %s124, %s140
    %p142 = scmp.eq.s32.totalorder %s17, 0
    %p143 = por %p141, %p142
    %p144 = scmp.le.s32.totalorder 1, %s11
    %p145 = scmp.lt.s32.totalorder %s11, 3
    %p146 = pnand %p144, %p145
    %p147 = pneg %p146
    // Predicated region
    $region9: #{parallel_net_forward.26} parent=5 // pred_check
      _
    $region10: #{parallel_net_forward.26} parent=5 // pred_check_branch
      %149 = sbr.rel (%p146) target = $region12
    $region11: #{parallel_net_forward.26} parent=5 // pred_region
      %s150 = ssub.s32 %s11, 1
      // Predicated region
      $region13: #{parallel_net_forward.26} parent=11 // pred_check
        %p151 = pneg %p58
      $region14: #{parallel_net_forward.26} parent=11 // pred_check_branch
        %153 = sbr.rel (%p151) target = $region16
      $region15: #{parallel_net_forward.26} parent=11 // pred_region
        _
      $region16: #{parallel_net_forward.26} parent=11 // pred_fallthru
        _
    $region12: #{parallel_net_forward.26} parent=5 // pred_fallthru
      _
    %p154 = scmp.lt.s32.totalorder %s11, 2
    // Predicated region
    $region17: #{parallel_net_forward.26} parent=5 // pred_check
      %p155 = pneg %p154
    $region18: #{parallel_net_forward.26} parent=5 // pred_check_branch
      %157 = sbr.rel (%p155) target = $region20
    $region19: #{parallel_net_forward.26} parent=5 // pred_region
      // Predicated region
      $region21: #{parallel_net_forward.26} parent=19 // pred_check
        %p158 = pneg %p31
      $region22: #{parallel_net_forward.26} parent=19 // pred_check_branch
        %160 = sbr.rel (%p158) target = $region24
      $region23: #{parallel_net_forward.26} parent=19 // pred_region
        %s161 = smul.u32 32, %s11
        %p162 = scmp.lt.s32.totalorder %s161, 63
        %s163 = scalar_select %p162, %s161, 63
        %s164 = smul.addr %s163, 2
        %s165 = smul.addr %s164, 4
        %s166 = scalar_lea.vmem %s0, %s165
        %s167 = smul.u32 32, %s11
      $region24: #{parallel_net_forward.26} parent=19 // pred_fallthru
        _
    $region20: #{parallel_net_forward.26} parent=5 // pred_fallthru
      _
    %p168 = scmp.le.s32.totalorder 1, %s11
    %p169 = scmp.lt.s32.totalorder %s11, 3
    %p170 = pnand %p168, %p169
    %p171 = pneg %p170
    // Predicated region
    $region25: #{parallel_net_forward.26} parent=5 // pred_check
      _
    $region26: #{parallel_net_forward.26} parent=5 // pred_check_branch
      %173 = sbr.rel (%p170) target = $region28
    $region27: #{parallel_net_forward.26} parent=5 // pred_region
      %s174 = ssub.s32 %s11, 1
      %s175 = smul.u32 32, %s16
      %p176 = scmp.lt.s32.totalorder %s175, 63
      %s177 = scalar_select %p176, %s175, 63
      %s178 = smul.addr %s177, 2
      %s179 = smul.addr %s178, 4
      %s180 = scalar_lea.vmem %s0, %s179
      %p181 = pneg %p37
      %p182 = pneg %p34
      %p183 = pneg %p58
      %p184 = pneg %p55
      %p185 = pneg %p84
      %p186 = pneg %p81
      %s187 = smul.u32 32, %s16
      %p188 = scmp.lt.s32.totalorder %s187, 63
      %s189 = scalar_select %p188, %s187, 63
      %s190 = smul.addr %s189, 4
      %s191 = scalar_lea.vmem %s2, %s190
      %p192 = pneg %p110
      %p193 = pneg %p107
      %p194 = scmp.lt.s32.totalorder %s16, 1
      %s195 = scalar_select %p194, %s16, 1
      %s196 = scalar_lea.vmem %s3, %s195
      %p197 = pneg %p136
      %p198 = pneg %p133
      %p199 = scmp.lt.s32.totalorder %s16, 1
      %s200 = scalar_select %p199, %s16, 1
      %s201 = scalar_lea.vmem %s4, %s200
      %s202 = smul.u32 32, %s16
      %p203 = scmp.lt.s32.totalorder %s202, 63
      %s204 = scalar_select %p203, %s202, 63
      %s205 = smul.addr %s204, 2
      %s206 = smul.addr %s205, 4
      %s207 = scalar_lea.vmem %s0, %s206
      %s208 = smul.u32 32, %s16
      %s209 = smul.u32 32, %s16
      %p210 = scmp.lt.s32.totalorder %s209, 63
      %s211 = scalar_select %p210, %s209, 63
      %s212 = smul.addr %s211, 4
      %s213 = scalar_lea.vmem %s2, %s212
      %s214 = smul.u32 32, %s16
      %p215 = scmp.lt.s32.totalorder %s16, 1
      %s216 = scalar_select %p215, %s16, 1
      %s217 = scalar_lea.vmem %s3, %s216
      %p218 = scmp.lt.s32.totalorder %s16, 1
      %s219 = scalar_select %p218, %s16, 1
      %s220 = scalar_lea.vmem %s4, %s219
      %v222 = vld [vmem:[%s207] sm:$0xff]
      %v223 = vld [vmem:[%s207 + $0x8] sm:$0xff]
      %v224 = vld [vmem:[%s207 + $0x10] sm:$0xff]
      %v225 = vld [vmem:[%s207 + $0x18] sm:$0xff]
      %v226 = vld [vmem:[%s207 + $0x20] sm:$0xff]
      %v227 = vld [vmem:[%s207 + $0x28] sm:$0xff]
      %v228 = vld [vmem:[%s207 + $0x30] sm:$0xff]
      %v229 = vld [vmem:[%s207 + $0x38] sm:$0xff]
      %v230 = vld [vmem:[%s207 + $0x40] sm:$0xff]
      %v231 = vld [vmem:[%s207 + $0x48] sm:$0xff]
      %v232 = vld [vmem:[%s207 + $0x50] sm:$0xff]
      %v233 = vld [vmem:[%s207 + $0x58] sm:$0xff]
      %v234 = vld [vmem:[%s207 + $0x60] sm:$0xff]
      %v235 = vld [vmem:[%s207 + $0x68] sm:$0xff]
      %v236 = vld [vmem:[%s207 + $0x70] sm:$0xff]
      %v237 = vld [vmem:[%s207 + $0x78] sm:$0xff]
      %v238 = vld [vmem:[%s207 + $0x80] sm:$0xff]
      %v239 = vld [vmem:[%s207 + $0x88] sm:$0xff]
      %v240 = vld [vmem:[%s207 + $0x90] sm:$0xff]
      %v241 = vld [vmem:[%s207 + $0x98] sm:$0xff]
      %v242 = vld [vmem:[%s207 + $0xa0] sm:$0xff]
      %v243 = vld [vmem:[%s207 + $0xa8] sm:$0xff]
      %v244 = vld [vmem:[%s207 + $0xb0] sm:$0xff]
      %v245 = vld [vmem:[%s207 + $0xb8] sm:$0xff]
      %v246 = vld [vmem:[%s207 + $0xc0] sm:$0xff]
      %v247 = vld [vmem:[%s207 + $0xc8] sm:$0xff]
      %v248 = vld [vmem:[%s207 + $0xd0] sm:$0xff]
      %v249 = vld [vmem:[%s207 + $0xd8] sm:$0xff]
      %v250 = vld [vmem:[%s207 + $0xe0] sm:$0xff]
      %v251 = vld [vmem:[%s207 + $0xe8] sm:$0xff]
      %v252 = vld [vmem:[%s207 + $0xf0] sm:$0xff]
      %v253 = vld [vmem:[%s207 + $0xf8] sm:$0xff]
      %v254 = vld [vmem:[%s1] sm:$0xf]
      %v255 = vld [vmem:[%s1 + $0x4] sm:$0xf]
      %v256 = vld [vmem:[%s1 + $0x8] sm:$0xf]
      %v257 = vld [vmem:[%s1 + $0xc] sm:$0xf]
      %v258 = vld [vmem:[%s1 + $0x10] sm:$0xf]
      %v259 = vld [vmem:[%s1 + $0x14] sm:$0xf]
      %v260 = vld [vmem:[%s1 + $0x18] sm:$0xf]
      %v261 = vld [vmem:[%s1 + $0x1c] sm:$0xf]
      %v262 = vld [vmem:[%s1 + $0x20] sm:$0xf]
      %v263 = vld [vmem:[%s1 + $0x24] sm:$0xf]
      %v264 = vld [vmem:[%s1 + $0x28] sm:$0xf]
      %v265 = vld [vmem:[%s1 + $0x2c] sm:$0xf]
      %v266 = vld [vmem:[%s1 + $0x30] sm:$0xf]
      %v267 = vld [vmem:[%s1 + $0x34] sm:$0xf]
      %v268 = vld [vmem:[%s1 + $0x38] sm:$0xf]
      %v269 = vld [vmem:[%s1 + $0x3c] sm:$0xf]
      %v270 = vld [vmem:[%s1 + $0x40] sm:$0xf]
      %v271 = vld [vmem:[%s1 + $0x44] sm:$0xf]
      %v272 = vld [vmem:[%s1 + $0x48] sm:$0x3]
      %v305 = vunpack.c.l.b16 %v222
      %v306 = vunpack.c.h.b16 %v222
      %v307 = vunpack.c.l.b16 %v223
      %v308 = vunpack.c.h.b16 %v223
      %v309 = vunpack.c.l.b16 %v224
      %v310 = vunpack.c.h.b16 %v224
      %v311 = vunpack.c.l.b16 %v225
      %v312 = vunpack.c.h.b16 %v225
      %v313 = vunpack.c.l.b16 %v226
      %v314 = vunpack.c.h.b16 %v226
      %v315 = vunpack.c.l.b16 %v227
      %v316 = vunpack.c.h.b16 %v227
      %v317 = vunpack.c.l.b16 %v228
      %v318 = vunpack.c.h.b16 %v228
      %v319 = vunpack.c.l.b16 %v229
      %v320 = vunpack.c.h.b16 %v229
      %v321 = vunpack.c.l.b16 %v230
      %v322 = vunpack.c.h.b16 %v230
      %v323 = vunpack.c.l.b16 %v231
      %v324 = vunpack.c.h.b16 %v231
      %v325 = vunpack.c.l.b16 %v232
      %v326 = vunpack.c.h.b16 %v232
      %v327 = vunpack.c.l.b16 %v233
      %v328 = vunpack.c.h.b16 %v233
      %v329 = vunpack.c.l.b16 %v234
      %v330 = vunpack.c.h.b16 %v234
      %v331 = vunpack.c.l.b16 %v235
      %v332 = vunpack.c.h.b16 %v235
      %v333 = vunpack.c.l.b16 %v236
      %v334 = vunpack.c.h.b16 %v236
      %v335 = vunpack.c.l.b16 %v237
      %v336 = vunpack.c.h.b16 %v237
      %v337 = vunpack.c.l.b16 %v238
      %v338 = vunpack.c.h.b16 %v238
      %v339 = vunpack.c.l.b16 %v239
      %v340 = vunpack.c.h.b16 %v239
      %v341 = vunpack.c.l.b16 %v240
      %v342 = vunpack.c.h.b16 %v240
      %v343 = vunpack.c.l.b16 %v241
      %v344 = vunpack.c.h.b16 %v241
      %v345 = vunpack.c.l.b16 %v242
      %v346 = vunpack.c.h.b16 %v242
      %v347 = vunpack.c.l.b16 %v243
      %v348 = vunpack.c.h.b16 %v243
      %v349 = vunpack.c.l.b16 %v244
      %v350 = vunpack.c.h.b16 %v244
      %v351 = vunpack.c.l.b16 %v245
      %v352 = vunpack.c.h.b16 %v245
      %v353 = vunpack.c.l.b16 %v246
      %v354 = vunpack.c.h.b16 %v246
      %v355 = vunpack.c.l.b16 %v247
      %v356 = vunpack.c.h.b16 %v247
      %v357 = vunpack.c.l.b16 %v248
      %v358 = vunpack.c.h.b16 %v248
      %v359 = vunpack.c.l.b16 %v249
      %v360 = vunpack.c.h.b16 %v249
      %v361 = vunpack.c.l.b16 %v250
      %v362 = vunpack.c.h.b16 %v250
      %v363 = vunpack.c.l.b16 %v251
      %v364 = vunpack.c.h.b16 %v251
      %v365 = vunpack.c.l.b16 %v252
      %v366 = vunpack.c.h.b16 %v252
      %v367 = vunpack.c.l.b16 %v253
      %v368 = vunpack.c.h.b16 %v253
      %v369 = vpack.c.b16 %v307, %v305
      %v370 = vpack.c.b16 %v308, %v306
      %v371 = vpack.c.b16 %v311, %v309
      %v372 = vpack.c.b16 %v312, %v310
      %v373 = vpack.c.b16 %v315, %v313
      %v374 = vpack.c.b16 %v316, %v314
      %v375 = vpack.c.b16 %v319, %v317
      %v376 = vpack.c.b16 %v320, %v318
      %v377 = vpack.c.b16 %v323, %v321
      %v378 = vpack.c.b16 %v324, %v322
      %v379 = vpack.c.b16 %v327, %v325
      %v380 = vpack.c.b16 %v328, %v326
      %v381 = vpack.c.b16 %v331, %v329
      %v382 = vpack.c.b16 %v332, %v330
      %v383 = vpack.c.b16 %v335, %v333
      %v384 = vpack.c.b16 %v336, %v334
      %v385 = vpack.c.b16 %v339, %v337
      %v386 = vpack.c.b16 %v340, %v338
      %v387 = vpack.c.b16 %v343, %v341
      %v388 = vpack.c.b16 %v344, %v342
      %v389 = vpack.c.b16 %v347, %v345
      %v390 = vpack.c.b16 %v348, %v346
      %v391 = vpack.c.b16 %v351, %v349
      %v392 = vpack.c.b16 %v352, %v350
      %v393 = vpack.c.b16 %v355, %v353
      %v394 = vpack.c.b16 %v356, %v354
      %v395 = vpack.c.b16 %v359, %v357
      %v396 = vpack.c.b16 %v360, %v358
      %v397 = vpack.c.b16 %v363, %v361
      %v398 = vpack.c.b16 %v364, %v362
      %v399 = vpack.c.b16 %v367, %v365
      %v400 = vpack.c.b16 %v368, %v366
      %v436 = vunpack.c.l.b16 %v254
      %v437 = vunpack.c.l.b16 %v255
      %v438 = vunpack.c.l.b16 %v256
      %v439 = vunpack.c.l.b16 %v257
      %v440 = vunpack.c.l.b16 %v258
      %v441 = vunpack.c.l.b16 %v259
      %v442 = vunpack.c.l.b16 %v260
      %v443 = vunpack.c.l.b16 %v261
      %v444 = vunpack.c.l.b16 %v262
      %v445 = vunpack.c.l.b16 %v263
      %v446 = vunpack.c.l.b16 %v264
      %v447 = vunpack.c.l.b16 %v265
      %v448 = vunpack.c.l.b16 %v266
      %v449 = vunpack.c.l.b16 %v267
      %v450 = vunpack.c.l.b16 %v268
      %v451 = vunpack.c.l.b16 %v269
      %v452 = vunpack.c.l.b16 %v270
      %v453 = vunpack.c.l.b16 %v271
      %v454 = vunpack.c.l.b16 %v272
      %v455 = vpack.c.b16 %v437, %v436
      %v456 = vpack.c.b16 %v439, %v438
      %v457 = vpack.c.b16 %v441, %v440
      %v458 = vpack.c.b16 %v443, %v442
      %v459 = vpack.c.b16 %v445, %v444
      %v460 = vpack.c.b16 %v447, %v446
      %v461 = vpack.c.b16 %v449, %v448
      %v462 = vpack.c.b16 %v451, %v450
      %v463 = vpack.c.b16 %v453, %v452
      %v464 = vpack.c.b16 %v454, %v454
      %vm474 = vcmask 154624
      %v476 = vsel %vm474, %v370, 0
      %v479 = vsel %vm474, %v372, 0
      %v482 = vsel %vm474, %v374, 0
      %v485 = vsel %vm474, %v376, 0
      %v488 = vsel %vm474, %v378, 0
      %v491 = vsel %vm474, %v380, 0
      %v494 = vsel %vm474, %v382, 0
      %v497 = vsel %vm474, %v384, 0
      %v500 = vsel %vm474, %v386, 0
      %v503 = vsel %vm474, %v388, 0
      %v506 = vsel %vm474, %v390, 0
      %v509 = vsel %vm474, %v392, 0
      %v512 = vsel %vm474, %v394, 0
      %v515 = vsel %vm474, %v396, 0
      %v518 = vsel %vm474, %v398, 0
      %v521 = vsel %vm474, %v400, 0
      %vm523 = vcmask 1040384
      %vm524 = vcmask 1041408
      %v525 = vsel %vm523, 4294967295, 65535
      %v526 = vsel %vm524, %v525, 0
      %v528 = vand.u32 %v464, %v526
      %530 = vmatprep.subr.bf16.mxu0 0
      %531 = vmatpush1.bf16.msra.mxu0 %v462
      %532 = vmatprep.subr.bf16.mxu0 0
      %533 = vmatpush1.bf16.msra.mxu0 %v461
      %534 = vmatprep.subr.bf16.mxu0 0
      %535 = vmatpush1.bf16.msra.mxu0 %v460
      %536 = vmatprep.subr.bf16.mxu0 0
      %537 = vmatpush1.bf16.msra.mxu0 %v459
      %538 = vmatprep.subr.bf16.mxu0 0
      %539 = vmatpush1.bf16.msra.mxu0 %v458
      %540 = vmatprep.subr.bf16.mxu0 0
      %541 = vmatpush1.bf16.msra.mxu0 %v457
      %542 = vmatprep.subr.bf16.mxu0 0
      %543 = vmatpush1.bf16.msra.mxu0 %v456
      %544 = vmatprep.subr.bf16.mxu0 0
      %545 = vmatpush1.bf16.msra.mxu0 %v455
      %546 = vmatprep.subr.bf16.mxu0 0
      %547 = vmatpush2.bf16.msra.mxu0 0
      %548 = vmatprep.subr.bf16.mxu0 0
      %549 = vmatpush2.bf16.msra.mxu0 0
      %550 = vmatprep.subr.bf16.mxu0 0
      %551 = vmatpush2.bf16.msra.mxu0 0
      %552 = vmatprep.subr.bf16.mxu0 0
      %553 = vmatpush2.bf16.msra.mxu0 0
      %554 = vmatprep.subr.bf16.mxu0 0
      %555 = vmatpush2.bf16.msra.mxu0 0
      %556 = vmatprep.subr.bf16.mxu0 0
      %557 = vmatpush2.bf16.msra.mxu0 0
      %558 = vmatprep.subr.bf16.mxu0 0
      %559 = vmatpush2.bf16.msra.mxu0 %v528
      %560 = vmatprep.subr.bf16.mxu0 0
      %561 = vmatpush2.bf16.msra.mxu0 %v463
      %562 = vmatprep.mubr.bf16.mxu0 %v476
      %563 = vmatmul.mubr.bf16.gmra.mxu0 %v369
      %v564 = vpop.f32.mrf.mxu0
      %v565 = vadd.f32 0.0, %v564
      %v566 = vpop.f32.mrf.mxu0
      %v567 = vpop.f32.mrf.mxu0
      %v568 = vadd.f32 0.0, %v567
      %v569 = vpop.f32.mrf.mxu0
      %570 = vmatprep.mubr.bf16.mxu0 %v479
      %571 = vmatmul.mubr.bf16.gmra.mxu0 %v371
      %v572 = vpop.f32.mrf.mxu0
      %v573 = vadd.f32 0.0, %v572
      %v574 = vpop.f32.mrf.mxu0
      %v575 = vpop.f32.mrf.mxu0
      %v576 = vadd.f32 0.0, %v575
      %v577 = vpop.f32.mrf.mxu0
      %578 = vmatprep.mubr.bf16.mxu0 %v482
      %579 = vmatmul.mubr.bf16.gmra.mxu0 %v373
      %v580 = vpop.f32.mrf.mxu0
      %v581 = vadd.f32 0.0, %v580
      %v582 = vpop.f32.mrf.mxu0
      %v583 = vpop.f32.mrf.mxu0
      %v584 = vadd.f32 0.0, %v583
      %v585 = vpop.f32.mrf.mxu0
      %586 = vmatprep.mubr.bf16.mxu0 %v485
      %587 = vmatmul.mubr.bf16.gmra.mxu0 %v375
      %v588 = vpop.f32.mrf.mxu0
      %v589 = vadd.f32 0.0, %v588
      %v590 = vpop.f32.mrf.mxu0
      %v591 = vpop.f32.mrf.mxu0
      %v592 = vadd.f32 0.0, %v591
      %v593 = vpop.f32.mrf.mxu0
      %594 = vmatprep.mubr.bf16.mxu0 %v488
      %595 = vmatmul.mubr.bf16.gmra.mxu0 %v377
      %v596 = vpop.f32.mrf.mxu0
      %v597 = vadd.f32 0.0, %v596
      %v598 = vpop.f32.mrf.mxu0
      %v599 = vpop.f32.mrf.mxu0
      %v600 = vadd.f32 0.0, %v599
      %v601 = vpop.f32.mrf.mxu0
      %602 = vmatprep.mubr.bf16.mxu0 %v491
      %603 = vmatmul.mubr.bf16.gmra.mxu0 %v379
      %v604 = vpop.f32.mrf.mxu0
      %v605 = vadd.f32 0.0, %v604
      %v606 = vpop.f32.mrf.mxu0
      %v607 = vpop.f32.mrf.mxu0
      %v608 = vadd.f32 0.0, %v607
      %v609 = vpop.f32.mrf.mxu0
      %610 = vmatprep.mubr.bf16.mxu0 %v494
      %611 = vmatmul.mubr.bf16.gmra.mxu0 %v381
      %v612 = vpop.f32.mrf.mxu0
      %v613 = vadd.f32 0.0, %v612
      %v614 = vpop.f32.mrf.mxu0
      %v615 = vpop.f32.mrf.mxu0
      %v616 = vadd.f32 0.0, %v615
      %v617 = vpop.f32.mrf.mxu0
      %618 = vmatprep.mubr.bf16.mxu0 %v497
      %619 = vmatmul.mubr.bf16.gmra.mxu0 %v383
      %v620 = vpop.f32.mrf.mxu0
      %v621 = vadd.f32 0.0, %v620
      %v622 = vpop.f32.mrf.mxu0
      %v623 = vpop.f32.mrf.mxu0
      %v624 = vadd.f32 0.0, %v623
      %v625 = vpop.f32.mrf.mxu0
      %626 = vmatprep.mubr.bf16.mxu0 %v500
      %627 = vmatmul.mubr.bf16.gmra.mxu0 %v385
      %v628 = vpop.f32.mrf.mxu0
      %v629 = vadd.f32 0.0, %v628
      %v630 = vpop.f32.mrf.mxu0
      %v631 = vpop.f32.mrf.mxu0
      %v632 = vadd.f32 0.0, %v631
      %v633 = vpop.f32.mrf.mxu0
      %634 = vmatprep.mubr.bf16.mxu0 %v503
      %635 = vmatmul.mubr.bf16.gmra.mxu0 %v387
      %v636 = vpop.f32.mrf.mxu0
      %v637 = vadd.f32 0.0, %v636
      %v638 = vpop.f32.mrf.mxu0
      %v639 = vpop.f32.mrf.mxu0
      %v640 = vadd.f32 0.0, %v639
      %v641 = vpop.f32.mrf.mxu0
      %642 = vmatprep.mubr.bf16.mxu0 %v506
      %643 = vmatmul.mubr.bf16.gmra.mxu0 %v389
      %v644 = vpop.f32.mrf.mxu0
      %v645 = vadd.f32 0.0, %v644
      %v646 = vpop.f32.mrf.mxu0
      %v647 = vpop.f32.mrf.mxu0
      %v648 = vadd.f32 0.0, %v647
      %v649 = vpop.f32.mrf.mxu0
      %650 = vmatprep.mubr.bf16.mxu0 %v509
      %651 = vmatmul.mubr.bf16.gmra.mxu0 %v391
      %v652 = vpop.f32.mrf.mxu0
      %v653 = vadd.f32 0.0, %v652
      %v654 = vpop.f32.mrf.mxu0
      %v655 = vpop.f32.mrf.mxu0
      %v656 = vadd.f32 0.0, %v655
      %v657 = vpop.f32.mrf.mxu0
      %658 = vmatprep.mubr.bf16.mxu0 %v512
      %659 = vmatmul.mubr.bf16.gmra.mxu0 %v393
      %v660 = vpop.f32.mrf.mxu0
      %v661 = vadd.f32 0.0, %v660
      %v662 = vpop.f32.mrf.mxu0
      %v663 = vpop.f32.mrf.mxu0
      %v664 = vadd.f32 0.0, %v663
      %v665 = vpop.f32.mrf.mxu0
      %666 = vmatprep.mubr.bf16.mxu0 %v515
      %667 = vmatmul.mubr.bf16.gmra.mxu0 %v395
      %v668 = vpop.f32.mrf.mxu0
      %v669 = vadd.f32 0.0, %v668
      %v670 = vpop.f32.mrf.mxu0
      %v671 = vpop.f32.mrf.mxu0
      %v672 = vadd.f32 0.0, %v671
      %v673 = vpop.f32.mrf.mxu0
      %674 = vmatprep.mubr.bf16.mxu0 %v518
      %675 = vmatmul.mubr.bf16.gmra.mxu0 %v397
      %v676 = vpop.f32.mrf.mxu0
      %v677 = vadd.f32 0.0, %v676
      %v678 = vpop.f32.mrf.mxu0
      %v679 = vpop.f32.mrf.mxu0
      %v680 = vadd.f32 0.0, %v679
      %v681 = vpop.f32.mrf.mxu0
      %682 = vmatprep.mubr.bf16.mxu0 %v521
      %683 = vmatmul.mubr.bf16.gmra.mxu0 %v399
      %v684 = vpop.f32.mrf.mxu0
      %v685 = vadd.f32 0.0, %v684
      %v686 = vpop.f32.mrf.mxu0
      %v687 = vpop.f32.mrf.mxu0
      %v688 = vadd.f32 0.0, %v687
      %v689 = vpop.f32.mrf.mxu0
      %690 = vdwg.mxu0
      %v691 = vpack.c.bf16 %v568, %v565
      %v692 = vpack.c.bf16 %v576, %v573
      %v693 = vpack.c.bf16 %v584, %v581
      %v694 = vpack.c.bf16 %v592, %v589
      %v695 = vpack.c.bf16 %v600, %v597
      %v696 = vpack.c.bf16 %v608, %v605
      %v697 = vpack.c.bf16 %v616, %v613
      %v698 = vpack.c.bf16 %v624, %v621
      %v699 = vpack.c.bf16 %v632, %v629
      %v700 = vpack.c.bf16 %v640, %v637
      %v701 = vpack.c.bf16 %v648, %v645
      %v702 = vpack.c.bf16 %v656, %v653
      %v703 = vpack.c.bf16 %v664, %v661
      %v704 = vpack.c.bf16 %v672, %v669
      %v705 = vpack.c.bf16 %v680, %v677
      %v706 = vpack.c.bf16 %v688, %v685
      %v723 = vunpack.c.l.b16 %v691
      %v724 = vunpack.c.h.b16 %v691
      %v725 = vunpack.c.l.b16 %v692
      %v726 = vunpack.c.h.b16 %v692
      %v727 = vunpack.c.l.b16 %v693
      %v728 = vunpack.c.h.b16 %v693
      %v729 = vunpack.c.l.b16 %v694
      %v730 = vunpack.c.h.b16 %v694
      %v731 = vunpack.c.l.b16 %v695
      %v732 = vunpack.c.h.b16 %v695
      %v733 = vunpack.c.l.b16 %v696
      %v734 = vunpack.c.h.b16 %v696
      %v735 = vunpack.c.l.b16 %v697
      %v736 = vunpack.c.h.b16 %v697
      %v737 = vunpack.c.l.b16 %v698
      %v738 = vunpack.c.h.b16 %v698
      %v739 = vunpack.c.l.b16 %v699
      %v740 = vunpack.c.h.b16 %v699
      %v741 = vunpack.c.l.b16 %v700
      %v742 = vunpack.c.h.b16 %v700
      %v743 = vunpack.c.l.b16 %v701
      %v744 = vunpack.c.h.b16 %v701
      %v745 = vunpack.c.l.b16 %v702
      %v746 = vunpack.c.h.b16 %v702
      %v747 = vunpack.c.l.b16 %v703
      %v748 = vunpack.c.h.b16 %v703
      %v749 = vunpack.c.l.b16 %v704
      %v750 = vunpack.c.h.b16 %v704
      %v751 = vunpack.c.l.b16 %v705
      %v752 = vunpack.c.h.b16 %v705
      %v753 = vunpack.c.l.b16 %v706
      %v754 = vunpack.c.h.b16 %v706
      %v755 = vpack.c.b16 %v723, %v723
      %v756 = vpack.c.b16 %v724, %v724
      %v757 = vpack.c.b16 %v725, %v725
      %v758 = vpack.c.b16 %v726, %v726
      %v759 = vpack.c.b16 %v727, %v727
      %v760 = vpack.c.b16 %v728, %v728
      %v761 = vpack.c.b16 %v729, %v729
      %v762 = vpack.c.b16 %v730, %v730
      %v763 = vpack.c.b16 %v731, %v731
      %v764 = vpack.c.b16 %v732, %v732
      %v765 = vpack.c.b16 %v733, %v733
      %v766 = vpack.c.b16 %v734, %v734
      %v767 = vpack.c.b16 %v735, %v735
      %v768 = vpack.c.b16 %v736, %v736
      %v769 = vpack.c.b16 %v737, %v737
      %v770 = vpack.c.b16 %v738, %v738
      %v771 = vpack.c.b16 %v739, %v739
      %v772 = vpack.c.b16 %v740, %v740
      %v773 = vpack.c.b16 %v741, %v741
      %v774 = vpack.c.b16 %v742, %v742
      %v775 = vpack.c.b16 %v743, %v743
      %v776 = vpack.c.b16 %v744, %v744
      %v777 = vpack.c.b16 %v745, %v745
      %v778 = vpack.c.b16 %v746, %v746
      %v779 = vpack.c.b16 %v747, %v747
      %v780 = vpack.c.b16 %v748, %v748
      %v781 = vpack.c.b16 %v749, %v749
      %v782 = vpack.c.b16 %v750, %v750
      %v783 = vpack.c.b16 %v751, %v751
      %v784 = vpack.c.b16 %v752, %v752
      %v785 = vpack.c.b16 %v753, %v753
      %v786 = vpack.c.b16 %v754, %v754
      %vm819 = vcmask 27648
      %820 = vst.msk [vmem:[%s213] sm:$0xf] %vm819, %v755
      %821 = vst.msk [vmem:[%s213 + $0x4] sm:$0xf] %vm819, %v756
      %822 = vst.msk [vmem:[%s213 + $0x8] sm:$0xf] %vm819, %v757
      %823 = vst.msk [vmem:[%s213 + $0xc] sm:$0xf] %vm819, %v758
      %824 = vst.msk [vmem:[%s213 + $0x10] sm:$0xf] %vm819, %v759
      %825 = vst.msk [vmem:[%s213 + $0x14] sm:$0xf] %vm819, %v760
      %826 = vst.msk [vmem:[%s213 + $0x18] sm:$0xf] %vm819, %v761
      %827 = vst.msk [vmem:[%s213 + $0x1c] sm:$0xf] %vm819, %v762
      %828 = vst.msk [vmem:[%s213 + $0x20] sm:$0xf] %vm819, %v763
      %829 = vst.msk [vmem:[%s213 + $0x24] sm:$0xf] %vm819, %v764
      %830 = vst.msk [vmem:[%s213 + $0x28] sm:$0xf] %vm819, %v765
      %831 = vst.msk [vmem:[%s213 + $0x2c] sm:$0xf] %vm819, %v766
      %832 = vst.msk [vmem:[%s213 + $0x30] sm:$0xf] %vm819, %v767
      %833 = vst.msk [vmem:[%s213 + $0x34] sm:$0xf] %vm819, %v768
      %834 = vst.msk [vmem:[%s213 + $0x38] sm:$0xf] %vm819, %v769
      %835 = vst.msk [vmem:[%s213 + $0x3c] sm:$0xf] %vm819, %v770
      %836 = vst.msk [vmem:[%s213 + $0x40] sm:$0xf] %vm819, %v771
      %837 = vst.msk [vmem:[%s213 + $0x44] sm:$0xf] %vm819, %v772
      %838 = vst.msk [vmem:[%s213 + $0x48] sm:$0xf] %vm819, %v773
      %839 = vst.msk [vmem:[%s213 + $0x4c] sm:$0xf] %vm819, %v774
      %840 = vst.msk [vmem:[%s213 + $0x50] sm:$0xf] %vm819, %v775
      %841 = vst.msk [vmem:[%s213 + $0x54] sm:$0xf] %vm819, %v776
      %842 = vst.msk [vmem:[%s213 + $0x58] sm:$0xf] %vm819, %v777
      %843 = vst.msk [vmem:[%s213 + $0x5c] sm:$0xf] %vm819, %v778
      %844 = vst.msk [vmem:[%s213 + $0x60] sm:$0xf] %vm819, %v779
      %845 = vst.msk [vmem:[%s213 + $0x64] sm:$0xf] %vm819, %v780
      %846 = vst.msk [vmem:[%s213 + $0x68] sm:$0xf] %vm819, %v781
      %847 = vst.msk [vmem:[%s213 + $0x6c] sm:$0xf] %vm819, %v782
      %848 = vst.msk [vmem:[%s213 + $0x70] sm:$0xf] %vm819, %v783
      %849 = vst.msk [vmem:[%s213 + $0x74] sm:$0xf] %vm819, %v784
      %850 = vst.msk [vmem:[%s213 + $0x78] sm:$0xf] %vm819, %v785
      %851 = vst.msk [vmem:[%s213 + $0x7c] sm:$0xf] %vm819, %v786
      %vm852 = vcmask 31744
      %v853 = vsel %vm852, %v565, 0.0
      %v854 = vsel %vm852, %v568, 0.0
      %v855 = vadd.f32 %v853, %v854
      %v856 = vsel %vm852, %v573, 0.0
      %v857 = vadd.f32 %v855, %v856
      %v858 = vsel %vm852, %v576, 0.0
      %v859 = vadd.f32 %v857, %v858
      %v860 = vsel %vm852, %v581, 0.0
      %v861 = vadd.f32 %v859, %v860
      %v862 = vsel %vm852, %v584, 0.0
      %v863 = vadd.f32 %v861, %v862
      %v864 = vsel %vm852, %v589, 0.0
      %v865 = vadd.f32 %v863, %v864
      %v866 = vsel %vm852, %v592, 0.0
      %v867 = vadd.f32 %v865, %v866
      %v868 = vsel %vm852, %v597, 0.0
      %v869 = vadd.f32 %v867, %v868
      %v870 = vsel %vm852, %v600, 0.0
      %v871 = vadd.f32 %v869, %v870
      %v872 = vsel %vm852, %v605, 0.0
      %v873 = vadd.f32 %v871, %v872
      %v874 = vsel %vm852, %v608, 0.0
      %v875 = vadd.f32 %v873, %v874
      %v876 = vsel %vm852, %v613, 0.0
      %v877 = vadd.f32 %v875, %v876
      %v878 = vsel %vm852, %v616, 0.0
      %v879 = vadd.f32 %v877, %v878
      %v880 = vsel %vm852, %v621, 0.0
      %v881 = vadd.f32 %v879, %v880
      %v882 = vsel %vm852, %v624, 0.0
      %v883 = vadd.f32 %v881, %v882
      %v884 = vsel %vm852, %v629, 0.0
      %v885 = vadd.f32 %v883, %v884
      %v886 = vsel %vm852, %v632, 0.0
      %v887 = vadd.f32 %v885, %v886
      %v888 = vsel %vm852, %v637, 0.0
      %v889 = vadd.f32 %v887, %v888
      %v890 = vsel %vm852, %v640, 0.0
      %v891 = vadd.f32 %v889, %v890
      %v892 = vsel %vm852, %v645, 0.0
      %v893 = vadd.f32 %v891, %v892
      %v894 = vsel %vm852, %v648, 0.0
      %v895 = vadd.f32 %v893, %v894
      %v896 = vsel %vm852, %v653, 0.0
      %v897 = vadd.f32 %v895, %v896
      %v898 = vsel %vm852, %v656, 0.0
      %v899 = vadd.f32 %v897, %v898
      %v900 = vsel %vm852, %v661, 0.0
      %v901 = vadd.f32 %v899, %v900
      %v902 = vsel %vm852, %v664, 0.0
      %v903 = vadd.f32 %v901, %v902
      %v904 = vsel %vm852, %v669, 0.0
      %v905 = vadd.f32 %v903, %v904
      %v906 = vsel %vm852, %v672, 0.0
      %v907 = vadd.f32 %v905, %v906
      %v908 = vsel %vm852, %v677, 0.0
      %v909 = vadd.f32 %v907, %v908
      %v910 = vsel %vm852, %v680, 0.0
      %v911 = vadd.f32 %v909, %v910
      %v912 = vsel %vm852, %v685, 0.0
      %v913 = vadd.f32 %v911, %v912
      %v914 = vsel %vm852, %v688, 0.0
      %v915 = vadd.f32 %v913, %v914
      %v916 = vrot.slane %v915, 4
      %v917 = vadd.f32 %v915, %v916
      %v918 = vrot.slane %v917, 2
      %v919 = vadd.f32 %v917, %v918
      %v920 = vrot.slane %v919, 1
      %v921 = vadd.f32 %v919, %v920
      %vm922 = vcmask 24576
      %923 = vst.msk [vmem:[%s217] sm:$0x1] %vm922, %v921
      %v924 = vmul.f32 %v565, %v565
      %v925 = vmul.f32 %v568, %v568
      %v926 = vmul.f32 %v573, %v573
      %v927 = vmul.f32 %v576, %v576
      %v928 = vmul.f32 %v581, %v581
      %v929 = vmul.f32 %v584, %v584
      %v930 = vmul.f32 %v589, %v589
      %v931 = vmul.f32 %v592, %v592
      %v932 = vmul.f32 %v597, %v597
      %v933 = vmul.f32 %v600, %v600
      %v934 = vmul.f32 %v605, %v605
      %v935 = vmul.f32 %v608, %v608
      %v936 = vmul.f32 %v613, %v613
      %v937 = vmul.f32 %v616, %v616
      %v938 = vmul.f32 %v621, %v621
      %v939 = vmul.f32 %v624, %v624
      %v940 = vmul.f32 %v629, %v629
      %v941 = vmul.f32 %v632, %v632
      %v942 = vmul.f32 %v637, %v637
      %v943 = vmul.f32 %v640, %v640
      %v944 = vmul.f32 %v645, %v645
      %v945 = vmul.f32 %v648, %v648
      %v946 = vmul.f32 %v653, %v653
      %v947 = vmul.f32 %v656, %v656
      %v948 = vmul.f32 %v661, %v661
      %v949 = vmul.f32 %v664, %v664
      %v950 = vmul.f32 %v669, %v669
      %v951 = vmul.f32 %v672, %v672
      %v952 = vmul.f32 %v677, %v677
      %v953 = vmul.f32 %v680, %v680
      %v954 = vmul.f32 %v685, %v685
      %v955 = vmul.f32 %v688, %v688
      %v956 = vsel %vm852, %v924, 0.0
      %v957 = vsel %vm852, %v925, 0.0
      %v958 = vadd.f32 %v956, %v957
      %v959 = vsel %vm852, %v926, 0.0
      %v960 = vadd.f32 %v958, %v959
      %v961 = vsel %vm852, %v927, 0.0
      %v962 = vadd.f32 %v960, %v961
      %v963 = vsel %vm852, %v928, 0.0
      %v964 = vadd.f32 %v962, %v963
      %v965 = vsel %vm852, %v929, 0.0
      %v966 = vadd.f32 %v964, %v965
      %v967 = vsel %vm852, %v930, 0.0
      %v968 = vadd.f32 %v966, %v967
      %v969 = vsel %vm852, %v931, 0.0
      %v970 = vadd.f32 %v968, %v969
      %v971 = vsel %vm852, %v932, 0.0
      %v972 = vadd.f32 %v970, %v971
      %v973 = vsel %vm852, %v933, 0.0
      %v974 = vadd.f32 %v972, %v973
      %v975 = vsel %vm852, %v934, 0.0
      %v976 = vadd.f32 %v974, %v975
      %v977 = vsel %vm852, %v935, 0.0
      %v978 = vadd.f32 %v976, %v977
      %v979 = vsel %vm852, %v936, 0.0
      %v980 = vadd.f32 %v978, %v979
      %v981 = vsel %vm852, %v937, 0.0
      %v982 = vadd.f32 %v980, %v981
      %v983 = vsel %vm852, %v938, 0.0
      %v984 = vadd.f32 %v982, %v983
      %v985 = vsel %vm852, %v939, 0.0
      %v986 = vadd.f32 %v984, %v985
      %v987 = vsel %vm852, %v940, 0.0
      %v988 = vadd.f32 %v986, %v987
      %v989 = vsel %vm852, %v941, 0.0
      %v990 = vadd.f32 %v988, %v989
      %v991 = vsel %vm852, %v942, 0.0
      %v992 = vadd.f32 %v990, %v991
      %v993 = vsel %vm852, %v943, 0.0
      %v994 = vadd.f32 %v992, %v993
      %v995 = vsel %vm852, %v944, 0.0
      %v996 = vadd.f32 %v994, %v995
      %v997 = vsel %vm852, %v945, 0.0
      %v998 = vadd.f32 %v996, %v997
      %v999 = vsel %vm852, %v946, 0.0
      %v1000 = vadd.f32 %v998, %v999
      %v1001 = vsel %vm852, %v947, 0.0
      %v1002 = vadd.f32 %v1000, %v1001
      %v1003 = vsel %vm852, %v948, 0.0
      %v1004 = vadd.f32 %v1002, %v1003
      %v1005 = vsel %vm852, %v949, 0.0
      %v1006 = vadd.f32 %v1004, %v1005
      %v1007 = vsel %vm852, %v950, 0.0
      %v1008 = vadd.f32 %v1006, %v1007
      %v1009 = vsel %vm852, %v951, 0.0
      %v1010 = vadd.f32 %v1008, %v1009
      %v1011 = vsel %vm852, %v952, 0.0
      %v1012 = vadd.f32 %v1010, %v1011
      %v1013 = vsel %vm852, %v953, 0.0
      %v1014 = vadd.f32 %v1012, %v1013
      %v1015 = vsel %vm852, %v954, 0.0
      %v1016 = vadd.f32 %v1014, %v1015
      %v1017 = vsel %vm852, %v955, 0.0
      %v1018 = vadd.f32 %v1016, %v1017
      %v1019 = vrot.slane %v1018, 4
      %v1020 = vadd.f32 %v1018, %v1019
      %v1021 = vrot.slane %v1020, 2
      %v1022 = vadd.f32 %v1020, %v1021
      %v1023 = vrot.slane %v1022, 1
      %v1024 = vadd.f32 %v1022, %v1023
      %1025 = vst.msk [vmem:[%s220] sm:$0x1] %vm922, %v1024
      %s1026 = smul.u32 32, %s16
      %p1027 = scmp.lt.s32.totalorder %s1026, 63
      %s1028 = scalar_select %p1027, %s1026, 63
      %s1029 = smul.addr %s1028, 4
      %s1030 = scalar_lea.vmem %s2, %s1029
      %p1031 = scmp.lt.s32.totalorder %s16, 1
      %s1032 = scalar_select %p1031, %s16, 1
      %s1033 = scalar_lea.vmem %s3, %s1032
      %p1034 = scmp.lt.s32.totalorder %s16, 1
      %s1035 = scalar_select %p1034, %s16, 1
      %s1036 = scalar_lea.vmem %s4, %s1035
      // Predicated region
      $region29: #{parallel_net_forward.26} parent=27 // pred_check
        %p1037 = pneg %p81
      $region30: #{parallel_net_forward.26} parent=27 // pred_check_branch
        %1039 = sbr.rel (%p1037) target = $region32
      $region31: #{parallel_net_forward.26} parent=27 // pred_region
        %s1040 = smul.u32 32, %s16
      $region32: #{parallel_net_forward.26} parent=27 // pred_fallthru
        _
      // Predicated region
      $region33: #{parallel_net_forward.26} parent=27 // pred_check
        %p1041 = pneg %p107
      $region34: #{parallel_net_forward.26} parent=27 // pred_check_branch
        %1043 = sbr.rel (%p1041) target = $region36
      $region35: #{parallel_net_forward.26} parent=27 // pred_region
        _
      $region36: #{parallel_net_forward.26} parent=27 // pred_fallthru
        _
      // Predicated region
      $region37: #{parallel_net_forward.26} parent=27 // pred_check
        %p1044 = pneg %p133
      $region38: #{parallel_net_forward.26} parent=27 // pred_check_branch
        %1046 = sbr.rel (%p1044) target = $region40
      $region39: #{parallel_net_forward.26} parent=27 // pred_region
        _
      $region40: #{parallel_net_forward.26} parent=27 // pred_fallthru
        _
    $region28: #{parallel_net_forward.26} parent=5 // pred_fallthru
      _
    %p1047 = scmp.le.s32.totalorder 2, %s11
    // Predicated region
    $region41: #{parallel_net_forward.26} parent=5 // pred_check
      %p1048 = pneg %p1047
    $region42: #{parallel_net_forward.26} parent=5 // pred_check_branch
      %1050 = sbr.rel (%p1048) target = $region44
    $region43: #{parallel_net_forward.26} parent=5 // pred_region
      %s1051 = ssub.s32 %s11, 2
      // Predicated region
      $region45: #{parallel_net_forward.26} parent=43 // pred_check
        %p1052 = pneg %p87
      $region46: #{parallel_net_forward.26} parent=43 // pred_check_branch
        %1054 = sbr.rel (%p1052) target = $region48
      $region47: #{parallel_net_forward.26} parent=43 // pred_region
        %s1055 = smul.u32 32, %s17
        %p1056 = scmp.lt.s32.totalorder %s1055, 63
        %s1057 = scalar_select %p1056, %s1055, 63
        %s1058 = smul.addr %s1057, 4
        %s1059 = scalar_lea.vmem %s2, %s1058
      $region48: #{parallel_net_forward.26} parent=43 // pred_fallthru
        _
      // Predicated region
      $region49: #{parallel_net_forward.26} parent=43 // pred_check
        %p1060 = pneg %p113
      $region50: #{parallel_net_forward.26} parent=43 // pred_check_branch
        %1062 = sbr.rel (%p1060) target = $region52
      $region51: #{parallel_net_forward.26} parent=43 // pred_region
        %p1063 = scmp.lt.s32.totalorder %s17, 1
        %s1064 = scalar_select %p1063, %s17, 1
        %s1065 = scalar_lea.vmem %s3, %s1064
      $region52: #{parallel_net_forward.26} parent=43 // pred_fallthru
        _
      // Predicated region
      $region53: #{parallel_net_forward.26} parent=43 // pred_check
        %p1066 = pneg %p139
      $region54: #{parallel_net_forward.26} parent=43 // pred_check_branch
        %1068 = sbr.rel (%p1066) target = $region56
      $region55: #{parallel_net_forward.26} parent=43 // pred_region
        %p1069 = scmp.lt.s32.totalorder %s17, 1
        %s1070 = scalar_select %p1069, %s17, 1
        %s1071 = scalar_lea.vmem %s4, %s1070
      $region56: #{parallel_net_forward.26} parent=43 // pred_fallthru
        _
    $region44: #{parallel_net_forward.26} parent=5 // pred_fallthru
      _
  $region6: #{parallel_net_forward.26} parent=0 // loop_footer
    %s15 = sadd.s32 1, %s11
  $region7: #{parallel_net_forward.26} parent=0 // loop_footer_branch
    %10 = sbr.rel target = $region3
  $region8: #{parallel_net_forward.26} parent=0 // loop_exit
    _

// kernel: parallel_net_forward.28
$region0: #{parallel_net_forward.28}
  #allocation0 [shape = 'u32[]', space=smem, size = 0x4, offset = 0x4, fixed_abs, tag = 'smem constant byte address 0x4 - core index']
  #allocation1 [shape = 'u32[144,128]{1,0:T(1,128)}', space=vmem, size = 0x12000, scoped, tag = 'internal scratch']
  %s0 = inlined_call_operand.vmem [shape: f32[9,8,128], index: 0, kind: input, shape index: {}]
  %s1 = inlined_call_operand.vmem [shape: f32[8,128], index: 1, kind: output, shape index: {}]
  %s2 = sld [smem:[#allocation0]]
  $region14: #{parallel_net_forward.28} parent=0
    _
  %s4 = ssub.s32 1, %s2
  %s5 = scalar_select 0, %s4, %s2
  // Predicated region
  $region2: #{parallel_net_forward.28} parent=0 // pred_check
    _
  $region3: #{parallel_net_forward.28} parent=0 // pred_check_branch
    %7 = sbr.rel (0) target = $region5
  $region4: #{parallel_net_forward.28} parent=0 // pred_region
    _
  $region5: #{parallel_net_forward.28} parent=0 // pred_fallthru
    _
  %v8 = vld [vmem:[%s0] sm:$0xff]
  %s9 = scalar_lea.vmem %s0, 8
  %v10 = vld [vmem:[%s9] sm:$0xff]
  %v11 = vmax.f32 %v8, %v10
  %s12 = scalar_lea.vmem %s0, 16
  %v13 = vld [vmem:[%s12] sm:$0xff]
  %v14 = vmax.f32 %v11, %v13
  %s15 = scalar_lea.vmem %s0, 24
  %v16 = vld [vmem:[%s15] sm:$0xff]
  %v17 = vmax.f32 %v14, %v16
  %s18 = scalar_lea.vmem %s0, 32
  %v19 = vld [vmem:[%s18] sm:$0xff]
  %v20 = vmax.f32 %v17, %v19
  %s21 = scalar_lea.vmem %s0, 40
  %v22 = vld [vmem:[%s21] sm:$0xff]
  %v23 = vmax.f32 %v20, %v22
  %s24 = scalar_lea.vmem %s0, 48
  %v25 = vld [vmem:[%s24] sm:$0xff]
  %v26 = vmax.f32 %v23, %v25
  %s27 = scalar_lea.vmem %s0, 56
  %v28 = vld [vmem:[%s27] sm:$0xff]
  %v29 = vmax.f32 %v26, %v28
  %s30 = scalar_lea.vmem %s0, 64
  %v31 = vld [vmem:[%s30] sm:$0xff]
  %v32 = vmax.f32 %v29, %v31
  %33 = vst [vmem:[%s1] sm:$0xff] %v32
  // Predicated region
  $region6: #{parallel_net_forward.28} parent=0 // pred_check
    _
  $region7: #{parallel_net_forward.28} parent=0 // pred_check_branch
    %35 = sbr.rel (0) target = $region9
  $region8: #{parallel_net_forward.28} parent=0 // pred_region
    _
  $region9: #{parallel_net_forward.28} parent=0 // pred_fallthru
    _
  // Predicated region
  $region10: #{parallel_net_forward.28} parent=0 // pred_check
    _
  $region11: #{parallel_net_forward.28} parent=0 // pred_check_branch
    %37 = sbr.rel (0) target = $region13
  $region12: #{parallel_net_forward.28} parent=0 // pred_region
    _
  $region13: #{parallel_net_forward.28} parent=0 // pred_fallthru
    _

// kernel: parallel_net_forward.30
$region0: #{parallel_net_forward.30}
  #allocation0 [shape = 'u32[]', space=smem, size = 0x4, offset = 0x4, fixed_abs, tag = 'smem constant byte address 0x4 - core index']
  #allocation1 [shape = 'u32[144,128]{1,0:T(1,128)}', space=vmem, size = 0x12000, scoped, tag = 'internal scratch']
  %s0 = inlined_call_operand.vmem [shape: bf16[8,128], index: 0, kind: input, shape index: {}]
  %s1 = inlined_call_operand.vmem [shape: f32[1,128], index: 1, kind: input, shape index: {}]
  %s2 = inlined_call_operand.vmem [shape: f32[1,128], index: 2, kind: input, shape index: {}]
  %s3 = inlined_call_operand.vmem [shape: f32[8,128], index: 3, kind: output, shape index: {}]
  %s4 = sld [smem:[#allocation0]]
  $region22: #{parallel_net_forward.30} parent=0
    _
  %s6 = ssub.s32 1, %s4
  %s7 = scalar_select 0, %s6, %s4
  // Predicated region
  $region2: #{parallel_net_forward.30} parent=0 // pred_check
    _
  $region3: #{parallel_net_forward.30} parent=0 // pred_check_branch
    %9 = sbr.rel (0) target = $region5
  $region4: #{parallel_net_forward.30} parent=0 // pred_region
    _
  $region5: #{parallel_net_forward.30} parent=0 // pred_fallthru
    _
  // Predicated region
  $region6: #{parallel_net_forward.30} parent=0 // pred_check
    _
  $region7: #{parallel_net_forward.30} parent=0 // pred_check_branch
    %11 = sbr.rel (0) target = $region9
  $region8: #{parallel_net_forward.30} parent=0 // pred_region
    _
  $region9: #{parallel_net_forward.30} parent=0 // pred_fallthru
    _
  // Predicated region
  $region10: #{parallel_net_forward.30} parent=0 // pred_check
    _
  $region11: #{parallel_net_forward.30} parent=0 // pred_check_branch
    %13 = sbr.rel (0) target = $region13
  $region12: #{parallel_net_forward.30} parent=0 // pred_region
    _
  $region13: #{parallel_net_forward.30} parent=0 // pred_fallthru
    _
  %v14 = vld [vmem:[%s0] sm:$0xf]
  %v15 = vunpack.c.l.bf16 %v14
  %v16 = vld [vmem:[%s1] sm:$0x1]
  %v18 = vlaneseq
  %v19 = vshrl.u32 %v18, 7
  %v20 = vsub.s32 0, %v19
  %v21 = vrot.slane %v16, %v20
  %v23 = vmul.f32 %v15, %v21
  %v24 = vld [vmem:[%s2] sm:$0x1]
  %v26 = vlaneseq
  %v27 = vshrl.u32 %v26, 7
  %v28 = vsub.s32 0, %v27
  %v29 = vrot.slane %v24, %v28
  %v31 = vadd.f32 %v23, %v29
  %v32 = vmax.f32 %v31, 0.0
  %33 = vst [vmem:[%s3] sm:$0xff] %v32
  // Predicated region
  $region14: #{parallel_net_forward.30} parent=0 // pred_check
    _
  $region15: #{parallel_net_forward.30} parent=0 // pred_check_branch
    %35 = sbr.rel (0) target = $region17
  $region16: #{parallel_net_forward.30} parent=0 // pred_region
    _
  $region17: #{parallel_net_forward.30} parent=0 // pred_fallthru
    _
  // Predicated region
  $region18: #{parallel_net_forward.30} parent=0 // pred_check
    _
  $region19: #{parallel_net_forward.30} parent=0 // pred_check_branch
    %37 = sbr.rel (0) target = $region21
  $region20: #{parallel_net_forward.30} parent=0 // pred_region
    _
  $region21: #{parallel_net_forward.30} parent=0 // pred_fallthru
    _

// kernel: parallel_net_forward.32
$region0: #{parallel_net_forward.32}
  #allocation0 [shape = 'u32[]', space=smem, size = 0x4, offset = 0x4, fixed_abs, tag = 'smem constant byte address 0x4 - core index']
  #allocation1 [shape = 'u32[144,128]{1,0:T(1,128)}', space=vmem, size = 0x12000, scoped, tag = 'internal scratch']
  %s0 = inlined_call_operand.vmem [shape: bf16[8,128], index: 0, kind: input, shape index: {}]
  %s1 = inlined_call_operand.vmem [shape: f32[1,128], index: 1, kind: input, shape index: {}]
  %s2 = inlined_call_operand.vmem [shape: f32[1,128], index: 2, kind: input, shape index: {}]
  %s3 = inlined_call_operand.vmem [shape: f32[8,128], index: 3, kind: input, shape index: {}]
  %s4 = inlined_call_operand.vmem [shape: f32[8,128], index: 4, kind: output, shape index: {}]
  %s5 = sld [smem:[#allocation0]]
  $region26: #{parallel_net_forward.32} parent=0
    _
  %s7 = ssub.s32 1, %s5
  %s8 = scalar_select 0, %s7, %s5
  // Predicated region
  $region2: #{parallel_net_forward.32} parent=0 // pred_check
    _
  $region3: #{parallel_net_forward.32} parent=0 // pred_check_branch
    %10 = sbr.rel (0) target = $region5
  $region4: #{parallel_net_forward.32} parent=0 // pred_region
    _
  $region5: #{parallel_net_forward.32} parent=0 // pred_fallthru
    _
  // Predicated region
  $region6: #{parallel_net_forward.32} parent=0 // pred_check
    _
  $region7: #{parallel_net_forward.32} parent=0 // pred_check_branch
    %12 = sbr.rel (0) target = $region9
  $region8: #{parallel_net_forward.32} parent=0 // pred_region
    _
  $region9: #{parallel_net_forward.32} parent=0 // pred_fallthru
    _
  // Predicated region
  $region10: #{parallel_net_forward.32} parent=0 // pred_check
    _
  $region11: #{parallel_net_forward.32} parent=0 // pred_check_branch
    %14 = sbr.rel (0) target = $region13
  $region12: #{parallel_net_forward.32} parent=0 // pred_region
    _
  $region13: #{parallel_net_forward.32} parent=0 // pred_fallthru
    _
  // Predicated region
  $region14: #{parallel_net_forward.32} parent=0 // pred_check
    _
  $region15: #{parallel_net_forward.32} parent=0 // pred_check_branch
    %16 = sbr.rel (0) target = $region17
  $region16: #{parallel_net_forward.32} parent=0 // pred_region
    _
  $region17: #{parallel_net_forward.32} parent=0 // pred_fallthru
    _
  %v17 = vld [vmem:[%s0] sm:$0xf]
  %v18 = vunpack.c.l.bf16 %v17
  %v19 = vld [vmem:[%s1] sm:$0x1]
  %v21 = vlaneseq
  %v22 = vshrl.u32 %v21, 7
  %v23 = vsub.s32 0, %v22
  %v24 = vrot.slane %v19, %v23
  %v26 = vmul.f32 %v18, %v24
  %v27 = vld [vmem:[%s2] sm:$0x1]
  %v29 = vlaneseq
  %v30 = vshrl.u32 %v29, 7
  %v31 = vsub.s32 0, %v30
  %v32 = vrot.slane %v27, %v31
  %v34 = vadd.f32 %v26, %v32
  %v35 = vmax.f32 %v34, 0.0
  %v36 = vld [vmem:[%s3] sm:$0xff]
  %v37 = vmul.f32 %v35, 0.125
  %v38 = vadd.f32 %v36, %v37
  %39 = vst [vmem:[%s4] sm:$0xff] %v38
  // Predicated region
  $region18: #{parallel_net_forward.32} parent=0 // pred_check
    _
  $region19: #{parallel_net_forward.32} parent=0 // pred_check_branch
    %41 = sbr.rel (0) target = $region21
  $region20: #{parallel_net_forward.32} parent=0 // pred_region
    _
  $region21: #{parallel_net_forward.32} parent=0 // pred_fallthru
    _
  // Predicated region
  $region22: #{parallel_net_forward.32} parent=0 // pred_check
    _
  $region23: #{parallel_net_forward.32} parent=0 // pred_check_branch
    %43 = sbr.rel (0) target = $region25
  $region24: #{parallel_net_forward.32} parent=0 // pred_region
    _
  $region25: #{parallel_net_forward.32} parent=0 // pred_fallthru
    _

// kernel: parallel_net_forward.29
$region0: #{parallel_net_forward.29}
  #allocation0 [shape = 'u32[]', space=smem, size = 0x4, offset = 0x4, fixed_abs, tag = 'smem constant byte address 0x4 - core index']
  #allocation1 [shape = 'u32[144,128]{1,0:T(1,128)}', space=vmem, size = 0x12000, scoped, tag = 'internal scratch']
  %s0 = inlined_call_operand.vmem [shape: bf16[2,120,4], index: 0, kind: input, shape index: {}]
  %s1 = inlined_call_operand.vmem [shape: bf16[9,4,4], index: 1, kind: input, shape index: {}]
  %s2 = inlined_call_operand.vmem [shape: f32[80,1], index: 2, kind: input, shape index: {}]
  %s3 = inlined_call_operand.vmem [shape: bf16[2,80,4], index: 3, kind: output, shape index: {0}]
  %s4 = inlined_call_operand.vmem [shape: f32[2,1,4], index: 4, kind: output, shape index: {1}]
  %s5 = inlined_call_operand.vmem [shape: f32[2,1,4], index: 5, kind: output, shape index: {2}]
  %6 = xla_tuple %s3, %s4, %s5
  %s7 = sld [smem:[#allocation0]]
  $region61: #{parallel_net_forward.29} parent=0
    _
  %s9 = ssub.s32 1, %s7
  %s10 = scalar_select 0, %s9, %s7
  loop: start=0, step=1, limit=4
  $region2: #{parallel_net_forward.29} parent=0 // loop_pre_header
    _
  $region3: #{parallel_net_forward.29} parent=0 // loop_header
    %s12 = sphi 0, %s16
    %p13 = scmp.ge.s32.totalorder %s12, 4
    %s22 = sphi 0, %s24
    %s25 = sphi 0, %s22
    %s26 = sphi 0, %s25
    %s42 = sphi 0, %s26
    %s46 = sphi 0, %s46
    %s48 = sphi 0, %s46
    %s49 = sphi 0, %s48
    %s63 = sphi 0, %s49
    %s67 = sphi 0, %s67
    %s69 = sphi 0, %s67
    %s70 = sphi 0, %s69
    %s84 = sphi 0, %s70
    %s90 = sphi 0, %s92
    %s93 = sphi 0, %s90
    %s94 = sphi 0, %s93
    %s110 = sphi 0, %s94
    %s116 = sphi 0, %s118
    %s119 = sphi 0, %s116
    %s120 = sphi 0, %s119
    %s136 = sphi 0, %s120
    %s142 = sphi 0, %s144
    %s145 = sphi 0, %s142
    %s146 = sphi 0, %s145
    %s162 = sphi 0, %s146
  $region4: #{parallel_net_forward.29} parent=0 // loop_header_branch
    %15 = sbr.rel (%p13) target = $region8
  $region5: #{parallel_net_forward.29} parent=0 // loop_body
    %s17 = ssub.s32 %s12, 1
    %s18 = ssub.s32 %s12, 2
    %s19 = sadd.s32 %s12, 1
    %s20 = ssub.s32 %s12, %s19
    %p21 = scmp.eq.s32.totalorder %s20, 0
    %s23 = sadd.s32 %s22, 1
    %s24 = scalar_select %p21, %s22, %s23
    %p27 = pneg %p21
    %p28 = scmp.eq.s32.totalorder %s12, 1
    %p29 = por %p27, %p28
    %p30 = scmp.ne.s32.totalorder %s22, %s25
    %p31 = scmp.eq.s32.totalorder %s12, 0
    %p32 = por %p30, %p31
    %p33 = scmp.ne.s32.totalorder %s22, %s25
    %p34 = scmp.eq.s32.totalorder %s17, 1
    %p35 = por %p33, %p34
    %p36 = scmp.ne.s32.totalorder %s25, %s26
    %p37 = scmp.eq.s32.totalorder %s17, 0
    %p38 = por %p36, %p37
    %p39 = scmp.ne.s32.totalorder %s25, %s26
    %p40 = scmp.eq.s32.totalorder %s18, 1
    %p41 = por %p39, %p40
    %p43 = scmp.ne.s32.totalorder %s26, %s42
    %p44 = scmp.eq.s32.totalorder %s18, 0
    %p45 = por %p43, %p44
    %s47 = sadd.s32 %s46, 1
    %p50 = scmp.eq.s32.totalorder %s12, 1
    %p51 = scmp.ne.s32.totalorder %s46, %s48
    %p52 = scmp.eq.s32.totalorder %s12, 0
    %p53 = por %p51, %p52
    %p54 = scmp.ne.s32.totalorder %s46, %s48
    %p55 = scmp.eq.s32.totalorder %s17, 1
    %p56 = por %p54, %p55
    %p57 = scmp.ne.s32.totalorder %s48, %s49
    %p58 = scmp.eq.s32.totalorder %s17, 0
    %p59 = por %p57, %p58
    %p60 = scmp.ne.s32.totalorder %s48, %s49
    %p61 = scmp.eq.s32.totalorder %s18, 1
    %p62 = por %p60, %p61
    %p64 = scmp.ne.s32.totalorder %s49, %s63
    %p65 = scmp.eq.s32.totalorder %s18, 0
    %p66 = por %p64, %p65
    %s68 = sadd.s32 %s67, 1
    %p71 = scmp.eq.s32.totalorder %s12, 1
    %p72 = scmp.ne.s32.totalorder %s67, %s69
    %p73 = scmp.eq.s32.totalorder %s12, 0
    %p74 = por %p72, %p73
    %p75 = scmp.ne.s32.totalorder %s67, %s69
    %p76 = scmp.eq.s32.totalorder %s17, 1
    %p77 = por %p75, %p76
    %p78 = scmp.ne.s32.totalorder %s69, %s70
    %p79 = scmp.eq.s32.totalorder %s17, 0
    %p80 = por %p78, %p79
    %p81 = scmp.ne.s32.totalorder %s69, %s70
    %p82 = scmp.eq.s32.totalorder %s18, 1
    %p83 = por %p81, %p82
    %p85 = scmp.ne.s32.totalorder %s70, %s84
    %p86 = scmp.eq.s32.totalorder %s18, 0
    %p87 = por %p85, %p86
    %s88 = ssub.s32 %s12, %s19
    %p89 = scmp.eq.s32.totalorder %s88, 0
    %s91 = sadd.s32 %s90, 1
    %s92 = scalar_select %p89, %s90, %s91
    %p95 = pneg %p89
    %p96 = scmp.eq.s32.totalorder %s12, 1
    %p97 = por %p95, %p96
    %p98 = scmp.ne.s32.totalorder %s90, %s93
    %p99 = scmp.eq.s32.totalorder %s12, 0
    %p100 = por %p98, %p99
    %p101 = scmp.ne.s32.totalorder %s90, %s93
    %p102 = scmp.eq.s32.totalorder %s17, 1
    %p103 = por %p101, %p102
    %p104 = scmp.ne.s32.totalorder %s93, %s94
    %p105 = scmp.eq.s32.totalorder %s17, 0
    %p106 = por %p104, %p105
    %p107 = scmp.ne.s32.totalorder %s93, %s94
    %p108 = scmp.eq.s32.totalorder %s18, 1
    %p109 = por %p107, %p108
    %p111 = scmp.ne.s32.totalorder %s94, %s110
    %p112 = scmp.eq.s32.totalorder %s18, 0
    %p113 = por %p111, %p112
    %s114 = ssub.s32 %s12, %s19
    %p115 = scmp.eq.s32.totalorder %s114, 0
    %s117 = sadd.s32 %s116, 1
    %s118 = scalar_select %p115, %s116, %s117
    %p121 = pneg %p115
    %p122 = scmp.eq.s32.totalorder %s12, 1
    %p123 = por %p121, %p122
    %p124 = scmp.ne.s32.totalorder %s116, %s119
    %p125 = scmp.eq.s32.totalorder %s12, 0
    %p126 = por %p124, %p125
    %p127 = scmp.ne.s32.totalorder %s116, %s119
    %p128 = scmp.eq.s32.totalorder %s17, 1
    %p129 = por %p127, %p128
    %p130 = scmp.ne.s32.totalorder %s119, %s120
    %p131 = scmp.eq.s32.totalorder %s17, 0
    %p132 = por %p130, %p131
    %p133 = scmp.ne.s32.totalorder %s119, %s120
    %p134 = scmp.eq.s32.totalorder %s18, 1
    %p135 = por %p133, %p134
    %p137 = scmp.ne.s32.totalorder %s120, %s136
    %p138 = scmp.eq.s32.totalorder %s18, 0
    %p139 = por %p137, %p138
    %s140 = ssub.s32 %s12, %s19
    %p141 = scmp.eq.s32.totalorder %s140, 0
    %s143 = sadd.s32 %s142, 1
    %s144 = scalar_select %p141, %s142, %s143
    %p147 = pneg %p141
    %p148 = scmp.eq.s32.totalorder %s12, 1
    %p149 = por %p147, %p148
    %p150 = scmp.ne.s32.totalorder %s142, %s145
    %p151 = scmp.eq.s32.totalorder %s12, 0
    %p152 = por %p150, %p151
    %p153 = scmp.ne.s32.totalorder %s142, %s145
    %p154 = scmp.eq.s32.totalorder %s17, 1
    %p155 = por %p153, %p154
    %p156 = scmp.ne.s32.totalorder %s145, %s146
    %p157 = scmp.eq.s32.totalorder %s17, 0
    %p158 = por %p156, %p157
    %p159 = scmp.ne.s32.totalorder %s145, %s146
    %p160 = scmp.eq.s32.totalorder %s18, 1
    %p161 = por %p159, %p160
    %p163 = scmp.ne.s32.totalorder %s146, %s162
    %p164 = scmp.eq.s32.totalorder %s18, 0
    %p165 = por %p163, %p164
    %p166 = scmp.le.s32.totalorder 1, %s12
    %p167 = scmp.lt.s32.totalorder %s12, 3
    %p168 = pnand %p166, %p167
    %p169 = pneg %p168
    // Predicated region
    $region9: #{parallel_net_forward.29} parent=5 // pred_check
      _
    $region10: #{parallel_net_forward.29} parent=5 // pred_check_branch
      %171 = sbr.rel (%p168) target = $region12
    $region11: #{parallel_net_forward.29} parent=5 // pred_region
      %s172 = ssub.s32 %s12, 1
      // Predicated region
      $region13: #{parallel_net_forward.29} parent=11 // pred_check
        %p173 = pneg %p59
      $region14: #{parallel_net_forward.29} parent=11 // pred_check_branch
        %175 = sbr.rel (%p173) target = $region16
      $region15: #{parallel_net_forward.29} parent=11 // pred_region
        _
      $region16: #{parallel_net_forward.29} parent=11 // pred_fallthru
        _
      // Predicated region
      $region17: #{parallel_net_forward.29} parent=11 // pred_check
        %p176 = pneg %p80
      $region18: #{parallel_net_forward.29} parent=11 // pred_check_branch
        %178 = sbr.rel (%p176) target = $region20
      $region19: #{parallel_net_forward.29} parent=11 // pred_region
        _
      $region20: #{parallel_net_forward.29} parent=11 // pred_fallthru
        _
    $region12: #{parallel_net_forward.29} parent=5 // pred_fallthru
      _
    %p179 = scmp.lt.s32.totalorder %s12, 2
    // Predicated region
    $region21: #{parallel_net_forward.29} parent=5 // pred_check
      %p180 = pneg %p179
    $region22: #{parallel_net_forward.29} parent=5 // pred_check_branch
      %182 = sbr.rel (%p180) target = $region24
    $region23: #{parallel_net_forward.29} parent=5 // pred_region
      // Predicated region
      $region25: #{parallel_net_forward.29} parent=23 // pred_check
        %p183 = pneg %p32
      $region26: #{parallel_net_forward.29} parent=23 // pred_check_branch
        %185 = sbr.rel (%p183) target = $region28
      $region27: #{parallel_net_forward.29} parent=23 // pred_region
        %p186 = scmp.lt.s32.totalorder %s12, 1
        %s187 = scalar_select %p186, %s12, 1
        %s188 = smul.addr %s187, 15
        %s189 = smul.addr %s188, 4
        %s190 = scalar_lea.vmem %s0, %s189
      $region28: #{parallel_net_forward.29} parent=23 // pred_fallthru
        _
    $region24: #{parallel_net_forward.29} parent=5 // pred_fallthru
      _
    %p191 = scmp.le.s32.totalorder 1, %s12
    %p192 = scmp.lt.s32.totalorder %s12, 3
    %p193 = pnand %p191, %p192
    %p194 = pneg %p193
    // Predicated region
    $region29: #{parallel_net_forward.29} parent=5 // pred_check
      _
    $region30: #{parallel_net_forward.29} parent=5 // pred_check_branch
      %196 = sbr.rel (%p193) target = $region32
    $region31: #{parallel_net_forward.29} parent=5 // pred_region
      %s197 = ssub.s32 %s12, 1
      %p198 = scmp.lt.s32.totalorder %s17, 1
      %s199 = scalar_select %p198, %s17, 1
      %s200 = smul.addr %s199, 15
      %s201 = smul.addr %s200, 4
      %s202 = scalar_lea.vmem %s0, %s201
      %p203 = pneg %p38
      %p204 = pneg %p35
      %p205 = pneg %p59
      %p206 = pneg %p56
      %p207 = pneg %p80
      %p208 = pneg %p77
      %p209 = pneg %p106
      %p210 = pneg %p103
      %p211 = scmp.lt.s32.totalorder %s17, 1
      %s212 = scalar_select %p211, %s17, 1
      %s213 = smul.addr %s212, 10
      %s214 = smul.addr %s213, 4
      %s215 = scalar_lea.vmem %s3, %s214
      %p216 = pneg %p132
      %p217 = pneg %p129
      %p218 = scmp.lt.s32.totalorder %s17, 1
      %s219 = scalar_select %p218, %s17, 1
      %s220 = scalar_lea.vmem %s4, %s219
      %p221 = pneg %p158
      %p222 = pneg %p155
      %p223 = scmp.lt.s32.totalorder %s17, 1
      %s224 = scalar_select %p223, %s17, 1
      %s225 = scalar_lea.vmem %s5, %s224
      %p226 = scmp.lt.s32.totalorder %s17, 1
      %s227 = scalar_select %p226, %s17, 1
      %s228 = smul.addr %s227, 15
      %s229 = smul.addr %s228, 4
      %s230 = scalar_lea.vmem %s0, %s229
      %p231 = scmp.lt.s32.totalorder %s17, 1
      %s232 = scalar_select %p231, %s17, 1
      %s233 = smul.addr %s232, 10
      %s234 = smul.addr %s233, 4
      %s235 = scalar_lea.vmem %s3, %s234
      %p236 = scmp.lt.s32.totalorder %s17, 1
      %s237 = scalar_select %p236, %s17, 1
      %s238 = scalar_lea.vmem %s4, %s237
      %p239 = scmp.lt.s32.totalorder %s17, 1
      %s240 = scalar_select %p239, %s17, 1
      %s241 = scalar_lea.vmem %s5, %s240
      %v243 = vld [vmem:[%s230 + $0x4] sm:$0xf]
      %v244 = vld [vmem:[%s230 + $0x8] sm:$0xf]
      %v245 = vld [vmem:[%s230 + $0xc] sm:$0xf]
      %v246 = vld [vmem:[%s230 + $0x10] sm:$0xf]
      %v247 = vld [vmem:[%s230 + $0x14] sm:$0xf]
      %v248 = vld [vmem:[%s230 + $0x18] sm:$0xf]
      %v249 = vld [vmem:[%s230 + $0x1c] sm:$0xf]
      %v250 = vld [vmem:[%s230 + $0x20] sm:$0xf]
      %v251 = vld [vmem:[%s230 + $0x24] sm:$0xf]
      %v252 = vld [vmem:[%s230 + $0x28] sm:$0xf]
      %v253 = vld [vmem:[%s230 + $0x2c] sm:$0x1]
      %v254 = vld [vmem:[%s1] sm:$0x3]
      %v255 = vld [vmem:[%s230 + $0x4] sm:$0xe]
      %s256 = scalar_lea.vmem %s1, 2
      %v257 = vld [vmem:[%s256] sm:$0x3]
      %v269 = vunpack.c.l.b16 %v255
      %v270 = vunpack.c.l.b16 %v244
      %v271 = vunpack.c.l.b16 %v245
      %v272 = vunpack.c.l.b16 %v246
      %v273 = vunpack.c.l.b16 %v247
      %v274 = vunpack.c.l.b16 %v248
      %v275 = vunpack.c.l.b16 %v249
      %v276 = vunpack.c.l.b16 %v250
      %v277 = vunpack.c.l.b16 %v251
      %v278 = vunpack.c.l.b16 %v252
      %v279 = vunpack.c.l.b16 %v253
      %v280 = vpack.c.b16 %v270, %v269
      %v281 = vpack.c.b16 %v272, %v271
      %v282 = vpack.c.b16 %v274, %v273
      %v283 = vpack.c.b16 %v276, %v275
      %v284 = vpack.c.b16 %v278, %v277
      %v285 = vpack.c.b16 %v279, %v279
      %vm286 = vcmask 1046528
      %v287 = vrot.slane %v280, 1
      %v288 = vrot.slane %v281, 1
      %v289 = vsel %vm286, %v287, %v288
      %v290 = vrot.slane %v282, 1
      %v291 = vsel %vm286, %v288, %v290
      %v292 = vrot.slane %v283, 1
      %v293 = vsel %vm286, %v290, %v292
      %v294 = vrot.slane %v284, 1
      %v295 = vsel %vm286, %v292, %v294
      %v296 = vrot.slane %v285, 1
      %v297 = vsel %vm286, %v294, %v296
      %vm298 = vcmask 31744
      %v300 = vsel %vm298, %v289, 0
      %v303 = vsel %vm298, %v291, 0
      %v306 = vsel %vm298, %v293, 0
      %v309 = vsel %vm298, %v295, 0
      %v312 = vsel %vm298, %v297, 0
      %vm314 = vcmask 1041408
      %v316 = vsel %vm314, %v257, 0
      %318 = vmatprep.subr.bf16.mxu0 0
      %319 = vmatpush1.bf16.msra.mxu0 0
      %320 = vmatprep.subr.bf16.mxu0 0
      %321 = vmatpush1.bf16.msra.mxu0 0
      %322 = vmatprep.subr.bf16.mxu0 0
      %323 = vmatpush1.bf16.msra.mxu0 0
      %324 = vmatprep.subr.bf16.mxu0 0
      %325 = vmatpush1.bf16.msra.mxu0 0
      %326 = vmatprep.subr.bf16.mxu0 0
      %327 = vmatpush1.bf16.msra.mxu0 0
      %328 = vmatprep.subr.bf16.mxu0 0
      %329 = vmatpush1.bf16.msra.mxu0 0
      %330 = vmatprep.subr.bf16.mxu0 0
      %331 = vmatpush1.bf16.msra.mxu0 0
      %332 = vmatprep.subr.bf16.mxu0 0
      %333 = vmatpush1.bf16.msra.mxu0 %v316
      %334 = vmatprep.subr.bf16.mxu0 0
      %335 = vmatpush2.bf16.msra.mxu0 0
      %336 = vmatprep.subr.bf16.mxu0 0
      %337 = vmatpush2.bf16.msra.mxu0 0
      %338 = vmatprep.subr.bf16.mxu0 0
      %339 = vmatpush2.bf16.msra.mxu0 0
      %340 = vmatprep.subr.bf16.mxu0 0
      %341 = vmatpush2.bf16.msra.mxu0 0
      %342 = vmatprep.subr.bf16.mxu0 0
      %343 = vmatpush2.bf16.msra.mxu0 0
      %344 = vmatprep.subr.bf16.mxu0 0
      %345 = vmatpush2.bf16.msra.mxu0 0
      %346 = vmatprep.subr.bf16.mxu0 0
      %347 = vmatpush2.bf16.msra.mxu0 0
      %348 = vmatprep.subr.bf16.mxu0 0
      %349 = vmatpush2.bf16.msra.mxu0 0
      %350 = vmatprep.mubr.bf16.mxu0 0
      %351 = vmatmul.mubr.bf16.gmra.mxu0 %v300
      %v352 = vpop.f32.mrf.mxu0
      %v353 = vadd.f32 0.0, %v352
      %v354 = vpop.f32.mrf.mxu0
      %v355 = vpop.f32.mrf.mxu0
      %v356 = vadd.f32 0.0, %v355
      %v357 = vpop.f32.mrf.mxu0
      %358 = vmatprep.mubr.bf16.mxu0 0
      %359 = vmatmul.mubr.bf16.gmra.mxu0 %v303
      %v360 = vpop.f32.mrf.mxu0
      %v361 = vadd.f32 0.0, %v360
      %v362 = vpop.f32.mrf.mxu0
      %v363 = vpop.f32.mrf.mxu0
      %v364 = vadd.f32 0.0, %v363
      %v365 = vpop.f32.mrf.mxu0
      %366 = vmatprep.mubr.bf16.mxu0 0
      %367 = vmatmul.mubr.bf16.gmra.mxu0 %v306
      %v368 = vpop.f32.mrf.mxu0
      %v369 = vadd.f32 0.0, %v368
      %v370 = vpop.f32.mrf.mxu0
      %v371 = vpop.f32.mrf.mxu0
      %v372 = vadd.f32 0.0, %v371
      %v373 = vpop.f32.mrf.mxu0
      %374 = vmatprep.mubr.bf16.mxu0 0
      %375 = vmatmul.mubr.bf16.gmra.mxu0 %v309
      %v376 = vpop.f32.mrf.mxu0
      %v377 = vadd.f32 0.0, %v376
      %v378 = vpop.f32.mrf.mxu0
      %v379 = vpop.f32.mrf.mxu0
      %v380 = vadd.f32 0.0, %v379
      %v381 = vpop.f32.mrf.mxu0
      %382 = vmatprep.mubr.bf16.mxu0 0
      %383 = vmatmul.mubr.bf16.gmra.mxu0 %v312
      %v384 = vpop.f32.mrf.mxu0
      %v385 = vadd.f32 0.0, %v384
      %v386 = vpop.f32.mrf.mxu0
      %v387 = vpop.f32.mrf.mxu0
      %v388 = vadd.f32 0.0, %v387
      %v389 = vpop.f32.mrf.mxu0
      %390 = vdwg.mxu0
      %v392 = vunpack.c.l.b16 %v243
      %v393 = vpack.c.b16 %v270, %v392
      %vm394 = vsmask.f32 7424
      %v396 = vshrl.u32 %v393, 16
      %v398 = vshll.u32 %v393, 16
      %v400 = vrot.slane %v398, 1
      %v401 = vor.u32 %v396, %v400
      %v403 = vshll.u32 %v281, 16
      %v405 = vrot.slane %v403, 1
      %v406 = vsel %vm394, %v401, %v405
      %v407 = vshrl.u32 %v281, 16
      %v409 = vor.u32 %v407, %v405
      %v411 = vshll.u32 %v282, 16
      %v413 = vrot.slane %v411, 1
      %v414 = vsel %vm394, %v409, %v413
      %v415 = vshrl.u32 %v282, 16
      %v417 = vor.u32 %v415, %v413
      %v419 = vshll.u32 %v283, 16
      %v421 = vrot.slane %v419, 1
      %v422 = vsel %vm394, %v417, %v421
      %v423 = vshrl.u32 %v283, 16
      %v425 = vor.u32 %v423, %v421
      %v427 = vshll.u32 %v284, 16
      %v429 = vrot.slane %v427, 1
      %v430 = vsel %vm394, %v425, %v429
      %v431 = vshrl.u32 %v284, 16
      %v433 = vor.u32 %v431, %v429
      %v435 = vshll.u32 %v285, 16
      %v437 = vrot.slane %v435, 1
      %v438 = vsel %vm394, %v433, %v437
      %v440 = vsel %vm298, %v406, 0
      %v443 = vsel %vm298, %v414, 0
      %v446 = vsel %vm298, %v422, 0
      %v449 = vsel %vm298, %v430, 0
      %v452 = vsel %vm298, %v438, 0
      %v455 = vsel %vm314, %v254, 0
      %457 = vmatprep.subr.bf16.mxu0 0
      %458 = vmatpush1.bf16.msra.mxu0 0
      %459 = vmatprep.subr.bf16.mxu0 0
      %460 = vmatpush1.bf16.msra.mxu0 0
      %461 = vmatprep.subr.bf16.mxu0 0
      %462 = vmatpush1.bf16.msra.mxu0 0
      %463 = vmatprep.subr.bf16.mxu0 0
      %464 = vmatpush1.bf16.msra.mxu0 0
      %465 = vmatprep.subr.bf16.mxu0 0
      %466 = vmatpush1.bf16.msra.mxu0 0
      %467 = vmatprep.subr.bf16.mxu0 0
      %468 = vmatpush1.bf16.msra.mxu0 0
      %469 = vmatprep.subr.bf16.mxu0 0
      %470 = vmatpush1.bf16.msra.mxu0 0
      %471 = vmatprep.subr.bf16.mxu0 0
      %472 = vmatpush1.bf16.msra.mxu0 %v455
      %473 = vmatprep.subr.bf16.mxu0 0
      %474 = vmatpush2.bf16.msra.mxu0 0
      %475 = vmatprep.subr.bf16.mxu0 0
      %476 = vmatpush2.bf16.msra.mxu0 0
      %477 = vmatprep.subr.bf16.mxu0 0
      %478 = vmatpush2.bf16.msra.mxu0 0
      %479 = vmatprep.subr.bf16.mxu0 0
      %480 = vmatpush2.bf16.msra.mxu0 0
      %481 = vmatprep.subr.bf16.mxu0 0
      %482 = vmatpush2.bf16.msra.mxu0 0
      %483 = vmatprep.subr.bf16.mxu0 0
      %484 = vmatpush2.bf16.msra.mxu0 0
      %485 = vmatprep.subr.bf16.mxu0 0
      %486 = vmatpush2.bf16.msra.mxu0 0
      %487 = vmatprep.subr.bf16.mxu0 0
      %488 = vmatpush2.bf16.msra.mxu0 0
      %489 = vmatprep.mubr.bf16.mxu0 0
      %490 = vmatmul.mubr.bf16.gmra.mxu0 %v440
      %v491 = vpop.f32.mrf.mxu0
      %v492 = vadd.f32 %v353, %v491
      %v493 = vpop.f32.mrf.mxu0
      %v494 = vpop.f32.mrf.mxu0
      %v495 = vadd.f32 %v356, %v494
      %v496 = vpop.f32.mrf.mxu0
      %497 = vmatprep.mubr.bf16.mxu0 0
      %498 = vmatmul.mubr.bf16.gmra.mxu0 %v443
      %v499 = vpop.f32.mrf.mxu0
      %v500 = vadd.f32 %v361, %v499
      %v501 = vpop.f32.mrf.mxu0
      %v502 = vpop.f32.mrf.mxu0
      %v503 = vadd.f32 %v364, %v502
      %v504 = vpop.f32.mrf.mxu0
      %505 = vmatprep.mubr.bf16.mxu0 0
      %506 = vmatmul.mubr.bf16.gmra.mxu0 %v446
      %v507 = vpop.f32.mrf.mxu0
      %v508 = vadd.f32 %v369, %v507
      %v509 = vpop.f32.mrf.mxu0
      %v510 = vpop.f32.mrf.mxu0
      %v511 = vadd.f32 %v372, %v510
      %v512 = vpop.f32.mrf.mxu0
      %513 = vmatprep.mubr.bf16.mxu0 0
      %514 = vmatmul.mubr.bf16.gmra.mxu0 %v449
      %v515 = vpop.f32.mrf.mxu0
      %v516 = vadd.f32 %v377, %v515
      %v517 = vpop.f32.mrf.mxu0
      %v518 = vpop.f32.mrf.mxu0
      %v519 = vadd.f32 %v380, %v518
      %v520 = vpop.f32.mrf.mxu0
      %521 = vmatprep.mubr.bf16.mxu0 0
      %522 = vmatmul.mubr.bf16.gmra.mxu0 %v452
      %v523 = vpop.f32.mrf.mxu0
      %v524 = vadd.f32 %v385, %v523
      %v525 = vpop.f32.mrf.mxu0
      %v526 = vpop.f32.mrf.mxu0
      %v527 = vadd.f32 %v388, %v526
      %v528 = vpop.f32.mrf.mxu0
      %529 = vdwg.mxu0
      %v530 = vld [vmem:[%s230 + $0x2c] sm:$0x3]
      %s531 = scalar_lea.vmem %s1, 4
      %v532 = vld [vmem:[%s531] sm:$0x3]
      %v534 = vunpack.c.l.b16 %v530
      %v535 = vpack.c.b16 %v534, %v534
      %vm536 = vsmask.f32 6400
      %v538 = vshrl.u32 %v280, 16
      %v540 = vrot.slane %v538, 1
      %v541 = vshll.u32 %v280, 16
      %v543 = vrot.slane %v541, 2
      %v544 = vor.u32 %v540, %v543
      %v545 = vrot.slane %v407, 1
      %v546 = vrot.slane %v403, 2
      %v547 = vor.u32 %v545, %v546
      %v548 = vsel %vm536, %v544, %v547
      %v549 = vrot.slane %v415, 1
      %v550 = vrot.slane %v411, 2
      %v551 = vor.u32 %v549, %v550
      %v552 = vsel %vm536, %v547, %v551
      %v553 = vrot.slane %v423, 1
      %v554 = vrot.slane %v419, 2
      %v555 = vor.u32 %v553, %v554
      %v556 = vsel %vm536, %v551, %v555
      %v557 = vrot.slane %v431, 1
      %v558 = vrot.slane %v427, 2
      %v559 = vor.u32 %v557, %v558
      %v560 = vsel %vm536, %v555, %v559
      %v562 = vshrl.u32 %v535, 16
      %v564 = vrot.slane %v562, 1
      %v565 = vshll.u32 %v535, 16
      %v567 = vrot.slane %v565, 2
      %v568 = vor.u32 %v564, %v567
      %v569 = vsel %vm536, %v559, %v568
      %v571 = vsel %vm298, %v548, 0
      %v574 = vsel %vm298, %v552, 0
      %v577 = vsel %vm298, %v556, 0
      %v580 = vsel %vm298, %v560, 0
      %v583 = vsel %vm298, %v569, 0
      %v586 = vsel %vm314, %v532, 0
      %588 = vmatprep.subr.bf16.mxu0 0
      %589 = vmatpush1.bf16.msra.mxu0 0
      %590 = vmatprep.subr.bf16.mxu0 0
      %591 = vmatpush1.bf16.msra.mxu0 0
      %592 = vmatprep.subr.bf16.mxu0 0
      %593 = vmatpush1.bf16.msra.mxu0 0
      %594 = vmatprep.subr.bf16.mxu0 0
      %595 = vmatpush1.bf16.msra.mxu0 0
      %596 = vmatprep.subr.bf16.mxu0 0
      %597 = vmatpush1.bf16.msra.mxu0 0
      %598 = vmatprep.subr.bf16.mxu0 0
      %599 = vmatpush1.bf16.msra.mxu0 0
      %600 = vmatprep.subr.bf16.mxu0 0
      %601 = vmatpush1.bf16.msra.mxu0 0
      %602 = vmatprep.subr.bf16.mxu0 0
      %603 = vmatpush1.bf16.msra.mxu0 %v586
      %604 = vmatprep.subr.bf16.mxu0 0
      %605 = vmatpush2.bf16.msra.mxu0 0
      %606 = vmatprep.subr.bf16.mxu0 0
      %607 = vmatpush2.bf16.msra.mxu0 0
      %608 = vmatprep.subr.bf16.mxu0 0
      %609 = vmatpush2.bf16.msra.mxu0 0
      %610 = vmatprep.subr.bf16.mxu0 0
      %611 = vmatpush2.bf16.msra.mxu0 0
      %612 = vmatprep.subr.bf16.mxu0 0
      %613 = vmatpush2.bf16.msra.mxu0 0
      %614 = vmatprep.subr.bf16.mxu0 0
      %615 = vmatpush2.bf16.msra.mxu0 0
      %616 = vmatprep.subr.bf16.mxu0 0
      %617 = vmatpush2.bf16.msra.mxu0 0
      %618 = vmatprep.subr.bf16.mxu0 0
      %619 = vmatpush2.bf16.msra.mxu0 0
      %620 = vmatprep.mubr.bf16.mxu0 0
      %621 = vmatmul.mubr.bf16.gmra.mxu0 %v571
      %v622 = vpop.f32.mrf.mxu0
      %v623 = vadd.f32 0.0, %v622
      %v624 = vpop.f32.mrf.mxu0
      %v625 = vpop.f32.mrf.mxu0
      %v626 = vadd.f32 0.0, %v625
      %v627 = vpop.f32.mrf.mxu0
      %628 = vmatprep.mubr.bf16.mxu0 0
      %629 = vmatmul.mubr.bf16.gmra.mxu0 %v574
      %v630 = vpop.f32.mrf.mxu0
      %v631 = vadd.f32 0.0, %v630
      %v632 = vpop.f32.mrf.mxu0
      %v633 = vpop.f32.mrf.mxu0
      %v634 = vadd.f32 0.0, %v633
      %v635 = vpop.f32.mrf.mxu0
      %636 = vmatprep.mubr.bf16.mxu0 0
      %637 = vmatmul.mubr.bf16.gmra.mxu0 %v577
      %v638 = vpop.f32.mrf.mxu0
      %v639 = vadd.f32 0.0, %v638
      %v640 = vpop.f32.mrf.mxu0
      %v641 = vpop.f32.mrf.mxu0
      %v642 = vadd.f32 0.0, %v641
      %v643 = vpop.f32.mrf.mxu0
      %644 = vmatprep.mubr.bf16.mxu0 0
      %645 = vmatmul.mubr.bf16.gmra.mxu0 %v580
      %v646 = vpop.f32.mrf.mxu0
      %v647 = vadd.f32 0.0, %v646
      %v648 = vpop.f32.mrf.mxu0
      %v649 = vpop.f32.mrf.mxu0
      %v650 = vadd.f32 0.0, %v649
      %v651 = vpop.f32.mrf.mxu0
      %652 = vmatprep.mubr.bf16.mxu0 0
      %653 = vmatmul.mubr.bf16.gmra.mxu0 %v583
      %v654 = vpop.f32.mrf.mxu0
      %v655 = vadd.f32 0.0, %v654
      %v656 = vpop.f32.mrf.mxu0
      %v657 = vpop.f32.mrf.mxu0
      %v658 = vadd.f32 0.0, %v657
      %v659 = vpop.f32.mrf.mxu0
      %660 = vdwg.mxu0
      %v661 = vadd.f32 %v492, %v623
      %v662 = vadd.f32 %v495, %v626
      %v663 = vadd.f32 %v500, %v631
      %v664 = vadd.f32 %v503, %v634
      %v665 = vadd.f32 %v508, %v639
      %v666 = vadd.f32 %v511, %v642
      %v667 = vadd.f32 %v516, %v647
      %v668 = vadd.f32 %v519, %v650
      %v669 = vadd.f32 %v524, %v655
      %v670 = vadd.f32 %v527, %v658
      %v671 = vld [vmem:[%s230 + $0x8] sm:$0xe]
      %v672 = vld [vmem:[%s230 + $0xc] sm:$0xf]
      %v673 = vld [vmem:[%s230 + $0x10] sm:$0xf]
      %v674 = vld [vmem:[%s230 + $0x14] sm:$0xf]
      %v675 = vld [vmem:[%s230 + $0x18] sm:$0xf]
      %v676 = vld [vmem:[%s230 + $0x1c] sm:$0xf]
      %v677 = vld [vmem:[%s230 + $0x20] sm:$0xf]
      %v678 = vld [vmem:[%s230 + $0x24] sm:$0xf]
      %v679 = vld [vmem:[%s230 + $0x28] sm:$0xf]
      %v680 = vld [vmem:[%s230 + $0x2c] sm:$0xf]
      %v681 = vld [vmem:[%s230 + $0x30] sm:$0x3]
      %s682 = scalar_lea.vmem %s1, 6
      %v683 = vld [vmem:[%s682] sm:$0x3]
      %v695 = vunpack.c.l.b16 %v671
      %v696 = vunpack.c.l.b16 %v672
      %v697 = vunpack.c.l.b16 %v673
      %v698 = vunpack.c.l.b16 %v674
      %v699 = vunpack.c.l.b16 %v675
      %v700 = vunpack.c.l.b16 %v676
      %v701 = vunpack.c.l.b16 %v677
      %v702 = vunpack.c.l.b16 %v678
      %v703 = vunpack.c.l.b16 %v679
      %v704 = vunpack.c.l.b16 %v680
      %v705 = vunpack.c.l.b16 %v681
      %v706 = vpack.c.b16 %v696, %v695
      %v707 = vpack.c.b16 %v698, %v697
      %v708 = vpack.c.b16 %v700, %v699
      %v709 = vpack.c.b16 %v702, %v701
      %v710 = vpack.c.b16 %v704, %v703
      %v711 = vpack.c.b16 %v705, %v705
      %v713 = vshrl.u32 %v706, 16
      %v715 = vrot.slane %v713, 1
      %v716 = vshll.u32 %v706, 16
      %v718 = vrot.slane %v716, 2
      %v719 = vor.u32 %v715, %v718
      %v721 = vshrl.u32 %v707, 16
      %v723 = vrot.slane %v721, 1
      %v724 = vshll.u32 %v707, 16
      %v726 = vrot.slane %v724, 2
      %v727 = vor.u32 %v723, %v726
      %v728 = vsel %vm536, %v719, %v727
      %v730 = vshrl.u32 %v708, 16
      %v732 = vrot.slane %v730, 1
      %v733 = vshll.u32 %v708, 16
      %v735 = vrot.slane %v733, 2
      %v736 = vor.u32 %v732, %v735
      %v737 = vsel %vm536, %v727, %v736
      %v739 = vshrl.u32 %v709, 16
      %v741 = vrot.slane %v739, 1
      %v742 = vshll.u32 %v709, 16
      %v744 = vrot.slane %v742, 2
      %v745 = vor.u32 %v741, %v744
      %v746 = vsel %vm536, %v736, %v745
      %v748 = vshrl.u32 %v710, 16
      %v750 = vrot.slane %v748, 1
      %v751 = vshll.u32 %v710, 16
      %v753 = vrot.slane %v751, 2
      %v754 = vor.u32 %v750, %v753
      %v755 = vsel %vm536, %v745, %v754
      %v757 = vshrl.u32 %v711, 16
      %v759 = vrot.slane %v757, 1
      %v760 = vshll.u32 %v711, 16
      %v762 = vrot.slane %v760, 2
      %v763 = vor.u32 %v759, %v762
      %v764 = vsel %vm536, %v754, %v763
      %v766 = vsel %vm298, %v728, 0
      %v769 = vsel %vm298, %v737, 0
      %v772 = vsel %vm298, %v746, 0
      %v775 = vsel %vm298, %v755, 0
      %v778 = vsel %vm298, %v764, 0
      %v781 = vsel %vm314, %v683, 0
      %783 = vmatprep.subr.bf16.mxu0 0
      %784 = vmatpush1.bf16.msra.mxu0 0
      %785 = vmatprep.subr.bf16.mxu0 0
      %786 = vmatpush1.bf16.msra.mxu0 0
      %787 = vmatprep.subr.bf16.mxu0 0
      %788 = vmatpush1.bf16.msra.mxu0 0
      %789 = vmatprep.subr.bf16.mxu0 0
      %790 = vmatpush1.bf16.msra.mxu0 0
      %791 = vmatprep.subr.bf16.mxu0 0
      %792 = vmatpush1.bf16.msra.mxu0 0
      %793 = vmatprep.subr.bf16.mxu0 0
      %794 = vmatpush1.bf16.msra.mxu0 0
      %795 = vmatprep.subr.bf16.mxu0 0
      %796 = vmatpush1.bf16.msra.mxu0 0
      %797 = vmatprep.subr.bf16.mxu0 0
      %798 = vmatpush1.bf16.msra.mxu0 %v781
      %799 = vmatprep.subr.bf16.mxu0 0
      %800 = vmatpush2.bf16.msra.mxu0 0
      %801 = vmatprep.subr.bf16.mxu0 0
      %802 = vmatpush2.bf16.msra.mxu0 0
      %803 = vmatprep.subr.bf16.mxu0 0
      %804 = vmatpush2.bf16.msra.mxu0 0
      %805 = vmatprep.subr.bf16.mxu0 0
      %806 = vmatpush2.bf16.msra.mxu0 0
      %807 = vmatprep.subr.bf16.mxu0 0
      %808 = vmatpush2.bf16.msra.mxu0 0
      %809 = vmatprep.subr.bf16.mxu0 0
      %810 = vmatpush2.bf16.msra.mxu0 0
      %811 = vmatprep.subr.bf16.mxu0 0
      %812 = vmatpush2.bf16.msra.mxu0 0
      %813 = vmatprep.subr.bf16.mxu0 0
      %814 = vmatpush2.bf16.msra.mxu0 0
      %815 = vmatprep.mubr.bf16.mxu0 0
      %816 = vmatmul.mubr.bf16.gmra.mxu0 %v766
      %v817 = vpop.f32.mrf.mxu0
      %v818 = vadd.f32 0.0, %v817
      %v819 = vpop.f32.mrf.mxu0
      %v820 = vpop.f32.mrf.mxu0
      %v821 = vadd.f32 0.0, %v820
      %v822 = vpop.f32.mrf.mxu0
      %823 = vmatprep.mubr.bf16.mxu0 0
      %824 = vmatmul.mubr.bf16.gmra.mxu0 %v769
      %v825 = vpop.f32.mrf.mxu0
      %v826 = vadd.f32 0.0, %v825
      %v827 = vpop.f32.mrf.mxu0
      %v828 = vpop.f32.mrf.mxu0
      %v829 = vadd.f32 0.0, %v828
      %v830 = vpop.f32.mrf.mxu0
      %831 = vmatprep.mubr.bf16.mxu0 0
      %832 = vmatmul.mubr.bf16.gmra.mxu0 %v772
      %v833 = vpop.f32.mrf.mxu0
      %v834 = vadd.f32 0.0, %v833
      %v835 = vpop.f32.mrf.mxu0
      %v836 = vpop.f32.mrf.mxu0
      %v837 = vadd.f32 0.0, %v836
      %v838 = vpop.f32.mrf.mxu0
      %839 = vmatprep.mubr.bf16.mxu0 0
      %840 = vmatmul.mubr.bf16.gmra.mxu0 %v775
      %v841 = vpop.f32.mrf.mxu0
      %v842 = vadd.f32 0.0, %v841
      %v843 = vpop.f32.mrf.mxu0
      %v844 = vpop.f32.mrf.mxu0
      %v845 = vadd.f32 0.0, %v844
      %v846 = vpop.f32.mrf.mxu0
      %847 = vmatprep.mubr.bf16.mxu0 0
      %848 = vmatmul.mubr.bf16.gmra.mxu0 %v778
      %v849 = vpop.f32.mrf.mxu0
      %v850 = vadd.f32 0.0, %v849
      %v851 = vpop.f32.mrf.mxu0
      %v852 = vpop.f32.mrf.mxu0
      %v853 = vadd.f32 0.0, %v852
      %v854 = vpop.f32.mrf.mxu0
      %855 = vdwg.mxu0
      %v856 = vadd.f32 %v661, %v818
      %v857 = vadd.f32 %v662, %v821
      %v858 = vadd.f32 %v663, %v826
      %v859 = vadd.f32 %v664, %v829
      %v860 = vadd.f32 %v665, %v834
      %v861 = vadd.f32 %v666, %v837
      %v862 = vadd.f32 %v667, %v842
      %v863 = vadd.f32 %v668, %v845
      %v864 = vadd.f32 %v669, %v850
      %v865 = vadd.f32 %v670, %v853
      %v866 = vld [vmem:[%s230 + $0x8] sm:$0xc]
      %s867 = scalar_lea.vmem %s1, 8
      %v868 = vld [vmem:[%s867] sm:$0x3]
      %v870 = vunpack.c.l.b16 %v866
      %v871 = vpack.c.b16 %v696, %v870
      %vm872 = vcmask 1045504
      %v873 = vrot.slane %v871, 2
      %v874 = vrot.slane %v707, 2
      %v875 = vsel %vm872, %v873, %v874
      %v876 = vrot.slane %v708, 2
      %v877 = vsel %vm872, %v874, %v876
      %v878 = vrot.slane %v709, 2
      %v879 = vsel %vm872, %v876, %v878
      %v880 = vrot.slane %v710, 2
      %v881 = vsel %vm872, %v878, %v880
      %v882 = vrot.slane %v711, 2
      %v883 = vsel %vm872, %v880, %v882
      %v885 = vsel %vm298, %v875, 0
      %v888 = vsel %vm298, %v877, 0
      %v891 = vsel %vm298, %v879, 0
      %v894 = vsel %vm298, %v881, 0
      %v897 = vsel %vm298, %v883, 0
      %v900 = vsel %vm314, %v868, 0
      %902 = vmatprep.subr.bf16.mxu0 0
      %903 = vmatpush1.bf16.msra.mxu0 0
      %904 = vmatprep.subr.bf16.mxu0 0
      %905 = vmatpush1.bf16.msra.mxu0 0
      %906 = vmatprep.subr.bf16.mxu0 0
      %907 = vmatpush1.bf16.msra.mxu0 0
      %908 = vmatprep.subr.bf16.mxu0 0
      %909 = vmatpush1.bf16.msra.mxu0 0
      %910 = vmatprep.subr.bf16.mxu0 0
      %911 = vmatpush1.bf16.msra.mxu0 0
      %912 = vmatprep.subr.bf16.mxu0 0
      %913 = vmatpush1.bf16.msra.mxu0 0
      %914 = vmatprep.subr.bf16.mxu0 0
      %915 = vmatpush1.bf16.msra.mxu0 0
      %916 = vmatprep.subr.bf16.mxu0 0
      %917 = vmatpush1.bf16.msra.mxu0 %v900
      %918 = vmatprep.subr.bf16.mxu0 0
      %919 = vmatpush2.bf16.msra.mxu0 0
      %920 = vmatprep.subr.bf16.mxu0 0
      %921 = vmatpush2.bf16.msra.mxu0 0
      %922 = vmatprep.subr.bf16.mxu0 0
      %923 = vmatpush2.bf16.msra.mxu0 0
      %924 = vmatprep.subr.bf16.mxu0 0
      %925 = vmatpush2.bf16.msra.mxu0 0
      %926 = vmatprep.subr.bf16.mxu0 0
      %927 = vmatpush2.bf16.msra.mxu0 0
      %928 = vmatprep.subr.bf16.mxu0 0
      %929 = vmatpush2.bf16.msra.mxu0 0
      %930 = vmatprep.subr.bf16.mxu0 0
      %931 = vmatpush2.bf16.msra.mxu0 0
      %932 = vmatprep.subr.bf16.mxu0 0
      %933 = vmatpush2.bf16.msra.mxu0 0
      %934 = vmatprep.mubr.bf16.mxu0 0
      %935 = vmatmul.mubr.bf16.gmra.mxu0 %v885
      %v936 = vpop.f32.mrf.mxu0
      %v937 = vadd.f32 0.0, %v936
      %v938 = vpop.f32.mrf.mxu0
      %v939 = vpop.f32.mrf.mxu0
      %v940 = vadd.f32 0.0, %v939
      %v941 = vpop.f32.mrf.mxu0
      %942 = vmatprep.mubr.bf16.mxu0 0
      %943 = vmatmul.mubr.bf16.gmra.mxu0 %v888
      %v944 = vpop.f32.mrf.mxu0
      %v945 = vadd.f32 0.0, %v944
      %v946 = vpop.f32.mrf.mxu0
      %v947 = vpop.f32.mrf.mxu0
      %v948 = vadd.f32 0.0, %v947
      %v949 = vpop.f32.mrf.mxu0
      %950 = vmatprep.mubr.bf16.mxu0 0
      %951 = vmatmul.mubr.bf16.gmra.mxu0 %v891
      %v952 = vpop.f32.mrf.mxu0
      %v953 = vadd.f32 0.0, %v952
      %v954 = vpop.f32.mrf.mxu0
      %v955 = vpop.f32.mrf.mxu0
      %v956 = vadd.f32 0.0, %v955
      %v957 = vpop.f32.mrf.mxu0
      %958 = vmatprep.mubr.bf16.mxu0 0
      %959 = vmatmul.mubr.bf16.gmra.mxu0 %v894
      %v960 = vpop.f32.mrf.mxu0
      %v961 = vadd.f32 0.0, %v960
      %v962 = vpop.f32.mrf.mxu0
      %v963 = vpop.f32.mrf.mxu0
      %v964 = vadd.f32 0.0, %v963
      %v965 = vpop.f32.mrf.mxu0
      %966 = vmatprep.mubr.bf16.mxu0 0
      %967 = vmatmul.mubr.bf16.gmra.mxu0 %v897
      %v968 = vpop.f32.mrf.mxu0
      %v969 = vadd.f32 0.0, %v968
      %v970 = vpop.f32.mrf.mxu0
      %v971 = vpop.f32.mrf.mxu0
      %v972 = vadd.f32 0.0, %v971
      %v973 = vpop.f32.mrf.mxu0
      %974 = vdwg.mxu0
      %v975 = vadd.f32 %v856, %v937
      %v976 = vadd.f32 %v857, %v940
      %v977 = vadd.f32 %v858, %v945
      %v978 = vadd.f32 %v859, %v948
      %v979 = vadd.f32 %v860, %v953
      %v980 = vadd.f32 %v861, %v956
      %v981 = vadd.f32 %v862, %v961
      %v982 = vadd.f32 %v863, %v964
      %v983 = vadd.f32 %v864, %v969
      %v984 = vadd.f32 %v865, %v972
      %v985 = vld [vmem:[%s230 + $0x30] sm:$0x7]
      %s986 = scalar_lea.vmem %s1, 10
      %v987 = vld [vmem:[%s986] sm:$0x3]
      %v989 = vunpack.c.l.b16 %v985
      %v990 = vpack.c.b16 %v989, %v989
      %vm991 = vsmask.f32 5376
      %v993 = vshrl.u32 %v871, 16
      %v995 = vrot.slane %v993, 2
      %v996 = vshll.u32 %v871, 16
      %v998 = vrot.slane %v996, 3
      %v999 = vor.u32 %v995, %v998
      %v1000 = vrot.slane %v721, 2
      %v1001 = vrot.slane %v724, 3
      %v1002 = vor.u32 %v1000, %v1001
      %v1003 = vsel %vm991, %v999, %v1002
      %v1004 = vrot.slane %v730, 2
      %v1005 = vrot.slane %v733, 3
      %v1006 = vor.u32 %v1004, %v1005
      %v1007 = vsel %vm991, %v1002, %v1006
      %v1008 = vrot.slane %v739, 2
      %v1009 = vrot.slane %v742, 3
      %v1010 = vor.u32 %v1008, %v1009
      %v1011 = vsel %vm991, %v1006, %v1010
      %v1012 = vrot.slane %v748, 2
      %v1013 = vrot.slane %v751, 3
      %v1014 = vor.u32 %v1012, %v1013
      %v1015 = vsel %vm991, %v1010, %v1014
      %v1017 = vshrl.u32 %v990, 16
      %v1019 = vrot.slane %v1017, 2
      %v1020 = vshll.u32 %v990, 16
      %v1022 = vrot.slane %v1020, 3
      %v1023 = vor.u32 %v1019, %v1022
      %v1024 = vsel %vm991, %v1014, %v1023
      %v1026 = vsel %vm298, %v1003, 0
      %v1029 = vsel %vm298, %v1007, 0
      %v1032 = vsel %vm298, %v1011, 0
      %v1035 = vsel %vm298, %v1015, 0
      %v1038 = vsel %vm298, %v1024, 0
      %v1041 = vsel %vm314, %v987, 0
      %1043 = vmatprep.subr.bf16.mxu0 0
      %1044 = vmatpush1.bf16.msra.mxu0 0
      %1045 = vmatprep.subr.bf16.mxu0 0
      %1046 = vmatpush1.bf16.msra.mxu0 0
      %1047 = vmatprep.subr.bf16.mxu0 0
      %1048 = vmatpush1.bf16.msra.mxu0 0
      %1049 = vmatprep.subr.bf16.mxu0 0
      %1050 = vmatpush1.bf16.msra.mxu0 0
      %1051 = vmatprep.subr.bf16.mxu0 0
      %1052 = vmatpush1.bf16.msra.mxu0 0
      %1053 = vmatprep.subr.bf16.mxu0 0
      %1054 = vmatpush1.bf16.msra.mxu0 0
      %1055 = vmatprep.subr.bf16.mxu0 0
      %1056 = vmatpush1.bf16.msra.mxu0 0
      %1057 = vmatprep.subr.bf16.mxu0 0
      %1058 = vmatpush1.bf16.msra.mxu0 %v1041
      %1059 = vmatprep.subr.bf16.mxu0 0
      %1060 = vmatpush2.bf16.msra.mxu0 0
      %1061 = vmatprep.subr.bf16.mxu0 0
      %1062 = vmatpush2.bf16.msra.mxu0 0
      %1063 = vmatprep.subr.bf16.mxu0 0
      %1064 = vmatpush2.bf16.msra.mxu0 0
      %1065 = vmatprep.subr.bf16.mxu0 0
      %1066 = vmatpush2.bf16.msra.mxu0 0
      %1067 = vmatprep.subr.bf16.mxu0 0
      %1068 = vmatpush2.bf16.msra.mxu0 0
      %1069 = vmatprep.subr.bf16.mxu0 0
      %1070 = vmatpush2.bf16.msra.mxu0 0
      %1071 = vmatprep.subr.bf16.mxu0 0
      %1072 = vmatpush2.bf16.msra.mxu0 0
      %1073 = vmatprep.subr.bf16.mxu0 0
      %1074 = vmatpush2.bf16.msra.mxu0 0
      %1075 = vmatprep.mubr.bf16.mxu0 0
      %1076 = vmatmul.mubr.bf16.gmra.mxu0 %v1026
      %v1077 = vpop.f32.mrf.mxu0
      %v1078 = vadd.f32 0.0, %v1077
      %v1079 = vpop.f32.mrf.mxu0
      %v1080 = vpop.f32.mrf.mxu0
      %v1081 = vadd.f32 0.0, %v1080
      %v1082 = vpop.f32.mrf.mxu0
      %1083 = vmatprep.mubr.bf16.mxu0 0
      %1084 = vmatmul.mubr.bf16.gmra.mxu0 %v1029
      %v1085 = vpop.f32.mrf.mxu0
      %v1086 = vadd.f32 0.0, %v1085
      %v1087 = vpop.f32.mrf.mxu0
      %v1088 = vpop.f32.mrf.mxu0
      %v1089 = vadd.f32 0.0, %v1088
      %v1090 = vpop.f32.mrf.mxu0
      %1091 = vmatprep.mubr.bf16.mxu0 0
      %1092 = vmatmul.mubr.bf16.gmra.mxu0 %v1032
      %v1093 = vpop.f32.mrf.mxu0
      %v1094 = vadd.f32 0.0, %v1093
      %v1095 = vpop.f32.mrf.mxu0
      %v1096 = vpop.f32.mrf.mxu0
      %v1097 = vadd.f32 0.0, %v1096
      %v1098 = vpop.f32.mrf.mxu0
      %1099 = vmatprep.mubr.bf16.mxu0 0
      %1100 = vmatmul.mubr.bf16.gmra.mxu0 %v1035
      %v1101 = vpop.f32.mrf.mxu0
      %v1102 = vadd.f32 0.0, %v1101
      %v1103 = vpop.f32.mrf.mxu0
      %v1104 = vpop.f32.mrf.mxu0
      %v1105 = vadd.f32 0.0, %v1104
      %v1106 = vpop.f32.mrf.mxu0
      %1107 = vmatprep.mubr.bf16.mxu0 0
      %1108 = vmatmul.mubr.bf16.gmra.mxu0 %v1038
      %v1109 = vpop.f32.mrf.mxu0
      %v1110 = vadd.f32 0.0, %v1109
      %v1111 = vpop.f32.mrf.mxu0
      %v1112 = vpop.f32.mrf.mxu0
      %v1113 = vadd.f32 0.0, %v1112
      %v1114 = vpop.f32.mrf.mxu0
      %1115 = vdwg.mxu0
      %v1116 = vadd.f32 %v975, %v1078
      %v1117 = vadd.f32 %v976, %v1081
      %v1118 = vadd.f32 %v977, %v1086
      %v1119 = vadd.f32 %v978, %v1089
      %v1120 = vadd.f32 %v979, %v1094
      %v1121 = vadd.f32 %v980, %v1097
      %v1122 = vadd.f32 %v981, %v1102
      %v1123 = vadd.f32 %v982, %v1105
      %v1124 = vadd.f32 %v983, %v1110
      %v1125 = vadd.f32 %v984, %v1113
      %v1126 = vld [vmem:[%s230 + $0xc] sm:$0xc]
      %v1127 = vld [vmem:[%s230 + $0x10] sm:$0xf]
      %v1128 = vld [vmem:[%s230 + $0x14] sm:$0xf]
      %v1129 = vld [vmem:[%s230 + $0x18] sm:$0xf]
      %v1130 = vld [vmem:[%s230 + $0x1c] sm:$0xf]
      %v1131 = vld [vmem:[%s230 + $0x20] sm:$0xf]
      %v1132 = vld [vmem:[%s230 + $0x24] sm:$0xf]
      %v1133 = vld [vmem:[%s230 + $0x28] sm:$0xf]
      %v1134 = vld [vmem:[%s230 + $0x2c] sm:$0xf]
      %v1135 = vld [vmem:[%s230 + $0x30] sm:$0xf]
      %v1136 = vld [vmem:[%s230 + $0x34] sm:$0x7]
      %s1137 = scalar_lea.vmem %s1, 12
      %v1138 = vld [vmem:[%s1137] sm:$0x3]
      %v1150 = vunpack.c.l.b16 %v1126
      %v1151 = vunpack.c.l.b16 %v1127
      %v1152 = vunpack.c.l.b16 %v1128
      %v1153 = vunpack.c.l.b16 %v1129
      %v1154 = vunpack.c.l.b16 %v1130
      %v1155 = vunpack.c.l.b16 %v1131
      %v1156 = vunpack.c.l.b16 %v1132
      %v1157 = vunpack.c.l.b16 %v1133
      %v1158 = vunpack.c.l.b16 %v1134
      %v1159 = vunpack.c.l.b16 %v1135
      %v1160 = vunpack.c.l.b16 %v1136
      %v1161 = vpack.c.b16 %v1151, %v1150
      %v1162 = vpack.c.b16 %v1153, %v1152
      %v1163 = vpack.c.b16 %v1155, %v1154
      %v1164 = vpack.c.b16 %v1157, %v1156
      %v1165 = vpack.c.b16 %v1159, %v1158
      %v1166 = vpack.c.b16 %v1160, %v1160
      %v1168 = vshrl.u32 %v1161, 16
      %v1170 = vrot.slane %v1168, 2
      %v1171 = vshll.u32 %v1161, 16
      %v1173 = vrot.slane %v1171, 3
      %v1174 = vor.u32 %v1170, %v1173
      %v1176 = vshrl.u32 %v1162, 16
      %v1178 = vrot.slane %v1176, 2
      %v1179 = vshll.u32 %v1162, 16
      %v1181 = vrot.slane %v1179, 3
      %v1182 = vor.u32 %v1178, %v1181
      %v1183 = vsel %vm991, %v1174, %v1182
      %v1185 = vshrl.u32 %v1163, 16
      %v1187 = vrot.slane %v1185, 2
      %v1188 = vshll.u32 %v1163, 16
      %v1190 = vrot.slane %v1188, 3
      %v1191 = vor.u32 %v1187, %v1190
      %v1192 = vsel %vm991, %v1182, %v1191
      %v1194 = vshrl.u32 %v1164, 16
      %v1196 = vrot.slane %v1194, 2
      %v1197 = vshll.u32 %v1164, 16
      %v1199 = vrot.slane %v1197, 3
      %v1200 = vor.u32 %v1196, %v1199
      %v1201 = vsel %vm991, %v1191, %v1200
      %v1203 = vshrl.u32 %v1165, 16
      %v1205 = vrot.slane %v1203, 2
      %v1206 = vshll.u32 %v1165, 16
      %v1208 = vrot.slane %v1206, 3
      %v1209 = vor.u32 %v1205, %v1208
      %v1210 = vsel %vm991, %v1200, %v1209
      %v1212 = vshrl.u32 %v1166, 16
      %v1214 = vrot.slane %v1212, 2
      %v1215 = vshll.u32 %v1166, 16
      %v1217 = vrot.slane %v1215, 3
      %v1218 = vor.u32 %v1214, %v1217
      %v1219 = vsel %vm991, %v1209, %v1218
      %v1221 = vsel %vm298, %v1183, 0
      %v1224 = vsel %vm298, %v1192, 0
      %v1227 = vsel %vm298, %v1201, 0
      %v1230 = vsel %vm298, %v1210, 0
      %v1233 = vsel %vm298, %v1219, 0
      %v1236 = vsel %vm314, %v1138, 0
      %1238 = vmatprep.subr.bf16.mxu0 0
      %1239 = vmatpush1.bf16.msra.mxu0 0
      %1240 = vmatprep.subr.bf16.mxu0 0
      %1241 = vmatpush1.bf16.msra.mxu0 0
      %1242 = vmatprep.subr.bf16.mxu0 0
      %1243 = vmatpush1.bf16.msra.mxu0 0
      %1244 = vmatprep.subr.bf16.mxu0 0
      %1245 = vmatpush1.bf16.msra.mxu0 0
      %1246 = vmatprep.subr.bf16.mxu0 0
      %1247 = vmatpush1.bf16.msra.mxu0 0
      %1248 = vmatprep.subr.bf16.mxu0 0
      %1249 = vmatpush1.bf16.msra.mxu0 0
      %1250 = vmatprep.subr.bf16.mxu0 0
      %1251 = vmatpush1.bf16.msra.mxu0 0
      %1252 = vmatprep.subr.bf16.mxu0 0
      %1253 = vmatpush1.bf16.msra.mxu0 %v1236
      %1254 = vmatprep.subr.bf16.mxu0 0
      %1255 = vmatpush2.bf16.msra.mxu0 0
      %1256 = vmatprep.subr.bf16.mxu0 0
      %1257 = vmatpush2.bf16.msra.mxu0 0
      %1258 = vmatprep.subr.bf16.mxu0 0
      %1259 = vmatpush2.bf16.msra.mxu0 0
      %1260 = vmatprep.subr.bf16.mxu0 0
      %1261 = vmatpush2.bf16.msra.mxu0 0
      %1262 = vmatprep.subr.bf16.mxu0 0
      %1263 = vmatpush2.bf16.msra.mxu0 0
      %1264 = vmatprep.subr.bf16.mxu0 0
      %1265 = vmatpush2.bf16.msra.mxu0 0
      %1266 = vmatprep.subr.bf16.mxu0 0
      %1267 = vmatpush2.bf16.msra.mxu0 0
      %1268 = vmatprep.subr.bf16.mxu0 0
      %1269 = vmatpush2.bf16.msra.mxu0 0
      %1270 = vmatprep.mubr.bf16.mxu0 0
      %1271 = vmatmul.mubr.bf16.gmra.mxu0 %v1221
      %v1272 = vpop.f32.mrf.mxu0
      %v1273 = vadd.f32 0.0, %v1272
      %v1274 = vpop.f32.mrf.mxu0
      %v1275 = vpop.f32.mrf.mxu0
      %v1276 = vadd.f32 0.0, %v1275
      %v1277 = vpop.f32.mrf.mxu0
      %1278 = vmatprep.mubr.bf16.mxu0 0
      %1279 = vmatmul.mubr.bf16.gmra.mxu0 %v1224
      %v1280 = vpop.f32.mrf.mxu0
      %v1281 = vadd.f32 0.0, %v1280
      %v1282 = vpop.f32.mrf.mxu0
      %v1283 = vpop.f32.mrf.mxu0
      %v1284 = vadd.f32 0.0, %v1283
      %v1285 = vpop.f32.mrf.mxu0
      %1286 = vmatprep.mubr.bf16.mxu0 0
      %1287 = vmatmul.mubr.bf16.gmra.mxu0 %v1227
      %v1288 = vpop.f32.mrf.mxu0
      %v1289 = vadd.f32 0.0, %v1288
      %v1290 = vpop.f32.mrf.mxu0
      %v1291 = vpop.f32.mrf.mxu0
      %v1292 = vadd.f32 0.0, %v1291
      %v1293 = vpop.f32.mrf.mxu0
      %1294 = vmatprep.mubr.bf16.mxu0 0
      %1295 = vmatmul.mubr.bf16.gmra.mxu0 %v1230
      %v1296 = vpop.f32.mrf.mxu0
      %v1297 = vadd.f32 0.0, %v1296
      %v1298 = vpop.f32.mrf.mxu0
      %v1299 = vpop.f32.mrf.mxu0
      %v1300 = vadd.f32 0.0, %v1299
      %v1301 = vpop.f32.mrf.mxu0
      %1302 = vmatprep.mubr.bf16.mxu0 0
      %1303 = vmatmul.mubr.bf16.gmra.mxu0 %v1233
      %v1304 = vpop.f32.mrf.mxu0
      %v1305 = vadd.f32 0.0, %v1304
      %v1306 = vpop.f32.mrf.mxu0
      %v1307 = vpop.f32.mrf.mxu0
      %v1308 = vadd.f32 0.0, %v1307
      %v1309 = vpop.f32.mrf.mxu0
      %1310 = vdwg.mxu0
      %v1311 = vadd.f32 %v1116, %v1273
      %v1312 = vadd.f32 %v1117, %v1276
      %v1313 = vadd.f32 %v1118, %v1281
      %v1314 = vadd.f32 %v1119, %v1284
      %v1315 = vadd.f32 %v1120, %v1289
      %v1316 = vadd.f32 %v1121, %v1292
      %v1317 = vadd.f32 %v1122, %v1297
      %v1318 = vadd.f32 %v1123, %v1300
      %v1319 = vadd.f32 %v1124, %v1305
      %v1320 = vadd.f32 %v1125, %v1308
      %v1321 = vld [vmem:[%s230 + $0xc] sm:$0x8]
      %s1322 = scalar_lea.vmem %s1, 14
      %v1323 = vld [vmem:[%s1322] sm:$0x3]
      %v1325 = vunpack.c.l.b16 %v1321
      %v1326 = vpack.c.b16 %v1151, %v1325
      %vm1327 = vcmask 1044480
      %v1328 = vrot.slane %v1326, 3
      %v1329 = vrot.slane %v1162, 3
      %v1330 = vsel %vm1327, %v1328, %v1329
      %v1331 = vrot.slane %v1163, 3
      %v1332 = vsel %vm1327, %v1329, %v1331
      %v1333 = vrot.slane %v1164, 3
      %v1334 = vsel %vm1327, %v1331, %v1333
      %v1335 = vrot.slane %v1165, 3
      %v1336 = vsel %vm1327, %v1333, %v1335
      %v1337 = vrot.slane %v1166, 3
      %v1338 = vsel %vm1327, %v1335, %v1337
      %v1340 = vsel %vm298, %v1330, 0
      %v1343 = vsel %vm298, %v1332, 0
      %v1346 = vsel %vm298, %v1334, 0
      %v1349 = vsel %vm298, %v1336, 0
      %v1352 = vsel %vm298, %v1338, 0
      %v1355 = vsel %vm314, %v1323, 0
      %1357 = vmatprep.subr.bf16.mxu0 0
      %1358 = vmatpush1.bf16.msra.mxu0 0
      %1359 = vmatprep.subr.bf16.mxu0 0
      %1360 = vmatpush1.bf16.msra.mxu0 0
      %1361 = vmatprep.subr.bf16.mxu0 0
      %1362 = vmatpush1.bf16.msra.mxu0 0
      %1363 = vmatprep.subr.bf16.mxu0 0
      %1364 = vmatpush1.bf16.msra.mxu0 0
      %1365 = vmatprep.subr.bf16.mxu0 0
      %1366 = vmatpush1.bf16.msra.mxu0 0
      %1367 = vmatprep.subr.bf16.mxu0 0
      %1368 = vmatpush1.bf16.msra.mxu0 0
      %1369 = vmatprep.subr.bf16.mxu0 0
      %1370 = vmatpush1.bf16.msra.mxu0 0
      %1371 = vmatprep.subr.bf16.mxu0 0
      %1372 = vmatpush1.bf16.msra.mxu0 %v1355
      %1373 = vmatprep.subr.bf16.mxu0 0
      %1374 = vmatpush2.bf16.msra.mxu0 0
      %1375 = vmatprep.subr.bf16.mxu0 0
      %1376 = vmatpush2.bf16.msra.mxu0 0
      %1377 = vmatprep.subr.bf16.mxu0 0
      %1378 = vmatpush2.bf16.msra.mxu0 0
      %1379 = vmatprep.subr.bf16.mxu0 0
      %1380 = vmatpush2.bf16.msra.mxu0 0
      %1381 = vmatprep.subr.bf16.mxu0 0
      %1382 = vmatpush2.bf16.msra.mxu0 0
      %1383 = vmatprep.subr.bf16.mxu0 0
      %1384 = vmatpush2.bf16.msra.mxu0 0
      %1385 = vmatprep.subr.bf16.mxu0 0
      %1386 = vmatpush2.bf16.msra.mxu0 0
      %1387 = vmatprep.subr.bf16.mxu0 0
      %1388 = vmatpush2.bf16.msra.mxu0 0
      %1389 = vmatprep.mubr.bf16.mxu0 0
      %1390 = vmatmul.mubr.bf16.gmra.mxu0 %v1340
      %v1391 = vpop.f32.mrf.mxu0
      %v1392 = vadd.f32 0.0, %v1391
      %v1393 = vpop.f32.mrf.mxu0
      %v1394 = vpop.f32.mrf.mxu0
      %v1395 = vadd.f32 0.0, %v1394
      %v1396 = vpop.f32.mrf.mxu0
      %1397 = vmatprep.mubr.bf16.mxu0 0
      %1398 = vmatmul.mubr.bf16.gmra.mxu0 %v1343
      %v1399 = vpop.f32.mrf.mxu0
      %v1400 = vadd.f32 0.0, %v1399
      %v1401 = vpop.f32.mrf.mxu0
      %v1402 = vpop.f32.mrf.mxu0
      %v1403 = vadd.f32 0.0, %v1402
      %v1404 = vpop.f32.mrf.mxu0
      %1405 = vmatprep.mubr.bf16.mxu0 0
      %1406 = vmatmul.mubr.bf16.gmra.mxu0 %v1346
      %v1407 = vpop.f32.mrf.mxu0
      %v1408 = vadd.f32 0.0, %v1407
      %v1409 = vpop.f32.mrf.mxu0
      %v1410 = vpop.f32.mrf.mxu0
      %v1411 = vadd.f32 0.0, %v1410
      %v1412 = vpop.f32.mrf.mxu0
      %1413 = vmatprep.mubr.bf16.mxu0 0
      %1414 = vmatmul.mubr.bf16.gmra.mxu0 %v1349
      %v1415 = vpop.f32.mrf.mxu0
      %v1416 = vadd.f32 0.0, %v1415
      %v1417 = vpop.f32.mrf.mxu0
      %v1418 = vpop.f32.mrf.mxu0
      %v1419 = vadd.f32 0.0, %v1418
      %v1420 = vpop.f32.mrf.mxu0
      %1421 = vmatprep.mubr.bf16.mxu0 0
      %1422 = vmatmul.mubr.bf16.gmra.mxu0 %v1352
      %v1423 = vpop.f32.mrf.mxu0
      %v1424 = vadd.f32 0.0, %v1423
      %v1425 = vpop.f32.mrf.mxu0
      %v1426 = vpop.f32.mrf.mxu0
      %v1427 = vadd.f32 0.0, %v1426
      %v1428 = vpop.f32.mrf.mxu0
      %1429 = vdwg.mxu0
      %v1430 = vadd.f32 %v1311, %v1392
      %v1431 = vadd.f32 %v1312, %v1395
      %v1432 = vadd.f32 %v1313, %v1400
      %v1433 = vadd.f32 %v1314, %v1403
      %v1434 = vadd.f32 %v1315, %v1408
      %v1435 = vadd.f32 %v1316, %v1411
      %v1436 = vadd.f32 %v1317, %v1416
      %v1437 = vadd.f32 %v1318, %v1419
      %v1438 = vadd.f32 %v1319, %v1424
      %v1439 = vadd.f32 %v1320, %v1427
      %v1440 = vld [vmem:[%s230 + $0x34] sm:$0xf]
      %s1441 = scalar_lea.vmem %s1, 16
      %v1442 = vld [vmem:[%s1441] sm:$0x3]
      %v1444 = vunpack.c.l.b16 %v1440
      %v1445 = vpack.c.b16 %v1444, %v1444
      %vm1446 = vsmask.f32 4352
      %v1448 = vshrl.u32 %v1326, 16
      %v1450 = vrot.slane %v1448, 3
      %v1451 = vshll.u32 %v1326, 16
      %v1453 = vrot.slane %v1451, 4
      %v1454 = vor.u32 %v1450, %v1453
      %v1455 = vrot.slane %v1176, 3
      %v1456 = vrot.slane %v1179, 4
      %v1457 = vor.u32 %v1455, %v1456
      %v1458 = vsel %vm1446, %v1454, %v1457
      %v1459 = vrot.slane %v1185, 3
      %v1460 = vrot.slane %v1188, 4
      %v1461 = vor.u32 %v1459, %v1460
      %v1462 = vsel %vm1446, %v1457, %v1461
      %v1463 = vrot.slane %v1194, 3
      %v1464 = vrot.slane %v1197, 4
      %v1465 = vor.u32 %v1463, %v1464
      %v1466 = vsel %vm1446, %v1461, %v1465
      %v1467 = vrot.slane %v1203, 3
      %v1468 = vrot.slane %v1206, 4
      %v1469 = vor.u32 %v1467, %v1468
      %v1470 = vsel %vm1446, %v1465, %v1469
      %v1472 = vshrl.u32 %v1445, 16
      %v1474 = vrot.slane %v1472, 3
      %v1475 = vshll.u32 %v1445, 16
      %v1477 = vrot.slane %v1475, 4
      %v1478 = vor.u32 %v1474, %v1477
      %v1479 = vsel %vm1446, %v1469, %v1478
      %v1481 = vsel %vm298, %v1458, 0
      %v1484 = vsel %vm298, %v1462, 0
      %v1487 = vsel %vm298, %v1466, 0
      %v1490 = vsel %vm298, %v1470, 0
      %v1493 = vsel %vm298, %v1479, 0
      %v1496 = vsel %vm314, %v1442, 0
      %1498 = vmatprep.subr.bf16.mxu0 0
      %1499 = vmatpush1.bf16.msra.mxu0 0
      %1500 = vmatprep.subr.bf16.mxu0 0
      %1501 = vmatpush1.bf16.msra.mxu0 0
      %1502 = vmatprep.subr.bf16.mxu0 0
      %1503 = vmatpush1.bf16.msra.mxu0 0
      %1504 = vmatprep.subr.bf16.mxu0 0
      %1505 = vmatpush1.bf16.msra.mxu0 0
      %1506 = vmatprep.subr.bf16.mxu0 0
      %1507 = vmatpush1.bf16.msra.mxu0 0
      %1508 = vmatprep.subr.bf16.mxu0 0
      %1509 = vmatpush1.bf16.msra.mxu0 0
      %1510 = vmatprep.subr.bf16.mxu0 0
      %1511 = vmatpush1.bf16.msra.mxu0 0
      %1512 = vmatprep.subr.bf16.mxu0 0
      %1513 = vmatpush1.bf16.msra.mxu0 %v1496
      %1514 = vmatprep.subr.bf16.mxu0 0
      %1515 = vmatpush2.bf16.msra.mxu0 0
      %1516 = vmatprep.subr.bf16.mxu0 0
      %1517 = vmatpush2.bf16.msra.mxu0 0
      %1518 = vmatprep.subr.bf16.mxu0 0
      %1519 = vmatpush2.bf16.msra.mxu0 0
      %1520 = vmatprep.subr.bf16.mxu0 0
      %1521 = vmatpush2.bf16.msra.mxu0 0
      %1522 = vmatprep.subr.bf16.mxu0 0
      %1523 = vmatpush2.bf16.msra.mxu0 0
      %1524 = vmatprep.subr.bf16.mxu0 0
      %1525 = vmatpush2.bf16.msra.mxu0 0
      %1526 = vmatprep.subr.bf16.mxu0 0
      %1527 = vmatpush2.bf16.msra.mxu0 0
      %1528 = vmatprep.subr.bf16.mxu0 0
      %1529 = vmatpush2.bf16.msra.mxu0 0
      %1530 = vmatprep.mubr.bf16.mxu0 0
      %1531 = vmatmul.mubr.bf16.gmra.mxu0 %v1481
      %v1532 = vpop.f32.mrf.mxu0
      %v1533 = vadd.f32 0.0, %v1532
      %v1534 = vpop.f32.mrf.mxu0
      %v1535 = vpop.f32.mrf.mxu0
      %v1536 = vadd.f32 0.0, %v1535
      %v1537 = vpop.f32.mrf.mxu0
      %1538 = vmatprep.mubr.bf16.mxu0 0
      %1539 = vmatmul.mubr.bf16.gmra.mxu0 %v1484
      %v1540 = vpop.f32.mrf.mxu0
      %v1541 = vadd.f32 0.0, %v1540
      %v1542 = vpop.f32.mrf.mxu0
      %v1543 = vpop.f32.mrf.mxu0
      %v1544 = vadd.f32 0.0, %v1543
      %v1545 = vpop.f32.mrf.mxu0
      %1546 = vmatprep.mubr.bf16.mxu0 0
      %1547 = vmatmul.mubr.bf16.gmra.mxu0 %v1487
      %v1548 = vpop.f32.mrf.mxu0
      %v1549 = vadd.f32 0.0, %v1548
      %v1550 = vpop.f32.mrf.mxu0
      %v1551 = vpop.f32.mrf.mxu0
      %v1552 = vadd.f32 0.0, %v1551
      %v1553 = vpop.f32.mrf.mxu0
      %1554 = vmatprep.mubr.bf16.mxu0 0
      %1555 = vmatmul.mubr.bf16.gmra.mxu0 %v1490
      %v1556 = vpop.f32.mrf.mxu0
      %v1557 = vadd.f32 0.0, %v1556
      %v1558 = vpop.f32.mrf.mxu0
      %v1559 = vpop.f32.mrf.mxu0
      %v1560 = vadd.f32 0.0, %v1559
      %v1561 = vpop.f32.mrf.mxu0
      %1562 = vmatprep.mubr.bf16.mxu0 0
      %1563 = vmatmul.mubr.bf16.gmra.mxu0 %v1493
      %v1564 = vpop.f32.mrf.mxu0
      %v1565 = vadd.f32 0.0, %v1564
      %v1566 = vpop.f32.mrf.mxu0
      %v1567 = vpop.f32.mrf.mxu0
      %v1568 = vadd.f32 0.0, %v1567
      %v1569 = vpop.f32.mrf.mxu0
      %1570 = vdwg.mxu0
      %v1571 = vadd.f32 %v1430, %v1533
      %v1572 = vadd.f32 %v1431, %v1536
      %v1573 = vadd.f32 %v1432, %v1541
      %v1574 = vadd.f32 %v1433, %v1544
      %v1575 = vadd.f32 %v1434, %v1549
      %v1576 = vadd.f32 %v1435, %v1552
      %v1577 = vadd.f32 %v1436, %v1557
      %v1578 = vadd.f32 %v1437, %v1560
      %v1579 = vadd.f32 %v1438, %v1565
      %v1580 = vadd.f32 %v1439, %v1568
      %v1581 = vpack.c.bf16 %v1572, %v1571
      %v1582 = vpack.c.bf16 %v1574, %v1573
      %v1583 = vpack.c.bf16 %v1576, %v1575
      %v1584 = vpack.c.bf16 %v1578, %v1577
      %v1585 = vpack.c.bf16 %v1580, %v1579
      %v1591 = vunpack.c.l.b16 %v1581
      %v1592 = vunpack.c.h.b16 %v1581
      %v1593 = vunpack.c.l.b16 %v1582
      %v1594 = vunpack.c.h.b16 %v1582
      %v1595 = vunpack.c.l.b16 %v1583
      %v1596 = vunpack.c.h.b16 %v1583
      %v1597 = vunpack.c.l.b16 %v1584
      %v1598 = vunpack.c.h.b16 %v1584
      %v1599 = vunpack.c.l.b16 %v1585
      %v1600 = vunpack.c.h.b16 %v1585
      %v1601 = vpack.c.b16 %v1591, %v1591
      %v1602 = vpack.c.b16 %v1592, %v1592
      %v1603 = vpack.c.b16 %v1593, %v1593
      %v1604 = vpack.c.b16 %v1594, %v1594
      %v1605 = vpack.c.b16 %v1595, %v1595
      %v1606 = vpack.c.b16 %v1596, %v1596
      %v1607 = vpack.c.b16 %v1597, %v1597
      %v1608 = vpack.c.b16 %v1598, %v1598
      %v1609 = vpack.c.b16 %v1599, %v1599
      %v1610 = vpack.c.b16 %v1600, %v1600
      %vm1621 = vcmask 27648
      %1622 = vst.msk [vmem:[%s235] sm:$0xf] %vm1621, %v1601
      %1623 = vst.msk [vmem:[%s235 + $0x4] sm:$0xf] %vm1621, %v1602
      %1624 = vst.msk [vmem:[%s235 + $0x8] sm:$0xf] %vm1621, %v1603
      %1625 = vst.msk [vmem:[%s235 + $0xc] sm:$0xf] %vm1621, %v1604
      %1626 = vst.msk [vmem:[%s235 + $0x10] sm:$0xf] %vm1621, %v1605
      %1627 = vst.msk [vmem:[%s235 + $0x14] sm:$0xf] %vm1621, %v1606
      %1628 = vst.msk [vmem:[%s235 + $0x18] sm:$0xf] %vm1621, %v1607
      %1629 = vst.msk [vmem:[%s235 + $0x1c] sm:$0xf] %vm1621, %v1608
      %1630 = vst.msk [vmem:[%s235 + $0x20] sm:$0xf] %vm1621, %v1609
      %1631 = vst.msk [vmem:[%s235 + $0x24] sm:$0xf] %vm1621, %v1610
      %v1632 = vld [vmem:[%s2] sm:$0xff]
      %v1633 = vld [vmem:[%s2 + $0x8] sm:$0xff]
      %v1634 = vld [vmem:[%s2 + $0x10] sm:$0xff]
      %v1635 = vld [vmem:[%s2 + $0x18] sm:$0xff]
      %v1636 = vld [vmem:[%s2 + $0x20] sm:$0xff]
      %v1637 = vld [vmem:[%s2 + $0x28] sm:$0xff]
      %v1638 = vld [vmem:[%s2 + $0x30] sm:$0xff]
      %v1639 = vld [vmem:[%s2 + $0x38] sm:$0xff]
      %v1640 = vld [vmem:[%s2 + $0x40] sm:$0xff]
      %v1641 = vld [vmem:[%s2 + $0x48] sm:$0xff]
      %1643 = vset.pattern.permute.xlu0 0
      %1644 = vperm.xlu0 %1643, %v1632
      %v1645 = vpop.permute.xlu0 %1644
      %1648 = vset.pattern.permute.xlu0 0
      %1649 = vperm.xlu0 %1648, %v1633
      %v1650 = vpop.permute.xlu0 %1649
      %1653 = vset.pattern.permute.xlu0 0
      %1654 = vperm.xlu0 %1653, %v1634
      %v1655 = vpop.permute.xlu0 %1654
      %1658 = vset.pattern.permute.xlu0 0
      %1659 = vperm.xlu0 %1658, %v1635
      %v1660 = vpop.permute.xlu0 %1659
      %1663 = vset.pattern.permute.xlu0 0
      %1664 = vperm.xlu0 %1663, %v1636
      %v1665 = vpop.permute.xlu0 %1664
      %1668 = vset.pattern.permute.xlu0 0
      %1669 = vperm.xlu0 %1668, %v1637
      %v1670 = vpop.permute.xlu0 %1669
      %1673 = vset.pattern.permute.xlu0 0
      %1674 = vperm.xlu0 %1673, %v1638
      %v1675 = vpop.permute.xlu0 %1674
      %1678 = vset.pattern.permute.xlu0 0
      %1679 = vperm.xlu0 %1678, %v1639
      %v1680 = vpop.permute.xlu0 %1679
      %1683 = vset.pattern.permute.xlu0 0
      %1684 = vperm.xlu0 %1683, %v1640
      %v1685 = vpop.permute.xlu0 %1684
      %1688 = vset.pattern.permute.xlu0 0
      %1689 = vperm.xlu0 %1688, %v1641
      %v1690 = vpop.permute.xlu0 %1689
      %v1692 = vmul.f32 %v1571, %v1645
      %v1693 = vmul.f32 %v1572, %v1650
      %v1694 = vmul.f32 %v1573, %v1655
      %v1695 = vmul.f32 %v1574, %v1660
      %v1696 = vmul.f32 %v1575, %v1665
      %v1697 = vmul.f32 %v1576, %v1670
      %v1698 = vmul.f32 %v1577, %v1675
      %v1699 = vmul.f32 %v1578, %v1680
      %v1700 = vmul.f32 %v1579, %v1685
      %v1701 = vmul.f32 %v1580, %v1690
      %v1702 = vsel %vm298, %v1692, 0.0
      %v1703 = vsel %vm298, %v1693, 0.0
      %v1704 = vadd.f32 %v1702, %v1703
      %v1705 = vsel %vm298, %v1694, 0.0
      %v1706 = vadd.f32 %v1704, %v1705
      %v1707 = vsel %vm298, %v1695, 0.0
      %v1708 = vadd.f32 %v1706, %v1707
      %v1709 = vsel %vm298, %v1696, 0.0
      %v1710 = vadd.f32 %v1708, %v1709
      %v1711 = vsel %vm298, %v1697, 0.0
      %v1712 = vadd.f32 %v1710, %v1711
      %v1713 = vsel %vm298, %v1698, 0.0
      %v1714 = vadd.f32 %v1712, %v1713
      %v1715 = vsel %vm298, %v1699, 0.0
      %v1716 = vadd.f32 %v1714, %v1715
      %v1717 = vsel %vm298, %v1700, 0.0
      %v1718 = vadd.f32 %v1716, %v1717
      %v1719 = vsel %vm298, %v1701, 0.0
      %v1720 = vadd.f32 %v1718, %v1719
      %v1721 = vrot.slane %v1720, 4
      %v1722 = vadd.f32 %v1720, %v1721
      %v1723 = vrot.slane %v1722, 2
      %v1724 = vadd.f32 %v1722, %v1723
      %v1725 = vrot.slane %v1724, 1
      %v1726 = vadd.f32 %v1724, %v1725
      %vm1727 = vcmask 24576
      %1728 = vst.msk [vmem:[%s238] sm:$0x1] %vm1727, %v1726
      %v1729 = vmul.f32 %v1692, %v1692
      %v1730 = vmul.f32 %v1693, %v1693
      %v1731 = vmul.f32 %v1694, %v1694
      %v1732 = vmul.f32 %v1695, %v1695
      %v1733 = vmul.f32 %v1696, %v1696
      %v1734 = vmul.f32 %v1697, %v1697
      %v1735 = vmul.f32 %v1698, %v1698
      %v1736 = vmul.f32 %v1699, %v1699
      %v1737 = vmul.f32 %v1700, %v1700
      %v1738 = vmul.f32 %v1701, %v1701
      %v1739 = vsel %vm298, %v1729, 0.0
      %v1740 = vsel %vm298, %v1730, 0.0
      %v1741 = vadd.f32 %v1739, %v1740
      %v1742 = vsel %vm298, %v1731, 0.0
      %v1743 = vadd.f32 %v1741, %v1742
      %v1744 = vsel %vm298, %v1732, 0.0
      %v1745 = vadd.f32 %v1743, %v1744
      %v1746 = vsel %vm298, %v1733, 0.0
      %v1747 = vadd.f32 %v1745, %v1746
      %v1748 = vsel %vm298, %v1734, 0.0
      %v1749 = vadd.f32 %v1747, %v1748
      %v1750 = vsel %vm298, %v1735, 0.0
      %v1751 = vadd.f32 %v1749, %v1750
      %v1752 = vsel %vm298, %v1736, 0.0
      %v1753 = vadd.f32 %v1751, %v1752
      %v1754 = vsel %vm298, %v1737, 0.0
      %v1755 = vadd.f32 %v1753, %v1754
      %v1756 = vsel %vm298, %v1738, 0.0
      %v1757 = vadd.f32 %v1755, %v1756
      %v1758 = vrot.slane %v1757, 4
      %v1759 = vadd.f32 %v1757, %v1758
      %v1760 = vrot.slane %v1759, 2
      %v1761 = vadd.f32 %v1759, %v1760
      %v1762 = vrot.slane %v1761, 1
      %v1763 = vadd.f32 %v1761, %v1762
      %1764 = vst.msk [vmem:[%s241] sm:$0x1] %vm1727, %v1763
      %p1765 = scmp.lt.s32.totalorder %s17, 1
      %s1766 = scalar_select %p1765, %s17, 1
      %s1767 = smul.addr %s1766, 10
      %s1768 = smul.addr %s1767, 4
      %s1769 = scalar_lea.vmem %s3, %s1768
      %p1770 = scmp.lt.s32.totalorder %s17, 1
      %s1771 = scalar_select %p1770, %s17, 1
      %s1772 = scalar_lea.vmem %s4, %s1771
      %p1773 = scmp.lt.s32.totalorder %s17, 1
      %s1774 = scalar_select %p1773, %s17, 1
      %s1775 = scalar_lea.vmem %s5, %s1774
      // Predicated region
      $region33: #{parallel_net_forward.29} parent=31 // pred_check
        %p1776 = pneg %p103
      $region34: #{parallel_net_forward.29} parent=31 // pred_check_branch
        %1778 = sbr.rel (%p1776) target = $region36
      $region35: #{parallel_net_forward.29} parent=31 // pred_region
        _
      $region36: #{parallel_net_forward.29} parent=31 // pred_fallthru
        _
      // Predicated region
      $region37: #{parallel_net_forward.29} parent=31 // pred_check
        %p1779 = pneg %p129
      $region38: #{parallel_net_forward.29} parent=31 // pred_check_branch
        %1781 = sbr.rel (%p1779) target = $region40
      $region39: #{parallel_net_forward.29} parent=31 // pred_region
        _
      $region40: #{parallel_net_forward.29} parent=31 // pred_fallthru
        _
      // Predicated region
      $region41: #{parallel_net_forward.29} parent=31 // pred_check
        %p1782 = pneg %p155
      $region42: #{parallel_net_forward.29} parent=31 // pred_check_branch
        %1784 = sbr.rel (%p1782) target = $region44
      $region43: #{parallel_net_forward.29} parent=31 // pred_region
        _
      $region44: #{parallel_net_forward.29} parent=31 // pred_fallthru
        _
    $region32: #{parallel_net_forward.29} parent=5 // pred_fallthru
      _
    %p1785 = scmp.le.s32.totalorder 2, %s12
    // Predicated region
    $region45: #{parallel_net_forward.29} parent=5 // pred_check
      %p1786 = pneg %p1785
    $region46: #{parallel_net_forward.29} parent=5 // pred_check_branch
      %1788 = sbr.rel (%p1786) target = $region48
    $region47: #{parallel_net_forward.29} parent=5 // pred_region
      %s1789 = ssub.s32 %s12, 2
      // Predicated region
      $region49: #{parallel_net_forward.29} parent=47 // pred_check
        %p1790 = pneg %p109
      $region50: #{parallel_net_forward.29} parent=47 // pred_check_branch
        %1792 = sbr.rel (%p1790) target = $region52
      $region51: #{parallel_net_forward.29} parent=47 // pred_region
        %p1793 = scmp.lt.s32.totalorder %s18, 1
        %s1794 = scalar_select %p1793, %s18, 1
        %s1795 = smul.addr %s1794, 10
        %s1796 = smul.addr %s1795, 4
        %s1797 = scalar_lea.vmem %s3, %s1796
      $region52: #{parallel_net_forward.29} parent=47 // pred_fallthru
        _
      // Predicated region
      $region53: #{parallel_net_forward.29} parent=47 // pred_check
        %p1798 = pneg %p135
      $region54: #{parallel_net_forward.29} parent=47 // pred_check_branch
        %1800 = sbr.rel (%p1798) target = $region56
      $region55: #{parallel_net_forward.29} parent=47 // pred_region
        %p1801 = scmp.lt.s32.totalorder %s18, 1
        %s1802 = scalar_select %p1801, %s18, 1
        %s1803 = scalar_lea.vmem %s4, %s1802
      $region56: #{parallel_net_forward.29} parent=47 // pred_fallthru
        _
      // Predicated region
      $region57: #{parallel_net_forward.29} parent=47 // pred_check
        %p1804 = pneg %p161
      $region58: #{parallel_net_forward.29} parent=47 // pred_check_branch
        %1806 = sbr.rel (%p1804) target = $region60
      $region59: #{parallel_net_forward.29} parent=47 // pred_region
        %p1807 = scmp.lt.s32.totalorder %s18, 1
        %s1808 = scalar_select %p1807, %s18, 1
        %s1809 = scalar_lea.vmem %s5, %s1808
      $region60: #{parallel_net_forward.29} parent=47 // pred_fallthru
        _
    $region48: #{parallel_net_forward.29} parent=5 // pred_fallthru
      _
  $region6: #{parallel_net_forward.29} parent=0 // loop_footer
    %s16 = sadd.s32 1, %s12
  $region7: #{parallel_net_forward.29} parent=0 // loop_footer_branch
    %11 = sbr.rel target = $region3
  $region8: #{parallel_net_forward.29} parent=0 // loop_exit
    _

// kernel: tile.153
$region0: #{tile.153}
  #allocation0 [shape = 's32[1]{0}', space=sflag, size = 0x4, scoped, tag = 'scoped memory for tile.153']
  %s0 = inlined_call_operand.vmem [shape: f32[8], index: 0, kind: input, shape index: {}]
  %s1 = inlined_call_operand.vmem [shape: f32[16,8], index: 1, kind: output, shape index: {}]
  // Predicated region
  $region2: #{tile.153} parent=0 // pred_check
    _
  $region3: #{tile.153} parent=0 // pred_check_branch
    %3 = sbr.rel (0) target = $region5
  $region4: #{tile.153} parent=0 // pred_region
    _
  $region5: #{tile.153} parent=0 // pred_fallthru
    _
  %v4 = vld [vmem:[%s0] ss:$0 sm:$0xff]
  %5 = vst [vmem:[%s1] sm:$0xff] %v4
  %s6 = scalar_lea.vmem %s1, 8
  %7 = vst [vmem:[%s6] sm:$0xff] %v4

// kernel: tile.154
$region0: #{tile.154}
  %s0 = inlined_call_operand.vmem [shape: f32[16,8], index: 0, kind: input, shape index: {}]
  %s1 = inlined_call_operand.vmem [shape: f32[1,128], index: 1, kind: output, shape index: {}]
  $region1: #{tile.154} parent=0
    #allocation0 [shape = 'u8[4096]{0}', space=vmem, size = 0x1000, scoped, tag = 'scoped mem for output reshape']
    %v2 = vld [vmem:[%s0] sm:$0x1]
    %vm3 = vcmask 64512
    %4 = vst.msk [vmem:[#allocation0] sm:$0x1] %vm3, %v2
    %s5 = scalar_lea.vmem %s0, 15
    %v6 = vld [vmem:[%s5] sm:$0x1]
    %7 = vrot.lane.b32.xlu0 %v6, 120
    %v8 = vpop.permute.xlu0 %7
    %vm9 = vcmask 1048512
    %10 = vst.msk [vmem:[#allocation0] sm:$0x1] %vm9, %v8
    %s11 = scalar_lea.vmem %s0, 14
    %v12 = vld [vmem:[%s11] sm:$0x1]
    %13 = vrot.lane.b32.xlu0 %v12, 112
    %v14 = vpop.permute.xlu0 %13
    %vm15 = vcmask 982912
    %16 = vst.msk [vmem:[#allocation0] sm:$0x1] %vm15, %v14
    %s17 = scalar_lea.vmem %s0, 13
    %v18 = vld [vmem:[%s17] sm:$0x1]
    %19 = vrot.lane.b32.xlu0 %v18, 104
    %v20 = vpop.permute.xlu0 %19
    %vm21 = vcmask 917312
    %22 = vst.msk [vmem:[#allocation0] sm:$0x1] %vm21, %v20
    %s23 = scalar_lea.vmem %s0, 12
    %v24 = vld [vmem:[%s23] sm:$0x1]
    %25 = vrot.lane.b32.xlu0 %v24, 96
    %v26 = vpop.permute.xlu0 %25
    %vm27 = vcmask 851712
    %28 = vst.msk [vmem:[#allocation0] sm:$0x1] %vm27, %v26
    %s29 = scalar_lea.vmem %s0, 11
    %v30 = vld [vmem:[%s29] sm:$0x1]
    %31 = vrot.lane.b32.xlu0 %v30, 88
    %v32 = vpop.permute.xlu0 %31
    %vm33 = vcmask 786112
    %34 = vst.msk [vmem:[#allocation0] sm:$0x1] %vm33, %v32
    %s35 = scalar_lea.vmem %s0, 10
    %v36 = vld [vmem:[%s35] sm:$0x1]
    %37 = vrot.lane.b32.xlu0 %v36, 80
    %v38 = vpop.permute.xlu0 %37
    %vm39 = vcmask 720512
    %40 = vst.msk [vmem:[#allocation0] sm:$0x1] %vm39, %v38
    %s41 = scalar_lea.vmem %s0, 9
    %v42 = vld [vmem:[%s41] sm:$0x1]
    %43 = vrot.lane.b32.xlu0 %v42, 72
    %v44 = vpop.permute.xlu0 %43
    %vm45 = vcmask 654912
    %46 = vst.msk [vmem:[#allocation0] sm:$0x1] %vm45, %v44
    %s47 = scalar_lea.vmem %s0, 8
    %v48 = vld [vmem:[%s47] sm:$0x1]
    %49 = vrot.lane.b32.xlu0 %v48, 64
    %v50 = vpop.permute.xlu0 %49
    %vm51 = vcmask 589312
    %52 = vst.msk [vmem:[#allocation0] sm:$0x1] %vm51, %v50
    %s53 = scalar_lea.vmem %s0, 7
    %v54 = vld [vmem:[%s53] sm:$0x1]
    %55 = vrot.lane.b32.xlu0 %v54, 56
    %v56 = vpop.permute.xlu0 %55
    %vm57 = vcmask 523712
    %58 = vst.msk [vmem:[#allocation0] sm:$0x1] %vm57, %v56
    %s59 = scalar_lea.vmem %s0, 6
    %v60 = vld [vmem:[%s59] sm:$0x1]
    %61 = vrot.lane.b32.xlu0 %v60, 48
    %v62 = vpop.permute.xlu0 %61
    %vm63 = vcmask 458112
    %64 = vst.msk [vmem:[#allocation0] sm:$0x1] %vm63, %v62
    %s65 = scalar_lea.vmem %s0, 5
    %v66 = vld [vmem:[%s65] sm:$0x1]
    %67 = vrot.lane.b32.xlu0 %v66, 40
    %v68 = vpop.permute.xlu0 %67
    %vm69 = vcmask 392512
    %70 = vst.msk [vmem:[#allocation0] sm:$0x1] %vm69, %v68
    %s71 = scalar_lea.vmem %s0, 4
    %v72 = vld [vmem:[%s71] sm:$0x1]
    %73 = vrot.lane.b32.xlu0 %v72, 32
    %v74 = vpop.permute.xlu0 %73
    %vm75 = vcmask 326912
    %76 = vst.msk [vmem:[#allocation0] sm:$0x1] %vm75, %v74
    %s77 = scalar_lea.vmem %s0, 3
    %v78 = vld [vmem:[%s77] sm:$0x1]
    %79 = vrot.lane.b32.xlu0 %v78, 24
    %v80 = vpop.permute.xlu0 %79
    %vm81 = vcmask 261312
    %82 = vst.msk [vmem:[#allocation0] sm:$0x1] %vm81, %v80
    %s83 = scalar_lea.vmem %s0, 2
    %v84 = vld [vmem:[%s83] sm:$0x1]
    %85 = vrot.lane.b32.xlu0 %v84, 16
    %v86 = vpop.permute.xlu0 %85
    %vm87 = vcmask 195712
    %88 = vst.msk [vmem:[#allocation0] sm:$0x1] %vm87, %v86
    %s89 = scalar_lea.vmem %s0, 1
    %v90 = vld [vmem:[%s89] sm:$0x1]
    %91 = vrot.lane.b32.xlu0 %v90, 8
    %v92 = vpop.permute.xlu0 %91
    %vm93 = vcmask 130112
    %94 = vst.msk [vmem:[#allocation0] sm:$0x1] %vm93, %v92
    %s96 = sshll.u32 1, 1
    %s97 = ssub.s32 %s96, 1
    %v99 = vld [vmem:[#allocation0] sm:%s97]
    %s100 = sshll.u32 1, 1
    %s101 = ssub.s32 %s100, 1
    %102 = vst [vmem:[%s1] sm:%s101] %v99

// kernel: parallel_net_forward.33
$region0: #{parallel_net_forward.33}
  #allocation0 [shape = 'u32[]', space=smem, size = 0x4, offset = 0x4, fixed_abs, tag = 'smem constant byte address 0x4 - core index']
  #allocation1 [shape = 'u32[144,128]{1,0:T(1,128)}', space=vmem, size = 0x12000, scoped, tag = 'internal scratch']
  %s0 = inlined_call_operand.vmem [shape: bf16[32,36], index: 0, kind: input, shape index: {}]
  %s1 = inlined_call_operand.vmem [shape: bf16[36,8], index: 1, kind: input, shape index: {}]
  %s2 = inlined_call_operand.vmem [shape: bf16[32,8], index: 2, kind: output, shape index: {0}]
  %s3 = inlined_call_operand.vmem [shape: f32[2,1,8], index: 3, kind: output, shape index: {1}]
  %s4 = inlined_call_operand.vmem [shape: f32[2,1,8], index: 4, kind: output, shape index: {2}]
  %5 = xla_tuple %s2, %s3, %s4
  %s6 = sld [smem:[#allocation0]]
  $region57: #{parallel_net_forward.33} parent=0
    _
  %s8 = ssub.s32 1, %s6
  %s9 = scalar_select 0, %s8, %s6
  loop: start=0, step=1, limit=4
  $region2: #{parallel_net_forward.33} parent=0 // loop_pre_header
    _
  $region3: #{parallel_net_forward.33} parent=0 // loop_header
    %s11 = sphi 0, %s15
    %p12 = scmp.ge.s32.totalorder %s11, 4
    %s21 = sphi 0, %s23
    %s24 = sphi 0, %s21
    %s25 = sphi 0, %s24
    %s41 = sphi 0, %s25
    %s45 = sphi 0, %s45
    %s47 = sphi 0, %s45
    %s48 = sphi 0, %s47
    %s62 = sphi 0, %s48
    %s68 = sphi 0, %s70
    %s71 = sphi 0, %s68
    %s72 = sphi 0, %s71
    %s88 = sphi 0, %s72
    %s94 = sphi 0, %s96
    %s97 = sphi 0, %s94
    %s98 = sphi 0, %s97
    %s114 = sphi 0, %s98
    %s120 = sphi 0, %s122
    %s123 = sphi 0, %s120
    %s124 = sphi 0, %s123
    %s140 = sphi 0, %s124
  $region4: #{parallel_net_forward.33} parent=0 // loop_header_branch
    %14 = sbr.rel (%p12) target = $region8
  $region5: #{parallel_net_forward.33} parent=0 // loop_body
    %s16 = ssub.s32 %s11, 1
    %s17 = ssub.s32 %s11, 2
    %s18 = sadd.s32 %s11, 1
    %s19 = ssub.s32 %s11, %s18
    %p20 = scmp.eq.s32.totalorder %s19, 0
    %s22 = sadd.s32 %s21, 1
    %s23 = scalar_select %p20, %s21, %s22
    %p26 = pneg %p20
    %p27 = scmp.eq.s32.totalorder %s11, 1
    %p28 = por %p26, %p27
    %p29 = scmp.ne.s32.totalorder %s21, %s24
    %p30 = scmp.eq.s32.totalorder %s11, 0
    %p31 = por %p29, %p30
    %p32 = scmp.ne.s32.totalorder %s21, %s24
    %p33 = scmp.eq.s32.totalorder %s16, 1
    %p34 = por %p32, %p33
    %p35 = scmp.ne.s32.totalorder %s24, %s25
    %p36 = scmp.eq.s32.totalorder %s16, 0
    %p37 = por %p35, %p36
    %p38 = scmp.ne.s32.totalorder %s24, %s25
    %p39 = scmp.eq.s32.totalorder %s17, 1
    %p40 = por %p38, %p39
    %p42 = scmp.ne.s32.totalorder %s25, %s41
    %p43 = scmp.eq.s32.totalorder %s17, 0
    %p44 = por %p42, %p43
    %s46 = sadd.s32 %s45, 1
    %p49 = scmp.eq.s32.totalorder %s11, 1
    %p50 = scmp.ne.s32.totalorder %s45, %s47
    %p51 = scmp.eq.s32.totalorder %s11, 0
    %p52 = por %p50, %p51
    %p53 = scmp.ne.s32.totalorder %s45, %s47
    %p54 = scmp.eq.s32.totalorder %s16, 1
    %p55 = por %p53, %p54
    %p56 = scmp.ne.s32.totalorder %s47, %s48
    %p57 = scmp.eq.s32.totalorder %s16, 0
    %p58 = por %p56, %p57
    %p59 = scmp.ne.s32.totalorder %s47, %s48
    %p60 = scmp.eq.s32.totalorder %s17, 1
    %p61 = por %p59, %p60
    %p63 = scmp.ne.s32.totalorder %s48, %s62
    %p64 = scmp.eq.s32.totalorder %s17, 0
    %p65 = por %p63, %p64
    %s66 = ssub.s32 %s11, %s18
    %p67 = scmp.eq.s32.totalorder %s66, 0
    %s69 = sadd.s32 %s68, 1
    %s70 = scalar_select %p67, %s68, %s69
    %p73 = pneg %p67
    %p74 = scmp.eq.s32.totalorder %s11, 1
    %p75 = por %p73, %p74
    %p76 = scmp.ne.s32.totalorder %s68, %s71
    %p77 = scmp.eq.s32.totalorder %s11, 0
    %p78 = por %p76, %p77
    %p79 = scmp.ne.s32.totalorder %s68, %s71
    %p80 = scmp.eq.s32.totalorder %s16, 1
    %p81 = por %p79, %p80
    %p82 = scmp.ne.s32.totalorder %s71, %s72
    %p83 = scmp.eq.s32.totalorder %s16, 0
    %p84 = por %p82, %p83
    %p85 = scmp.ne.s32.totalorder %s71, %s72
    %p86 = scmp.eq.s32.totalorder %s17, 1
    %p87 = por %p85, %p86
    %p89 = scmp.ne.s32.totalorder %s72, %s88
    %p90 = scmp.eq.s32.totalorder %s17, 0
    %p91 = por %p89, %p90
    %s92 = ssub.s32 %s11, %s18
    %p93 = scmp.eq.s32.totalorder %s92, 0
    %s95 = sadd.s32 %s94, 1
    %s96 = scalar_select %p93, %s94, %s95
    %p99 = pneg %p93
    %p100 = scmp.eq.s32.totalorder %s11, 1
    %p101 = por %p99, %p100
    %p102 = scmp.ne.s32.totalorder %s94, %s97
    %p103 = scmp.eq.s32.totalorder %s11, 0
    %p104 = por %p102, %p103
    %p105 = scmp.ne.s32.totalorder %s94, %s97
    %p106 = scmp.eq.s32.totalorder %s16, 1
    %p107 = por %p105, %p106
    %p108 = scmp.ne.s32.totalorder %s97, %s98
    %p109 = scmp.eq.s32.totalorder %s16, 0
    %p110 = por %p108, %p109
    %p111 = scmp.ne.s32.totalorder %s97, %s98
    %p112 = scmp.eq.s32.totalorder %s17, 1
    %p113 = por %p111, %p112
    %p115 = scmp.ne.s32.totalorder %s98, %s114
    %p116 = scmp.eq.s32.totalorder %s17, 0
    %p117 = por %p115, %p116
    %s118 = ssub.s32 %s11, %s18
    %p119 = scmp.eq.s32.totalorder %s118, 0
    %s121 = sadd.s32 %s120, 1
    %s122 = scalar_select %p119, %s120, %s121
    %p125 = pneg %p119
    %p126 = scmp.eq.s32.totalorder %s11, 1
    %p127 = por %p125, %p126
    %p128 = scmp.ne.s32.totalorder %s120, %s123
    %p129 = scmp.eq.s32.totalorder %s11, 0
    %p130 = por %p128, %p129
    %p131 = scmp.ne.s32.totalorder %s120, %s123
    %p132 = scmp.eq.s32.totalorder %s16, 1
    %p133 = por %p131, %p132
    %p134 = scmp.ne.s32.totalorder %s123, %s124
    %p135 = scmp.eq.s32.totalorder %s16, 0
    %p136 = por %p134, %p135
    %p137 = scmp.ne.s32.totalorder %s123, %s124
    %p138 = scmp.eq.s32.totalorder %s17, 1
    %p139 = por %p137, %p138
    %p141 = scmp.ne.s32.totalorder %s124, %s140
    %p142 = scmp.eq.s32.totalorder %s17, 0
    %p143 = por %p141, %p142
    %p144 = scmp.le.s32.totalorder 1, %s11
    %p145 = scmp.lt.s32.totalorder %s11, 3
    %p146 = pnand %p144, %p145
    %p147 = pneg %p146
    // Predicated region
    $region9: #{parallel_net_forward.33} parent=5 // pred_check
      _
    $region10: #{parallel_net_forward.33} parent=5 // pred_check_branch
      %149 = sbr.rel (%p146) target = $region12
    $region11: #{parallel_net_forward.33} parent=5 // pred_region
      %s150 = ssub.s32 %s11, 1
      // Predicated region
      $region13: #{parallel_net_forward.33} parent=11 // pred_check
        %p151 = pneg %p58
      $region14: #{parallel_net_forward.33} parent=11 // pred_check_branch
        %153 = sbr.rel (%p151) target = $region16
      $region15: #{parallel_net_forward.33} parent=11 // pred_region
        _
      $region16: #{parallel_net_forward.33} parent=11 // pred_fallthru
        _
    $region12: #{parallel_net_forward.33} parent=5 // pred_fallthru
      _
    %p154 = scmp.lt.s32.totalorder %s11, 2
    // Predicated region
    $region17: #{parallel_net_forward.33} parent=5 // pred_check
      %p155 = pneg %p154
    $region18: #{parallel_net_forward.33} parent=5 // pred_check_branch
      %157 = sbr.rel (%p155) target = $region20
    $region19: #{parallel_net_forward.33} parent=5 // pred_region
      // Predicated region
      $region21: #{parallel_net_forward.33} parent=19 // pred_check
        %p158 = pneg %p31
      $region22: #{parallel_net_forward.33} parent=19 // pred_check_branch
        %160 = sbr.rel (%p158) target = $region24
      $region23: #{parallel_net_forward.33} parent=19 // pred_region
        %s161 = smul.u32 2, %s11
        %p162 = scmp.lt.s32.totalorder %s161, 3
        %s163 = scalar_select %p162, %s161, 3
        %s164 = smul.addr %s163, 4
        %s165 = scalar_lea.vmem %s0, %s164
        %s166 = smul.u32 2, %s11
      $region24: #{parallel_net_forward.33} parent=19 // pred_fallthru
        _
    $region20: #{parallel_net_forward.33} parent=5 // pred_fallthru
      _
    %p167 = scmp.le.s32.totalorder 1, %s11
    %p168 = scmp.lt.s32.totalorder %s11, 3
    %p169 = pnand %p167, %p168
    %p170 = pneg %p169
    // Predicated region
    $region25: #{parallel_net_forward.33} parent=5 // pred_check
      _
    $region26: #{parallel_net_forward.33} parent=5 // pred_check_branch
      %172 = sbr.rel (%p169) target = $region28
    $region27: #{parallel_net_forward.33} parent=5 // pred_region
      %s173 = ssub.s32 %s11, 1
      %s174 = smul.u32 2, %s16
      %p175 = scmp.lt.s32.totalorder %s174, 3
      %s176 = scalar_select %p175, %s174, 3
      %s177 = smul.addr %s176, 4
      %s178 = scalar_lea.vmem %s0, %s177
      %p179 = pneg %p37
      %p180 = pneg %p34
      %p181 = pneg %p58
      %p182 = pneg %p55
      %p183 = pneg %p84
      %p184 = pneg %p81
      %s185 = smul.u32 2, %s16
      %p186 = scmp.lt.s32.totalorder %s185, 3
      %s187 = scalar_select %p186, %s185, 3
      %s188 = smul.addr %s187, 4
      %s189 = scalar_lea.vmem %s2, %s188
      %p190 = pneg %p110
      %p191 = pneg %p107
      %p192 = scmp.lt.s32.totalorder %s16, 1
      %s193 = scalar_select %p192, %s16, 1
      %s194 = scalar_lea.vmem %s3, %s193
      %p195 = pneg %p136
      %p196 = pneg %p133
      %p197 = scmp.lt.s32.totalorder %s16, 1
      %s198 = scalar_select %p197, %s16, 1
      %s199 = scalar_lea.vmem %s4, %s198
      %s200 = smul.u32 2, %s16
      %p201 = scmp.lt.s32.totalorder %s200, 3
      %s202 = scalar_select %p201, %s200, 3
      %s203 = smul.addr %s202, 4
      %s204 = scalar_lea.vmem %s0, %s203
      %s205 = smul.u32 2, %s16
      %s206 = smul.u32 2, %s16
      %p207 = scmp.lt.s32.totalorder %s206, 3
      %s208 = scalar_select %p207, %s206, 3
      %s209 = smul.addr %s208, 4
      %s210 = scalar_lea.vmem %s2, %s209
      %s211 = smul.u32 2, %s16
      %p212 = scmp.lt.s32.totalorder %s16, 1
      %s213 = scalar_select %p212, %s16, 1
      %s214 = scalar_lea.vmem %s3, %s213
      %p215 = scmp.lt.s32.totalorder %s16, 1
      %s216 = scalar_select %p215, %s16, 1
      %s217 = scalar_lea.vmem %s4, %s216
      %v219 = vld [vmem:[%s204] sm:$0xf]
      %v220 = vld [vmem:[%s204 + $0x4] sm:$0xf]
      %v221 = vld [vmem:[%s1] sm:$0xf]
      %v222 = vld [vmem:[%s1 + $0x4] sm:$0xf]
      %v223 = vld [vmem:[%s1 + $0x8] sm:$0xf]
      %v224 = vld [vmem:[%s1 + $0xc] sm:$0xf]
      %v225 = vld [vmem:[%s1 + $0x10] sm:$0x3]
      %v228 = vunpack.c.l.b16 %v219
      %v229 = vunpack.c.l.b16 %v220
      %v230 = vpack.c.b16 %v229, %v228
      %v236 = vunpack.c.l.b16 %v221
      %v237 = vunpack.c.l.b16 %v222
      %v238 = vunpack.c.l.b16 %v223
      %v239 = vunpack.c.l.b16 %v224
      %v240 = vunpack.c.l.b16 %v225
      %v241 = vpack.c.b16 %v237, %v236
      %v242 = vpack.c.b16 %v239, %v238
      %v243 = vpack.c.b16 %v240, %v240
      %vm246 = vcmask 293888
      %v248 = vsel %vm246, %v230, 0
      %vm250 = vcmask 1041408
      %v252 = vsel %vm250, %v243, 0
      %254 = vmatprep.subr.bf16.mxu0 0
      %255 = vmatpush1.bf16.msra.mxu0 0
      %256 = vmatprep.subr.bf16.mxu0 0
      %257 = vmatpush1.bf16.msra.mxu0 0
      %258 = vmatprep.subr.bf16.mxu0 0
      %259 = vmatpush1.bf16.msra.mxu0 0
      %260 = vmatprep.subr.bf16.mxu0 0
      %261 = vmatpush1.bf16.msra.mxu0 0
      %262 = vmatprep.subr.bf16.mxu0 0
      %263 = vmatpush1.bf16.msra.mxu0 0
      %264 = vmatprep.subr.bf16.mxu0 0
      %265 = vmatpush1.bf16.msra.mxu0 %v252
      %266 = vmatprep.subr.bf16.mxu0 0
      %267 = vmatpush1.bf16.msra.mxu0 %v242
      %268 = vmatprep.subr.bf16.mxu0 0
      %269 = vmatpush1.bf16.msra.mxu0 %v241
      %270 = vmatprep.subr.bf16.mxu0 0
      %271 = vmatpush2.bf16.msra.mxu0 0
      %272 = vmatprep.subr.bf16.mxu0 0
      %273 = vmatpush2.bf16.msra.mxu0 0
      %274 = vmatprep.subr.bf16.mxu0 0
      %275 = vmatpush2.bf16.msra.mxu0 0
      %276 = vmatprep.subr.bf16.mxu0 0
      %277 = vmatpush2.bf16.msra.mxu0 0
      %278 = vmatprep.subr.bf16.mxu0 0
      %279 = vmatpush2.bf16.msra.mxu0 0
      %280 = vmatprep.subr.bf16.mxu0 0
      %281 = vmatpush2.bf16.msra.mxu0 0
      %282 = vmatprep.subr.bf16.mxu0 0
      %283 = vmatpush2.bf16.msra.mxu0 0
      %284 = vmatprep.subr.bf16.mxu0 0
      %285 = vmatpush2.bf16.msra.mxu0 0
      %286 = vmatprep.mubr.bf16.mxu0 0
      %287 = vmatmul.mubr.bf16.gmra.mxu0 %v248
      %v288 = vpop.f32.mrf.mxu0
      %v289 = vadd.f32 0.0, %v288
      %v290 = vpop.f32.mrf.mxu0
      %v291 = vpop.f32.mrf.mxu0
      %v292 = vadd.f32 0.0, %v291
      %v293 = vpop.f32.mrf.mxu0
      %294 = vdwg.mxu0
      %v295 = vpack.c.bf16 %v292, %v289
      %v297 = vunpack.c.l.b16 %v295
      %v298 = vunpack.c.h.b16 %v295
      %v299 = vpack.c.b16 %v297, %v297
      %v300 = vpack.c.b16 %v298, %v298
      %vm303 = vcmask 60416
      %304 = vst.msk [vmem:[%s210] sm:$0xf] %vm303, %v299
      %305 = vst.msk [vmem:[%s210 + $0x4] sm:$0xf] %vm303, %v300
      %vm306 = vcmask 64512
      %v307 = vsel %vm306, %v289, 0.0
      %v308 = vsel %vm306, %v292, 0.0
      %v309 = vadd.f32 %v307, %v308
      %v310 = vrot.slane %v309, 4
      %v311 = vadd.f32 %v309, %v310
      %v312 = vrot.slane %v311, 2
      %v313 = vadd.f32 %v311, %v312
      %v314 = vrot.slane %v313, 1
      %v315 = vadd.f32 %v313, %v314
      %vm316 = vcmask 57344
      %317 = vst.msk [vmem:[%s214] sm:$0x1] %vm316, %v315
      %v318 = vmul.f32 %v289, %v289
      %v319 = vmul.f32 %v292, %v292
      %v320 = vsel %vm306, %v318, 0.0
      %v321 = vsel %vm306, %v319, 0.0
      %v322 = vadd.f32 %v320, %v321
      %v323 = vrot.slane %v322, 4
      %v324 = vadd.f32 %v322, %v323
      %v325 = vrot.slane %v324, 2
      %v326 = vadd.f32 %v324, %v325
      %v327 = vrot.slane %v326, 1
      %v328 = vadd.f32 %v326, %v327
      %329 = vst.msk [vmem:[%s217] sm:$0x1] %vm316, %v328
      %s330 = smul.u32 2, %s16
      %p331 = scmp.lt.s32.totalorder %s330, 3
      %s332 = scalar_select %p331, %s330, 3
      %s333 = smul.addr %s332, 4
      %s334 = scalar_lea.vmem %s2, %s333
      %p335 = scmp.lt.s32.totalorder %s16, 1
      %s336 = scalar_select %p335, %s16, 1
      %s337 = scalar_lea.vmem %s3, %s336
      %p338 = scmp.lt.s32.totalorder %s16, 1
      %s339 = scalar_select %p338, %s16, 1
      %s340 = scalar_lea.vmem %s4, %s339
      // Predicated region
      $region29: #{parallel_net_forward.33} parent=27 // pred_check
        %p341 = pneg %p81
      $region30: #{parallel_net_forward.33} parent=27 // pred_check_branch
        %343 = sbr.rel (%p341) target = $region32
      $region31: #{parallel_net_forward.33} parent=27 // pred_region
        %s344 = smul.u32 2, %s16
      $region32: #{parallel_net_forward.33} parent=27 // pred_fallthru
        _
      // Predicated region
      $region33: #{parallel_net_forward.33} parent=27 // pred_check
        %p345 = pneg %p107
      $region34: #{parallel_net_forward.33} parent=27 // pred_check_branch
        %347 = sbr.rel (%p345) target = $region36
      $region35: #{parallel_net_forward.33} parent=27 // pred_region
        _
      $region36: #{parallel_net_forward.33} parent=27 // pred_fallthru
        _
      // Predicated region
      $region37: #{parallel_net_forward.33} parent=27 // pred_check
        %p348 = pneg %p133
      $region38: #{parallel_net_forward.33} parent=27 // pred_check_branch
        %350 = sbr.rel (%p348) target = $region40
      $region39: #{parallel_net_forward.33} parent=27 // pred_region
        _
      $region40: #{parallel_net_forward.33} parent=27 // pred_fallthru
        _
    $region28: #{parallel_net_forward.33} parent=5 // pred_fallthru
      _
    %p351 = scmp.le.s32.totalorder 2, %s11
    // Predicated region
    $region41: #{parallel_net_forward.33} parent=5 // pred_check
      %p352 = pneg %p351
    $region42: #{parallel_net_forward.33} parent=5 // pred_check_branch
      %354 = sbr.rel (%p352) target = $region44
    $region43: #{parallel_net_forward.33} parent=5 // pred_region
      %s355 = ssub.s32 %s11, 2
      // Predicated region
      $region45: #{parallel_net_forward.33} parent=43 // pred_check
        %p356 = pneg %p87
      $region46: #{parallel_net_forward.33} parent=43 // pred_check_branch
        %358 = sbr.rel (%p356) target = $region48
      $region47: #{parallel_net_forward.33} parent=43 // pred_region
        %s359 = smul.u32 2, %s17
        %p360 = scmp.lt.s32.totalorder %s359, 3
        %s361 = scalar_select %p360, %s359, 3
        %s362 = smul.addr %s361, 4
        %s363 = scalar_lea.vmem %s2, %s362
      $region48: #{parallel_net_forward.33} parent=43 // pred_fallthru
        _
      // Predicated region
      $region49: #{parallel_net_forward.33} parent=43 // pred_check
        %p364 = pneg %p113
      $region50: #{parallel_net_forward.33} parent=43 // pred_check_branch
        %366 = sbr.rel (%p364) target = $region52
      $region51: #{parallel_net_forward.33} parent=43 // pred_region
        %p367 = scmp.lt.s32.totalorder %s17, 1
        %s368 = scalar_select %p367, %s17, 1
        %s369 = scalar_lea.vmem %s3, %s368
      $region52: #{parallel_net_forward.33} parent=43 // pred_fallthru
        _
      // Predicated region
      $region53: #{parallel_net_forward.33} parent=43 // pred_check
        %p370 = pneg %p139
      $region54: #{parallel_net_forward.33} parent=43 // pred_check_branch
        %372 = sbr.rel (%p370) target = $region56
      $region55: #{parallel_net_forward.33} parent=43 // pred_region
        %p373 = scmp.lt.s32.totalorder %s17, 1
        %s374 = scalar_select %p373, %s17, 1
        %s375 = scalar_lea.vmem %s4, %s374
      $region56: #{parallel_net_forward.33} parent=43 // pred_fallthru
        _
    $region44: #{parallel_net_forward.33} parent=5 // pred_fallthru
      _
  $region6: #{parallel_net_forward.33} parent=0 // loop_footer
    %s15 = sadd.s32 1, %s11
  $region7: #{parallel_net_forward.33} parent=0 // loop_footer_branch
    %10 = sbr.rel target = $region3
  $region8: #{parallel_net_forward.33} parent=0 // loop_exit
    _

// kernel: parallel_net_forward.35
$region0: #{parallel_net_forward.35}
  #allocation0 [shape = 'u32[]', space=smem, size = 0x4, offset = 0x4, fixed_abs, tag = 'smem constant byte address 0x4 - core index']
  #allocation1 [shape = 'u32[144,128]{1,0:T(1,128)}', space=vmem, size = 0x12000, scoped, tag = 'internal scratch']
  %s0 = inlined_call_operand.vmem [shape: bf16[2,48,8], index: 0, kind: input, shape index: {}]
  %s1 = inlined_call_operand.vmem [shape: bf16[9,8,8], index: 1, kind: input, shape index: {}]
  %s2 = inlined_call_operand.vmem [shape: f32[24,1], index: 2, kind: input, shape index: {}]
  %s3 = inlined_call_operand.vmem [shape: bf16[2,24,8], index: 3, kind: output, shape index: {0}]
  %s4 = inlined_call_operand.vmem [shape: f32[2,1,8], index: 4, kind: output, shape index: {1}]
  %s5 = inlined_call_operand.vmem [shape: f32[2,1,8], index: 5, kind: output, shape index: {2}]
  %6 = xla_tuple %s3, %s4, %s5
  %s7 = sld [smem:[#allocation0]]
  $region61: #{parallel_net_forward.35} parent=0
    _
  %s9 = ssub.s32 1, %s7
  %s10 = scalar_select 0, %s9, %s7
  loop: start=0, step=1, limit=4
  $region2: #{parallel_net_forward.35} parent=0 // loop_pre_header
    _
  $region3: #{parallel_net_forward.35} parent=0 // loop_header
    %s12 = sphi 0, %s16
    %p13 = scmp.ge.s32.totalorder %s12, 4
    %s22 = sphi 0, %s24
    %s25 = sphi 0, %s22
    %s26 = sphi 0, %s25
    %s42 = sphi 0, %s26
    %s46 = sphi 0, %s46
    %s48 = sphi 0, %s46
    %s49 = sphi 0, %s48
    %s63 = sphi 0, %s49
    %s67 = sphi 0, %s67
    %s69 = sphi 0, %s67
    %s70 = sphi 0, %s69
    %s84 = sphi 0, %s70
    %s90 = sphi 0, %s92
    %s93 = sphi 0, %s90
    %s94 = sphi 0, %s93
    %s110 = sphi 0, %s94
    %s116 = sphi 0, %s118
    %s119 = sphi 0, %s116
    %s120 = sphi 0, %s119
    %s136 = sphi 0, %s120
    %s142 = sphi 0, %s144
    %s145 = sphi 0, %s142
    %s146 = sphi 0, %s145
    %s162 = sphi 0, %s146
  $region4: #{parallel_net_forward.35} parent=0 // loop_header_branch
    %15 = sbr.rel (%p13) target = $region8
  $region5: #{parallel_net_forward.35} parent=0 // loop_body
    %s17 = ssub.s32 %s12, 1
    %s18 = ssub.s32 %s12, 2
    %s19 = sadd.s32 %s12, 1
    %s20 = ssub.s32 %s12, %s19
    %p21 = scmp.eq.s32.totalorder %s20, 0
    %s23 = sadd.s32 %s22, 1
    %s24 = scalar_select %p21, %s22, %s23
    %p27 = pneg %p21
    %p28 = scmp.eq.s32.totalorder %s12, 1
    %p29 = por %p27, %p28
    %p30 = scmp.ne.s32.totalorder %s22, %s25
    %p31 = scmp.eq.s32.totalorder %s12, 0
    %p32 = por %p30, %p31
    %p33 = scmp.ne.s32.totalorder %s22, %s25
    %p34 = scmp.eq.s32.totalorder %s17, 1
    %p35 = por %p33, %p34
    %p36 = scmp.ne.s32.totalorder %s25, %s26
    %p37 = scmp.eq.s32.totalorder %s17, 0
    %p38 = por %p36, %p37
    %p39 = scmp.ne.s32.totalorder %s25, %s26
    %p40 = scmp.eq.s32.totalorder %s18, 1
    %p41 = por %p39, %p40
    %p43 = scmp.ne.s32.totalorder %s26, %s42
    %p44 = scmp.eq.s32.totalorder %s18, 0
    %p45 = por %p43, %p44
    %s47 = sadd.s32 %s46, 1
    %p50 = scmp.eq.s32.totalorder %s12, 1
    %p51 = scmp.ne.s32.totalorder %s46, %s48
    %p52 = scmp.eq.s32.totalorder %s12, 0
    %p53 = por %p51, %p52
    %p54 = scmp.ne.s32.totalorder %s46, %s48
    %p55 = scmp.eq.s32.totalorder %s17, 1
    %p56 = por %p54, %p55
    %p57 = scmp.ne.s32.totalorder %s48, %s49
    %p58 = scmp.eq.s32.totalorder %s17, 0
    %p59 = por %p57, %p58
    %p60 = scmp.ne.s32.totalorder %s48, %s49
    %p61 = scmp.eq.s32.totalorder %s18, 1
    %p62 = por %p60, %p61
    %p64 = scmp.ne.s32.totalorder %s49, %s63
    %p65 = scmp.eq.s32.totalorder %s18, 0
    %p66 = por %p64, %p65
    %s68 = sadd.s32 %s67, 1
    %p71 = scmp.eq.s32.totalorder %s12, 1
    %p72 = scmp.ne.s32.totalorder %s67, %s69
    %p73 = scmp.eq.s32.totalorder %s12, 0
    %p74 = por %p72, %p73
    %p75 = scmp.ne.s32.totalorder %s67, %s69
    %p76 = scmp.eq.s32.totalorder %s17, 1
    %p77 = por %p75, %p76
    %p78 = scmp.ne.s32.totalorder %s69, %s70
    %p79 = scmp.eq.s32.totalorder %s17, 0
    %p80 = por %p78, %p79
    %p81 = scmp.ne.s32.totalorder %s69, %s70
    %p82 = scmp.eq.s32.totalorder %s18, 1
    %p83 = por %p81, %p82
    %p85 = scmp.ne.s32.totalorder %s70, %s84
    %p86 = scmp.eq.s32.totalorder %s18, 0
    %p87 = por %p85, %p86
    %s88 = ssub.s32 %s12, %s19
    %p89 = scmp.eq.s32.totalorder %s88, 0
    %s91 = sadd.s32 %s90, 1
    %s92 = scalar_select %p89, %s90, %s91
    %p95 = pneg %p89
    %p96 = scmp.eq.s32.totalorder %s12, 1
    %p97 = por %p95, %p96
    %p98 = scmp.ne.s32.totalorder %s90, %s93
    %p99 = scmp.eq.s32.totalorder %s12, 0
    %p100 = por %p98, %p99
    %p101 = scmp.ne.s32.totalorder %s90, %s93
    %p102 = scmp.eq.s32.totalorder %s17, 1
    %p103 = por %p101, %p102
    %p104 = scmp.ne.s32.totalorder %s93, %s94
    %p105 = scmp.eq.s32.totalorder %s17, 0
    %p106 = por %p104, %p105
    %p107 = scmp.ne.s32.totalorder %s93, %s94
    %p108 = scmp.eq.s32.totalorder %s18, 1
    %p109 = por %p107, %p108
    %p111 = scmp.ne.s32.totalorder %s94, %s110
    %p112 = scmp.eq.s32.totalorder %s18, 0
    %p113 = por %p111, %p112
    %s114 = ssub.s32 %s12, %s19
    %p115 = scmp.eq.s32.totalorder %s114, 0
    %s117 = sadd.s32 %s116, 1
    %s118 = scalar_select %p115, %s116, %s117
    %p121 = pneg %p115
    %p122 = scmp.eq.s32.totalorder %s12, 1
    %p123 = por %p121, %p122
    %p124 = scmp.ne.s32.totalorder %s116, %s119
    %p125 = scmp.eq.s32.totalorder %s12, 0
    %p126 = por %p124, %p125
    %p127 = scmp.ne.s32.totalorder %s116, %s119
    %p128 = scmp.eq.s32.totalorder %s17, 1
    %p129 = por %p127, %p128
    %p130 = scmp.ne.s32.totalorder %s119, %s120
    %p131 = scmp.eq.s32.totalorder %s17, 0
    %p132 = por %p130, %p131
    %p133 = scmp.ne.s32.totalorder %s119, %s120
    %p134 = scmp.eq.s32.totalorder %s18, 1
    %p135 = por %p133, %p134
    %p137 = scmp.ne.s32.totalorder %s120, %s136
    %p138 = scmp.eq.s32.totalorder %s18, 0
    %p139 = por %p137, %p138
    %s140 = ssub.s32 %s12, %s19
    %p141 = scmp.eq.s32.totalorder %s140, 0
    %s143 = sadd.s32 %s142, 1
    %s144 = scalar_select %p141, %s142, %s143
    %p147 = pneg %p141
    %p148 = scmp.eq.s32.totalorder %s12, 1
    %p149 = por %p147, %p148
    %p150 = scmp.ne.s32.totalorder %s142, %s145
    %p151 = scmp.eq.s32.totalorder %s12, 0
    %p152 = por %p150, %p151
    %p153 = scmp.ne.s32.totalorder %s142, %s145
    %p154 = scmp.eq.s32.totalorder %s17, 1
    %p155 = por %p153, %p154
    %p156 = scmp.ne.s32.totalorder %s145, %s146
    %p157 = scmp.eq.s32.totalorder %s17, 0
    %p158 = por %p156, %p157
    %p159 = scmp.ne.s32.totalorder %s145, %s146
    %p160 = scmp.eq.s32.totalorder %s18, 1
    %p161 = por %p159, %p160
    %p163 = scmp.ne.s32.totalorder %s146, %s162
    %p164 = scmp.eq.s32.totalorder %s18, 0
    %p165 = por %p163, %p164
    %p166 = scmp.le.s32.totalorder 1, %s12
    %p167 = scmp.lt.s32.totalorder %s12, 3
    %p168 = pnand %p166, %p167
    %p169 = pneg %p168
    // Predicated region
    $region9: #{parallel_net_forward.35} parent=5 // pred_check
      _
    $region10: #{parallel_net_forward.35} parent=5 // pred_check_branch
      %171 = sbr.rel (%p168) target = $region12
    $region11: #{parallel_net_forward.35} parent=5 // pred_region
      %s172 = ssub.s32 %s12, 1
      // Predicated region
      $region13: #{parallel_net_forward.35} parent=11 // pred_check
        %p173 = pneg %p59
      $region14: #{parallel_net_forward.35} parent=11 // pred_check_branch
        %175 = sbr.rel (%p173) target = $region16
      $region15: #{parallel_net_forward.35} parent=11 // pred_region
        _
      $region16: #{parallel_net_forward.35} parent=11 // pred_fallthru
        _
      // Predicated region
      $region17: #{parallel_net_forward.35} parent=11 // pred_check
        %p176 = pneg %p80
      $region18: #{parallel_net_forward.35} parent=11 // pred_check_branch
        %178 = sbr.rel (%p176) target = $region20
      $region19: #{parallel_net_forward.35} parent=11 // pred_region
        _
      $region20: #{parallel_net_forward.35} parent=11 // pred_fallthru
        _
    $region12: #{parallel_net_forward.35} parent=5 // pred_fallthru
      _
    %p179 = scmp.lt.s32.totalorder %s12, 2
    // Predicated region
    $region21: #{parallel_net_forward.35} parent=5 // pred_check
      %p180 = pneg %p179
    $region22: #{parallel_net_forward.35} parent=5 // pred_check_branch
      %182 = sbr.rel (%p180) target = $region24
    $region23: #{parallel_net_forward.35} parent=5 // pred_region
      // Predicated region
      $region25: #{parallel_net_forward.35} parent=23 // pred_check
        %p183 = pneg %p32
      $region26: #{parallel_net_forward.35} parent=23 // pred_check_branch
        %185 = sbr.rel (%p183) target = $region28
      $region27: #{parallel_net_forward.35} parent=23 // pred_region
        %p186 = scmp.lt.s32.totalorder %s12, 1
        %s187 = scalar_select %p186, %s12, 1
        %s188 = smul.addr %s187, 6
        %s189 = smul.addr %s188, 4
        %s190 = scalar_lea.vmem %s0, %s189
      $region28: #{parallel_net_forward.35} parent=23 // pred_fallthru
        _
    $region24: #{parallel_net_forward.35} parent=5 // pred_fallthru
      _
    %p191 = scmp.le.s32.totalorder 1, %s12
    %p192 = scmp.lt.s32.totalorder %s12, 3
    %p193 = pnand %p191, %p192
    %p194 = pneg %p193
    // Predicated region
    $region29: #{parallel_net_forward.35} parent=5 // pred_check
      _
    $region30: #{parallel_net_forward.35} parent=5 // pred_check_branch
      %196 = sbr.rel (%p193) target = $region32
    $region31: #{parallel_net_forward.35} parent=5 // pred_region
      %s197 = ssub.s32 %s12, 1
      %p198 = scmp.lt.s32.totalorder %s17, 1
      %s199 = scalar_select %p198, %s17, 1
      %s200 = smul.addr %s199, 6
      %s201 = smul.addr %s200, 4
      %s202 = scalar_lea.vmem %s0, %s201
      %p203 = pneg %p38
      %p204 = pneg %p35
      %p205 = pneg %p59
      %p206 = pneg %p56
      %p207 = pneg %p80
      %p208 = pneg %p77
      %p209 = pneg %p106
      %p210 = pneg %p103
      %p211 = scmp.lt.s32.totalorder %s17, 1
      %s212 = scalar_select %p211, %s17, 1
      %s213 = smul.addr %s212, 3
      %s214 = smul.addr %s213, 4
      %s215 = scalar_lea.vmem %s3, %s214
      %p216 = pneg %p132
      %p217 = pneg %p129
      %p218 = scmp.lt.s32.totalorder %s17, 1
      %s219 = scalar_select %p218, %s17, 1
      %s220 = scalar_lea.vmem %s4, %s219
      %p221 = pneg %p158
      %p222 = pneg %p155
      %p223 = scmp.lt.s32.totalorder %s17, 1
      %s224 = scalar_select %p223, %s17, 1
      %s225 = scalar_lea.vmem %s5, %s224
      %p226 = scmp.lt.s32.totalorder %s17, 1
      %s227 = scalar_select %p226, %s17, 1
      %s228 = smul.addr %s227, 6
      %s229 = smul.addr %s228, 4
      %s230 = scalar_lea.vmem %s0, %s229
      %p231 = scmp.lt.s32.totalorder %s17, 1
      %s232 = scalar_select %p231, %s17, 1
      %s233 = smul.addr %s232, 3
      %s234 = smul.addr %s233, 4
      %s235 = scalar_lea.vmem %s3, %s234
      %p236 = scmp.lt.s32.totalorder %s17, 1
      %s237 = scalar_select %p236, %s17, 1
      %s238 = scalar_lea.vmem %s4, %s237
      %p239 = scmp.lt.s32.totalorder %s17, 1
      %s240 = scalar_select %p239, %s17, 1
      %s241 = scalar_lea.vmem %s5, %s240
      %v243 = vld [vmem:[%s230] sm:$0xc]
      %v244 = vld [vmem:[%s230 + $0x4] sm:$0xf]
      %v245 = vld [vmem:[%s230 + $0x8] sm:$0xf]
      %v246 = vld [vmem:[%s230 + $0xc] sm:$0x7]
      %v247 = vld [vmem:[%s1] sm:$0xf]
      %v248 = vld [vmem:[%s230] sm:$0x8]
      %s249 = scalar_lea.vmem %s1, 4
      %v250 = vld [vmem:[%s249] sm:$0xf]
      %v255 = vunpack.c.l.b16 %v248
      %v256 = vunpack.c.l.b16 %v244
      %v257 = vunpack.c.l.b16 %v245
      %v258 = vunpack.c.l.b16 %v246
      %v259 = vpack.c.b16 %v256, %v255
      %v260 = vpack.c.b16 %v258, %v257
      %vm261 = vcmask 1044480
      %v262 = vrot.slane %v259, 3
      %v263 = vrot.slane %v260, 3
      %v264 = vsel %vm261, %v262, %v263
      %vm265 = vcmask 64512
      %v267 = vsel %vm265, %v264, 0
      %v270 = vsel %vm265, %v263, 0
      %vm272 = vcmask 1043456
      %v274 = vsel %vm272, %v250, 0
      %276 = vmatprep.subr.bf16.mxu0 0
      %277 = vmatpush1.bf16.msra.mxu0 0
      %278 = vmatprep.subr.bf16.mxu0 0
      %279 = vmatpush1.bf16.msra.mxu0 0
      %280 = vmatprep.subr.bf16.mxu0 0
      %281 = vmatpush1.bf16.msra.mxu0 0
      %282 = vmatprep.subr.bf16.mxu0 0
      %283 = vmatpush1.bf16.msra.mxu0 0
      %284 = vmatprep.subr.bf16.mxu0 0
      %285 = vmatpush1.bf16.msra.mxu0 0
      %286 = vmatprep.subr.bf16.mxu0 0
      %287 = vmatpush1.bf16.msra.mxu0 0
      %288 = vmatprep.subr.bf16.mxu0 0
      %289 = vmatpush1.bf16.msra.mxu0 0
      %290 = vmatprep.subr.bf16.mxu0 0
      %291 = vmatpush1.bf16.msra.mxu0 %v274
      %292 = vmatprep.subr.bf16.mxu0 0
      %293 = vmatpush2.bf16.msra.mxu0 0
      %294 = vmatprep.subr.bf16.mxu0 0
      %295 = vmatpush2.bf16.msra.mxu0 0
      %296 = vmatprep.subr.bf16.mxu0 0
      %297 = vmatpush2.bf16.msra.mxu0 0
      %298 = vmatprep.subr.bf16.mxu0 0
      %299 = vmatpush2.bf16.msra.mxu0 0
      %300 = vmatprep.subr.bf16.mxu0 0
      %301 = vmatpush2.bf16.msra.mxu0 0
      %302 = vmatprep.subr.bf16.mxu0 0
      %303 = vmatpush2.bf16.msra.mxu0 0
      %304 = vmatprep.subr.bf16.mxu0 0
      %305 = vmatpush2.bf16.msra.mxu0 0
      %306 = vmatprep.subr.bf16.mxu0 0
      %307 = vmatpush2.bf16.msra.mxu0 0
      %308 = vmatprep.mubr.bf16.mxu0 0
      %309 = vmatmul.mubr.bf16.gmra.mxu0 %v267
      %v310 = vpop.f32.mrf.mxu0
      %v311 = vadd.f32 0.0, %v310
      %v312 = vpop.f32.mrf.mxu0
      %v313 = vpop.f32.mrf.mxu0
      %v314 = vadd.f32 0.0, %v313
      %v315 = vpop.f32.mrf.mxu0
      %316 = vmatprep.mubr.bf16.mxu0 0
      %317 = vmatmul.mubr.bf16.gmra.mxu0 %v270
      %v318 = vpop.f32.mrf.mxu0
      %v319 = vadd.f32 0.0, %v318
      %v320 = vpop.f32.mrf.mxu0
      %v321 = vpop.f32.mrf.mxu0
      %v322 = vpop.f32.mrf.mxu0
      %323 = vdwg.mxu0
      %v325 = vunpack.c.l.b16 %v243
      %v326 = vpack.c.b16 %v256, %v325
      %vm327 = vsmask.f32 5376
      %v329 = vshrl.u32 %v326, 16
      %v331 = vrot.slane %v329, 2
      %v332 = vshll.u32 %v326, 16
      %v334 = vrot.slane %v332, 3
      %v335 = vor.u32 %v331, %v334
      %v337 = vshrl.u32 %v260, 16
      %v339 = vrot.slane %v337, 2
      %v340 = vshll.u32 %v260, 16
      %v342 = vrot.slane %v340, 3
      %v343 = vor.u32 %v339, %v342
      %v344 = vsel %vm327, %v335, %v343
      %v346 = vsel %vm265, %v344, 0
      %v349 = vsel %vm265, %v343, 0
      %v352 = vsel %vm272, %v247, 0
      %354 = vmatprep.subr.bf16.mxu0 0
      %355 = vmatpush1.bf16.msra.mxu0 0
      %356 = vmatprep.subr.bf16.mxu0 0
      %357 = vmatpush1.bf16.msra.mxu0 0
      %358 = vmatprep.subr.bf16.mxu0 0
      %359 = vmatpush1.bf16.msra.mxu0 0
      %360 = vmatprep.subr.bf16.mxu0 0
      %361 = vmatpush1.bf16.msra.mxu0 0
      %362 = vmatprep.subr.bf16.mxu0 0
      %363 = vmatpush1.bf16.msra.mxu0 0
      %364 = vmatprep.subr.bf16.mxu0 0
      %365 = vmatpush1.bf16.msra.mxu0 0
      %366 = vmatprep.subr.bf16.mxu0 0
      %367 = vmatpush1.bf16.msra.mxu0 0
      %368 = vmatprep.subr.bf16.mxu0 0
      %369 = vmatpush1.bf16.msra.mxu0 %v352
      %370 = vmatprep.subr.bf16.mxu0 0
      %371 = vmatpush2.bf16.msra.mxu0 0
      %372 = vmatprep.subr.bf16.mxu0 0
      %373 = vmatpush2.bf16.msra.mxu0 0
      %374 = vmatprep.subr.bf16.mxu0 0
      %375 = vmatpush2.bf16.msra.mxu0 0
      %376 = vmatprep.subr.bf16.mxu0 0
      %377 = vmatpush2.bf16.msra.mxu0 0
      %378 = vmatprep.subr.bf16.mxu0 0
      %379 = vmatpush2.bf16.msra.mxu0 0
      %380 = vmatprep.subr.bf16.mxu0 0
      %381 = vmatpush2.bf16.msra.mxu0 0
      %382 = vmatprep.subr.bf16.mxu0 0
      %383 = vmatpush2.bf16.msra.mxu0 0
      %384 = vmatprep.subr.bf16.mxu0 0
      %385 = vmatpush2.bf16.msra.mxu0 0
      %386 = vmatprep.mubr.bf16.mxu0 0
      %387 = vmatmul.mubr.bf16.gmra.mxu0 %v346
      %v388 = vpop.f32.mrf.mxu0
      %v389 = vadd.f32 %v311, %v388
      %v390 = vpop.f32.mrf.mxu0
      %v391 = vpop.f32.mrf.mxu0
      %v392 = vadd.f32 %v314, %v391
      %v393 = vpop.f32.mrf.mxu0
      %394 = vmatprep.mubr.bf16.mxu0 0
      %395 = vmatmul.mubr.bf16.gmra.mxu0 %v349
      %v396 = vpop.f32.mrf.mxu0
      %v397 = vadd.f32 %v319, %v396
      %v398 = vpop.f32.mrf.mxu0
      %v399 = vpop.f32.mrf.mxu0
      %v400 = vpop.f32.mrf.mxu0
      %401 = vdwg.mxu0
      %v402 = vld [vmem:[%s230 + $0xc] sm:$0xf]
      %s403 = scalar_lea.vmem %s1, 8
      %v404 = vld [vmem:[%s403] sm:$0xf]
      %v406 = vunpack.c.l.b16 %v402
      %v407 = vpack.c.b16 %v406, %v257
      %vm408 = vsmask.f32 4352
      %v410 = vshrl.u32 %v259, 16
      %v412 = vrot.slane %v410, 3
      %v413 = vshll.u32 %v259, 16
      %v415 = vrot.slane %v413, 4
      %v416 = vor.u32 %v412, %v415
      %v418 = vshrl.u32 %v407, 16
      %v420 = vrot.slane %v418, 3
      %v421 = vshll.u32 %v407, 16
      %v423 = vrot.slane %v421, 4
      %v424 = vor.u32 %v420, %v423
      %v425 = vsel %vm408, %v416, %v424
      %v427 = vsel %vm265, %v425, 0
      %v430 = vsel %vm265, %v424, 0
      %v433 = vsel %vm272, %v404, 0
      %435 = vmatprep.subr.bf16.mxu0 0
      %436 = vmatpush1.bf16.msra.mxu0 0
      %437 = vmatprep.subr.bf16.mxu0 0
      %438 = vmatpush1.bf16.msra.mxu0 0
      %439 = vmatprep.subr.bf16.mxu0 0
      %440 = vmatpush1.bf16.msra.mxu0 0
      %441 = vmatprep.subr.bf16.mxu0 0
      %442 = vmatpush1.bf16.msra.mxu0 0
      %443 = vmatprep.subr.bf16.mxu0 0
      %444 = vmatpush1.bf16.msra.mxu0 0
      %445 = vmatprep.subr.bf16.mxu0 0
      %446 = vmatpush1.bf16.msra.mxu0 0
      %447 = vmatprep.subr.bf16.mxu0 0
      %448 = vmatpush1.bf16.msra.mxu0 0
      %449 = vmatprep.subr.bf16.mxu0 0
      %450 = vmatpush1.bf16.msra.mxu0 %v433
      %451 = vmatprep.subr.bf16.mxu0 0
      %452 = vmatpush2.bf16.msra.mxu0 0
      %453 = vmatprep.subr.bf16.mxu0 0
      %454 = vmatpush2.bf16.msra.mxu0 0
      %455 = vmatprep.subr.bf16.mxu0 0
      %456 = vmatpush2.bf16.msra.mxu0 0
      %457 = vmatprep.subr.bf16.mxu0 0
      %458 = vmatpush2.bf16.msra.mxu0 0
      %459 = vmatprep.subr.bf16.mxu0 0
      %460 = vmatpush2.bf16.msra.mxu0 0
      %461 = vmatprep.subr.bf16.mxu0 0
      %462 = vmatpush2.bf16.msra.mxu0 0
      %463 = vmatprep.subr.bf16.mxu0 0
      %464 = vmatpush2.bf16.msra.mxu0 0
      %465 = vmatprep.subr.bf16.mxu0 0
      %466 = vmatpush2.bf16.msra.mxu0 0
      %467 = vmatprep.mubr.bf16.mxu0 0
      %468 = vmatmul.mubr.bf16.gmra.mxu0 %v427
      %v469 = vpop.f32.mrf.mxu0
      %v470 = vadd.f32 0.0, %v469
      %v471 = vpop.f32.mrf.mxu0
      %v472 = vpop.f32.mrf.mxu0
      %v473 = vadd.f32 0.0, %v472
      %v474 = vpop.f32.mrf.mxu0
      %475 = vmatprep.mubr.bf16.mxu0 0
      %476 = vmatmul.mubr.bf16.gmra.mxu0 %v430
      %v477 = vpop.f32.mrf.mxu0
      %v478 = vadd.f32 0.0, %v477
      %v479 = vpop.f32.mrf.mxu0
      %v480 = vpop.f32.mrf.mxu0
      %v481 = vpop.f32.mrf.mxu0
      %482 = vdwg.mxu0
      %v483 = vadd.f32 %v389, %v470
      %v484 = vadd.f32 %v392, %v473
      %v485 = vadd.f32 %v397, %v478
      %v486 = vld [vmem:[%s230 + $0x4] sm:$0xe]
      %v487 = vld [vmem:[%s230 + $0x8] sm:$0xf]
      %v488 = vld [vmem:[%s230 + $0xc] sm:$0xf]
      %v489 = vld [vmem:[%s230 + $0x10] sm:$0x3]
      %s490 = scalar_lea.vmem %s1, 12
      %v491 = vld [vmem:[%s490] sm:$0xf]
      %v496 = vunpack.c.l.b16 %v486
      %v497 = vunpack.c.l.b16 %v487
      %v498 = vunpack.c.l.b16 %v488
      %v499 = vunpack.c.l.b16 %v489
      %v500 = vpack.c.b16 %v497, %v496
      %v501 = vpack.c.b16 %v499, %v498
      %vm502 = vsmask.f32 6400
      %v504 = vshrl.u32 %v500, 16
      %v506 = vrot.slane %v504, 1
      %v507 = vshll.u32 %v500, 16
      %v509 = vrot.slane %v507, 2
      %v510 = vor.u32 %v506, %v509
      %v512 = vshrl.u32 %v501, 16
      %v514 = vrot.slane %v512, 1
      %v515 = vshll.u32 %v501, 16
      %v517 = vrot.slane %v515, 2
      %v518 = vor.u32 %v514, %v517
      %v519 = vsel %vm502, %v510, %v518
      %v521 = vsel %vm265, %v519, 0
      %v524 = vsel %vm265, %v518, 0
      %v527 = vsel %vm272, %v491, 0
      %529 = vmatprep.subr.bf16.mxu0 0
      %530 = vmatpush1.bf16.msra.mxu0 0
      %531 = vmatprep.subr.bf16.mxu0 0
      %532 = vmatpush1.bf16.msra.mxu0 0
      %533 = vmatprep.subr.bf16.mxu0 0
      %534 = vmatpush1.bf16.msra.mxu0 0
      %535 = vmatprep.subr.bf16.mxu0 0
      %536 = vmatpush1.bf16.msra.mxu0 0
      %537 = vmatprep.subr.bf16.mxu0 0
      %538 = vmatpush1.bf16.msra.mxu0 0
      %539 = vmatprep.subr.bf16.mxu0 0
      %540 = vmatpush1.bf16.msra.mxu0 0
      %541 = vmatprep.subr.bf16.mxu0 0
      %542 = vmatpush1.bf16.msra.mxu0 0
      %543 = vmatprep.subr.bf16.mxu0 0
      %544 = vmatpush1.bf16.msra.mxu0 %v527
      %545 = vmatprep.subr.bf16.mxu0 0
      %546 = vmatpush2.bf16.msra.mxu0 0
      %547 = vmatprep.subr.bf16.mxu0 0
      %548 = vmatpush2.bf16.msra.mxu0 0
      %549 = vmatprep.subr.bf16.mxu0 0
      %550 = vmatpush2.bf16.msra.mxu0 0
      %551 = vmatprep.subr.bf16.mxu0 0
      %552 = vmatpush2.bf16.msra.mxu0 0
      %553 = vmatprep.subr.bf16.mxu0 0
      %554 = vmatpush2.bf16.msra.mxu0 0
      %555 = vmatprep.subr.bf16.mxu0 0
      %556 = vmatpush2.bf16.msra.mxu0 0
      %557 = vmatprep.subr.bf16.mxu0 0
      %558 = vmatpush2.bf16.msra.mxu0 0
      %559 = vmatprep.subr.bf16.mxu0 0
      %560 = vmatpush2.bf16.msra.mxu0 0
      %561 = vmatprep.mubr.bf16.mxu0 0
      %562 = vmatmul.mubr.bf16.gmra.mxu0 %v521
      %v563 = vpop.f32.mrf.mxu0
      %v564 = vadd.f32 0.0, %v563
      %v565 = vpop.f32.mrf.mxu0
      %v566 = vpop.f32.mrf.mxu0
      %v567 = vadd.f32 0.0, %v566
      %v568 = vpop.f32.mrf.mxu0
      %569 = vmatprep.mubr.bf16.mxu0 0
      %570 = vmatmul.mubr.bf16.gmra.mxu0 %v524
      %v571 = vpop.f32.mrf.mxu0
      %v572 = vadd.f32 0.0, %v571
      %v573 = vpop.f32.mrf.mxu0
      %v574 = vpop.f32.mrf.mxu0
      %v575 = vpop.f32.mrf.mxu0
      %576 = vdwg.mxu0
      %v577 = vadd.f32 %v483, %v564
      %v578 = vadd.f32 %v484, %v567
      %v579 = vadd.f32 %v485, %v572
      %v580 = vld [vmem:[%s230 + $0x4] sm:$0xc]
      %s581 = scalar_lea.vmem %s1, 16
      %v582 = vld [vmem:[%s581] sm:$0xf]
      %v584 = vunpack.c.l.b16 %v580
      %v585 = vpack.c.b16 %v497, %v584
      %vm586 = vcmask 1045504
      %v587 = vrot.slane %v585, 2
      %v588 = vrot.slane %v501, 2
      %v589 = vsel %vm586, %v587, %v588
      %v591 = vsel %vm265, %v589, 0
      %v594 = vsel %vm265, %v588, 0
      %v597 = vsel %vm272, %v582, 0
      %599 = vmatprep.subr.bf16.mxu0 0
      %600 = vmatpush1.bf16.msra.mxu0 0
      %601 = vmatprep.subr.bf16.mxu0 0
      %602 = vmatpush1.bf16.msra.mxu0 0
      %603 = vmatprep.subr.bf16.mxu0 0
      %604 = vmatpush1.bf16.msra.mxu0 0
      %605 = vmatprep.subr.bf16.mxu0 0
      %606 = vmatpush1.bf16.msra.mxu0 0
      %607 = vmatprep.subr.bf16.mxu0 0
      %608 = vmatpush1.bf16.msra.mxu0 0
      %609 = vmatprep.subr.bf16.mxu0 0
      %610 = vmatpush1.bf16.msra.mxu0 0
      %611 = vmatprep.subr.bf16.mxu0 0
      %612 = vmatpush1.bf16.msra.mxu0 0
      %613 = vmatprep.subr.bf16.mxu0 0
      %614 = vmatpush1.bf16.msra.mxu0 %v597
      %615 = vmatprep.subr.bf16.mxu0 0
      %616 = vmatpush2.bf16.msra.mxu0 0
      %617 = vmatprep.subr.bf16.mxu0 0
      %618 = vmatpush2.bf16.msra.mxu0 0
      %619 = vmatprep.subr.bf16.mxu0 0
      %620 = vmatpush2.bf16.msra.mxu0 0
      %621 = vmatprep.subr.bf16.mxu0 0
      %622 = vmatpush2.bf16.msra.mxu0 0
      %623 = vmatprep.subr.bf16.mxu0 0
      %624 = vmatpush2.bf16.msra.mxu0 0
      %625 = vmatprep.subr.bf16.mxu0 0
      %626 = vmatpush2.bf16.msra.mxu0 0
      %627 = vmatprep.subr.bf16.mxu0 0
      %628 = vmatpush2.bf16.msra.mxu0 0
      %629 = vmatprep.subr.bf16.mxu0 0
      %630 = vmatpush2.bf16.msra.mxu0 0
      %631 = vmatprep.mubr.bf16.mxu0 0
      %632 = vmatmul.mubr.bf16.gmra.mxu0 %v591
      %v633 = vpop.f32.mrf.mxu0
      %v634 = vadd.f32 0.0, %v633
      %v635 = vpop.f32.mrf.mxu0
      %v636 = vpop.f32.mrf.mxu0
      %v637 = vadd.f32 0.0, %v636
      %v638 = vpop.f32.mrf.mxu0
      %639 = vmatprep.mubr.bf16.mxu0 0
      %640 = vmatmul.mubr.bf16.gmra.mxu0 %v594
      %v641 = vpop.f32.mrf.mxu0
      %v642 = vadd.f32 0.0, %v641
      %v643 = vpop.f32.mrf.mxu0
      %v644 = vpop.f32.mrf.mxu0
      %v645 = vpop.f32.mrf.mxu0
      %646 = vdwg.mxu0
      %v647 = vadd.f32 %v577, %v634
      %v648 = vadd.f32 %v578, %v637
      %v649 = vadd.f32 %v579, %v642
      %v650 = vld [vmem:[%s230 + $0x10] sm:$0x7]
      %s651 = scalar_lea.vmem %s1, 20
      %v652 = vld [vmem:[%s651] sm:$0xf]
      %v654 = vunpack.c.l.b16 %v650
      %v655 = vpack.c.b16 %v654, %v498
      %v657 = vshrl.u32 %v585, 16
      %v659 = vrot.slane %v657, 2
      %v660 = vshll.u32 %v585, 16
      %v662 = vrot.slane %v660, 3
      %v663 = vor.u32 %v659, %v662
      %v665 = vshrl.u32 %v655, 16
      %v667 = vrot.slane %v665, 2
      %v668 = vshll.u32 %v655, 16
      %v670 = vrot.slane %v668, 3
      %v671 = vor.u32 %v667, %v670
      %v672 = vsel %vm327, %v663, %v671
      %v674 = vsel %vm265, %v672, 0
      %v677 = vsel %vm265, %v671, 0
      %v680 = vsel %vm272, %v652, 0
      %682 = vmatprep.subr.bf16.mxu0 0
      %683 = vmatpush1.bf16.msra.mxu0 0
      %684 = vmatprep.subr.bf16.mxu0 0
      %685 = vmatpush1.bf16.msra.mxu0 0
      %686 = vmatprep.subr.bf16.mxu0 0
      %687 = vmatpush1.bf16.msra.mxu0 0
      %688 = vmatprep.subr.bf16.mxu0 0
      %689 = vmatpush1.bf16.msra.mxu0 0
      %690 = vmatprep.subr.bf16.mxu0 0
      %691 = vmatpush1.bf16.msra.mxu0 0
      %692 = vmatprep.subr.bf16.mxu0 0
      %693 = vmatpush1.bf16.msra.mxu0 0
      %694 = vmatprep.subr.bf16.mxu0 0
      %695 = vmatpush1.bf16.msra.mxu0 0
      %696 = vmatprep.subr.bf16.mxu0 0
      %697 = vmatpush1.bf16.msra.mxu0 %v680
      %698 = vmatprep.subr.bf16.mxu0 0
      %699 = vmatpush2.bf16.msra.mxu0 0
      %700 = vmatprep.subr.bf16.mxu0 0
      %701 = vmatpush2.bf16.msra.mxu0 0
      %702 = vmatprep.subr.bf16.mxu0 0
      %703 = vmatpush2.bf16.msra.mxu0 0
      %704 = vmatprep.subr.bf16.mxu0 0
      %705 = vmatpush2.bf16.msra.mxu0 0
      %706 = vmatprep.subr.bf16.mxu0 0
      %707 = vmatpush2.bf16.msra.mxu0 0
      %708 = vmatprep.subr.bf16.mxu0 0
      %709 = vmatpush2.bf16.msra.mxu0 0
      %710 = vmatprep.subr.bf16.mxu0 0
      %711 = vmatpush2.bf16.msra.mxu0 0
      %712 = vmatprep.subr.bf16.mxu0 0
      %713 = vmatpush2.bf16.msra.mxu0 0
      %714 = vmatprep.mubr.bf16.mxu0 0
      %715 = vmatmul.mubr.bf16.gmra.mxu0 %v674
      %v716 = vpop.f32.mrf.mxu0
      %v717 = vadd.f32 0.0, %v716
      %v718 = vpop.f32.mrf.mxu0
      %v719 = vpop.f32.mrf.mxu0
      %v720 = vadd.f32 0.0, %v719
      %v721 = vpop.f32.mrf.mxu0
      %722 = vmatprep.mubr.bf16.mxu0 0
      %723 = vmatmul.mubr.bf16.gmra.mxu0 %v677
      %v724 = vpop.f32.mrf.mxu0
      %v725 = vadd.f32 0.0, %v724
      %v726 = vpop.f32.mrf.mxu0
      %v727 = vpop.f32.mrf.mxu0
      %v728 = vpop.f32.mrf.mxu0
      %729 = vdwg.mxu0
      %v730 = vadd.f32 %v647, %v717
      %v731 = vadd.f32 %v648, %v720
      %v732 = vadd.f32 %v649, %v725
      %v733 = vld [vmem:[%s230 + $0x8] sm:$0xf]
      %v734 = vld [vmem:[%s230 + $0xc] sm:$0xf]
      %v735 = vld [vmem:[%s230 + $0x10] sm:$0xf]
      %v736 = vld [vmem:[%s230 + $0x14] sm:$0x1]
      %s737 = scalar_lea.vmem %s1, 24
      %v738 = vld [vmem:[%s737] sm:$0xf]
      %v743 = vunpack.c.l.b16 %v733
      %v744 = vunpack.c.l.b16 %v734
      %v745 = vunpack.c.l.b16 %v735
      %v746 = vunpack.c.l.b16 %v736
      %v747 = vpack.c.b16 %v744, %v743
      %v748 = vpack.c.b16 %v746, %v745
      %vm749 = vsmask.f32 7424
      %v751 = vshrl.u32 %v747, 16
      %v753 = vshll.u32 %v747, 16
      %v755 = vrot.slane %v753, 1
      %v756 = vor.u32 %v751, %v755
      %v758 = vshll.u32 %v748, 16
      %v760 = vrot.slane %v758, 1
      %v761 = vsel %vm749, %v756, %v760
      %v762 = vshrl.u32 %v748, 16
      %v764 = vor.u32 %v762, %v760
      %v766 = vsel %vm265, %v761, 0
      %v769 = vsel %vm265, %v764, 0
      %v772 = vsel %vm272, %v738, 0
      %774 = vmatprep.subr.bf16.mxu0 0
      %775 = vmatpush1.bf16.msra.mxu0 0
      %776 = vmatprep.subr.bf16.mxu0 0
      %777 = vmatpush1.bf16.msra.mxu0 0
      %778 = vmatprep.subr.bf16.mxu0 0
      %779 = vmatpush1.bf16.msra.mxu0 0
      %780 = vmatprep.subr.bf16.mxu0 0
      %781 = vmatpush1.bf16.msra.mxu0 0
      %782 = vmatprep.subr.bf16.mxu0 0
      %783 = vmatpush1.bf16.msra.mxu0 0
      %784 = vmatprep.subr.bf16.mxu0 0
      %785 = vmatpush1.bf16.msra.mxu0 0
      %786 = vmatprep.subr.bf16.mxu0 0
      %787 = vmatpush1.bf16.msra.mxu0 0
      %788 = vmatprep.subr.bf16.mxu0 0
      %789 = vmatpush1.bf16.msra.mxu0 %v772
      %790 = vmatprep.subr.bf16.mxu0 0
      %791 = vmatpush2.bf16.msra.mxu0 0
      %792 = vmatprep.subr.bf16.mxu0 0
      %793 = vmatpush2.bf16.msra.mxu0 0
      %794 = vmatprep.subr.bf16.mxu0 0
      %795 = vmatpush2.bf16.msra.mxu0 0
      %796 = vmatprep.subr.bf16.mxu0 0
      %797 = vmatpush2.bf16.msra.mxu0 0
      %798 = vmatprep.subr.bf16.mxu0 0
      %799 = vmatpush2.bf16.msra.mxu0 0
      %800 = vmatprep.subr.bf16.mxu0 0
      %801 = vmatpush2.bf16.msra.mxu0 0
      %802 = vmatprep.subr.bf16.mxu0 0
      %803 = vmatpush2.bf16.msra.mxu0 0
      %804 = vmatprep.subr.bf16.mxu0 0
      %805 = vmatpush2.bf16.msra.mxu0 0
      %806 = vmatprep.mubr.bf16.mxu0 0
      %807 = vmatmul.mubr.bf16.gmra.mxu0 %v766
      %v808 = vpop.f32.mrf.mxu0
      %v809 = vadd.f32 0.0, %v808
      %v810 = vpop.f32.mrf.mxu0
      %v811 = vpop.f32.mrf.mxu0
      %v812 = vadd.f32 0.0, %v811
      %v813 = vpop.f32.mrf.mxu0
      %814 = vmatprep.mubr.bf16.mxu0 0
      %815 = vmatmul.mubr.bf16.gmra.mxu0 %v769
      %v816 = vpop.f32.mrf.mxu0
      %v817 = vadd.f32 0.0, %v816
      %v818 = vpop.f32.mrf.mxu0
      %v819 = vpop.f32.mrf.mxu0
      %v820 = vpop.f32.mrf.mxu0
      %821 = vdwg.mxu0
      %v822 = vadd.f32 %v730, %v809
      %v823 = vadd.f32 %v731, %v812
      %v824 = vadd.f32 %v732, %v817
      %v825 = vld [vmem:[%s230 + $0x8] sm:$0xe]
      %s826 = scalar_lea.vmem %s1, 28
      %v827 = vld [vmem:[%s826] sm:$0xf]
      %v829 = vunpack.c.l.b16 %v825
      %v830 = vpack.c.b16 %v744, %v829
      %vm831 = vcmask 1046528
      %v832 = vrot.slane %v830, 1
      %v833 = vrot.slane %v748, 1
      %v834 = vsel %vm831, %v832, %v833
      %v836 = vsel %vm265, %v834, 0
      %v839 = vsel %vm265, %v833, 0
      %v842 = vsel %vm272, %v827, 0
      %844 = vmatprep.subr.bf16.mxu0 0
      %845 = vmatpush1.bf16.msra.mxu0 0
      %846 = vmatprep.subr.bf16.mxu0 0
      %847 = vmatpush1.bf16.msra.mxu0 0
      %848 = vmatprep.subr.bf16.mxu0 0
      %849 = vmatpush1.bf16.msra.mxu0 0
      %850 = vmatprep.subr.bf16.mxu0 0
      %851 = vmatpush1.bf16.msra.mxu0 0
      %852 = vmatprep.subr.bf16.mxu0 0
      %853 = vmatpush1.bf16.msra.mxu0 0
      %854 = vmatprep.subr.bf16.mxu0 0
      %855 = vmatpush1.bf16.msra.mxu0 0
      %856 = vmatprep.subr.bf16.mxu0 0
      %857 = vmatpush1.bf16.msra.mxu0 0
      %858 = vmatprep.subr.bf16.mxu0 0
      %859 = vmatpush1.bf16.msra.mxu0 %v842
      %860 = vmatprep.subr.bf16.mxu0 0
      %861 = vmatpush2.bf16.msra.mxu0 0
      %862 = vmatprep.subr.bf16.mxu0 0
      %863 = vmatpush2.bf16.msra.mxu0 0
      %864 = vmatprep.subr.bf16.mxu0 0
      %865 = vmatpush2.bf16.msra.mxu0 0
      %866 = vmatprep.subr.bf16.mxu0 0
      %867 = vmatpush2.bf16.msra.mxu0 0
      %868 = vmatprep.subr.bf16.mxu0 0
      %869 = vmatpush2.bf16.msra.mxu0 0
      %870 = vmatprep.subr.bf16.mxu0 0
      %871 = vmatpush2.bf16.msra.mxu0 0
      %872 = vmatprep.subr.bf16.mxu0 0
      %873 = vmatpush2.bf16.msra.mxu0 0
      %874 = vmatprep.subr.bf16.mxu0 0
      %875 = vmatpush2.bf16.msra.mxu0 0
      %876 = vmatprep.mubr.bf16.mxu0 0
      %877 = vmatmul.mubr.bf16.gmra.mxu0 %v836
      %v878 = vpop.f32.mrf.mxu0
      %v879 = vadd.f32 0.0, %v878
      %v880 = vpop.f32.mrf.mxu0
      %v881 = vpop.f32.mrf.mxu0
      %v882 = vadd.f32 0.0, %v881
      %v883 = vpop.f32.mrf.mxu0
      %884 = vmatprep.mubr.bf16.mxu0 0
      %885 = vmatmul.mubr.bf16.gmra.mxu0 %v839
      %v886 = vpop.f32.mrf.mxu0
      %v887 = vadd.f32 0.0, %v886
      %v888 = vpop.f32.mrf.mxu0
      %v889 = vpop.f32.mrf.mxu0
      %v890 = vpop.f32.mrf.mxu0
      %891 = vdwg.mxu0
      %v892 = vadd.f32 %v822, %v879
      %v893 = vadd.f32 %v823, %v882
      %v894 = vadd.f32 %v824, %v887
      %v895 = vld [vmem:[%s230 + $0x14] sm:$0x3]
      %s896 = scalar_lea.vmem %s1, 32
      %v897 = vld [vmem:[%s896] sm:$0xf]
      %v899 = vunpack.c.l.b16 %v895
      %v900 = vpack.c.b16 %v899, %v745
      %v902 = vshrl.u32 %v830, 16
      %v904 = vrot.slane %v902, 1
      %v905 = vshll.u32 %v830, 16
      %v907 = vrot.slane %v905, 2
      %v908 = vor.u32 %v904, %v907
      %v910 = vshrl.u32 %v900, 16
      %v912 = vrot.slane %v910, 1
      %v913 = vshll.u32 %v900, 16
      %v915 = vrot.slane %v913, 2
      %v916 = vor.u32 %v912, %v915
      %v917 = vsel %vm502, %v908, %v916
      %v919 = vsel %vm265, %v917, 0
      %v922 = vsel %vm265, %v916, 0
      %v925 = vsel %vm272, %v897, 0
      %927 = vmatprep.subr.bf16.mxu0 0
      %928 = vmatpush1.bf16.msra.mxu0 0
      %929 = vmatprep.subr.bf16.mxu0 0
      %930 = vmatpush1.bf16.msra.mxu0 0
      %931 = vmatprep.subr.bf16.mxu0 0
      %932 = vmatpush1.bf16.msra.mxu0 0
      %933 = vmatprep.subr.bf16.mxu0 0
      %934 = vmatpush1.bf16.msra.mxu0 0
      %935 = vmatprep.subr.bf16.mxu0 0
      %936 = vmatpush1.bf16.msra.mxu0 0
      %937 = vmatprep.subr.bf16.mxu0 0
      %938 = vmatpush1.bf16.msra.mxu0 0
      %939 = vmatprep.subr.bf16.mxu0 0
      %940 = vmatpush1.bf16.msra.mxu0 0
      %941 = vmatprep.subr.bf16.mxu0 0
      %942 = vmatpush1.bf16.msra.mxu0 %v925
      %943 = vmatprep.subr.bf16.mxu0 0
      %944 = vmatpush2.bf16.msra.mxu0 0
      %945 = vmatprep.subr.bf16.mxu0 0
      %946 = vmatpush2.bf16.msra.mxu0 0
      %947 = vmatprep.subr.bf16.mxu0 0
      %948 = vmatpush2.bf16.msra.mxu0 0
      %949 = vmatprep.subr.bf16.mxu0 0
      %950 = vmatpush2.bf16.msra.mxu0 0
      %951 = vmatprep.subr.bf16.mxu0 0
      %952 = vmatpush2.bf16.msra.mxu0 0
      %953 = vmatprep.subr.bf16.mxu0 0
      %954 = vmatpush2.bf16.msra.mxu0 0
      %955 = vmatprep.subr.bf16.mxu0 0
      %956 = vmatpush2.bf16.msra.mxu0 0
      %957 = vmatprep.subr.bf16.mxu0 0
      %958 = vmatpush2.bf16.msra.mxu0 0
      %959 = vmatprep.mubr.bf16.mxu0 0
      %960 = vmatmul.mubr.bf16.gmra.mxu0 %v919
      %v961 = vpop.f32.mrf.mxu0
      %v962 = vadd.f32 0.0, %v961
      %v963 = vpop.f32.mrf.mxu0
      %v964 = vpop.f32.mrf.mxu0
      %v965 = vadd.f32 0.0, %v964
      %v966 = vpop.f32.mrf.mxu0
      %967 = vmatprep.mubr.bf16.mxu0 0
      %968 = vmatmul.mubr.bf16.gmra.mxu0 %v922
      %v969 = vpop.f32.mrf.mxu0
      %v970 = vadd.f32 0.0, %v969
      %v971 = vpop.f32.mrf.mxu0
      %v972 = vpop.f32.mrf.mxu0
      %v973 = vpop.f32.mrf.mxu0
      %974 = vdwg.mxu0
      %v975 = vadd.f32 %v892, %v962
      %v976 = vadd.f32 %v893, %v965
      %v977 = vadd.f32 %v894, %v970
      %v978 = vpack.c.bf16 %v976, %v975
      %v979 = vpack.c.bf16 %v977, %v977
      %v982 = vunpack.c.l.b16 %v978
      %v983 = vunpack.c.h.b16 %v978
      %v984 = vunpack.c.l.b16 %v979
      %v985 = vpack.c.b16 %v982, %v982
      %v986 = vpack.c.b16 %v983, %v983
      %v987 = vpack.c.b16 %v984, %v984
      %vm991 = vcmask 60416
      %992 = vst.msk [vmem:[%s235] sm:$0xf] %vm991, %v985
      %993 = vst.msk [vmem:[%s235 + $0x4] sm:$0xf] %vm991, %v986
      %994 = vst.msk [vmem:[%s235 + $0x8] sm:$0xf] %vm991, %v987
      %v995 = vld [vmem:[%s2] sm:$0xff]
      %v996 = vld [vmem:[%s2 + $0x8] sm:$0xff]
      %v997 = vld [vmem:[%s2 + $0x10] sm:$0xff]
      %999 = vset.pattern.permute.xlu0 0
      %1000 = vperm.xlu0 %999, %v995
      %v1001 = vpop.permute.xlu0 %1000
      %1004 = vset.pattern.permute.xlu0 0
      %1005 = vperm.xlu0 %1004, %v996
      %v1006 = vpop.permute.xlu0 %1005
      %1009 = vset.pattern.permute.xlu0 0
      %1010 = vperm.xlu0 %1009, %v997
      %v1011 = vpop.permute.xlu0 %1010
      %v1013 = vmul.f32 %v975, %v1001
      %v1014 = vmul.f32 %v976, %v1006
      %v1015 = vmul.f32 %v977, %v1011
      %v1016 = vsel %vm265, %v1013, 0.0
      %v1017 = vsel %vm265, %v1014, 0.0
      %v1018 = vadd.f32 %v1016, %v1017
      %v1019 = vsel %vm265, %v1015, 0.0
      %v1020 = vadd.f32 %v1018, %v1019
      %v1021 = vrot.slane %v1020, 4
      %v1022 = vadd.f32 %v1020, %v1021
      %v1023 = vrot.slane %v1022, 2
      %v1024 = vadd.f32 %v1022, %v1023
      %v1025 = vrot.slane %v1024, 1
      %v1026 = vadd.f32 %v1024, %v1025
      %vm1027 = vcmask 57344
      %1028 = vst.msk [vmem:[%s238] sm:$0x1] %vm1027, %v1026
      %v1029 = vmul.f32 %v1013, %v1013
      %v1030 = vmul.f32 %v1014, %v1014
      %v1031 = vmul.f32 %v1015, %v1015
      %v1032 = vsel %vm265, %v1029, 0.0
      %v1033 = vsel %vm265, %v1030, 0.0
      %v1034 = vadd.f32 %v1032, %v1033
      %v1035 = vsel %vm265, %v1031, 0.0
      %v1036 = vadd.f32 %v1034, %v1035
      %v1037 = vrot.slane %v1036, 4
      %v1038 = vadd.f32 %v1036, %v1037
      %v1039 = vrot.slane %v1038, 2
      %v1040 = vadd.f32 %v1038, %v1039
      %v1041 = vrot.slane %v1040, 1
      %v1042 = vadd.f32 %v1040, %v1041
      %1043 = vst.msk [vmem:[%s241] sm:$0x1] %vm1027, %v1042
      %p1044 = scmp.lt.s32.totalorder %s17, 1
      %s1045 = scalar_select %p1044, %s17, 1
      %s1046 = smul.addr %s1045, 3
      %s1047 = smul.addr %s1046, 4
      %s1048 = scalar_lea.vmem %s3, %s1047
      %p1049 = scmp.lt.s32.totalorder %s17, 1
      %s1050 = scalar_select %p1049, %s17, 1
      %s1051 = scalar_lea.vmem %s4, %s1050
      %p1052 = scmp.lt.s32.totalorder %s17, 1
      %s1053 = scalar_select %p1052, %s17, 1
      %s1054 = scalar_lea.vmem %s5, %s1053
      // Predicated region
      $region33: #{parallel_net_forward.35} parent=31 // pred_check
        %p1055 = pneg %p103
      $region34: #{parallel_net_forward.35} parent=31 // pred_check_branch
        %1057 = sbr.rel (%p1055) target = $region36
      $region35: #{parallel_net_forward.35} parent=31 // pred_region
        _
      $region36: #{parallel_net_forward.35} parent=31 // pred_fallthru
        _
      // Predicated region
      $region37: #{parallel_net_forward.35} parent=31 // pred_check
        %p1058 = pneg %p129
      $region38: #{parallel_net_forward.35} parent=31 // pred_check_branch
        %1060 = sbr.rel (%p1058) target = $region40
      $region39: #{parallel_net_forward.35} parent=31 // pred_region
        _
      $region40: #{parallel_net_forward.35} parent=31 // pred_fallthru
        _
      // Predicated region
      $region41: #{parallel_net_forward.35} parent=31 // pred_check
        %p1061 = pneg %p155
      $region42: #{parallel_net_forward.35} parent=31 // pred_check_branch
        %1063 = sbr.rel (%p1061) target = $region44
      $region43: #{parallel_net_forward.35} parent=31 // pred_region
        _
      $region44: #{parallel_net_forward.35} parent=31 // pred_fallthru
        _
    $region32: #{parallel_net_forward.35} parent=5 // pred_fallthru
      _
    %p1064 = scmp.le.s32.totalorder 2, %s12
    // Predicated region
    $region45: #{parallel_net_forward.35} parent=5 // pred_check
      %p1065 = pneg %p1064
    $region46: #{parallel_net_forward.35} parent=5 // pred_check_branch
      %1067 = sbr.rel (%p1065) target = $region48
    $region47: #{parallel_net_forward.35} parent=5 // pred_region
      %s1068 = ssub.s32 %s12, 2
      // Predicated region
      $region49: #{parallel_net_forward.35} parent=47 // pred_check
        %p1069 = pneg %p109
      $region50: #{parallel_net_forward.35} parent=47 // pred_check_branch
        %1071 = sbr.rel (%p1069) target = $region52
      $region51: #{parallel_net_forward.35} parent=47 // pred_region
        %p1072 = scmp.lt.s32.totalorder %s18, 1
        %s1073 = scalar_select %p1072, %s18, 1
        %s1074 = smul.addr %s1073, 3
        %s1075 = smul.addr %s1074, 4
        %s1076 = scalar_lea.vmem %s3, %s1075
      $region52: #{parallel_net_forward.35} parent=47 // pred_fallthru
        _
      // Predicated region
      $region53: #{parallel_net_forward.35} parent=47 // pred_check
        %p1077 = pneg %p135
      $region54: #{parallel_net_forward.35} parent=47 // pred_check_branch
        %1079 = sbr.rel (%p1077) target = $region56
      $region55: #{parallel_net_forward.35} parent=47 // pred_region
        %p1080 = scmp.lt.s32.totalorder %s18, 1
        %s1081 = scalar_select %p1080, %s18, 1
        %s1082 = scalar_lea.vmem %s4, %s1081
      $region56: #{parallel_net_forward.35} parent=47 // pred_fallthru
        _
      // Predicated region
      $region57: #{parallel_net_forward.35} parent=47 // pred_check
        %p1083 = pneg %p161
      $region58: #{parallel_net_forward.35} parent=47 // pred_check_branch
        %1085 = sbr.rel (%p1083) target = $region60
      $region59: #{parallel_net_forward.35} parent=47 // pred_region
        %p1086 = scmp.lt.s32.totalorder %s18, 1
        %s1087 = scalar_select %p1086, %s18, 1
        %s1088 = scalar_lea.vmem %s5, %s1087
      $region60: #{parallel_net_forward.35} parent=47 // pred_fallthru
        _
    $region48: #{parallel_net_forward.35} parent=5 // pred_fallthru
      _
  $region6: #{parallel_net_forward.35} parent=0 // loop_footer
    %s16 = sadd.s32 1, %s12
  $region7: #{parallel_net_forward.35} parent=0 // loop_footer_branch
    %11 = sbr.rel target = $region3
  $region8: #{parallel_net_forward.35} parent=0 // loop_exit
    _

// kernel: tile.183
$region0: #{tile.183}
  #allocation0 [shape = 's32[1]{0}', space=sflag, size = 0x4, scoped, tag = 'scoped memory for tile.183']
  %s0 = inlined_call_operand.vmem [shape: f32[16], index: 0, kind: input, shape index: {}]
  %s1 = inlined_call_operand.vmem [shape: f32[8,16], index: 1, kind: output, shape index: {}]
  // Predicated region
  $region2: #{tile.183} parent=0 // pred_check
    _
  $region3: #{tile.183} parent=0 // pred_check_branch
    %3 = sbr.rel (0) target = $region5
  $region4: #{tile.183} parent=0 // pred_region
    _
  $region5: #{tile.183} parent=0 // pred_fallthru
    _
  %v4 = vld [vmem:[%s0] ss:$0 sm:$0xff]
  %5 = vst [vmem:[%s1] sm:$0xff] %v4

// kernel: tile.184
$region0: #{tile.184}
  %s0 = inlined_call_operand.vmem [shape: f32[8,16], index: 0, kind: input, shape index: {}]
  %s1 = inlined_call_operand.vmem [shape: f32[1,128], index: 1, kind: output, shape index: {}]
  $region1: #{tile.184} parent=0
    #allocation0 [shape = 'u8[4096]{0}', space=vmem, size = 0x1000, scoped, tag = 'scoped mem for output reshape']
    %v2 = vld [vmem:[%s0] sm:$0x1]
    %vm3 = vcmask 130048
    %4 = vst.msk [vmem:[#allocation0] sm:$0x1] %vm3, %v2
    %s5 = scalar_lea.vmem %s0, 7
    %v6 = vld [vmem:[%s5] sm:$0x1]
    %7 = vrot.lane.b32.xlu0 %v6, 112
    %v8 = vpop.permute.xlu0 %7
    %vm9 = vcmask 1048448
    %10 = vst.msk [vmem:[#allocation0] sm:$0x1] %vm9, %v8
    %s11 = scalar_lea.vmem %s0, 6
    %v12 = vld [vmem:[%s11] sm:$0x1]
    %13 = vrot.lane.b32.xlu0 %v12, 96
    %v14 = vpop.permute.xlu0 %13
    %vm15 = vcmask 917248
    %16 = vst.msk [vmem:[#allocation0] sm:$0x1] %vm15, %v14
    %s17 = scalar_lea.vmem %s0, 5
    %v18 = vld [vmem:[%s17] sm:$0x1]
    %19 = vrot.lane.b32.xlu0 %v18, 80
    %v20 = vpop.permute.xlu0 %19
    %vm21 = vcmask 786048
    %22 = vst.msk [vmem:[#allocation0] sm:$0x1] %vm21, %v20
    %s23 = scalar_lea.vmem %s0, 4
    %v24 = vld [vmem:[%s23] sm:$0x1]
    %25 = vrot.lane.b32.xlu0 %v24, 64
    %v26 = vpop.permute.xlu0 %25
    %vm27 = vcmask 654848
    %28 = vst.msk [vmem:[#allocation0] sm:$0x1] %vm27, %v26
    %s29 = scalar_lea.vmem %s0, 3
    %v30 = vld [vmem:[%s29] sm:$0x1]
    %31 = vrot.lane.b32.xlu0 %v30, 48
    %v32 = vpop.permute.xlu0 %31
    %vm33 = vcmask 523648
    %34 = vst.msk [vmem:[#allocation0] sm:$0x1] %vm33, %v32
    %s35 = scalar_lea.vmem %s0, 2
    %v36 = vld [vmem:[%s35] sm:$0x1]
    %37 = vrot.lane.b32.xlu0 %v36, 32
    %v38 = vpop.permute.xlu0 %37
    %vm39 = vcmask 392448
    %40 = vst.msk [vmem:[#allocation0] sm:$0x1] %vm39, %v38
    %s41 = scalar_lea.vmem %s0, 1
    %v42 = vld [vmem:[%s41] sm:$0x1]
    %43 = vrot.lane.b32.xlu0 %v42, 16
    %v44 = vpop.permute.xlu0 %43
    %vm45 = vcmask 261248
    %46 = vst.msk [vmem:[#allocation0] sm:$0x1] %vm45, %v44
    %s48 = sshll.u32 1, 1
    %s49 = ssub.s32 %s48, 1
    %v51 = vld [vmem:[#allocation0] sm:%s49]
    %s52 = sshll.u32 1, 1
    %s53 = ssub.s32 %s52, 1
    %54 = vst [vmem:[%s1] sm:%s53] %v51

// kernel: parallel_net_forward.39
$region0: #{parallel_net_forward.39}
  #allocation0 [shape = 'u32[]', space=smem, size = 0x4, offset = 0x4, fixed_abs, tag = 'smem constant byte address 0x4 - core index']
  #allocation1 [shape = 'u32[144,128]{1,0:T(1,128)}', space=vmem, size = 0x12000, scoped, tag = 'internal scratch']
  %s0 = inlined_call_operand.vmem [shape: bf16[8,72], index: 0, kind: input, shape index: {}]
  %s1 = inlined_call_operand.vmem [shape: bf16[72,16], index: 1, kind: input, shape index: {}]
  %s2 = inlined_call_operand.vmem [shape: bf16[8,16], index: 2, kind: output, shape index: {0}]
  %s3 = inlined_call_operand.vmem [shape: f32[1,1,16], index: 3, kind: output, shape index: {1}]
  %s4 = inlined_call_operand.vmem [shape: f32[1,1,16], index: 4, kind: output, shape index: {2}]
  %5 = xla_tuple %s2, %s3, %s4
  %s6 = sld [smem:[#allocation0]]
  $region34: #{parallel_net_forward.39} parent=0
    _
  %s8 = ssub.s32 1, %s6
  %s9 = scalar_select 0, %s8, %s6
  // Predicated region
  $region2: #{parallel_net_forward.39} parent=0 // pred_check
    _
  $region3: #{parallel_net_forward.39} parent=0 // pred_check_branch
    %11 = sbr.rel (0) target = $region5
  $region4: #{parallel_net_forward.39} parent=0 // pred_region
    _
  $region5: #{parallel_net_forward.39} parent=0 // pred_fallthru
    _
  // Predicated region
  $region6: #{parallel_net_forward.39} parent=0 // pred_check
    _
  $region7: #{parallel_net_forward.39} parent=0 // pred_check_branch
    %13 = sbr.rel (0) target = $region9
  $region8: #{parallel_net_forward.39} parent=0 // pred_region
    _
  $region9: #{parallel_net_forward.39} parent=0 // pred_fallthru
    _
  %v15 = vld [vmem:[%s0] sm:$0xf]
  %v16 = vld [vmem:[%s1] sm:$0xf]
  %v17 = vld [vmem:[%s1 + $0x4] sm:$0xf]
  %v18 = vld [vmem:[%s1 + $0x8] sm:$0xf]
  %v19 = vld [vmem:[%s1 + $0xc] sm:$0xf]
  %v20 = vld [vmem:[%s1 + $0x10] sm:$0xf]
  %v21 = vld [vmem:[%s1 + $0x14] sm:$0xf]
  %v22 = vld [vmem:[%s1 + $0x18] sm:$0xf]
  %v23 = vld [vmem:[%s1 + $0x1c] sm:$0xf]
  %v24 = vld [vmem:[%s1 + $0x20] sm:$0xf]
  %v34 = vunpack.c.l.b16 %v16
  %v35 = vunpack.c.l.b16 %v17
  %v36 = vunpack.c.l.b16 %v18
  %v37 = vunpack.c.l.b16 %v19
  %v38 = vunpack.c.l.b16 %v20
  %v39 = vunpack.c.l.b16 %v21
  %v40 = vunpack.c.l.b16 %v22
  %v41 = vunpack.c.l.b16 %v23
  %v42 = vunpack.c.l.b16 %v24
  %v43 = vpack.c.b16 %v35, %v34
  %v44 = vpack.c.b16 %v37, %v36
  %v45 = vpack.c.b16 %v39, %v38
  %v46 = vpack.c.b16 %v41, %v40
  %v47 = vpack.c.b16 %v42, %v42
  %vm52 = vcmask 588800
  %v54 = vsel %vm52, %v15, 0
  %vm56 = vcmask 1043456
  %v58 = vsel %vm56, %v47, 0
  %60 = vmatprep.subr.bf16.mxu0 0
  %61 = vmatpush1.bf16.msra.mxu0 0
  %62 = vmatprep.subr.bf16.mxu0 0
  %63 = vmatpush1.bf16.msra.mxu0 0
  %64 = vmatprep.subr.bf16.mxu0 0
  %65 = vmatpush1.bf16.msra.mxu0 0
  %66 = vmatprep.subr.bf16.mxu0 0
  %67 = vmatpush1.bf16.msra.mxu0 %v58
  %68 = vmatprep.subr.bf16.mxu0 0
  %69 = vmatpush1.bf16.msra.mxu0 %v46
  %70 = vmatprep.subr.bf16.mxu0 0
  %71 = vmatpush1.bf16.msra.mxu0 %v45
  %72 = vmatprep.subr.bf16.mxu0 0
  %73 = vmatpush1.bf16.msra.mxu0 %v44
  %74 = vmatprep.subr.bf16.mxu0 0
  %75 = vmatpush1.bf16.msra.mxu0 %v43
  %76 = vmatprep.subr.bf16.mxu0 0
  %77 = vmatpush2.bf16.msra.mxu0 0
  %78 = vmatprep.subr.bf16.mxu0 0
  %79 = vmatpush2.bf16.msra.mxu0 0
  %80 = vmatprep.subr.bf16.mxu0 0
  %81 = vmatpush2.bf16.msra.mxu0 0
  %82 = vmatprep.subr.bf16.mxu0 0
  %83 = vmatpush2.bf16.msra.mxu0 0
  %84 = vmatprep.subr.bf16.mxu0 0
  %85 = vmatpush2.bf16.msra.mxu0 0
  %86 = vmatprep.subr.bf16.mxu0 0
  %87 = vmatpush2.bf16.msra.mxu0 0
  %88 = vmatprep.subr.bf16.mxu0 0
  %89 = vmatpush2.bf16.msra.mxu0 0
  %90 = vmatprep.subr.bf16.mxu0 0
  %91 = vmatpush2.bf16.msra.mxu0 0
  %92 = vmatprep.mubr.bf16.mxu0 0
  %93 = vmatmul.mubr.bf16.gmra.mxu0 %v54
  %v94 = vpop.f32.mrf.mxu0
  %v95 = vadd.f32 0.0, %v94
  %v96 = vpop.f32.mrf.mxu0
  %v97 = vpop.f32.mrf.mxu0
  %v98 = vpop.f32.mrf.mxu0
  %99 = vdwg.mxu0
  %v100 = vpack.c.bf16 %v95, %v95
  %vm101 = vcmask 125952
  %102 = vst.msk [vmem:[%s2] sm:$0xf] %vm101, %v100
  %vm103 = vcmask 130048
  %v104 = vsel %vm103, %v95, 0.0
  %v105 = vrot.slane %v104, 4
  %v106 = vadd.f32 %v104, %v105
  %v107 = vrot.slane %v106, 2
  %v108 = vadd.f32 %v106, %v107
  %v109 = vrot.slane %v108, 1
  %v110 = vadd.f32 %v108, %v109
  %vm111 = vcmask 122880
  %112 = vst.msk [vmem:[%s3] sm:$0x1] %vm111, %v110
  %v113 = vmul.f32 %v95, %v95
  %v114 = vsel %vm103, %v113, 0.0
  %v115 = vrot.slane %v114, 4
  %v116 = vadd.f32 %v114, %v115
  %v117 = vrot.slane %v116, 2
  %v118 = vadd.f32 %v116, %v117
  %v119 = vrot.slane %v118, 1
  %v120 = vadd.f32 %v118, %v119
  %121 = vst.msk [vmem:[%s4] sm:$0x1] %vm111, %v120
  // Predicated region
  $region10: #{parallel_net_forward.39} parent=0 // pred_check
    _
  $region11: #{parallel_net_forward.39} parent=0 // pred_check_branch
    %123 = sbr.rel (0) target = $region13
  $region12: #{parallel_net_forward.39} parent=0 // pred_region
    _
  $region13: #{parallel_net_forward.39} parent=0 // pred_fallthru
    _
  // Predicated region
  $region14: #{parallel_net_forward.39} parent=0 // pred_check
    _
  $region15: #{parallel_net_forward.39} parent=0 // pred_check_branch
    %125 = sbr.rel (0) target = $region17
  $region16: #{parallel_net_forward.39} parent=0 // pred_region
    _
  $region17: #{parallel_net_forward.39} parent=0 // pred_fallthru
    _
  // Predicated region
  $region18: #{parallel_net_forward.39} parent=0 // pred_check
    _
  $region19: #{parallel_net_forward.39} parent=0 // pred_check_branch
    %127 = sbr.rel (0) target = $region21
  $region20: #{parallel_net_forward.39} parent=0 // pred_region
    _
  $region21: #{parallel_net_forward.39} parent=0 // pred_fallthru
    _
  // Predicated region
  $region22: #{parallel_net_forward.39} parent=0 // pred_check
    _
  $region23: #{parallel_net_forward.39} parent=0 // pred_check_branch
    %129 = sbr.rel (0) target = $region25
  $region24: #{parallel_net_forward.39} parent=0 // pred_region
    _
  $region25: #{parallel_net_forward.39} parent=0 // pred_fallthru
    _
  // Predicated region
  $region26: #{parallel_net_forward.39} parent=0 // pred_check
    _
  $region27: #{parallel_net_forward.39} parent=0 // pred_check_branch
    %131 = sbr.rel (0) target = $region29
  $region28: #{parallel_net_forward.39} parent=0 // pred_region
    _
  $region29: #{parallel_net_forward.39} parent=0 // pred_fallthru
    _
  // Predicated region
  $region30: #{parallel_net_forward.39} parent=0 // pred_check
    _
  $region31: #{parallel_net_forward.39} parent=0 // pred_check_branch
    %133 = sbr.rel (0) target = $region33
  $region32: #{parallel_net_forward.39} parent=0 // pred_region
    _
  $region33: #{parallel_net_forward.39} parent=0 // pred_fallthru
    _

// kernel: parallel_net_forward.41
$region0: #{parallel_net_forward.41}
  #allocation0 [shape = 'u32[]', space=smem, size = 0x4, offset = 0x4, fixed_abs, tag = 'smem constant byte address 0x4 - core index']
  #allocation1 [shape = 'u32[144,128]{1,0:T(1,128)}', space=vmem, size = 0x12000, scoped, tag = 'internal scratch']
  %s0 = inlined_call_operand.vmem [shape: bf16[2,24,16], index: 0, kind: input, shape index: {}]
  %s1 = inlined_call_operand.vmem [shape: bf16[9,16,16], index: 1, kind: input, shape index: {}]
  %s2 = inlined_call_operand.vmem [shape: f32[8,1], index: 2, kind: input, shape index: {}]
  %s3 = inlined_call_operand.vmem [shape: bf16[2,8,16], index: 3, kind: output, shape index: {0}]
  %s4 = inlined_call_operand.vmem [shape: f32[2,1,16], index: 4, kind: output, shape index: {1}]
  %s5 = inlined_call_operand.vmem [shape: f32[2,1,16], index: 5, kind: output, shape index: {2}]
  %6 = xla_tuple %s3, %s4, %s5
  %s7 = sld [smem:[#allocation0]]
  $region61: #{parallel_net_forward.41} parent=0
    _
  %s9 = ssub.s32 1, %s7
  %s10 = scalar_select 0, %s9, %s7
  loop: start=0, step=1, limit=4
  $region2: #{parallel_net_forward.41} parent=0 // loop_pre_header
    _
  $region3: #{parallel_net_forward.41} parent=0 // loop_header
    %s12 = sphi 0, %s16
    %p13 = scmp.ge.s32.totalorder %s12, 4
    %s22 = sphi 0, %s24
    %s25 = sphi 0, %s22
    %s26 = sphi 0, %s25
    %s42 = sphi 0, %s26
    %s46 = sphi 0, %s46
    %s48 = sphi 0, %s46
    %s49 = sphi 0, %s48
    %s63 = sphi 0, %s49
    %s67 = sphi 0, %s67
    %s69 = sphi 0, %s67
    %s70 = sphi 0, %s69
    %s84 = sphi 0, %s70
    %s90 = sphi 0, %s92
    %s93 = sphi 0, %s90
    %s94 = sphi 0, %s93
    %s110 = sphi 0, %s94
    %s116 = sphi 0, %s118
    %s119 = sphi 0, %s116
    %s120 = sphi 0, %s119
    %s136 = sphi 0, %s120
    %s142 = sphi 0, %s144
    %s145 = sphi 0, %s142
    %s146 = sphi 0, %s145
    %s162 = sphi 0, %s146
  $region4: #{parallel_net_forward.41} parent=0 // loop_header_branch
    %15 = sbr.rel (%p13) target = $region8
  $region5: #{parallel_net_forward.41} parent=0 // loop_body
    %s17 = ssub.s32 %s12, 1
    %s18 = ssub.s32 %s12, 2
    %s19 = sadd.s32 %s12, 1
    %s20 = ssub.s32 %s12, %s19
    %p21 = scmp.eq.s32.totalorder %s20, 0
    %s23 = sadd.s32 %s22, 1
    %s24 = scalar_select %p21, %s22, %s23
    %p27 = pneg %p21
    %p28 = scmp.eq.s32.totalorder %s12, 1
    %p29 = por %p27, %p28
    %p30 = scmp.ne.s32.totalorder %s22, %s25
    %p31 = scmp.eq.s32.totalorder %s12, 0
    %p32 = por %p30, %p31
    %p33 = scmp.ne.s32.totalorder %s22, %s25
    %p34 = scmp.eq.s32.totalorder %s17, 1
    %p35 = por %p33, %p34
    %p36 = scmp.ne.s32.totalorder %s25, %s26
    %p37 = scmp.eq.s32.totalorder %s17, 0
    %p38 = por %p36, %p37
    %p39 = scmp.ne.s32.totalorder %s25, %s26
    %p40 = scmp.eq.s32.totalorder %s18, 1
    %p41 = por %p39, %p40
    %p43 = scmp.ne.s32.totalorder %s26, %s42
    %p44 = scmp.eq.s32.totalorder %s18, 0
    %p45 = por %p43, %p44
    %s47 = sadd.s32 %s46, 1
    %p50 = scmp.eq.s32.totalorder %s12, 1
    %p51 = scmp.ne.s32.totalorder %s46, %s48
    %p52 = scmp.eq.s32.totalorder %s12, 0
    %p53 = por %p51, %p52
    %p54 = scmp.ne.s32.totalorder %s46, %s48
    %p55 = scmp.eq.s32.totalorder %s17, 1
    %p56 = por %p54, %p55
    %p57 = scmp.ne.s32.totalorder %s48, %s49
    %p58 = scmp.eq.s32.totalorder %s17, 0
    %p59 = por %p57, %p58
    %p60 = scmp.ne.s32.totalorder %s48, %s49
    %p61 = scmp.eq.s32.totalorder %s18, 1
    %p62 = por %p60, %p61
    %p64 = scmp.ne.s32.totalorder %s49, %s63
    %p65 = scmp.eq.s32.totalorder %s18, 0
    %p66 = por %p64, %p65
    %s68 = sadd.s32 %s67, 1
    %p71 = scmp.eq.s32.totalorder %s12, 1
    %p72 = scmp.ne.s32.totalorder %s67, %s69
    %p73 = scmp.eq.s32.totalorder %s12, 0
    %p74 = por %p72, %p73
    %p75 = scmp.ne.s32.totalorder %s67, %s69
    %p76 = scmp.eq.s32.totalorder %s17, 1
    %p77 = por %p75, %p76
    %p78 = scmp.ne.s32.totalorder %s69, %s70
    %p79 = scmp.eq.s32.totalorder %s17, 0
    %p80 = por %p78, %p79
    %p81 = scmp.ne.s32.totalorder %s69, %s70
    %p82 = scmp.eq.s32.totalorder %s18, 1
    %p83 = por %p81, %p82
    %p85 = scmp.ne.s32.totalorder %s70, %s84
    %p86 = scmp.eq.s32.totalorder %s18, 0
    %p87 = por %p85, %p86
    %s88 = ssub.s32 %s12, %s19
    %p89 = scmp.eq.s32.totalorder %s88, 0
    %s91 = sadd.s32 %s90, 1
    %s92 = scalar_select %p89, %s90, %s91
    %p95 = pneg %p89
    %p96 = scmp.eq.s32.totalorder %s12, 1
    %p97 = por %p95, %p96
    %p98 = scmp.ne.s32.totalorder %s90, %s93
    %p99 = scmp.eq.s32.totalorder %s12, 0
    %p100 = por %p98, %p99
    %p101 = scmp.ne.s32.totalorder %s90, %s93
    %p102 = scmp.eq.s32.totalorder %s17, 1
    %p103 = por %p101, %p102
    %p104 = scmp.ne.s32.totalorder %s93, %s94
    %p105 = scmp.eq.s32.totalorder %s17, 0
    %p106 = por %p104, %p105
    %p107 = scmp.ne.s32.totalorder %s93, %s94
    %p108 = scmp.eq.s32.totalorder %s18, 1
    %p109 = por %p107, %p108
    %p111 = scmp.ne.s32.totalorder %s94, %s110
    %p112 = scmp.eq.s32.totalorder %s18, 0
    %p113 = por %p111, %p112
    %s114 = ssub.s32 %s12, %s19
    %p115 = scmp.eq.s32.totalorder %s114, 0
    %s117 = sadd.s32 %s116, 1
    %s118 = scalar_select %p115, %s116, %s117
    %p121 = pneg %p115
    %p122 = scmp.eq.s32.totalorder %s12, 1
    %p123 = por %p121, %p122
    %p124 = scmp.ne.s32.totalorder %s116, %s119
    %p125 = scmp.eq.s32.totalorder %s12, 0
    %p126 = por %p124, %p125
    %p127 = scmp.ne.s32.totalorder %s116, %s119
    %p128 = scmp.eq.s32.totalorder %s17, 1
    %p129 = por %p127, %p128
    %p130 = scmp.ne.s32.totalorder %s119, %s120
    %p131 = scmp.eq.s32.totalorder %s17, 0
    %p132 = por %p130, %p131
    %p133 = scmp.ne.s32.totalorder %s119, %s120
    %p134 = scmp.eq.s32.totalorder %s18, 1
    %p135 = por %p133, %p134
    %p137 = scmp.ne.s32.totalorder %s120, %s136
    %p138 = scmp.eq.s32.totalorder %s18, 0
    %p139 = por %p137, %p138
    %s140 = ssub.s32 %s12, %s19
    %p141 = scmp.eq.s32.totalorder %s140, 0
    %s143 = sadd.s32 %s142, 1
    %s144 = scalar_select %p141, %s142, %s143
    %p147 = pneg %p141
    %p148 = scmp.eq.s32.totalorder %s12, 1
    %p149 = por %p147, %p148
    %p150 = scmp.ne.s32.totalorder %s142, %s145
    %p151 = scmp.eq.s32.totalorder %s12, 0
    %p152 = por %p150, %p151
    %p153 = scmp.ne.s32.totalorder %s142, %s145
    %p154 = scmp.eq.s32.totalorder %s17, 1
    %p155 = por %p153, %p154
    %p156 = scmp.ne.s32.totalorder %s145, %s146
    %p157 = scmp.eq.s32.totalorder %s17, 0
    %p158 = por %p156, %p157
    %p159 = scmp.ne.s32.totalorder %s145, %s146
    %p160 = scmp.eq.s32.totalorder %s18, 1
    %p161 = por %p159, %p160
    %p163 = scmp.ne.s32.totalorder %s146, %s162
    %p164 = scmp.eq.s32.totalorder %s18, 0
    %p165 = por %p163, %p164
    %p166 = scmp.le.s32.totalorder 1, %s12
    %p167 = scmp.lt.s32.totalorder %s12, 3
    %p168 = pnand %p166, %p167
    %p169 = pneg %p168
    // Predicated region
    $region9: #{parallel_net_forward.41} parent=5 // pred_check
      _
    $region10: #{parallel_net_forward.41} parent=5 // pred_check_branch
      %171 = sbr.rel (%p168) target = $region12
    $region11: #{parallel_net_forward.41} parent=5 // pred_region
      %s172 = ssub.s32 %s12, 1
      // Predicated region
      $region13: #{parallel_net_forward.41} parent=11 // pred_check
        %p173 = pneg %p59
      $region14: #{parallel_net_forward.41} parent=11 // pred_check_branch
        %175 = sbr.rel (%p173) target = $region16
      $region15: #{parallel_net_forward.41} parent=11 // pred_region
        _
      $region16: #{parallel_net_forward.41} parent=11 // pred_fallthru
        _
      // Predicated region
      $region17: #{parallel_net_forward.41} parent=11 // pred_check
        %p176 = pneg %p80
      $region18: #{parallel_net_forward.41} parent=11 // pred_check_branch
        %178 = sbr.rel (%p176) target = $region20
      $region19: #{parallel_net_forward.41} parent=11 // pred_region
        _
      $region20: #{parallel_net_forward.41} parent=11 // pred_fallthru
        _
    $region12: #{parallel_net_forward.41} parent=5 // pred_fallthru
      _
    %p179 = scmp.lt.s32.totalorder %s12, 2
    // Predicated region
    $region21: #{parallel_net_forward.41} parent=5 // pred_check
      %p180 = pneg %p179
    $region22: #{parallel_net_forward.41} parent=5 // pred_check_branch
      %182 = sbr.rel (%p180) target = $region24
    $region23: #{parallel_net_forward.41} parent=5 // pred_region
      // Predicated region
      $region25: #{parallel_net_forward.41} parent=23 // pred_check
        %p183 = pneg %p32
      $region26: #{parallel_net_forward.41} parent=23 // pred_check_branch
        %185 = sbr.rel (%p183) target = $region28
      $region27: #{parallel_net_forward.41} parent=23 // pred_region
        %p186 = scmp.lt.s32.totalorder %s12, 1
        %s187 = scalar_select %p186, %s12, 1
        %s188 = smul.addr %s187, 3
        %s189 = smul.addr %s188, 4
        %s190 = scalar_lea.vmem %s0, %s189
      $region28: #{parallel_net_forward.41} parent=23 // pred_fallthru
        _
    $region24: #{parallel_net_forward.41} parent=5 // pred_fallthru
      _
    %p191 = scmp.le.s32.totalorder 1, %s12
    %p192 = scmp.lt.s32.totalorder %s12, 3
    %p193 = pnand %p191, %p192
    %p194 = pneg %p193
    // Predicated region
    $region29: #{parallel_net_forward.41} parent=5 // pred_check
      _
    $region30: #{parallel_net_forward.41} parent=5 // pred_check_branch
      %196 = sbr.rel (%p193) target = $region32
    $region31: #{parallel_net_forward.41} parent=5 // pred_region
      %s197 = ssub.s32 %s12, 1
      %p198 = scmp.lt.s32.totalorder %s17, 1
      %s199 = scalar_select %p198, %s17, 1
      %s200 = smul.addr %s199, 3
      %s201 = smul.addr %s200, 4
      %s202 = scalar_lea.vmem %s0, %s201
      %p203 = pneg %p38
      %p204 = pneg %p35
      %p205 = pneg %p59
      %p206 = pneg %p56
      %p207 = pneg %p80
      %p208 = pneg %p77
      %p209 = pneg %p106
      %p210 = pneg %p103
      %p211 = scmp.lt.s32.totalorder %s17, 1
      %s212 = scalar_select %p211, %s17, 1
      %s213 = smul.addr %s212, 4
      %s214 = scalar_lea.vmem %s3, %s213
      %p215 = pneg %p132
      %p216 = pneg %p129
      %p217 = scmp.lt.s32.totalorder %s17, 1
      %s218 = scalar_select %p217, %s17, 1
      %s219 = scalar_lea.vmem %s4, %s218
      %p220 = pneg %p158
      %p221 = pneg %p155
      %p222 = scmp.lt.s32.totalorder %s17, 1
      %s223 = scalar_select %p222, %s17, 1
      %s224 = scalar_lea.vmem %s5, %s223
      %p225 = scmp.lt.s32.totalorder %s17, 1
      %s226 = scalar_select %p225, %s17, 1
      %s227 = smul.addr %s226, 3
      %s228 = smul.addr %s227, 4
      %s229 = scalar_lea.vmem %s0, %s228
      %p230 = scmp.lt.s32.totalorder %s17, 1
      %s231 = scalar_select %p230, %s17, 1
      %s232 = smul.addr %s231, 4
      %s233 = scalar_lea.vmem %s3, %s232
      %p234 = scmp.lt.s32.totalorder %s17, 1
      %s235 = scalar_select %p234, %s17, 1
      %s236 = scalar_lea.vmem %s4, %s235
      %p237 = scmp.lt.s32.totalorder %s17, 1
      %s238 = scalar_select %p237, %s17, 1
      %s239 = scalar_lea.vmem %s5, %s238
      %v241 = vld [vmem:[%s229] sm:$0xe]
      %v242 = vld [vmem:[%s229 + $0x4] sm:$0x3]
      %v243 = vld [vmem:[%s1] sm:$0xf]
      %v244 = vld [vmem:[%s1 + $0x4] sm:$0xf]
      %v245 = vld [vmem:[%s229] sm:$0xc]
      %s246 = scalar_lea.vmem %s1, 8
      %v247 = vld [vmem:[%s246] sm:$0xf]
      %v248 = vld [vmem:[%s246 + $0x4] sm:$0xf]
      %v251 = vunpack.c.l.b16 %v245
      %v252 = vunpack.c.l.b16 %v242
      %v253 = vpack.c.b16 %v252, %v251
      %v254 = vrot.slane %v253, 2
      %v257 = vunpack.c.l.b16 %v247
      %v258 = vunpack.c.l.b16 %v248
      %v259 = vpack.c.b16 %v258, %v257
      %vm261 = vcmask 130048
      %v263 = vsel %vm261, %v254, 0
      %265 = vmatprep.subr.bf16.mxu0 0
      %266 = vmatpush1.bf16.msra.mxu0 0
      %267 = vmatprep.subr.bf16.mxu0 0
      %268 = vmatpush1.bf16.msra.mxu0 0
      %269 = vmatprep.subr.bf16.mxu0 0
      %270 = vmatpush1.bf16.msra.mxu0 0
      %271 = vmatprep.subr.bf16.mxu0 0
      %272 = vmatpush1.bf16.msra.mxu0 0
      %273 = vmatprep.subr.bf16.mxu0 0
      %274 = vmatpush1.bf16.msra.mxu0 0
      %275 = vmatprep.subr.bf16.mxu0 0
      %276 = vmatpush1.bf16.msra.mxu0 0
      %277 = vmatprep.subr.bf16.mxu0 0
      %278 = vmatpush1.bf16.msra.mxu0 0
      %279 = vmatprep.subr.bf16.mxu0 0
      %280 = vmatpush1.bf16.msra.mxu0 %v259
      %281 = vmatprep.subr.bf16.mxu0 0
      %282 = vmatpush2.bf16.msra.mxu0 0
      %283 = vmatprep.subr.bf16.mxu0 0
      %284 = vmatpush2.bf16.msra.mxu0 0
      %285 = vmatprep.subr.bf16.mxu0 0
      %286 = vmatpush2.bf16.msra.mxu0 0
      %287 = vmatprep.subr.bf16.mxu0 0
      %288 = vmatpush2.bf16.msra.mxu0 0
      %289 = vmatprep.subr.bf16.mxu0 0
      %290 = vmatpush2.bf16.msra.mxu0 0
      %291 = vmatprep.subr.bf16.mxu0 0
      %292 = vmatpush2.bf16.msra.mxu0 0
      %293 = vmatprep.subr.bf16.mxu0 0
      %294 = vmatpush2.bf16.msra.mxu0 0
      %295 = vmatprep.subr.bf16.mxu0 0
      %296 = vmatpush2.bf16.msra.mxu0 0
      %297 = vmatprep.mubr.bf16.mxu0 0
      %298 = vmatmul.mubr.bf16.gmra.mxu0 %v263
      %v299 = vpop.f32.mrf.mxu0
      %v300 = vadd.f32 0.0, %v299
      %v301 = vpop.f32.mrf.mxu0
      %v302 = vpop.f32.mrf.mxu0
      %v303 = vpop.f32.mrf.mxu0
      %304 = vdwg.mxu0
      %v306 = vunpack.c.l.b16 %v241
      %v307 = vpack.c.b16 %v252, %v306
      %v309 = vshrl.u32 %v307, 16
      %v311 = vrot.slane %v309, 1
      %v312 = vshll.u32 %v307, 16
      %v314 = vrot.slane %v312, 2
      %v315 = vor.u32 %v311, %v314
      %v318 = vunpack.c.l.b16 %v243
      %v319 = vunpack.c.l.b16 %v244
      %v320 = vpack.c.b16 %v319, %v318
      %v323 = vsel %vm261, %v315, 0
      %325 = vmatprep.subr.bf16.mxu0 0
      %326 = vmatpush1.bf16.msra.mxu0 0
      %327 = vmatprep.subr.bf16.mxu0 0
      %328 = vmatpush1.bf16.msra.mxu0 0
      %329 = vmatprep.subr.bf16.mxu0 0
      %330 = vmatpush1.bf16.msra.mxu0 0
      %331 = vmatprep.subr.bf16.mxu0 0
      %332 = vmatpush1.bf16.msra.mxu0 0
      %333 = vmatprep.subr.bf16.mxu0 0
      %334 = vmatpush1.bf16.msra.mxu0 0
      %335 = vmatprep.subr.bf16.mxu0 0
      %336 = vmatpush1.bf16.msra.mxu0 0
      %337 = vmatprep.subr.bf16.mxu0 0
      %338 = vmatpush1.bf16.msra.mxu0 0
      %339 = vmatprep.subr.bf16.mxu0 0
      %340 = vmatpush1.bf16.msra.mxu0 %v320
      %341 = vmatprep.subr.bf16.mxu0 0
      %342 = vmatpush2.bf16.msra.mxu0 0
      %343 = vmatprep.subr.bf16.mxu0 0
      %344 = vmatpush2.bf16.msra.mxu0 0
      %345 = vmatprep.subr.bf16.mxu0 0
      %346 = vmatpush2.bf16.msra.mxu0 0
      %347 = vmatprep.subr.bf16.mxu0 0
      %348 = vmatpush2.bf16.msra.mxu0 0
      %349 = vmatprep.subr.bf16.mxu0 0
      %350 = vmatpush2.bf16.msra.mxu0 0
      %351 = vmatprep.subr.bf16.mxu0 0
      %352 = vmatpush2.bf16.msra.mxu0 0
      %353 = vmatprep.subr.bf16.mxu0 0
      %354 = vmatpush2.bf16.msra.mxu0 0
      %355 = vmatprep.subr.bf16.mxu0 0
      %356 = vmatpush2.bf16.msra.mxu0 0
      %357 = vmatprep.mubr.bf16.mxu0 0
      %358 = vmatmul.mubr.bf16.gmra.mxu0 %v323
      %v359 = vpop.f32.mrf.mxu0
      %v360 = vadd.f32 %v300, %v359
      %v361 = vpop.f32.mrf.mxu0
      %v362 = vpop.f32.mrf.mxu0
      %v363 = vpop.f32.mrf.mxu0
      %364 = vdwg.mxu0
      %v365 = vld [vmem:[%s229 + $0x4] sm:$0x7]
      %s366 = scalar_lea.vmem %s1, 16
      %v367 = vld [vmem:[%s366] sm:$0xf]
      %v368 = vld [vmem:[%s366 + $0x4] sm:$0xf]
      %v370 = vunpack.c.l.b16 %v365
      %v371 = vpack.c.b16 %v370, %v251
      %v373 = vshrl.u32 %v371, 16
      %v375 = vrot.slane %v373, 2
      %v376 = vshll.u32 %v371, 16
      %v378 = vrot.slane %v376, 3
      %v379 = vor.u32 %v375, %v378
      %v382 = vunpack.c.l.b16 %v367
      %v383 = vunpack.c.l.b16 %v368
      %v384 = vpack.c.b16 %v383, %v382
      %v387 = vsel %vm261, %v379, 0
      %389 = vmatprep.subr.bf16.mxu0 0
      %390 = vmatpush1.bf16.msra.mxu0 0
      %391 = vmatprep.subr.bf16.mxu0 0
      %392 = vmatpush1.bf16.msra.mxu0 0
      %393 = vmatprep.subr.bf16.mxu0 0
      %394 = vmatpush1.bf16.msra.mxu0 0
      %395 = vmatprep.subr.bf16.mxu0 0
      %396 = vmatpush1.bf16.msra.mxu0 0
      %397 = vmatprep.subr.bf16.mxu0 0
      %398 = vmatpush1.bf16.msra.mxu0 0
      %399 = vmatprep.subr.bf16.mxu0 0
      %400 = vmatpush1.bf16.msra.mxu0 0
      %401 = vmatprep.subr.bf16.mxu0 0
      %402 = vmatpush1.bf16.msra.mxu0 0
      %403 = vmatprep.subr.bf16.mxu0 0
      %404 = vmatpush1.bf16.msra.mxu0 %v384
      %405 = vmatprep.subr.bf16.mxu0 0
      %406 = vmatpush2.bf16.msra.mxu0 0
      %407 = vmatprep.subr.bf16.mxu0 0
      %408 = vmatpush2.bf16.msra.mxu0 0
      %409 = vmatprep.subr.bf16.mxu0 0
      %410 = vmatpush2.bf16.msra.mxu0 0
      %411 = vmatprep.subr.bf16.mxu0 0
      %412 = vmatpush2.bf16.msra.mxu0 0
      %413 = vmatprep.subr.bf16.mxu0 0
      %414 = vmatpush2.bf16.msra.mxu0 0
      %415 = vmatprep.subr.bf16.mxu0 0
      %416 = vmatpush2.bf16.msra.mxu0 0
      %417 = vmatprep.subr.bf16.mxu0 0
      %418 = vmatpush2.bf16.msra.mxu0 0
      %419 = vmatprep.subr.bf16.mxu0 0
      %420 = vmatpush2.bf16.msra.mxu0 0
      %421 = vmatprep.mubr.bf16.mxu0 0
      %422 = vmatmul.mubr.bf16.gmra.mxu0 %v387
      %v423 = vpop.f32.mrf.mxu0
      %v424 = vadd.f32 0.0, %v423
      %v425 = vpop.f32.mrf.mxu0
      %v426 = vpop.f32.mrf.mxu0
      %v427 = vpop.f32.mrf.mxu0
      %428 = vdwg.mxu0
      %v429 = vadd.f32 %v360, %v424
      %v430 = vld [vmem:[%s229] sm:$0x8]
      %v431 = vld [vmem:[%s229 + $0x4] sm:$0xf]
      %s432 = scalar_lea.vmem %s1, 24
      %v433 = vld [vmem:[%s432] sm:$0xf]
      %v434 = vld [vmem:[%s432 + $0x4] sm:$0xf]
      %v437 = vunpack.c.l.b16 %v430
      %v438 = vunpack.c.l.b16 %v431
      %v439 = vpack.c.b16 %v438, %v437
      %v441 = vshrl.u32 %v439, 16
      %v443 = vrot.slane %v441, 3
      %v444 = vshll.u32 %v439, 16
      %v446 = vrot.slane %v444, 4
      %v447 = vor.u32 %v443, %v446
      %v450 = vunpack.c.l.b16 %v433
      %v451 = vunpack.c.l.b16 %v434
      %v452 = vpack.c.b16 %v451, %v450
      %v455 = vsel %vm261, %v447, 0
      %457 = vmatprep.subr.bf16.mxu0 0
      %458 = vmatpush1.bf16.msra.mxu0 0
      %459 = vmatprep.subr.bf16.mxu0 0
      %460 = vmatpush1.bf16.msra.mxu0 0
      %461 = vmatprep.subr.bf16.mxu0 0
      %462 = vmatpush1.bf16.msra.mxu0 0
      %463 = vmatprep.subr.bf16.mxu0 0
      %464 = vmatpush1.bf16.msra.mxu0 0
      %465 = vmatprep.subr.bf16.mxu0 0
      %466 = vmatpush1.bf16.msra.mxu0 0
      %467 = vmatprep.subr.bf16.mxu0 0
      %468 = vmatpush1.bf16.msra.mxu0 0
      %469 = vmatprep.subr.bf16.mxu0 0
      %470 = vmatpush1.bf16.msra.mxu0 0
      %471 = vmatprep.subr.bf16.mxu0 0
      %472 = vmatpush1.bf16.msra.mxu0 %v452
      %473 = vmatprep.subr.bf16.mxu0 0
      %474 = vmatpush2.bf16.msra.mxu0 0
      %475 = vmatprep.subr.bf16.mxu0 0
      %476 = vmatpush2.bf16.msra.mxu0 0
      %477 = vmatprep.subr.bf16.mxu0 0
      %478 = vmatpush2.bf16.msra.mxu0 0
      %479 = vmatprep.subr.bf16.mxu0 0
      %480 = vmatpush2.bf16.msra.mxu0 0
      %481 = vmatprep.subr.bf16.mxu0 0
      %482 = vmatpush2.bf16.msra.mxu0 0
      %483 = vmatprep.subr.bf16.mxu0 0
      %484 = vmatpush2.bf16.msra.mxu0 0
      %485 = vmatprep.subr.bf16.mxu0 0
      %486 = vmatpush2.bf16.msra.mxu0 0
      %487 = vmatprep.subr.bf16.mxu0 0
      %488 = vmatpush2.bf16.msra.mxu0 0
      %489 = vmatprep.mubr.bf16.mxu0 0
      %490 = vmatmul.mubr.bf16.gmra.mxu0 %v455
      %v491 = vpop.f32.mrf.mxu0
      %v492 = vadd.f32 0.0, %v491
      %v493 = vpop.f32.mrf.mxu0
      %v494 = vpop.f32.mrf.mxu0
      %v495 = vpop.f32.mrf.mxu0
      %496 = vdwg.mxu0
      %v497 = vadd.f32 %v429, %v492
      %s498 = scalar_lea.vmem %s1, 32
      %v499 = vld [vmem:[%s498] sm:$0xf]
      %v500 = vld [vmem:[%s498 + $0x4] sm:$0xf]
      %v503 = vunpack.c.l.b16 %v499
      %v504 = vunpack.c.l.b16 %v500
      %v505 = vpack.c.b16 %v504, %v503
      %v508 = vsel %vm261, %v431, 0
      %510 = vmatprep.subr.bf16.mxu0 0
      %511 = vmatpush1.bf16.msra.mxu0 0
      %512 = vmatprep.subr.bf16.mxu0 0
      %513 = vmatpush1.bf16.msra.mxu0 0
      %514 = vmatprep.subr.bf16.mxu0 0
      %515 = vmatpush1.bf16.msra.mxu0 0
      %516 = vmatprep.subr.bf16.mxu0 0
      %517 = vmatpush1.bf16.msra.mxu0 0
      %518 = vmatprep.subr.bf16.mxu0 0
      %519 = vmatpush1.bf16.msra.mxu0 0
      %520 = vmatprep.subr.bf16.mxu0 0
      %521 = vmatpush1.bf16.msra.mxu0 0
      %522 = vmatprep.subr.bf16.mxu0 0
      %523 = vmatpush1.bf16.msra.mxu0 0
      %524 = vmatprep.subr.bf16.mxu0 0
      %525 = vmatpush1.bf16.msra.mxu0 %v505
      %526 = vmatprep.subr.bf16.mxu0 0
      %527 = vmatpush2.bf16.msra.mxu0 0
      %528 = vmatprep.subr.bf16.mxu0 0
      %529 = vmatpush2.bf16.msra.mxu0 0
      %530 = vmatprep.subr.bf16.mxu0 0
      %531 = vmatpush2.bf16.msra.mxu0 0
      %532 = vmatprep.subr.bf16.mxu0 0
      %533 = vmatpush2.bf16.msra.mxu0 0
      %534 = vmatprep.subr.bf16.mxu0 0
      %535 = vmatpush2.bf16.msra.mxu0 0
      %536 = vmatprep.subr.bf16.mxu0 0
      %537 = vmatpush2.bf16.msra.mxu0 0
      %538 = vmatprep.subr.bf16.mxu0 0
      %539 = vmatpush2.bf16.msra.mxu0 0
      %540 = vmatprep.subr.bf16.mxu0 0
      %541 = vmatpush2.bf16.msra.mxu0 0
      %542 = vmatprep.mubr.bf16.mxu0 0
      %543 = vmatmul.mubr.bf16.gmra.mxu0 %v508
      %v544 = vpop.f32.mrf.mxu0
      %v545 = vadd.f32 0.0, %v544
      %v546 = vpop.f32.mrf.mxu0
      %v547 = vpop.f32.mrf.mxu0
      %v548 = vpop.f32.mrf.mxu0
      %549 = vdwg.mxu0
      %v550 = vadd.f32 %v497, %v545
      %v551 = vld [vmem:[%s229 + $0x4] sm:$0xf]
      %v552 = vld [vmem:[%s229 + $0x8] sm:$0x1]
      %s553 = scalar_lea.vmem %s1, 40
      %v554 = vld [vmem:[%s553] sm:$0xf]
      %v555 = vld [vmem:[%s553 + $0x4] sm:$0xf]
      %v558 = vunpack.c.l.b16 %v551
      %v559 = vunpack.c.l.b16 %v552
      %v560 = vpack.c.b16 %v559, %v558
      %v562 = vshrl.u32 %v560, 16
      %v564 = vshll.u32 %v560, 16
      %v566 = vrot.slane %v564, 1
      %v567 = vor.u32 %v562, %v566
      %v570 = vunpack.c.l.b16 %v554
      %v571 = vunpack.c.l.b16 %v555
      %v572 = vpack.c.b16 %v571, %v570
      %v575 = vsel %vm261, %v567, 0
      %577 = vmatprep.subr.bf16.mxu0 0
      %578 = vmatpush1.bf16.msra.mxu0 0
      %579 = vmatprep.subr.bf16.mxu0 0
      %580 = vmatpush1.bf16.msra.mxu0 0
      %581 = vmatprep.subr.bf16.mxu0 0
      %582 = vmatpush1.bf16.msra.mxu0 0
      %583 = vmatprep.subr.bf16.mxu0 0
      %584 = vmatpush1.bf16.msra.mxu0 0
      %585 = vmatprep.subr.bf16.mxu0 0
      %586 = vmatpush1.bf16.msra.mxu0 0
      %587 = vmatprep.subr.bf16.mxu0 0
      %588 = vmatpush1.bf16.msra.mxu0 0
      %589 = vmatprep.subr.bf16.mxu0 0
      %590 = vmatpush1.bf16.msra.mxu0 0
      %591 = vmatprep.subr.bf16.mxu0 0
      %592 = vmatpush1.bf16.msra.mxu0 %v572
      %593 = vmatprep.subr.bf16.mxu0 0
      %594 = vmatpush2.bf16.msra.mxu0 0
      %595 = vmatprep.subr.bf16.mxu0 0
      %596 = vmatpush2.bf16.msra.mxu0 0
      %597 = vmatprep.subr.bf16.mxu0 0
      %598 = vmatpush2.bf16.msra.mxu0 0
      %599 = vmatprep.subr.bf16.mxu0 0
      %600 = vmatpush2.bf16.msra.mxu0 0
      %601 = vmatprep.subr.bf16.mxu0 0
      %602 = vmatpush2.bf16.msra.mxu0 0
      %603 = vmatprep.subr.bf16.mxu0 0
      %604 = vmatpush2.bf16.msra.mxu0 0
      %605 = vmatprep.subr.bf16.mxu0 0
      %606 = vmatpush2.bf16.msra.mxu0 0
      %607 = vmatprep.subr.bf16.mxu0 0
      %608 = vmatpush2.bf16.msra.mxu0 0
      %609 = vmatprep.mubr.bf16.mxu0 0
      %610 = vmatmul.mubr.bf16.gmra.mxu0 %v575
      %v611 = vpop.f32.mrf.mxu0
      %v612 = vadd.f32 0.0, %v611
      %v613 = vpop.f32.mrf.mxu0
      %v614 = vpop.f32.mrf.mxu0
      %v615 = vpop.f32.mrf.mxu0
      %616 = vdwg.mxu0
      %v617 = vadd.f32 %v550, %v612
      %v618 = vld [vmem:[%s229 + $0x4] sm:$0xe]
      %v619 = vld [vmem:[%s229 + $0x8] sm:$0x3]
      %s620 = scalar_lea.vmem %s1, 48
      %v621 = vld [vmem:[%s620] sm:$0xf]
      %v622 = vld [vmem:[%s620 + $0x4] sm:$0xf]
      %v625 = vunpack.c.l.b16 %v618
      %v626 = vunpack.c.l.b16 %v619
      %v627 = vpack.c.b16 %v626, %v625
      %v629 = vshrl.u32 %v627, 16
      %v631 = vrot.slane %v629, 1
      %v632 = vshll.u32 %v627, 16
      %v634 = vrot.slane %v632, 2
      %v635 = vor.u32 %v631, %v634
      %v638 = vunpack.c.l.b16 %v621
      %v639 = vunpack.c.l.b16 %v622
      %v640 = vpack.c.b16 %v639, %v638
      %v643 = vsel %vm261, %v635, 0
      %645 = vmatprep.subr.bf16.mxu0 0
      %646 = vmatpush1.bf16.msra.mxu0 0
      %647 = vmatprep.subr.bf16.mxu0 0
      %648 = vmatpush1.bf16.msra.mxu0 0
      %649 = vmatprep.subr.bf16.mxu0 0
      %650 = vmatpush1.bf16.msra.mxu0 0
      %651 = vmatprep.subr.bf16.mxu0 0
      %652 = vmatpush1.bf16.msra.mxu0 0
      %653 = vmatprep.subr.bf16.mxu0 0
      %654 = vmatpush1.bf16.msra.mxu0 0
      %655 = vmatprep.subr.bf16.mxu0 0
      %656 = vmatpush1.bf16.msra.mxu0 0
      %657 = vmatprep.subr.bf16.mxu0 0
      %658 = vmatpush1.bf16.msra.mxu0 0
      %659 = vmatprep.subr.bf16.mxu0 0
      %660 = vmatpush1.bf16.msra.mxu0 %v640
      %661 = vmatprep.subr.bf16.mxu0 0
      %662 = vmatpush2.bf16.msra.mxu0 0
      %663 = vmatprep.subr.bf16.mxu0 0
      %664 = vmatpush2.bf16.msra.mxu0 0
      %665 = vmatprep.subr.bf16.mxu0 0
      %666 = vmatpush2.bf16.msra.mxu0 0
      %667 = vmatprep.subr.bf16.mxu0 0
      %668 = vmatpush2.bf16.msra.mxu0 0
      %669 = vmatprep.subr.bf16.mxu0 0
      %670 = vmatpush2.bf16.msra.mxu0 0
      %671 = vmatprep.subr.bf16.mxu0 0
      %672 = vmatpush2.bf16.msra.mxu0 0
      %673 = vmatprep.subr.bf16.mxu0 0
      %674 = vmatpush2.bf16.msra.mxu0 0
      %675 = vmatprep.subr.bf16.mxu0 0
      %676 = vmatpush2.bf16.msra.mxu0 0
      %677 = vmatprep.mubr.bf16.mxu0 0
      %678 = vmatmul.mubr.bf16.gmra.mxu0 %v643
      %v679 = vpop.f32.mrf.mxu0
      %v680 = vadd.f32 0.0, %v679
      %v681 = vpop.f32.mrf.mxu0
      %v682 = vpop.f32.mrf.mxu0
      %v683 = vpop.f32.mrf.mxu0
      %684 = vdwg.mxu0
      %v685 = vadd.f32 %v617, %v680
      %v686 = vld [vmem:[%s229 + $0x4] sm:$0xc]
      %s687 = scalar_lea.vmem %s1, 56
      %v688 = vld [vmem:[%s687] sm:$0xf]
      %v689 = vld [vmem:[%s687 + $0x4] sm:$0xf]
      %v691 = vunpack.c.l.b16 %v686
      %v692 = vpack.c.b16 %v626, %v691
      %v693 = vrot.slane %v692, 2
      %v696 = vunpack.c.l.b16 %v688
      %v697 = vunpack.c.l.b16 %v689
      %v698 = vpack.c.b16 %v697, %v696
      %v701 = vsel %vm261, %v693, 0
      %703 = vmatprep.subr.bf16.mxu0 0
      %704 = vmatpush1.bf16.msra.mxu0 0
      %705 = vmatprep.subr.bf16.mxu0 0
      %706 = vmatpush1.bf16.msra.mxu0 0
      %707 = vmatprep.subr.bf16.mxu0 0
      %708 = vmatpush1.bf16.msra.mxu0 0
      %709 = vmatprep.subr.bf16.mxu0 0
      %710 = vmatpush1.bf16.msra.mxu0 0
      %711 = vmatprep.subr.bf16.mxu0 0
      %712 = vmatpush1.bf16.msra.mxu0 0
      %713 = vmatprep.subr.bf16.mxu0 0
      %714 = vmatpush1.bf16.msra.mxu0 0
      %715 = vmatprep.subr.bf16.mxu0 0
      %716 = vmatpush1.bf16.msra.mxu0 0
      %717 = vmatprep.subr.bf16.mxu0 0
      %718 = vmatpush1.bf16.msra.mxu0 %v698
      %719 = vmatprep.subr.bf16.mxu0 0
      %720 = vmatpush2.bf16.msra.mxu0 0
      %721 = vmatprep.subr.bf16.mxu0 0
      %722 = vmatpush2.bf16.msra.mxu0 0
      %723 = vmatprep.subr.bf16.mxu0 0
      %724 = vmatpush2.bf16.msra.mxu0 0
      %725 = vmatprep.subr.bf16.mxu0 0
      %726 = vmatpush2.bf16.msra.mxu0 0
      %727 = vmatprep.subr.bf16.mxu0 0
      %728 = vmatpush2.bf16.msra.mxu0 0
      %729 = vmatprep.subr.bf16.mxu0 0
      %730 = vmatpush2.bf16.msra.mxu0 0
      %731 = vmatprep.subr.bf16.mxu0 0
      %732 = vmatpush2.bf16.msra.mxu0 0
      %733 = vmatprep.subr.bf16.mxu0 0
      %734 = vmatpush2.bf16.msra.mxu0 0
      %735 = vmatprep.mubr.bf16.mxu0 0
      %736 = vmatmul.mubr.bf16.gmra.mxu0 %v701
      %v737 = vpop.f32.mrf.mxu0
      %v738 = vadd.f32 0.0, %v737
      %v739 = vpop.f32.mrf.mxu0
      %v740 = vpop.f32.mrf.mxu0
      %v741 = vpop.f32.mrf.mxu0
      %742 = vdwg.mxu0
      %v743 = vadd.f32 %v685, %v738
      %v744 = vld [vmem:[%s229 + $0x8] sm:$0x7]
      %s745 = scalar_lea.vmem %s1, 64
      %v746 = vld [vmem:[%s745] sm:$0xf]
      %v747 = vld [vmem:[%s745 + $0x4] sm:$0xf]
      %v749 = vunpack.c.l.b16 %v744
      %v750 = vpack.c.b16 %v749, %v691
      %v752 = vshrl.u32 %v750, 16
      %v754 = vrot.slane %v752, 2
      %v755 = vshll.u32 %v750, 16
      %v757 = vrot.slane %v755, 3
      %v758 = vor.u32 %v754, %v757
      %v761 = vunpack.c.l.b16 %v746
      %v762 = vunpack.c.l.b16 %v747
      %v763 = vpack.c.b16 %v762, %v761
      %v766 = vsel %vm261, %v758, 0
      %768 = vmatprep.subr.bf16.mxu0 0
      %769 = vmatpush1.bf16.msra.mxu0 0
      %770 = vmatprep.subr.bf16.mxu0 0
      %771 = vmatpush1.bf16.msra.mxu0 0
      %772 = vmatprep.subr.bf16.mxu0 0
      %773 = vmatpush1.bf16.msra.mxu0 0
      %774 = vmatprep.subr.bf16.mxu0 0
      %775 = vmatpush1.bf16.msra.mxu0 0
      %776 = vmatprep.subr.bf16.mxu0 0
      %777 = vmatpush1.bf16.msra.mxu0 0
      %778 = vmatprep.subr.bf16.mxu0 0
      %779 = vmatpush1.bf16.msra.mxu0 0
      %780 = vmatprep.subr.bf16.mxu0 0
      %781 = vmatpush1.bf16.msra.mxu0 0
      %782 = vmatprep.subr.bf16.mxu0 0
      %783 = vmatpush1.bf16.msra.mxu0 %v763
      %784 = vmatprep.subr.bf16.mxu0 0
      %785 = vmatpush2.bf16.msra.mxu0 0
      %786 = vmatprep.subr.bf16.mxu0 0
      %787 = vmatpush2.bf16.msra.mxu0 0
      %788 = vmatprep.subr.bf16.mxu0 0
      %789 = vmatpush2.bf16.msra.mxu0 0
      %790 = vmatprep.subr.bf16.mxu0 0
      %791 = vmatpush2.bf16.msra.mxu0 0
      %792 = vmatprep.subr.bf16.mxu0 0
      %793 = vmatpush2.bf16.msra.mxu0 0
      %794 = vmatprep.subr.bf16.mxu0 0
      %795 = vmatpush2.bf16.msra.mxu0 0
      %796 = vmatprep.subr.bf16.mxu0 0
      %797 = vmatpush2.bf16.msra.mxu0 0
      %798 = vmatprep.subr.bf16.mxu0 0
      %799 = vmatpush2.bf16.msra.mxu0 0
      %800 = vmatprep.mubr.bf16.mxu0 0
      %801 = vmatmul.mubr.bf16.gmra.mxu0 %v766
      %v802 = vpop.f32.mrf.mxu0
      %v803 = vadd.f32 0.0, %v802
      %v804 = vpop.f32.mrf.mxu0
      %v805 = vpop.f32.mrf.mxu0
      %v806 = vpop.f32.mrf.mxu0
      %807 = vdwg.mxu0
      %v808 = vadd.f32 %v743, %v803
      %v809 = vpack.c.bf16 %v808, %v808
      %vm810 = vcmask 125952
      %811 = vst.msk [vmem:[%s233] sm:$0xf] %vm810, %v809
      %v812 = vld [vmem:[%s2] sm:$0xff]
      %814 = vset.pattern.permute.xlu0 0
      %815 = vperm.xlu0 %814, %v812
      %v816 = vpop.permute.xlu0 %815
      %v818 = vmul.f32 %v808, %v816
      %v819 = vsel %vm261, %v818, 0.0
      %v820 = vrot.slane %v819, 4
      %v821 = vadd.f32 %v819, %v820
      %v822 = vrot.slane %v821, 2
      %v823 = vadd.f32 %v821, %v822
      %v824 = vrot.slane %v823, 1
      %v825 = vadd.f32 %v823, %v824
      %vm826 = vcmask 122880
      %827 = vst.msk [vmem:[%s236] sm:$0x1] %vm826, %v825
      %v828 = vmul.f32 %v818, %v818
      %v829 = vsel %vm261, %v828, 0.0
      %v830 = vrot.slane %v829, 4
      %v831 = vadd.f32 %v829, %v830
      %v832 = vrot.slane %v831, 2
      %v833 = vadd.f32 %v831, %v832
      %v834 = vrot.slane %v833, 1
      %v835 = vadd.f32 %v833, %v834
      %836 = vst.msk [vmem:[%s239] sm:$0x1] %vm826, %v835
      %p837 = scmp.lt.s32.totalorder %s17, 1
      %s838 = scalar_select %p837, %s17, 1
      %s839 = smul.addr %s838, 4
      %s840 = scalar_lea.vmem %s3, %s839
      %p841 = scmp.lt.s32.totalorder %s17, 1
      %s842 = scalar_select %p841, %s17, 1
      %s843 = scalar_lea.vmem %s4, %s842
      %p844 = scmp.lt.s32.totalorder %s17, 1
      %s845 = scalar_select %p844, %s17, 1
      %s846 = scalar_lea.vmem %s5, %s845
      // Predicated region
      $region33: #{parallel_net_forward.41} parent=31 // pred_check
        %p847 = pneg %p103
      $region34: #{parallel_net_forward.41} parent=31 // pred_check_branch
        %849 = sbr.rel (%p847) target = $region36
      $region35: #{parallel_net_forward.41} parent=31 // pred_region
        _
      $region36: #{parallel_net_forward.41} parent=31 // pred_fallthru
        _
      // Predicated region
      $region37: #{parallel_net_forward.41} parent=31 // pred_check
        %p850 = pneg %p129
      $region38: #{parallel_net_forward.41} parent=31 // pred_check_branch
        %852 = sbr.rel (%p850) target = $region40
      $region39: #{parallel_net_forward.41} parent=31 // pred_region
        _
      $region40: #{parallel_net_forward.41} parent=31 // pred_fallthru
        _
      // Predicated region
      $region41: #{parallel_net_forward.41} parent=31 // pred_check
        %p853 = pneg %p155
      $region42: #{parallel_net_forward.41} parent=31 // pred_check_branch
        %855 = sbr.rel (%p853) target = $region44
      $region43: #{parallel_net_forward.41} parent=31 // pred_region
        _
      $region44: #{parallel_net_forward.41} parent=31 // pred_fallthru
        _
    $region32: #{parallel_net_forward.41} parent=5 // pred_fallthru
      _
    %p856 = scmp.le.s32.totalorder 2, %s12
    // Predicated region
    $region45: #{parallel_net_forward.41} parent=5 // pred_check
      %p857 = pneg %p856
    $region46: #{parallel_net_forward.41} parent=5 // pred_check_branch
      %859 = sbr.rel (%p857) target = $region48
    $region47: #{parallel_net_forward.41} parent=5 // pred_region
      %s860 = ssub.s32 %s12, 2
      // Predicated region
      $region49: #{parallel_net_forward.41} parent=47 // pred_check
        %p861 = pneg %p109
      $region50: #{parallel_net_forward.41} parent=47 // pred_check_branch
        %863 = sbr.rel (%p861) target = $region52
      $region51: #{parallel_net_forward.41} parent=47 // pred_region
        %p864 = scmp.lt.s32.totalorder %s18, 1
        %s865 = scalar_select %p864, %s18, 1
        %s866 = smul.addr %s865, 4
        %s867 = scalar_lea.vmem %s3, %s866
      $region52: #{parallel_net_forward.41} parent=47 // pred_fallthru
        _
      // Predicated region
      $region53: #{parallel_net_forward.41} parent=47 // pred_check
        %p868 = pneg %p135
      $region54: #{parallel_net_forward.41} parent=47 // pred_check_branch
        %870 = sbr.rel (%p868) target = $region56
      $region55: #{parallel_net_forward.41} parent=47 // pred_region
        %p871 = scmp.lt.s32.totalorder %s18, 1
        %s872 = scalar_select %p871, %s18, 1
        %s873 = scalar_lea.vmem %s4, %s872
      $region56: #{parallel_net_forward.41} parent=47 // pred_fallthru
        _
      // Predicated region
      $region57: #{parallel_net_forward.41} parent=47 // pred_check
        %p874 = pneg %p161
      $region58: #{parallel_net_forward.41} parent=47 // pred_check_branch
        %876 = sbr.rel (%p874) target = $region60
      $region59: #{parallel_net_forward.41} parent=47 // pred_region
        %p877 = scmp.lt.s32.totalorder %s18, 1
        %s878 = scalar_select %p877, %s18, 1
        %s879 = scalar_lea.vmem %s5, %s878
      $region60: #{parallel_net_forward.41} parent=47 // pred_fallthru
        _
    $region48: #{parallel_net_forward.41} parent=5 // pred_fallthru
      _
  $region6: #{parallel_net_forward.41} parent=0 // loop_footer
    %s16 = sadd.s32 1, %s12
  $region7: #{parallel_net_forward.41} parent=0 // loop_footer_branch
    %11 = sbr.rel target = $region3
  $region8: #{parallel_net_forward.41} parent=0 // loop_exit
    _

// kernel: tile.213
$region0: #{tile.213}
  #allocation0 [shape = 's32[1]{0}', space=sflag, size = 0x4, scoped, tag = 'scoped memory for tile.213']
  %s0 = inlined_call_operand.vmem [shape: f32[32], index: 0, kind: input, shape index: {}]
  %s1 = inlined_call_operand.vmem [shape: f32[4,32], index: 1, kind: output, shape index: {}]
  // Predicated region
  $region2: #{tile.213} parent=0 // pred_check
    _
  $region3: #{tile.213} parent=0 // pred_check_branch
    %3 = sbr.rel (0) target = $region5
  $region4: #{tile.213} parent=0 // pred_region
    _
  $region5: #{tile.213} parent=0 // pred_fallthru
    _
  %v4 = vld [vmem:[%s0] ss:$0 sm:$0xff]
  %5 = vst [vmem:[%s1] sm:$0xf] %v4

// kernel: tile.214
$region0: #{tile.214}
  %s0 = inlined_call_operand.vmem [shape: f32[4,32], index: 0, kind: input, shape index: {}]
  %s1 = inlined_call_operand.vmem [shape: f32[1,128], index: 1, kind: output, shape index: {}]
  $region1: #{tile.214} parent=0
    #allocation0 [shape = 'u8[4096]{0}', space=vmem, size = 0x1000, scoped, tag = 'scoped mem for output reshape']
    #allocation1 [shape = 'u8[4096]{0}', space=vmem, size = 0x1000, scoped, tag = 'scoped mem for input reshape']
    %s3 = sshll.u32 1, 4
    %s4 = ssub.s32 %s3, 1
    %v5 = vld [vmem:[%s0] sm:%s4]
    %6 = vst [vmem:[#allocation1] sm:%s4] %v5
    %v7 = vld [vmem:[#allocation1] sm:$0x1]
    %vm8 = vcmask 261120
    %9 = vst.msk [vmem:[#allocation0] sm:$0x1] %vm8, %v7
    %s10 = scalar_lea.vmem [#allocation1], 3
    %v11 = vld [vmem:[%s10] sm:$0x1]
    %12 = vrot.lane.b32.xlu0 %v11, 96
    %v13 = vpop.permute.xlu0 %12
    %vm14 = vcmask 1048320
    %15 = vst.msk [vmem:[#allocation0] sm:$0x1] %vm14, %v13
    %s16 = scalar_lea.vmem [#allocation1], 2
    %v17 = vld [vmem:[%s16] sm:$0x1]
    %18 = vrot.lane.b32.xlu0 %v17, 64
    %v19 = vpop.permute.xlu0 %18
    %vm20 = vcmask 785920
    %21 = vst.msk [vmem:[#allocation0] sm:$0x1] %vm20, %v19
    %s22 = scalar_lea.vmem [#allocation1], 1
    %v23 = vld [vmem:[%s22] sm:$0x1]
    %24 = vrot.lane.b32.xlu0 %v23, 32
    %v25 = vpop.permute.xlu0 %24
    %vm26 = vcmask 523520
    %27 = vst.msk [vmem:[#allocation0] sm:$0x1] %vm26, %v25
    %s29 = sshll.u32 1, 1
    %s30 = ssub.s32 %s29, 1
    %v32 = vld [vmem:[#allocation0] sm:%s30]
    %s33 = sshll.u32 1, 1
    %s34 = ssub.s32 %s33, 1
    %35 = vst [vmem:[%s1] sm:%s34] %v32

// kernel: parallel_net_forward.45
$region0: #{parallel_net_forward.45}
  #allocation0 [shape = 'u32[]', space=smem, size = 0x4, offset = 0x4, fixed_abs, tag = 'smem constant byte address 0x4 - core index']
  #allocation1 [shape = 'u32[144,128]{1,0:T(1,128)}', space=vmem, size = 0x12000, scoped, tag = 'internal scratch']
  %s0 = inlined_call_operand.vmem [shape: bf16[8,144], index: 0, kind: input, shape index: {}]
  %s1 = inlined_call_operand.vmem [shape: bf16[144,32], index: 1, kind: input, shape index: {}]
  %s2 = inlined_call_operand.vmem [shape: bf16[8,32], index: 2, kind: output, shape index: {0}]
  %s3 = inlined_call_operand.vmem [shape: f32[1,1,32], index: 3, kind: output, shape index: {1}]
  %s4 = inlined_call_operand.vmem [shape: f32[1,1,32], index: 4, kind: output, shape index: {2}]
  %5 = xla_tuple %s2, %s3, %s4
  %s6 = sld [smem:[#allocation0]]
  $region34: #{parallel_net_forward.45} parent=0
    _
  %s8 = ssub.s32 1, %s6
  %s9 = scalar_select 0, %s8, %s6
  // Predicated region
  $region2: #{parallel_net_forward.45} parent=0 // pred_check
    _
  $region3: #{parallel_net_forward.45} parent=0 // pred_check_branch
    %11 = sbr.rel (0) target = $region5
  $region4: #{parallel_net_forward.45} parent=0 // pred_region
    _
  $region5: #{parallel_net_forward.45} parent=0 // pred_fallthru
    _
  // Predicated region
  $region6: #{parallel_net_forward.45} parent=0 // pred_check
    _
  $region7: #{parallel_net_forward.45} parent=0 // pred_check_branch
    %13 = sbr.rel (0) target = $region9
  $region8: #{parallel_net_forward.45} parent=0 // pred_region
    _
  $region9: #{parallel_net_forward.45} parent=0 // pred_fallthru
    _
  %v15 = vld [vmem:[%s0] sm:$0xff]
  %v16 = vld [vmem:[%s1] sm:$0xf]
  %v17 = vld [vmem:[%s1 + $0x4] sm:$0xf]
  %v18 = vld [vmem:[%s1 + $0x8] sm:$0xf]
  %v19 = vld [vmem:[%s1 + $0xc] sm:$0xf]
  %v20 = vld [vmem:[%s1 + $0x10] sm:$0xf]
  %v21 = vld [vmem:[%s1 + $0x14] sm:$0xf]
  %v22 = vld [vmem:[%s1 + $0x18] sm:$0xf]
  %v23 = vld [vmem:[%s1 + $0x1c] sm:$0xf]
  %v24 = vld [vmem:[%s1 + $0x20] sm:$0xf]
  %v25 = vld [vmem:[%s1 + $0x24] sm:$0xf]
  %v26 = vld [vmem:[%s1 + $0x28] sm:$0xf]
  %v27 = vld [vmem:[%s1 + $0x2c] sm:$0xf]
  %v28 = vld [vmem:[%s1 + $0x30] sm:$0xf]
  %v29 = vld [vmem:[%s1 + $0x34] sm:$0xf]
  %v30 = vld [vmem:[%s1 + $0x38] sm:$0xf]
  %v31 = vld [vmem:[%s1 + $0x3c] sm:$0xf]
  %v32 = vld [vmem:[%s1 + $0x40] sm:$0xf]
  %v33 = vld [vmem:[%s1 + $0x44] sm:$0xf]
  %v35 = vunpack.c.l.b16 %v15
  %v36 = vunpack.c.h.b16 %v15
  %v37 = vpack.c.b16 %v35, %v35
  %v38 = vpack.c.b16 %v36, %v36
  %v58 = vunpack.c.l.b16 %v16
  %v59 = vunpack.c.l.b16 %v17
  %v60 = vunpack.c.l.b16 %v18
  %v61 = vunpack.c.l.b16 %v19
  %v62 = vunpack.c.l.b16 %v20
  %v63 = vunpack.c.l.b16 %v21
  %v64 = vunpack.c.l.b16 %v22
  %v65 = vunpack.c.l.b16 %v23
  %v66 = vunpack.c.l.b16 %v24
  %v67 = vunpack.c.l.b16 %v25
  %v68 = vunpack.c.l.b16 %v26
  %v69 = vunpack.c.l.b16 %v27
  %v70 = vunpack.c.l.b16 %v28
  %v71 = vunpack.c.l.b16 %v29
  %v72 = vunpack.c.l.b16 %v30
  %v73 = vunpack.c.l.b16 %v31
  %v74 = vunpack.c.l.b16 %v32
  %v75 = vunpack.c.l.b16 %v33
  %v76 = vpack.c.b16 %v59, %v58
  %v77 = vpack.c.b16 %v61, %v60
  %v78 = vpack.c.b16 %v63, %v62
  %v79 = vpack.c.b16 %v65, %v64
  %v80 = vpack.c.b16 %v67, %v66
  %v81 = vpack.c.b16 %v69, %v68
  %v82 = vpack.c.b16 %v71, %v70
  %v83 = vpack.c.b16 %v73, %v72
  %v84 = vpack.c.b16 %v75, %v74
  %vm94 = vcmask 130048
  %v96 = vsel %vm94, %v38, 0
  %98 = vmatprep.subr.bf16.mxu0 0
  %99 = vmatpush1.bf16.msra.mxu0 %v83
  %100 = vmatprep.subr.bf16.mxu0 0
  %101 = vmatpush1.bf16.msra.mxu0 %v82
  %102 = vmatprep.subr.bf16.mxu0 0
  %103 = vmatpush1.bf16.msra.mxu0 %v81
  %104 = vmatprep.subr.bf16.mxu0 0
  %105 = vmatpush1.bf16.msra.mxu0 %v80
  %106 = vmatprep.subr.bf16.mxu0 0
  %107 = vmatpush1.bf16.msra.mxu0 %v79
  %108 = vmatprep.subr.bf16.mxu0 0
  %109 = vmatpush1.bf16.msra.mxu0 %v78
  %110 = vmatprep.subr.bf16.mxu0 0
  %111 = vmatpush1.bf16.msra.mxu0 %v77
  %112 = vmatprep.subr.bf16.mxu0 0
  %113 = vmatpush1.bf16.msra.mxu0 %v76
  %114 = vmatprep.subr.bf16.mxu0 0
  %115 = vmatpush2.bf16.msra.mxu0 0
  %116 = vmatprep.subr.bf16.mxu0 0
  %117 = vmatpush2.bf16.msra.mxu0 0
  %118 = vmatprep.subr.bf16.mxu0 0
  %119 = vmatpush2.bf16.msra.mxu0 0
  %120 = vmatprep.subr.bf16.mxu0 0
  %121 = vmatpush2.bf16.msra.mxu0 0
  %122 = vmatprep.subr.bf16.mxu0 0
  %123 = vmatpush2.bf16.msra.mxu0 0
  %124 = vmatprep.subr.bf16.mxu0 0
  %125 = vmatpush2.bf16.msra.mxu0 0
  %126 = vmatprep.subr.bf16.mxu0 0
  %127 = vmatpush2.bf16.msra.mxu0 0
  %128 = vmatprep.subr.bf16.mxu0 0
  %129 = vmatpush2.bf16.msra.mxu0 %v84
  %130 = vmatprep.mubr.bf16.mxu0 %v96
  %131 = vmatmul.mubr.bf16.gmra.mxu0 %v37
  %v132 = vpop.f32.mrf.mxu0
  %v133 = vadd.f32 0.0, %v132
  %v134 = vpop.f32.mrf.mxu0
  %v135 = vpop.f32.mrf.mxu0
  %v136 = vpop.f32.mrf.mxu0
  %137 = vdwg.mxu0
  %v138 = vpack.c.bf16 %v133, %v133
  %vm139 = vcmask 257024
  %140 = vst.msk [vmem:[%s2] sm:$0xf] %vm139, %v138
  %vm141 = vcmask 261120
  %v142 = vsel %vm141, %v133, 0.0
  %v143 = vrot.slane %v142, 4
  %v144 = vadd.f32 %v142, %v143
  %v145 = vrot.slane %v144, 2
  %v146 = vadd.f32 %v144, %v145
  %v147 = vrot.slane %v146, 1
  %v148 = vadd.f32 %v146, %v147
  %vm149 = vcmask 253952
  %150 = vst.msk [vmem:[%s3] sm:$0x1] %vm149, %v148
  %v151 = vmul.f32 %v133, %v133
  %v152 = vsel %vm141, %v151, 0.0
  %v153 = vrot.slane %v152, 4
  %v154 = vadd.f32 %v152, %v153
  %v155 = vrot.slane %v154, 2
  %v156 = vadd.f32 %v154, %v155
  %v157 = vrot.slane %v156, 1
  %v158 = vadd.f32 %v156, %v157
  %159 = vst.msk [vmem:[%s4] sm:$0x1] %vm149, %v158
  // Predicated region
  $region10: #{parallel_net_forward.45} parent=0 // pred_check
    _
  $region11: #{parallel_net_forward.45} parent=0 // pred_check_branch
    %161 = sbr.rel (0) target = $region13
  $region12: #{parallel_net_forward.45} parent=0 // pred_region
    _
  $region13: #{parallel_net_forward.45} parent=0 // pred_fallthru
    _
  // Predicated region
  $region14: #{parallel_net_forward.45} parent=0 // pred_check
    _
  $region15: #{parallel_net_forward.45} parent=0 // pred_check_branch
    %163 = sbr.rel (0) target = $region17
  $region16: #{parallel_net_forward.45} parent=0 // pred_region
    _
  $region17: #{parallel_net_forward.45} parent=0 // pred_fallthru
    _
  // Predicated region
  $region18: #{parallel_net_forward.45} parent=0 // pred_check
    _
  $region19: #{parallel_net_forward.45} parent=0 // pred_check_branch
    %165 = sbr.rel (0) target = $region21
  $region20: #{parallel_net_forward.45} parent=0 // pred_region
    _
  $region21: #{parallel_net_forward.45} parent=0 // pred_fallthru
    _
  // Predicated region
  $region22: #{parallel_net_forward.45} parent=0 // pred_check
    _
  $region23: #{parallel_net_forward.45} parent=0 // pred_check_branch
    %167 = sbr.rel (0) target = $region25
  $region24: #{parallel_net_forward.45} parent=0 // pred_region
    _
  $region25: #{parallel_net_forward.45} parent=0 // pred_fallthru
    _
  // Predicated region
  $region26: #{parallel_net_forward.45} parent=0 // pred_check
    _
  $region27: #{parallel_net_forward.45} parent=0 // pred_check_branch
    %169 = sbr.rel (0) target = $region29
  $region28: #{parallel_net_forward.45} parent=0 // pred_region
    _
  $region29: #{parallel_net_forward.45} parent=0 // pred_fallthru
    _
  // Predicated region
  $region30: #{parallel_net_forward.45} parent=0 // pred_check
    _
  $region31: #{parallel_net_forward.45} parent=0 // pred_check_branch
    %171 = sbr.rel (0) target = $region33
  $region32: #{parallel_net_forward.45} parent=0 // pred_region
    _
  $region33: #{parallel_net_forward.45} parent=0 // pred_fallthru
    _

// kernel: parallel_net_forward.47
$region0: #{parallel_net_forward.47}
  #allocation0 [shape = 'u32[]', space=smem, size = 0x4, offset = 0x4, fixed_abs, tag = 'smem constant byte address 0x4 - core index']
  #allocation1 [shape = 'u32[144,128]{1,0:T(1,128)}', space=vmem, size = 0x12000, scoped, tag = 'internal scratch']
  %s0 = inlined_call_operand.vmem [shape: bf16[2,15,32], index: 0, kind: input, shape index: {}]
  %s1 = inlined_call_operand.vmem [shape: bf16[9,32,32], index: 1, kind: input, shape index: {}]
  %s2 = inlined_call_operand.vmem [shape: f32[3,1], index: 2, kind: input, shape index: {}]
  %s3 = inlined_call_operand.vmem [shape: bf16[2,3,32], index: 3, kind: output, shape index: {0}]
  %s4 = inlined_call_operand.vmem [shape: f32[2,1,32], index: 4, kind: output, shape index: {1}]
  %s5 = inlined_call_operand.vmem [shape: f32[2,1,32], index: 5, kind: output, shape index: {2}]
  %6 = xla_tuple %s3, %s4, %s5
  %s7 = sld [smem:[#allocation0]]
  $region61: #{parallel_net_forward.47} parent=0
    _
  %s9 = ssub.s32 1, %s7
  %s10 = scalar_select 0, %s9, %s7
  loop: start=0, step=1, limit=4
  $region2: #{parallel_net_forward.47} parent=0 // loop_pre_header
    _
  $region3: #{parallel_net_forward.47} parent=0 // loop_header
    %s12 = sphi 0, %s16
    %p13 = scmp.ge.s32.totalorder %s12, 4
    %s22 = sphi 0, %s24
    %s25 = sphi 0, %s22
    %s26 = sphi 0, %s25
    %s42 = sphi 0, %s26
    %s46 = sphi 0, %s46
    %s48 = sphi 0, %s46
    %s49 = sphi 0, %s48
    %s63 = sphi 0, %s49
    %s67 = sphi 0, %s67
    %s69 = sphi 0, %s67
    %s70 = sphi 0, %s69
    %s84 = sphi 0, %s70
    %s90 = sphi 0, %s92
    %s93 = sphi 0, %s90
    %s94 = sphi 0, %s93
    %s110 = sphi 0, %s94
    %s116 = sphi 0, %s118
    %s119 = sphi 0, %s116
    %s120 = sphi 0, %s119
    %s136 = sphi 0, %s120
    %s142 = sphi 0, %s144
    %s145 = sphi 0, %s142
    %s146 = sphi 0, %s145
    %s162 = sphi 0, %s146
  $region4: #{parallel_net_forward.47} parent=0 // loop_header_branch
    %15 = sbr.rel (%p13) target = $region8
  $region5: #{parallel_net_forward.47} parent=0 // loop_body
    %s17 = ssub.s32 %s12, 1
    %s18 = ssub.s32 %s12, 2
    %s19 = sadd.s32 %s12, 1
    %s20 = ssub.s32 %s12, %s19
    %p21 = scmp.eq.s32.totalorder %s20, 0
    %s23 = sadd.s32 %s22, 1
    %s24 = scalar_select %p21, %s22, %s23
    %p27 = pneg %p21
    %p28 = scmp.eq.s32.totalorder %s12, 1
    %p29 = por %p27, %p28
    %p30 = scmp.ne.s32.totalorder %s22, %s25
    %p31 = scmp.eq.s32.totalorder %s12, 0
    %p32 = por %p30, %p31
    %p33 = scmp.ne.s32.totalorder %s22, %s25
    %p34 = scmp.eq.s32.totalorder %s17, 1
    %p35 = por %p33, %p34
    %p36 = scmp.ne.s32.totalorder %s25, %s26
    %p37 = scmp.eq.s32.totalorder %s17, 0
    %p38 = por %p36, %p37
    %p39 = scmp.ne.s32.totalorder %s25, %s26
    %p40 = scmp.eq.s32.totalorder %s18, 1
    %p41 = por %p39, %p40
    %p43 = scmp.ne.s32.totalorder %s26, %s42
    %p44 = scmp.eq.s32.totalorder %s18, 0
    %p45 = por %p43, %p44
    %s47 = sadd.s32 %s46, 1
    %p50 = scmp.eq.s32.totalorder %s12, 1
    %p51 = scmp.ne.s32.totalorder %s46, %s48
    %p52 = scmp.eq.s32.totalorder %s12, 0
    %p53 = por %p51, %p52
    %p54 = scmp.ne.s32.totalorder %s46, %s48
    %p55 = scmp.eq.s32.totalorder %s17, 1
    %p56 = por %p54, %p55
    %p57 = scmp.ne.s32.totalorder %s48, %s49
    %p58 = scmp.eq.s32.totalorder %s17, 0
    %p59 = por %p57, %p58
    %p60 = scmp.ne.s32.totalorder %s48, %s49
    %p61 = scmp.eq.s32.totalorder %s18, 1
    %p62 = por %p60, %p61
    %p64 = scmp.ne.s32.totalorder %s49, %s63
    %p65 = scmp.eq.s32.totalorder %s18, 0
    %p66 = por %p64, %p65
    %s68 = sadd.s32 %s67, 1
    %p71 = scmp.eq.s32.totalorder %s12, 1
    %p72 = scmp.ne.s32.totalorder %s67, %s69
    %p73 = scmp.eq.s32.totalorder %s12, 0
    %p74 = por %p72, %p73
    %p75 = scmp.ne.s32.totalorder %s67, %s69
    %p76 = scmp.eq.s32.totalorder %s17, 1
    %p77 = por %p75, %p76
    %p78 = scmp.ne.s32.totalorder %s69, %s70
    %p79 = scmp.eq.s32.totalorder %s17, 0
    %p80 = por %p78, %p79
    %p81 = scmp.ne.s32.totalorder %s69, %s70
    %p82 = scmp.eq.s32.totalorder %s18, 1
    %p83 = por %p81, %p82
    %p85 = scmp.ne.s32.totalorder %s70, %s84
    %p86 = scmp.eq.s32.totalorder %s18, 0
    %p87 = por %p85, %p86
    %s88 = ssub.s32 %s12, %s19
    %p89 = scmp.eq.s32.totalorder %s88, 0
    %s91 = sadd.s32 %s90, 1
    %s92 = scalar_select %p89, %s90, %s91
    %p95 = pneg %p89
    %p96 = scmp.eq.s32.totalorder %s12, 1
    %p97 = por %p95, %p96
    %p98 = scmp.ne.s32.totalorder %s90, %s93
    %p99 = scmp.eq.s32.totalorder %s12, 0
    %p100 = por %p98, %p99
    %p101 = scmp.ne.s32.totalorder %s90, %s93
    %p102 = scmp.eq.s32.totalorder %s17, 1
    %p103 = por %p101, %p102
    %p104 = scmp.ne.s32.totalorder %s93, %s94
    %p105 = scmp.eq.s32.totalorder %s17, 0
    %p106 = por %p104, %p105
    %p107 = scmp.ne.s32.totalorder %s93, %s94
    %p108 = scmp.eq.s32.totalorder %s18, 1
    %p109 = por %p107, %p108
    %p111 = scmp.ne.s32.totalorder %s94, %s110
    %p112 = scmp.eq.s32.totalorder %s18, 0
    %p113 = por %p111, %p112
    %s114 = ssub.s32 %s12, %s19
    %p115 = scmp.eq.s32.totalorder %s114, 0
    %s117 = sadd.s32 %s116, 1
    %s118 = scalar_select %p115, %s116, %s117
    %p121 = pneg %p115
    %p122 = scmp.eq.s32.totalorder %s12, 1
    %p123 = por %p121, %p122
    %p124 = scmp.ne.s32.totalorder %s116, %s119
    %p125 = scmp.eq.s32.totalorder %s12, 0
    %p126 = por %p124, %p125
    %p127 = scmp.ne.s32.totalorder %s116, %s119
    %p128 = scmp.eq.s32.totalorder %s17, 1
    %p129 = por %p127, %p128
    %p130 = scmp.ne.s32.totalorder %s119, %s120
    %p131 = scmp.eq.s32.totalorder %s17, 0
    %p132 = por %p130, %p131
    %p133 = scmp.ne.s32.totalorder %s119, %s120
    %p134 = scmp.eq.s32.totalorder %s18, 1
    %p135 = por %p133, %p134
    %p137 = scmp.ne.s32.totalorder %s120, %s136
    %p138 = scmp.eq.s32.totalorder %s18, 0
    %p139 = por %p137, %p138
    %s140 = ssub.s32 %s12, %s19
    %p141 = scmp.eq.s32.totalorder %s140, 0
    %s143 = sadd.s32 %s142, 1
    %s144 = scalar_select %p141, %s142, %s143
    %p147 = pneg %p141
    %p148 = scmp.eq.s32.totalorder %s12, 1
    %p149 = por %p147, %p148
    %p150 = scmp.ne.s32.totalorder %s142, %s145
    %p151 = scmp.eq.s32.totalorder %s12, 0
    %p152 = por %p150, %p151
    %p153 = scmp.ne.s32.totalorder %s142, %s145
    %p154 = scmp.eq.s32.totalorder %s17, 1
    %p155 = por %p153, %p154
    %p156 = scmp.ne.s32.totalorder %s145, %s146
    %p157 = scmp.eq.s32.totalorder %s17, 0
    %p158 = por %p156, %p157
    %p159 = scmp.ne.s32.totalorder %s145, %s146
    %p160 = scmp.eq.s32.totalorder %s18, 1
    %p161 = por %p159, %p160
    %p163 = scmp.ne.s32.totalorder %s146, %s162
    %p164 = scmp.eq.s32.totalorder %s18, 0
    %p165 = por %p163, %p164
    %p166 = scmp.le.s32.totalorder 1, %s12
    %p167 = scmp.lt.s32.totalorder %s12, 3
    %p168 = pnand %p166, %p167
    %p169 = pneg %p168
    // Predicated region
    $region9: #{parallel_net_forward.47} parent=5 // pred_check
      _
    $region10: #{parallel_net_forward.47} parent=5 // pred_check_branch
      %171 = sbr.rel (%p168) target = $region12
    $region11: #{parallel_net_forward.47} parent=5 // pred_region
      %s172 = ssub.s32 %s12, 1
      // Predicated region
      $region13: #{parallel_net_forward.47} parent=11 // pred_check
        %p173 = pneg %p59
      $region14: #{parallel_net_forward.47} parent=11 // pred_check_branch
        %175 = sbr.rel (%p173) target = $region16
      $region15: #{parallel_net_forward.47} parent=11 // pred_region
        _
      $region16: #{parallel_net_forward.47} parent=11 // pred_fallthru
        _
      // Predicated region
      $region17: #{parallel_net_forward.47} parent=11 // pred_check
        %p176 = pneg %p80
      $region18: #{parallel_net_forward.47} parent=11 // pred_check_branch
        %178 = sbr.rel (%p176) target = $region20
      $region19: #{parallel_net_forward.47} parent=11 // pred_region
        _
      $region20: #{parallel_net_forward.47} parent=11 // pred_fallthru
        _
    $region12: #{parallel_net_forward.47} parent=5 // pred_fallthru
      _
    %p179 = scmp.lt.s32.totalorder %s12, 2
    // Predicated region
    $region21: #{parallel_net_forward.47} parent=5 // pred_check
      %p180 = pneg %p179
    $region22: #{parallel_net_forward.47} parent=5 // pred_check_branch
      %182 = sbr.rel (%p180) target = $region24
    $region23: #{parallel_net_forward.47} parent=5 // pred_region
      // Predicated region
      $region25: #{parallel_net_forward.47} parent=23 // pred_check
        %p183 = pneg %p32
      $region26: #{parallel_net_forward.47} parent=23 // pred_check_branch
        %185 = sbr.rel (%p183) target = $region28
      $region27: #{parallel_net_forward.47} parent=23 // pred_region
        %p186 = scmp.lt.s32.totalorder %s12, 1
        %s187 = scalar_select %p186, %s12, 1
        %s188 = smul.addr %s187, 2
        %s189 = smul.addr %s188, 4
        %s190 = scalar_lea.vmem %s0, %s189
      $region28: #{parallel_net_forward.47} parent=23 // pred_fallthru
        _
    $region24: #{parallel_net_forward.47} parent=5 // pred_fallthru
      _
    %p191 = scmp.le.s32.totalorder 1, %s12
    %p192 = scmp.lt.s32.totalorder %s12, 3
    %p193 = pnand %p191, %p192
    %p194 = pneg %p193
    // Predicated region
    $region29: #{parallel_net_forward.47} parent=5 // pred_check
      _
    $region30: #{parallel_net_forward.47} parent=5 // pred_check_branch
      %196 = sbr.rel (%p193) target = $region32
    $region31: #{parallel_net_forward.47} parent=5 // pred_region
      %s197 = ssub.s32 %s12, 1
      %p198 = scmp.lt.s32.totalorder %s17, 1
      %s199 = scalar_select %p198, %s17, 1
      %s200 = smul.addr %s199, 2
      %s201 = smul.addr %s200, 4
      %s202 = scalar_lea.vmem %s0, %s201
      %p203 = pneg %p38
      %p204 = pneg %p35
      %p205 = pneg %p59
      %p206 = pneg %p56
      %p207 = pneg %p80
      %p208 = pneg %p77
      %p209 = pneg %p106
      %p210 = pneg %p103
      %p211 = scmp.lt.s32.totalorder %s17, 1
      %s212 = scalar_select %p211, %s17, 1
      %s213 = smul.addr %s212, 2
      %s214 = scalar_lea.vmem %s3, %s213
      %p215 = pneg %p132
      %p216 = pneg %p129
      %p217 = scmp.lt.s32.totalorder %s17, 1
      %s218 = scalar_select %p217, %s17, 1
      %s219 = scalar_lea.vmem %s4, %s218
      %p220 = pneg %p158
      %p221 = pneg %p155
      %p222 = scmp.lt.s32.totalorder %s17, 1
      %s223 = scalar_select %p222, %s17, 1
      %s224 = scalar_lea.vmem %s5, %s223
      %p225 = scmp.lt.s32.totalorder %s17, 1
      %s226 = scalar_select %p225, %s17, 1
      %s227 = smul.addr %s226, 2
      %s228 = smul.addr %s227, 4
      %s229 = scalar_lea.vmem %s0, %s228
      %p230 = scmp.lt.s32.totalorder %s17, 1
      %s231 = scalar_select %p230, %s17, 1
      %s232 = smul.addr %s231, 2
      %s233 = scalar_lea.vmem %s3, %s232
      %p234 = scmp.lt.s32.totalorder %s17, 1
      %s235 = scalar_select %p234, %s17, 1
      %s236 = scalar_lea.vmem %s4, %s235
      %p237 = scmp.lt.s32.totalorder %s17, 1
      %s238 = scalar_select %p237, %s17, 1
      %s239 = scalar_lea.vmem %s5, %s238
      %v241 = vld [vmem:[%s229] sm:$0x6]
      %v242 = vld [vmem:[%s1] sm:$0xf]
      %v243 = vld [vmem:[%s1 + $0x4] sm:$0xf]
      %v244 = vld [vmem:[%s1 + $0x8] sm:$0xf]
      %v245 = vld [vmem:[%s1 + $0xc] sm:$0xf]
      %s246 = scalar_lea.vmem %s1, 16
      %v247 = vld [vmem:[%s246] sm:$0xf]
      %v248 = vld [vmem:[%s246 + $0x4] sm:$0xf]
      %v249 = vld [vmem:[%s246 + $0x8] sm:$0xf]
      %v250 = vld [vmem:[%s246 + $0xc] sm:$0xf]
      %v252 = vunpack.c.l.b16 %v241
      %v253 = vpack.c.b16 %v252, %v252
      %v255 = vshrl.u32 %v253, 16
      %v257 = vrot.slane %v255, 1
      %v258 = vshll.u32 %v253, 16
      %v260 = vrot.slane %v258, 2
      %v261 = vor.u32 %v257, %v260
      %v266 = vunpack.c.l.b16 %v247
      %v267 = vunpack.c.l.b16 %v248
      %v268 = vunpack.c.l.b16 %v249
      %v269 = vunpack.c.l.b16 %v250
      %v270 = vpack.c.b16 %v267, %v266
      %v271 = vpack.c.b16 %v269, %v268
      %vm274 = vcmask 261120
      %v276 = vsel %vm274, %v261, 0
      %278 = vmatprep.subr.bf16.mxu0 0
      %279 = vmatpush1.bf16.msra.mxu0 0
      %280 = vmatprep.subr.bf16.mxu0 0
      %281 = vmatpush1.bf16.msra.mxu0 0
      %282 = vmatprep.subr.bf16.mxu0 0
      %283 = vmatpush1.bf16.msra.mxu0 0
      %284 = vmatprep.subr.bf16.mxu0 0
      %285 = vmatpush1.bf16.msra.mxu0 0
      %286 = vmatprep.subr.bf16.mxu0 0
      %287 = vmatpush1.bf16.msra.mxu0 0
      %288 = vmatprep.subr.bf16.mxu0 0
      %289 = vmatpush1.bf16.msra.mxu0 0
      %290 = vmatprep.subr.bf16.mxu0 0
      %291 = vmatpush1.bf16.msra.mxu0 %v271
      %292 = vmatprep.subr.bf16.mxu0 0
      %293 = vmatpush1.bf16.msra.mxu0 %v270
      %294 = vmatprep.subr.bf16.mxu0 0
      %295 = vmatpush2.bf16.msra.mxu0 0
      %296 = vmatprep.subr.bf16.mxu0 0
      %297 = vmatpush2.bf16.msra.mxu0 0
      %298 = vmatprep.subr.bf16.mxu0 0
      %299 = vmatpush2.bf16.msra.mxu0 0
      %300 = vmatprep.subr.bf16.mxu0 0
      %301 = vmatpush2.bf16.msra.mxu0 0
      %302 = vmatprep.subr.bf16.mxu0 0
      %303 = vmatpush2.bf16.msra.mxu0 0
      %304 = vmatprep.subr.bf16.mxu0 0
      %305 = vmatpush2.bf16.msra.mxu0 0
      %306 = vmatprep.subr.bf16.mxu0 0
      %307 = vmatpush2.bf16.msra.mxu0 0
      %308 = vmatprep.subr.bf16.mxu0 0
      %309 = vmatpush2.bf16.msra.mxu0 0
      %310 = vmatprep.mubr.bf16.mxu0 0
      %311 = vmatmul.mubr.bf16.gmra.mxu0 %v276
      %v312 = vpop.f32.mrf.mxu0
      %v313 = vadd.f32 0.0, %v312
      %v314 = vpop.f32.mrf.mxu0
      %v315 = vpop.f32.mrf.mxu0
      %v316 = vpop.f32.mrf.mxu0
      %317 = vdwg.mxu0
      %v318 = vrot.slane %v253, 1
      %v323 = vunpack.c.l.b16 %v242
      %v324 = vunpack.c.l.b16 %v243
      %v325 = vunpack.c.l.b16 %v244
      %v326 = vunpack.c.l.b16 %v245
      %v327 = vpack.c.b16 %v324, %v323
      %v328 = vpack.c.b16 %v326, %v325
      %v332 = vsel %vm274, %v318, 0
      %334 = vmatprep.subr.bf16.mxu0 0
      %335 = vmatpush1.bf16.msra.mxu0 0
      %336 = vmatprep.subr.bf16.mxu0 0
      %337 = vmatpush1.bf16.msra.mxu0 0
      %338 = vmatprep.subr.bf16.mxu0 0
      %339 = vmatpush1.bf16.msra.mxu0 0
      %340 = vmatprep.subr.bf16.mxu0 0
      %341 = vmatpush1.bf16.msra.mxu0 0
      %342 = vmatprep.subr.bf16.mxu0 0
      %343 = vmatpush1.bf16.msra.mxu0 0
      %344 = vmatprep.subr.bf16.mxu0 0
      %345 = vmatpush1.bf16.msra.mxu0 0
      %346 = vmatprep.subr.bf16.mxu0 0
      %347 = vmatpush1.bf16.msra.mxu0 %v328
      %348 = vmatprep.subr.bf16.mxu0 0
      %349 = vmatpush1.bf16.msra.mxu0 %v327
      %350 = vmatprep.subr.bf16.mxu0 0
      %351 = vmatpush2.bf16.msra.mxu0 0
      %352 = vmatprep.subr.bf16.mxu0 0
      %353 = vmatpush2.bf16.msra.mxu0 0
      %354 = vmatprep.subr.bf16.mxu0 0
      %355 = vmatpush2.bf16.msra.mxu0 0
      %356 = vmatprep.subr.bf16.mxu0 0
      %357 = vmatpush2.bf16.msra.mxu0 0
      %358 = vmatprep.subr.bf16.mxu0 0
      %359 = vmatpush2.bf16.msra.mxu0 0
      %360 = vmatprep.subr.bf16.mxu0 0
      %361 = vmatpush2.bf16.msra.mxu0 0
      %362 = vmatprep.subr.bf16.mxu0 0
      %363 = vmatpush2.bf16.msra.mxu0 0
      %364 = vmatprep.subr.bf16.mxu0 0
      %365 = vmatpush2.bf16.msra.mxu0 0
      %366 = vmatprep.mubr.bf16.mxu0 0
      %367 = vmatmul.mubr.bf16.gmra.mxu0 %v332
      %v368 = vpop.f32.mrf.mxu0
      %v369 = vadd.f32 %v313, %v368
      %v370 = vpop.f32.mrf.mxu0
      %v371 = vpop.f32.mrf.mxu0
      %v372 = vpop.f32.mrf.mxu0
      %373 = vdwg.mxu0
      %v374 = vld [vmem:[%s229] sm:$0xc]
      %s375 = scalar_lea.vmem %s1, 32
      %v376 = vld [vmem:[%s375] sm:$0xf]
      %v377 = vld [vmem:[%s375 + $0x4] sm:$0xf]
      %v378 = vld [vmem:[%s375 + $0x8] sm:$0xf]
      %v379 = vld [vmem:[%s375 + $0xc] sm:$0xf]
      %v381 = vunpack.c.l.b16 %v374
      %v382 = vpack.c.b16 %v381, %v381
      %v383 = vrot.slane %v382, 2
      %v388 = vunpack.c.l.b16 %v376
      %v389 = vunpack.c.l.b16 %v377
      %v390 = vunpack.c.l.b16 %v378
      %v391 = vunpack.c.l.b16 %v379
      %v392 = vpack.c.b16 %v389, %v388
      %v393 = vpack.c.b16 %v391, %v390
      %v397 = vsel %vm274, %v383, 0
      %399 = vmatprep.subr.bf16.mxu0 0
      %400 = vmatpush1.bf16.msra.mxu0 0
      %401 = vmatprep.subr.bf16.mxu0 0
      %402 = vmatpush1.bf16.msra.mxu0 0
      %403 = vmatprep.subr.bf16.mxu0 0
      %404 = vmatpush1.bf16.msra.mxu0 0
      %405 = vmatprep.subr.bf16.mxu0 0
      %406 = vmatpush1.bf16.msra.mxu0 0
      %407 = vmatprep.subr.bf16.mxu0 0
      %408 = vmatpush1.bf16.msra.mxu0 0
      %409 = vmatprep.subr.bf16.mxu0 0
      %410 = vmatpush1.bf16.msra.mxu0 0
      %411 = vmatprep.subr.bf16.mxu0 0
      %412 = vmatpush1.bf16.msra.mxu0 %v393
      %413 = vmatprep.subr.bf16.mxu0 0
      %414 = vmatpush1.bf16.msra.mxu0 %v392
      %415 = vmatprep.subr.bf16.mxu0 0
      %416 = vmatpush2.bf16.msra.mxu0 0
      %417 = vmatprep.subr.bf16.mxu0 0
      %418 = vmatpush2.bf16.msra.mxu0 0
      %419 = vmatprep.subr.bf16.mxu0 0
      %420 = vmatpush2.bf16.msra.mxu0 0
      %421 = vmatprep.subr.bf16.mxu0 0
      %422 = vmatpush2.bf16.msra.mxu0 0
      %423 = vmatprep.subr.bf16.mxu0 0
      %424 = vmatpush2.bf16.msra.mxu0 0
      %425 = vmatprep.subr.bf16.mxu0 0
      %426 = vmatpush2.bf16.msra.mxu0 0
      %427 = vmatprep.subr.bf16.mxu0 0
      %428 = vmatpush2.bf16.msra.mxu0 0
      %429 = vmatprep.subr.bf16.mxu0 0
      %430 = vmatpush2.bf16.msra.mxu0 0
      %431 = vmatprep.mubr.bf16.mxu0 0
      %432 = vmatmul.mubr.bf16.gmra.mxu0 %v397
      %v433 = vpop.f32.mrf.mxu0
      %v434 = vadd.f32 0.0, %v433
      %v435 = vpop.f32.mrf.mxu0
      %v436 = vpop.f32.mrf.mxu0
      %v437 = vpop.f32.mrf.mxu0
      %438 = vdwg.mxu0
      %v439 = vadd.f32 %v369, %v434
      %s440 = scalar_lea.vmem %s1, 48
      %v441 = vld [vmem:[%s440] sm:$0xf]
      %v442 = vld [vmem:[%s440 + $0x4] sm:$0xf]
      %v443 = vld [vmem:[%s440 + $0x8] sm:$0xf]
      %v444 = vld [vmem:[%s440 + $0xc] sm:$0xf]
      %v446 = vshrl.u32 %v382, 16
      %v448 = vrot.slane %v446, 2
      %v449 = vshll.u32 %v382, 16
      %v451 = vrot.slane %v449, 3
      %v452 = vor.u32 %v448, %v451
      %v457 = vunpack.c.l.b16 %v441
      %v458 = vunpack.c.l.b16 %v442
      %v459 = vunpack.c.l.b16 %v443
      %v460 = vunpack.c.l.b16 %v444
      %v461 = vpack.c.b16 %v458, %v457
      %v462 = vpack.c.b16 %v460, %v459
      %v466 = vsel %vm274, %v452, 0
      %468 = vmatprep.subr.bf16.mxu0 0
      %469 = vmatpush1.bf16.msra.mxu0 0
      %470 = vmatprep.subr.bf16.mxu0 0
      %471 = vmatpush1.bf16.msra.mxu0 0
      %472 = vmatprep.subr.bf16.mxu0 0
      %473 = vmatpush1.bf16.msra.mxu0 0
      %474 = vmatprep.subr.bf16.mxu0 0
      %475 = vmatpush1.bf16.msra.mxu0 0
      %476 = vmatprep.subr.bf16.mxu0 0
      %477 = vmatpush1.bf16.msra.mxu0 0
      %478 = vmatprep.subr.bf16.mxu0 0
      %479 = vmatpush1.bf16.msra.mxu0 0
      %480 = vmatprep.subr.bf16.mxu0 0
      %481 = vmatpush1.bf16.msra.mxu0 %v462
      %482 = vmatprep.subr.bf16.mxu0 0
      %483 = vmatpush1.bf16.msra.mxu0 %v461
      %484 = vmatprep.subr.bf16.mxu0 0
      %485 = vmatpush2.bf16.msra.mxu0 0
      %486 = vmatprep.subr.bf16.mxu0 0
      %487 = vmatpush2.bf16.msra.mxu0 0
      %488 = vmatprep.subr.bf16.mxu0 0
      %489 = vmatpush2.bf16.msra.mxu0 0
      %490 = vmatprep.subr.bf16.mxu0 0
      %491 = vmatpush2.bf16.msra.mxu0 0
      %492 = vmatprep.subr.bf16.mxu0 0
      %493 = vmatpush2.bf16.msra.mxu0 0
      %494 = vmatprep.subr.bf16.mxu0 0
      %495 = vmatpush2.bf16.msra.mxu0 0
      %496 = vmatprep.subr.bf16.mxu0 0
      %497 = vmatpush2.bf16.msra.mxu0 0
      %498 = vmatprep.subr.bf16.mxu0 0
      %499 = vmatpush2.bf16.msra.mxu0 0
      %500 = vmatprep.mubr.bf16.mxu0 0
      %501 = vmatmul.mubr.bf16.gmra.mxu0 %v466
      %v502 = vpop.f32.mrf.mxu0
      %v503 = vadd.f32 0.0, %v502
      %v504 = vpop.f32.mrf.mxu0
      %v505 = vpop.f32.mrf.mxu0
      %v506 = vpop.f32.mrf.mxu0
      %507 = vdwg.mxu0
      %v508 = vadd.f32 %v439, %v503
      %v509 = vld [vmem:[%s229] sm:$0x8]
      %v510 = vld [vmem:[%s229 + $0x4] sm:$0x1]
      %s511 = scalar_lea.vmem %s1, 64
      %v512 = vld [vmem:[%s511] sm:$0xf]
      %v513 = vld [vmem:[%s511 + $0x4] sm:$0xf]
      %v514 = vld [vmem:[%s511 + $0x8] sm:$0xf]
      %v515 = vld [vmem:[%s511 + $0xc] sm:$0xf]
      %v518 = vunpack.c.l.b16 %v509
      %v519 = vunpack.c.l.b16 %v510
      %v520 = vpack.c.b16 %v519, %v518
      %v521 = vrot.slane %v520, 3
      %v526 = vunpack.c.l.b16 %v512
      %v527 = vunpack.c.l.b16 %v513
      %v528 = vunpack.c.l.b16 %v514
      %v529 = vunpack.c.l.b16 %v515
      %v530 = vpack.c.b16 %v527, %v526
      %v531 = vpack.c.b16 %v529, %v528
      %v535 = vsel %vm274, %v521, 0
      %537 = vmatprep.subr.bf16.mxu0 0
      %538 = vmatpush1.bf16.msra.mxu0 0
      %539 = vmatprep.subr.bf16.mxu0 0
      %540 = vmatpush1.bf16.msra.mxu0 0
      %541 = vmatprep.subr.bf16.mxu0 0
      %542 = vmatpush1.bf16.msra.mxu0 0
      %543 = vmatprep.subr.bf16.mxu0 0
      %544 = vmatpush1.bf16.msra.mxu0 0
      %545 = vmatprep.subr.bf16.mxu0 0
      %546 = vmatpush1.bf16.msra.mxu0 0
      %547 = vmatprep.subr.bf16.mxu0 0
      %548 = vmatpush1.bf16.msra.mxu0 0
      %549 = vmatprep.subr.bf16.mxu0 0
      %550 = vmatpush1.bf16.msra.mxu0 %v531
      %551 = vmatprep.subr.bf16.mxu0 0
      %552 = vmatpush1.bf16.msra.mxu0 %v530
      %553 = vmatprep.subr.bf16.mxu0 0
      %554 = vmatpush2.bf16.msra.mxu0 0
      %555 = vmatprep.subr.bf16.mxu0 0
      %556 = vmatpush2.bf16.msra.mxu0 0
      %557 = vmatprep.subr.bf16.mxu0 0
      %558 = vmatpush2.bf16.msra.mxu0 0
      %559 = vmatprep.subr.bf16.mxu0 0
      %560 = vmatpush2.bf16.msra.mxu0 0
      %561 = vmatprep.subr.bf16.mxu0 0
      %562 = vmatpush2.bf16.msra.mxu0 0
      %563 = vmatprep.subr.bf16.mxu0 0
      %564 = vmatpush2.bf16.msra.mxu0 0
      %565 = vmatprep.subr.bf16.mxu0 0
      %566 = vmatpush2.bf16.msra.mxu0 0
      %567 = vmatprep.subr.bf16.mxu0 0
      %568 = vmatpush2.bf16.msra.mxu0 0
      %569 = vmatprep.mubr.bf16.mxu0 0
      %570 = vmatmul.mubr.bf16.gmra.mxu0 %v535
      %v571 = vpop.f32.mrf.mxu0
      %v572 = vadd.f32 0.0, %v571
      %v573 = vpop.f32.mrf.mxu0
      %v574 = vpop.f32.mrf.mxu0
      %v575 = vpop.f32.mrf.mxu0
      %576 = vdwg.mxu0
      %v577 = vadd.f32 %v508, %v572
      %s578 = scalar_lea.vmem %s1, 80
      %v579 = vld [vmem:[%s578] sm:$0xf]
      %v580 = vld [vmem:[%s578 + $0x4] sm:$0xf]
      %v581 = vld [vmem:[%s578 + $0x8] sm:$0xf]
      %v582 = vld [vmem:[%s578 + $0xc] sm:$0xf]
      %v584 = vshrl.u32 %v520, 16
      %v586 = vrot.slane %v584, 3
      %v587 = vshll.u32 %v520, 16
      %v589 = vrot.slane %v587, 4
      %v590 = vor.u32 %v586, %v589
      %v595 = vunpack.c.l.b16 %v579
      %v596 = vunpack.c.l.b16 %v580
      %v597 = vunpack.c.l.b16 %v581
      %v598 = vunpack.c.l.b16 %v582
      %v599 = vpack.c.b16 %v596, %v595
      %v600 = vpack.c.b16 %v598, %v597
      %v604 = vsel %vm274, %v590, 0
      %606 = vmatprep.subr.bf16.mxu0 0
      %607 = vmatpush1.bf16.msra.mxu0 0
      %608 = vmatprep.subr.bf16.mxu0 0
      %609 = vmatpush1.bf16.msra.mxu0 0
      %610 = vmatprep.subr.bf16.mxu0 0
      %611 = vmatpush1.bf16.msra.mxu0 0
      %612 = vmatprep.subr.bf16.mxu0 0
      %613 = vmatpush1.bf16.msra.mxu0 0
      %614 = vmatprep.subr.bf16.mxu0 0
      %615 = vmatpush1.bf16.msra.mxu0 0
      %616 = vmatprep.subr.bf16.mxu0 0
      %617 = vmatpush1.bf16.msra.mxu0 0
      %618 = vmatprep.subr.bf16.mxu0 0
      %619 = vmatpush1.bf16.msra.mxu0 %v600
      %620 = vmatprep.subr.bf16.mxu0 0
      %621 = vmatpush1.bf16.msra.mxu0 %v599
      %622 = vmatprep.subr.bf16.mxu0 0
      %623 = vmatpush2.bf16.msra.mxu0 0
      %624 = vmatprep.subr.bf16.mxu0 0
      %625 = vmatpush2.bf16.msra.mxu0 0
      %626 = vmatprep.subr.bf16.mxu0 0
      %627 = vmatpush2.bf16.msra.mxu0 0
      %628 = vmatprep.subr.bf16.mxu0 0
      %629 = vmatpush2.bf16.msra.mxu0 0
      %630 = vmatprep.subr.bf16.mxu0 0
      %631 = vmatpush2.bf16.msra.mxu0 0
      %632 = vmatprep.subr.bf16.mxu0 0
      %633 = vmatpush2.bf16.msra.mxu0 0
      %634 = vmatprep.subr.bf16.mxu0 0
      %635 = vmatpush2.bf16.msra.mxu0 0
      %636 = vmatprep.subr.bf16.mxu0 0
      %637 = vmatpush2.bf16.msra.mxu0 0
      %638 = vmatprep.mubr.bf16.mxu0 0
      %639 = vmatmul.mubr.bf16.gmra.mxu0 %v604
      %v640 = vpop.f32.mrf.mxu0
      %v641 = vadd.f32 0.0, %v640
      %v642 = vpop.f32.mrf.mxu0
      %v643 = vpop.f32.mrf.mxu0
      %v644 = vpop.f32.mrf.mxu0
      %645 = vdwg.mxu0
      %v646 = vadd.f32 %v577, %v641
      %v647 = vld [vmem:[%s229 + $0x4] sm:$0x3]
      %s648 = scalar_lea.vmem %s1, 96
      %v649 = vld [vmem:[%s648] sm:$0xf]
      %v650 = vld [vmem:[%s648 + $0x4] sm:$0xf]
      %v651 = vld [vmem:[%s648 + $0x8] sm:$0xf]
      %v652 = vld [vmem:[%s648 + $0xc] sm:$0xf]
      %v657 = vunpack.c.l.b16 %v649
      %v658 = vunpack.c.l.b16 %v650
      %v659 = vunpack.c.l.b16 %v651
      %v660 = vunpack.c.l.b16 %v652
      %v661 = vpack.c.b16 %v658, %v657
      %v662 = vpack.c.b16 %v660, %v659
      %v666 = vsel %vm274, %v647, 0
      %668 = vmatprep.subr.bf16.mxu0 0
      %669 = vmatpush1.bf16.msra.mxu0 0
      %670 = vmatprep.subr.bf16.mxu0 0
      %671 = vmatpush1.bf16.msra.mxu0 0
      %672 = vmatprep.subr.bf16.mxu0 0
      %673 = vmatpush1.bf16.msra.mxu0 0
      %674 = vmatprep.subr.bf16.mxu0 0
      %675 = vmatpush1.bf16.msra.mxu0 0
      %676 = vmatprep.subr.bf16.mxu0 0
      %677 = vmatpush1.bf16.msra.mxu0 0
      %678 = vmatprep.subr.bf16.mxu0 0
      %679 = vmatpush1.bf16.msra.mxu0 0
      %680 = vmatprep.subr.bf16.mxu0 0
      %681 = vmatpush1.bf16.msra.mxu0 %v662
      %682 = vmatprep.subr.bf16.mxu0 0
      %683 = vmatpush1.bf16.msra.mxu0 %v661
      %684 = vmatprep.subr.bf16.mxu0 0
      %685 = vmatpush2.bf16.msra.mxu0 0
      %686 = vmatprep.subr.bf16.mxu0 0
      %687 = vmatpush2.bf16.msra.mxu0 0
      %688 = vmatprep.subr.bf16.mxu0 0
      %689 = vmatpush2.bf16.msra.mxu0 0
      %690 = vmatprep.subr.bf16.mxu0 0
      %691 = vmatpush2.bf16.msra.mxu0 0
      %692 = vmatprep.subr.bf16.mxu0 0
      %693 = vmatpush2.bf16.msra.mxu0 0
      %694 = vmatprep.subr.bf16.mxu0 0
      %695 = vmatpush2.bf16.msra.mxu0 0
      %696 = vmatprep.subr.bf16.mxu0 0
      %697 = vmatpush2.bf16.msra.mxu0 0
      %698 = vmatprep.subr.bf16.mxu0 0
      %699 = vmatpush2.bf16.msra.mxu0 0
      %700 = vmatprep.mubr.bf16.mxu0 0
      %701 = vmatmul.mubr.bf16.gmra.mxu0 %v666
      %v702 = vpop.f32.mrf.mxu0
      %v703 = vadd.f32 0.0, %v702
      %v704 = vpop.f32.mrf.mxu0
      %v705 = vpop.f32.mrf.mxu0
      %v706 = vpop.f32.mrf.mxu0
      %707 = vdwg.mxu0
      %v708 = vadd.f32 %v646, %v703
      %s709 = scalar_lea.vmem %s1, 112
      %v710 = vld [vmem:[%s709] sm:$0xf]
      %v711 = vld [vmem:[%s709 + $0x4] sm:$0xf]
      %v712 = vld [vmem:[%s709 + $0x8] sm:$0xf]
      %v713 = vld [vmem:[%s709 + $0xc] sm:$0xf]
      %v715 = vunpack.c.l.b16 %v647
      %v716 = vpack.c.b16 %v715, %v715
      %v718 = vshrl.u32 %v716, 16
      %v720 = vshll.u32 %v716, 16
      %v722 = vrot.slane %v720, 1
      %v723 = vor.u32 %v718, %v722
      %v728 = vunpack.c.l.b16 %v710
      %v729 = vunpack.c.l.b16 %v711
      %v730 = vunpack.c.l.b16 %v712
      %v731 = vunpack.c.l.b16 %v713
      %v732 = vpack.c.b16 %v729, %v728
      %v733 = vpack.c.b16 %v731, %v730
      %v737 = vsel %vm274, %v723, 0
      %739 = vmatprep.subr.bf16.mxu0 0
      %740 = vmatpush1.bf16.msra.mxu0 0
      %741 = vmatprep.subr.bf16.mxu0 0
      %742 = vmatpush1.bf16.msra.mxu0 0
      %743 = vmatprep.subr.bf16.mxu0 0
      %744 = vmatpush1.bf16.msra.mxu0 0
      %745 = vmatprep.subr.bf16.mxu0 0
      %746 = vmatpush1.bf16.msra.mxu0 0
      %747 = vmatprep.subr.bf16.mxu0 0
      %748 = vmatpush1.bf16.msra.mxu0 0
      %749 = vmatprep.subr.bf16.mxu0 0
      %750 = vmatpush1.bf16.msra.mxu0 0
      %751 = vmatprep.subr.bf16.mxu0 0
      %752 = vmatpush1.bf16.msra.mxu0 %v733
      %753 = vmatprep.subr.bf16.mxu0 0
      %754 = vmatpush1.bf16.msra.mxu0 %v732
      %755 = vmatprep.subr.bf16.mxu0 0
      %756 = vmatpush2.bf16.msra.mxu0 0
      %757 = vmatprep.subr.bf16.mxu0 0
      %758 = vmatpush2.bf16.msra.mxu0 0
      %759 = vmatprep.subr.bf16.mxu0 0
      %760 = vmatpush2.bf16.msra.mxu0 0
      %761 = vmatprep.subr.bf16.mxu0 0
      %762 = vmatpush2.bf16.msra.mxu0 0
      %763 = vmatprep.subr.bf16.mxu0 0
      %764 = vmatpush2.bf16.msra.mxu0 0
      %765 = vmatprep.subr.bf16.mxu0 0
      %766 = vmatpush2.bf16.msra.mxu0 0
      %767 = vmatprep.subr.bf16.mxu0 0
      %768 = vmatpush2.bf16.msra.mxu0 0
      %769 = vmatprep.subr.bf16.mxu0 0
      %770 = vmatpush2.bf16.msra.mxu0 0
      %771 = vmatprep.mubr.bf16.mxu0 0
      %772 = vmatmul.mubr.bf16.gmra.mxu0 %v737
      %v773 = vpop.f32.mrf.mxu0
      %v774 = vadd.f32 0.0, %v773
      %v775 = vpop.f32.mrf.mxu0
      %v776 = vpop.f32.mrf.mxu0
      %v777 = vpop.f32.mrf.mxu0
      %778 = vdwg.mxu0
      %v779 = vadd.f32 %v708, %v774
      %v780 = vld [vmem:[%s229 + $0x4] sm:$0x6]
      %s781 = scalar_lea.vmem %s1, 128
      %v782 = vld [vmem:[%s781] sm:$0xf]
      %v783 = vld [vmem:[%s781 + $0x4] sm:$0xf]
      %v784 = vld [vmem:[%s781 + $0x8] sm:$0xf]
      %v785 = vld [vmem:[%s781 + $0xc] sm:$0xf]
      %v787 = vunpack.c.l.b16 %v780
      %v788 = vpack.c.b16 %v787, %v787
      %v789 = vrot.slane %v788, 1
      %v794 = vunpack.c.l.b16 %v782
      %v795 = vunpack.c.l.b16 %v783
      %v796 = vunpack.c.l.b16 %v784
      %v797 = vunpack.c.l.b16 %v785
      %v798 = vpack.c.b16 %v795, %v794
      %v799 = vpack.c.b16 %v797, %v796
      %v803 = vsel %vm274, %v789, 0
      %805 = vmatprep.subr.bf16.mxu0 0
      %806 = vmatpush1.bf16.msra.mxu0 0
      %807 = vmatprep.subr.bf16.mxu0 0
      %808 = vmatpush1.bf16.msra.mxu0 0
      %809 = vmatprep.subr.bf16.mxu0 0
      %810 = vmatpush1.bf16.msra.mxu0 0
      %811 = vmatprep.subr.bf16.mxu0 0
      %812 = vmatpush1.bf16.msra.mxu0 0
      %813 = vmatprep.subr.bf16.mxu0 0
      %814 = vmatpush1.bf16.msra.mxu0 0
      %815 = vmatprep.subr.bf16.mxu0 0
      %816 = vmatpush1.bf16.msra.mxu0 0
      %817 = vmatprep.subr.bf16.mxu0 0
      %818 = vmatpush1.bf16.msra.mxu0 %v799
      %819 = vmatprep.subr.bf16.mxu0 0
      %820 = vmatpush1.bf16.msra.mxu0 %v798
      %821 = vmatprep.subr.bf16.mxu0 0
      %822 = vmatpush2.bf16.msra.mxu0 0
      %823 = vmatprep.subr.bf16.mxu0 0
      %824 = vmatpush2.bf16.msra.mxu0 0
      %825 = vmatprep.subr.bf16.mxu0 0
      %826 = vmatpush2.bf16.msra.mxu0 0
      %827 = vmatprep.subr.bf16.mxu0 0
      %828 = vmatpush2.bf16.msra.mxu0 0
      %829 = vmatprep.subr.bf16.mxu0 0
      %830 = vmatpush2.bf16.msra.mxu0 0
      %831 = vmatprep.subr.bf16.mxu0 0
      %832 = vmatpush2.bf16.msra.mxu0 0
      %833 = vmatprep.subr.bf16.mxu0 0
      %834 = vmatpush2.bf16.msra.mxu0 0
      %835 = vmatprep.subr.bf16.mxu0 0
      %836 = vmatpush2.bf16.msra.mxu0 0
      %837 = vmatprep.mubr.bf16.mxu0 0
      %838 = vmatmul.mubr.bf16.gmra.mxu0 %v803
      %v839 = vpop.f32.mrf.mxu0
      %v840 = vadd.f32 0.0, %v839
      %v841 = vpop.f32.mrf.mxu0
      %v842 = vpop.f32.mrf.mxu0
      %v843 = vpop.f32.mrf.mxu0
      %844 = vdwg.mxu0
      %v845 = vadd.f32 %v779, %v840
      %v846 = vpack.c.bf16 %v845, %v845
      %vm847 = vcmask 254976
      %vm848 = vsmask.f32 1280
      %vm849 = vmand %vm847, %vm848
      %v850 = vld [vmem:[%s233] sm:$0x3]
      %v851 = vsel %vm849, %v846, %v850
      %852 = vst [vmem:[%s233] sm:$0x3] %v851
      %v853 = vld [vmem:[%s2] sm:$0x7]
      %855 = vset.pattern.permute.xlu0 0
      %856 = vperm.xlu0 %855, %v853
      %v857 = vpop.permute.xlu0 %856
      %v859 = vmul.f32 %v845, %v857
      %vm860 = vcmask 256000
      %v861 = vsel %vm860, %v859, 0.0
      %v862 = vrot.slane %v861, 4
      %v863 = vadd.f32 %v861, %v862
      %v864 = vrot.slane %v863, 2
      %v865 = vadd.f32 %v863, %v864
      %v866 = vrot.slane %v865, 1
      %v867 = vadd.f32 %v865, %v866
      %vm868 = vcmask 253952
      %869 = vst.msk [vmem:[%s236] sm:$0x1] %vm868, %v867
      %v870 = vmul.f32 %v859, %v859
      %v871 = vsel %vm860, %v870, 0.0
      %v872 = vrot.slane %v871, 4
      %v873 = vadd.f32 %v871, %v872
      %v874 = vrot.slane %v873, 2
      %v875 = vadd.f32 %v873, %v874
      %v876 = vrot.slane %v875, 1
      %v877 = vadd.f32 %v875, %v876
      %878 = vst.msk [vmem:[%s239] sm:$0x1] %vm868, %v877
      %p879 = scmp.lt.s32.totalorder %s17, 1
      %s880 = scalar_select %p879, %s17, 1
      %s881 = smul.addr %s880, 2
      %s882 = scalar_lea.vmem %s3, %s881
      %p883 = scmp.lt.s32.totalorder %s17, 1
      %s884 = scalar_select %p883, %s17, 1
      %s885 = scalar_lea.vmem %s4, %s884
      %p886 = scmp.lt.s32.totalorder %s17, 1
      %s887 = scalar_select %p886, %s17, 1
      %s888 = scalar_lea.vmem %s5, %s887
      // Predicated region
      $region33: #{parallel_net_forward.47} parent=31 // pred_check
        %p889 = pneg %p103
      $region34: #{parallel_net_forward.47} parent=31 // pred_check_branch
        %891 = sbr.rel (%p889) target = $region36
      $region35: #{parallel_net_forward.47} parent=31 // pred_region
        _
      $region36: #{parallel_net_forward.47} parent=31 // pred_fallthru
        _
      // Predicated region
      $region37: #{parallel_net_forward.47} parent=31 // pred_check
        %p892 = pneg %p129
      $region38: #{parallel_net_forward.47} parent=31 // pred_check_branch
        %894 = sbr.rel (%p892) target = $region40
      $region39: #{parallel_net_forward.47} parent=31 // pred_region
        _
      $region40: #{parallel_net_forward.47} parent=31 // pred_fallthru
        _
      // Predicated region
      $region41: #{parallel_net_forward.47} parent=31 // pred_check
        %p895 = pneg %p155
      $region42: #{parallel_net_forward.47} parent=31 // pred_check_branch
        %897 = sbr.rel (%p895) target = $region44
      $region43: #{parallel_net_forward.47} parent=31 // pred_region
        _
      $region44: #{parallel_net_forward.47} parent=31 // pred_fallthru
        _
    $region32: #{parallel_net_forward.47} parent=5 // pred_fallthru
      _
    %p898 = scmp.le.s32.totalorder 2, %s12
    // Predicated region
    $region45: #{parallel_net_forward.47} parent=5 // pred_check
      %p899 = pneg %p898
    $region46: #{parallel_net_forward.47} parent=5 // pred_check_branch
      %901 = sbr.rel (%p899) target = $region48
    $region47: #{parallel_net_forward.47} parent=5 // pred_region
      %s902 = ssub.s32 %s12, 2
      // Predicated region
      $region49: #{parallel_net_forward.47} parent=47 // pred_check
        %p903 = pneg %p109
      $region50: #{parallel_net_forward.47} parent=47 // pred_check_branch
        %905 = sbr.rel (%p903) target = $region52
      $region51: #{parallel_net_forward.47} parent=47 // pred_region
        %p906 = scmp.lt.s32.totalorder %s18, 1
        %s907 = scalar_select %p906, %s18, 1
        %s908 = smul.addr %s907, 2
        %s909 = scalar_lea.vmem %s3, %s908
      $region52: #{parallel_net_forward.47} parent=47 // pred_fallthru
        _
      // Predicated region
      $region53: #{parallel_net_forward.47} parent=47 // pred_check
        %p910 = pneg %p135
      $region54: #{parallel_net_forward.47} parent=47 // pred_check_branch
        %912 = sbr.rel (%p910) target = $region56
      $region55: #{parallel_net_forward.47} parent=47 // pred_region
        %p913 = scmp.lt.s32.totalorder %s18, 1
        %s914 = scalar_select %p913, %s18, 1
        %s915 = scalar_lea.vmem %s4, %s914
      $region56: #{parallel_net_forward.47} parent=47 // pred_fallthru
        _
      // Predicated region
      $region57: #{parallel_net_forward.47} parent=47 // pred_check
        %p916 = pneg %p161
      $region58: #{parallel_net_forward.47} parent=47 // pred_check_branch
        %918 = sbr.rel (%p916) target = $region60
      $region59: #{parallel_net_forward.47} parent=47 // pred_region
        %p919 = scmp.lt.s32.totalorder %s18, 1
        %s920 = scalar_select %p919, %s18, 1
        %s921 = scalar_lea.vmem %s5, %s920
      $region60: #{parallel_net_forward.47} parent=47 // pred_fallthru
        _
    $region48: #{parallel_net_forward.47} parent=5 // pred_fallthru
      _
  $region6: #{parallel_net_forward.47} parent=0 // loop_footer
    %s16 = sadd.s32 1, %s12
  $region7: #{parallel_net_forward.47} parent=0 // loop_footer_branch
    %11 = sbr.rel target = $region3
  $region8: #{parallel_net_forward.47} parent=0 // loop_exit
    _

// kernel: parallel_net_forward.51
$region0: #{parallel_net_forward.51}
  #allocation0 [shape = 'u32[]', space=smem, size = 0x4, offset = 0x4, fixed_abs, tag = 'smem constant byte address 0x4 - core index']
  #allocation1 [shape = 'u32[144,128]{1,0:T(1,128)}', space=vmem, size = 0x12000, scoped, tag = 'internal scratch']
  %s0 = inlined_call_operand.vmem [shape: f32[2,1,32], index: 0, kind: input, shape index: {}]
  %s1 = inlined_call_operand.vmem [shape: bf16[32,256], index: 1, kind: input, shape index: {}]
  %s2 = inlined_call_operand.vmem [shape: f32[1,256], index: 2, kind: input, shape index: {}]
  %s3 = inlined_call_operand.hbm [shape: f32[2,256], index: 3, kind: output, shape index: {}]
  %s4 = sld [smem:[#allocation0]]
  $region22: #{parallel_net_forward.51} parent=0
    _
  %s6 = ssub.s32 1, %s4
  %s7 = scalar_select 0, %s6, %s4
  $region1: #{parallel_net_forward.51} parent=0
    #allocation2 [shape = 'u8[2048]{0}', space=vmem, size = 0x800, scoped, tag = 'output window, operand 0, single buffered']
    #allocation3 [shape = 's32[1]{0}', space=sflag, size = 0x4, scoped, tag = 'scoped memory for parallel_net_forward.51']
    %8 = vsyncpa [#allocation3], 0
    // Predicated region
    $region2: #{parallel_net_forward.51} parent=1 // pred_check
      _
    $region3: #{parallel_net_forward.51} parent=1 // pred_check_branch
      %10 = sbr.rel (0) target = $region5
    $region4: #{parallel_net_forward.51} parent=1 // pred_region
      _
    $region5: #{parallel_net_forward.51} parent=1 // pred_fallthru
      _
    // Predicated region
    $region6: #{parallel_net_forward.51} parent=1 // pred_check
      _
    $region7: #{parallel_net_forward.51} parent=1 // pred_check_branch
      %12 = sbr.rel (0) target = $region9
    $region8: #{parallel_net_forward.51} parent=1 // pred_region
      _
    $region9: #{parallel_net_forward.51} parent=1 // pred_fallthru
      _
    // Predicated region
    $region10: #{parallel_net_forward.51} parent=1 // pred_check
      _
    $region11: #{parallel_net_forward.51} parent=1 // pred_check_branch
      %14 = sbr.rel (0) target = $region13
    $region12: #{parallel_net_forward.51} parent=1 // pred_region
      _
    $region13: #{parallel_net_forward.51} parent=1 // pred_fallthru
      _
    %v16 = vld [vmem:[%s0] sm:$0x1]
    %v17 = vld [vmem:[%s0 + $0x1] sm:$0x1]
    %v18 = vadd.f32 %v16, 0.0
    %v19 = vadd.f32 %v17, 0.0
    %v20 = vpack.c.bf16 %v18, %v18
    %v21 = vpack.c.bf16 %v19, %v19
    %v22 = vld [vmem:[%s1] sm:$0xff]
    %v23 = vld [vmem:[%s1 + $0x8] sm:$0xff]
    %v24 = vld [vmem:[%s1 + $0x10] sm:$0xff]
    %v25 = vld [vmem:[%s1 + $0x18] sm:$0xff]
    %v26 = vld [vmem:[%s2] sm:$0x3]
    %v28 = vlaneseq
    %v29 = vshrl.u32 %v28, 7
    %v30 = vsub.s32 0, %v29
    %v31 = vrot.slane %v26, %v30
    %v32 = vlaneseq
    %v33 = vshrl.u32 %v32, 7
    %v34 = vsub.s32 1, %v33
    %v35 = vrot.slane %v26, %v34
    %v40 = vunpack.c.l.b16 %v20
    %v41 = vunpack.c.l.b16 %v21
    %v42 = vrot.slane %v41, 7
    %vm43 = vcmask 1041409
    %v44 = vsel %vm43, %v42, %v40
    %v45 = vpack.c.b16 %v44, %v44
    %v50 = vunpack.c.l.b16 %v22
    %v51 = vunpack.c.h.b16 %v22
    %v52 = vunpack.c.l.b16 %v23
    %v53 = vunpack.c.h.b16 %v23
    %v54 = vunpack.c.l.b16 %v24
    %v55 = vunpack.c.h.b16 %v24
    %v56 = vunpack.c.l.b16 %v25
    %v57 = vunpack.c.h.b16 %v25
    %v58 = vpack.c.b16 %v52, %v50
    %v59 = vpack.c.b16 %v53, %v51
    %v60 = vpack.c.b16 %v56, %v54
    %v61 = vpack.c.b16 %v57, %v55
    %vm66 = vcmask 261120
    %v68 = vsel %vm66, %v45, 0
    %70 = vmatprep.subr.bf16.mxu0 0
    %71 = vmatpush1.bf16.msra.mxu0 0
    %72 = vmatprep.subr.bf16.mxu0 0
    %73 = vmatpush1.bf16.msra.mxu0 0
    %74 = vmatprep.subr.bf16.mxu0 0
    %75 = vmatpush1.bf16.msra.mxu0 0
    %76 = vmatprep.subr.bf16.mxu0 0
    %77 = vmatpush1.bf16.msra.mxu0 0
    %78 = vmatprep.subr.bf16.mxu0 0
    %79 = vmatpush1.bf16.msra.mxu0 0
    %80 = vmatprep.subr.bf16.mxu0 0
    %81 = vmatpush1.bf16.msra.mxu0 0
    %82 = vmatprep.subr.bf16.mxu0 %v61
    %83 = vmatpush1.bf16.msra.mxu0 %v60
    %84 = vmatprep.subr.bf16.mxu0 %v59
    %85 = vmatpush1.bf16.msra.mxu0 %v58
    %86 = vmatprep.subr.bf16.mxu0 0
    %87 = vmatpush2.bf16.msra.mxu0 0
    %88 = vmatprep.subr.bf16.mxu0 0
    %89 = vmatpush2.bf16.msra.mxu0 0
    %90 = vmatprep.subr.bf16.mxu0 0
    %91 = vmatpush2.bf16.msra.mxu0 0
    %92 = vmatprep.subr.bf16.mxu0 0
    %93 = vmatpush2.bf16.msra.mxu0 0
    %94 = vmatprep.subr.bf16.mxu0 0
    %95 = vmatpush2.bf16.msra.mxu0 0
    %96 = vmatprep.subr.bf16.mxu0 0
    %97 = vmatpush2.bf16.msra.mxu0 0
    %98 = vmatprep.subr.bf16.mxu0 0
    %99 = vmatpush2.bf16.msra.mxu0 0
    %100 = vmatprep.subr.bf16.mxu0 0
    %101 = vmatpush2.bf16.msra.mxu0 0
    %102 = vmatprep.mubr.bf16.mxu0 0
    %103 = vmatmul.mubr.bf16.gmra.mxu0 %v68
    %v104 = vpop.f32.mrf.mxu0
    %v105 = vadd.f32 %v31, %v104
    %v106 = vpop.f32.mrf.mxu0
    %v107 = vadd.f32 %v35, %v106
    %v108 = vpop.f32.mrf.mxu0
    %v109 = vpop.f32.mrf.mxu0
    %110 = vdwg.mxu0
    %v113 = vcombine.low %v105, %v107
    %v115 = vunpack.c.l.s4 1983009808
    %v116 = vunpack.c.0.s8 %v115
    %v117 = vlaneseq
    %v118 = vshrl.u32 %v117, 7
    %v119 = vsub.s32 %v116, %v118
    %v120 = vrot.slane %v113, %v119
    %122 = vst [vmem:[#allocation2] sm:$0xf] %v120
    // Predicated region
    $region14: #{parallel_net_forward.51} parent=1 // pred_check
      _
    $region15: #{parallel_net_forward.51} parent=1 // pred_check_branch
      %124 = sbr.rel (0) target = $region17
    $region16: #{parallel_net_forward.51} parent=1 // pred_region
      %s126 = ssub.s32 64, 64
      %127 = vsyncadd [#allocation3], %s126
      %s129 = sshll.u32 [#allocation2], 4
      %s130 = int_to_ptr.vmem [resolvable:$true] %s129
      %132 = dma.vmem_to_hbm [thread:$0]  %s130, 64, %s3, [#allocation3]
    $region17: #{parallel_net_forward.51} parent=1 // pred_fallthru
      _
    // Predicated region
    $region18: #{parallel_net_forward.51} parent=1 // pred_check
      _
    $region19: #{parallel_net_forward.51} parent=1 // pred_check_branch
      %134 = sbr.rel (0) target = $region21
    $region20: #{parallel_net_forward.51} parent=1 // pred_region
      %135 = dma.done [#allocation3], 64
    $region21: #{parallel_net_forward.51} parent=1 // pred_fallthru
      _
    %136 = vsyncpa [#allocation3], 1

</llo_original>
